<compile_context>
chip_gen: v6e
topology: v6e:2x2x1
jax: 0.10.0
libtpu: 0.0.40
codegen_flags: <defaults>
</compile_context>

<pallas_src>
import functools

import numpy as np
import jax
import jax.numpy as jnp
from jax.experimental import pallas as pl
from jax.experimental.pallas import tpu as pltpu

EPS = 1e-5
SLOPE = 0.2
KS = 4                      # Conv3d kernel size used by UNetDownBlock


def _round_up(v, m):
    return ((v + m - 1) // m) * m


def _cdiv(a, b):
    return (a + b - 1) // b


def _vmem_limit_bytes():
    # v7x has only 64 MiB VMEM per TensorCore; keep the scoped limit safe on
    # every generation.
    cap = 64 * 1024 * 1024
    try:
        cap = int(getattr(pltpu.get_tpu_info(), "vmem_capacity_bytes", cap))
    except Exception:
        pass
    return min(48 * 1024 * 1024, (3 * cap) // 4)


# ---------------------------------------------------------------------------
# Fused kernel: on-chip 64-tap patch build + single conv-GEMM + InstanceNorm
#               + LeakyReLU.  One grid step == one (sample, Cout-tile).
# ---------------------------------------------------------------------------
def _down_block_kernel(x_ref, w_ref, mask_ref, o_ref, patch_ref, *,
                       offs, cin_p, inv_n_valid, slope, eps):
    # x_ref:     (8, Cin_p, R_in)  bf16 — 8 flattened parity sub-volumes of one sample
    # w_ref:     (Cout_t, 64*Cin_p) bf16 — fused (parity, shift, channel)-major weights
    # mask_ref:  (1, Rp)           f32  — 1.0 on valid output rows, 0.0 on padding rows
    # o_ref:     (Cout_t, Rp)      f32  — output block
    # patch_ref: (64*Cin_p, Rp)    bf16 — VMEM scratch: on-chip built patch tile
    rp = patch_ref.shape[1]

    # Build all 64 conv taps on-chip: each (parity, unit-shift) tap is a
    # contiguous lane slice of the flattened parity volume (row-shift trick),
    # written at a bf16-tile-aligned sublane offset of the scratch.
    for p in range(8):
        for qi, off in enumerate(offs):
            k = p * 8 + qi
            patch_ref[k * cin_p:(k + 1) * cin_p, :] = x_ref[p, :, off:off + rp]

    # Single weight-stationary bf16 GEMM with f32 accumulation (K = 64*Cin_p).
    o_ref[...] = jnp.dot(w_ref[...], patch_ref[...],
                         preferred_element_type=jnp.float32)

    # Fused InstanceNorm (masked, biased variance, one reduction pass over the
    # accumulator: var = E[x^2] - mean^2) + LeakyReLU epilogue.
    acc = o_ref[...]
    mask = mask_ref[...]                                   # (1, Rp)
    am = acc * mask
    mean = jnp.sum(am, axis=1, keepdims=True) * inv_n_valid
    ex2 = jnp.sum(am * acc, axis=1, keepdims=True) * inv_n_valid
    var = ex2 - mean * mean
    y = (acc - mean) * jax.lax.rsqrt(var + eps)
    o_ref[...] = jnp.where(y >= 0.0, y, slope * y)


# ---------------------------------------------------------------------------
# Wrapper: layout glue (single fused pad, parity split, weight re-pack) + call
# ---------------------------------------------------------------------------
def unet_down_block(x, w, *, slope=SLOPE, eps=EPS):
    """UNetDownBlock forward.

    x: [N, Cin, D, H, W] float32 (NCDHW), w: [Cout, Cin, 4, 4, 4] (PyTorch layout).
    Returns [N, Cout, D//2, H//2, W//2] float32 (NCDHW).
    """
    N, Cin, D, H, W = x.shape
    Cout = w.shape[0]
    assert w.shape == (Cout, Cin, KS, KS, KS), w.shape
    assert min(D, H, W) >= 2

    Do, Ho, Wo = D // 2, H // 2, W // 2                    # conv output extents
    hd, hh, hw = (D + 3) // 2, (H + 3) // 2, (W + 3) // 2  # parity-volume extents
    cin_p = _round_up(Cin, 16)           # bf16 sublane packing -> multiples of 16
    k64 = 64 * cin_p

    # Cout tiling (parallel grid axis; InstanceNorm stats are per (n, channel)).
    cout_p = _round_up(Cout, 16)
    if cout_p > 128:
        cout_tile = 128
        cout_p = _round_up(cout_p, cout_tile)
    else:
        cout_tile = cout_p
    n_j = cout_p // cout_tile

    r_struct = Do * hh * hw              # structured (padded-layout) output rows
    rp = _round_up(r_struct, 128)        # lane-dense output width
    max_off = hh * hw + hw + 1           # largest tap-shift row offset
    # Extra depth padding so the flattened parity volume already contains the
    # row-shift headroom (single fused pad instead of pad -> transpose -> pad).
    extra_d = _cdiv(max(0, rp + max_off - hd * hh * hw), hh * hw)
    hd_eff = hd + extra_d
    r_in = hd_eff * hh * hw

    # ---- input: ONE fused pad (channel pad, conv pad of 1, evenness pad and
    #      shift headroom), bf16 cast first to halve the wrapper HBM traffic,
    #      then split into the 8 stride-2 parity sub-volumes and flatten.
    xp = jnp.pad(x.astype(jnp.bfloat16),
                 ((0, 0), (0, cin_p - Cin),
                  (1, 2 * hd_eff - D - 1),
                  (1, 2 * hh - H - 1),
                  (1, 2 * hw - W - 1)))
    xr = xp.reshape(N, cin_p, hd_eff, 2, hh, 2, hw, 2)
    xpar = xr.transpose(0, 3, 5, 7, 1, 2, 4, 6).reshape(N, 8, cin_p, r_in)

    # ---- weights: [Cout, Cin, 4,4,4] -> fused [Cout_p, 64*Cin_p] where column
    #      ((rd,rh,rw)*8 + (qd,qh,qw))*Cin_p + c holds w[:, c, 2qd+rd, 2qh+rh, 2qw+rw].
    wp = jnp.pad(w.astype(jnp.float32),
                 ((0, cout_p - Cout), (0, cin_p - Cin), (0, 0), (0, 0), (0, 0)))
    wt = wp.reshape(cout_p, cin_p, 2, 2, 2, 2, 2, 2)       # co,c,qd,rd,qh,rh,qw,rw
    wfl = (wt.transpose(0, 3, 5, 7, 2, 4, 6, 1)            # co,rd,rh,rw,qd,qh,qw,c
             .reshape(cout_p, k64).astype(jnp.bfloat16))

    # ---- validity mask over padded output rows (for InstanceNorm statistics).
    lanes = np.arange(rp)
    valid = ((lanes < r_struct)
             & (lanes % hw < Wo)
             & ((lanes // hw) % hh < Ho))
    mask = jnp.asarray(valid.astype(np.float32)).reshape(1, rp)

    offs = tuple((qd * hh + qh) * hw + qw
                 for qd in range(2) for qh in range(2) for qw in range(2))
    n_valid = Do * Ho * Wo

    kern = functools.partial(_down_block_kernel, offs=offs, cin_p=cin_p,
                             inv_n_valid=1.0 / float(n_valid),
                             slope=float(slope), eps=float(eps))

    out = pl.pallas_call(
        kern,
        out_shape=jax.ShapeDtypeStruct((N, cout_p, rp), jnp.float32),
        grid=(N, n_j),
        in_specs=[
            # Whole-sample parity volumes; block index is sample-only -> fetched
            # once per sample even when the Cout-tile axis iterates.
            pl.BlockSpec((None, 8, cin_p, r_in), lambda n, j: (n, 0, 0, 0)),
            # Weights: sample-invariant block index -> VMEM-resident across the
            # batch (only re-fetched when the Cout tile changes).
            pl.BlockSpec((cout_tile, k64), lambda n, j: (j, 0)),
            pl.BlockSpec((1, rp), lambda n, j: (0, 0)),
        ],
        out_specs=pl.BlockSpec((None, cout_tile, rp), lambda n, j: (n, j, 0)),
        scratch_shapes=[pltpu.VMEM((k64, rp), jnp.bfloat16)],
        compiler_params=pltpu.CompilerParams(
            dimension_semantics=("parallel", "parallel"),
            vmem_limit_bytes=_vmem_limit_bytes()),
    )(xpar, wfl, mask)

    # Strip channel / row padding, un-flatten to NCDHW (output is lane-dense
    # [Cout, rows] so this is just a slice + reshape).
    out = out[:, :Cout, :r_struct].reshape(N, Cout, Do, hh, hw)
    return out[:, :, :, :Ho, :Wo]


# ---------------------------------------------------------------------------
# Pure-JAX reference (exact PyTorch semantics) for correctness checking
# ---------------------------------------------------------------------------
def _reference(x, w, slope=SLOPE, eps=EPS):
    y = jax.lax.conv_general_dilated(
        x, w, window_strides=(2, 2, 2), padding=[(1, 1)] * 3,
        dimension_numbers=("NCDHW", "OIDHW", "NCDHW"),
        precision=jax.lax.Precision.HIGHEST)
    mean = jnp.mean(y, axis=(2, 3, 4), keepdims=True)
    var = jnp.mean(jnp.square(y - mean), axis=(2, 3, 4), keepdims=True)
    yn = (y - mean) * jax.lax.rsqrt(var + eps)
    return jnp.where(yn >= 0.0, yn, slope * yn)


if __name__ == "__main__":
    key = jax.random.PRNGKey(0)
    kx, kw, kx2, kw2, kx3, kw3 = jax.random.split(key, 6)

    # UNetDownBlock(in_size=4, out_size=16) on a [2, 4, 16, 16, 16] input.
    N, Cin, Cout, S = 2, 4, 16, 16
    x = jax.random.normal(kx, (N, Cin, S, S, S), jnp.float32)
    bound = float(np.sqrt(6.0 / (Cin * KS ** 3)))          # kaiming_uniform_
    w = jax.random.uniform(kw, (Cout, Cin, KS, KS, KS), jnp.float32, -bound, bound)

    out = jax.block_until_ready(unet_down_block(x, w))
    assert out.shape == (N, Cout, S // 2, S // 2, S // 2), out.shape
    np.testing.assert_allclose(np.asarray(out), np.asarray(_reference(x, w)),
                               rtol=2e-2, atol=2e-2)

    # Second case: channel padding path (Cin=3, Cout=12) + non-cubic spatial.
    N2, Cin2, Cout2 = 1, 3, 12
    D2, H2, W2 = 8, 12, 10
    x2 = jax.random.normal(kx2, (N2, Cin2, D2, H2, W2), jnp.float32)
    bound2 = float(np.sqrt(6.0 / (Cin2 * KS ** 3)))
    w2 = jax.random.uniform(kw2, (Cout2, Cin2, KS, KS, KS), jnp.float32,
                            -bound2, bound2)
    out2 = jax.block_until_ready(unet_down_block(x2, w2))
    assert out2.shape == (N2, Cout2, D2 // 2, H2 // 2, W2 // 2), out2.shape
    np.testing.assert_allclose(np.asarray(out2), np.asarray(_reference(x2, w2)),
                               rtol=2e-2, atol=2e-2)

    # Third case: odd spatial extents (exercises the parity bookkeeping).
    N3, Cin3, Cout3 = 1, 3, 8
    D3, H3, W3 = 9, 7, 11
    x3 = jax.random.normal(kx3, (N3, Cin3, D3, H3, W3), jnp.float32)
    bound3 = float(np.sqrt(6.0 / (Cin3 * KS ** 3)))
    w3 = jax.random.uniform(kw3, (Cout3, Cin3, KS, KS, KS), jnp.float32,
                            -bound3, bound3)
    out3 = jax.block_until_ready(unet_down_block(x3, w3))
    assert out3.shape == (N3, Cout3, D3 // 2, H3 // 2, W3 // 2), out3.shape
    np.testing.assert_allclose(np.asarray(out3), np.asarray(_reference(x3, w3)),
                               rtol=2e-2, atol=2e-2)

    print("KERNEL_OK")
</pallas_src>

<mosaic_0001>
module attributes {stable_mosaic.version = 11 : i64} {
  func.func @_down_block_kernel(%arg0: i32, %arg1: i32, %arg2: memref<1x8x16x891xbf16, #tpu.memory_space<vmem>>, %arg3: memref<16x1024xbf16, #tpu.memory_space<vmem>>, %arg4: memref<1x768xf32, #tpu.memory_space<vmem>>, %arg5: memref<1x16x768xf32, #tpu.memory_space<vmem>>, %arg6: memref<1024x768xbf16, #tpu.memory_space<vmem>>) attributes {dimension_semantics = [#tpu.dimension_semantics<parallel>, #tpu.dimension_semantics<parallel>], iteration_bounds = array<i64: 2, 1>, scalar_prefetch = 0 : i64, scratch_operands = 1 : i64, tpu.core_type = #tpu.core_type<tc>, window_params = [{transform_indices = @transform_0, window_bounds = array<i64: 1, 8, 16, 891>}, {transform_indices = @transform_1, window_bounds = array<i64: 16, 1024>}, {pipeline_mode = #tpu.pipeline_mode<synchronous>, transform_indices = @transform_2, window_bounds = array<i64: 1, 768>}, {transform_indices = @transform_3, window_bounds = array<i64: 1, 16, 768>}]} {
    %c0 = arith.constant 0 : index
    %c0_0 = arith.constant 0 : index
    %c0_1 = arith.constant 0 : index
    %c0_2 = arith.constant 0 : index
    %0 = vector.load %arg2[%c0, %c0_0, %c0_1, %c0_2] : memref<1x8x16x891xbf16, #tpu.memory_space<vmem>>, vector<1x1x16x768xbf16>
    %1 = vector.shape_cast %0 : vector<1x1x16x768xbf16> to vector<16x768xbf16>
    %c0_3 = arith.constant 0 : index
    %c0_4 = arith.constant 0 : index
    %2 = vector.load %arg6[%c0_3, %c0_4] : memref<1024x768xbf16, #tpu.memory_space<vmem>>, vector<16x768xbf16>
    tpu.vector_store %arg6[%c0_3, %c0_4], %1 {strides = array<i32>} : memref<1024x768xbf16, #tpu.memory_space<vmem>>, vector<16x768xbf16>,
    %c0_5 = arith.constant 0 : index
    %c0_6 = arith.constant 0 : index
    %c0_7 = arith.constant 0 : index
    %c1 = arith.constant 1 : index
    %3 = vector.load %arg2[%c0_5, %c0_6, %c0_7, %c1] : memref<1x8x16x891xbf16, #tpu.memory_space<vmem>>, vector<1x1x16x768xbf16>
    %4 = vector.shape_cast %3 : vector<1x1x16x768xbf16> to vector<16x768xbf16>
    %c16 = arith.constant 16 : index
    %c0_8 = arith.constant 0 : index
    %5 = vector.load %arg6[%c16, %c0_8] : memref<1024x768xbf16, #tpu.memory_space<vmem>>, vector<16x768xbf16>
    tpu.vector_store %arg6[%c16, %c0_8], %4 {strides = array<i32>} : memref<1024x768xbf16, #tpu.memory_space<vmem>>, vector<16x768xbf16>,
    %c0_9 = arith.constant 0 : index
    %c0_10 = arith.constant 0 : index
    %c0_11 = arith.constant 0 : index
    %c9 = arith.constant 9 : index
    %6 = vector.load %arg2[%c0_9, %c0_10, %c0_11, %c9] : memref<1x8x16x891xbf16, #tpu.memory_space<vmem>>, vector<1x1x16x768xbf16>
    %7 = vector.shape_cast %6 : vector<1x1x16x768xbf16> to vector<16x768xbf16>
    %c32 = arith.constant 32 : index
    %c0_12 = arith.constant 0 : index
    %8 = vector.load %arg6[%c32, %c0_12] : memref<1024x768xbf16, #tpu.memory_space<vmem>>, vector<16x768xbf16>
    tpu.vector_store %arg6[%c32, %c0_12], %7 {strides = array<i32>} : memref<1024x768xbf16, #tpu.memory_space<vmem>>, vector<16x768xbf16>,
    %c0_13 = arith.constant 0 : index
    %c0_14 = arith.constant 0 : index
    %c0_15 = arith.constant 0 : index
    %c10 = arith.constant 10 : index
    %9 = vector.load %arg2[%c0_13, %c0_14, %c0_15, %c10] : memref<1x8x16x891xbf16, #tpu.memory_space<vmem>>, vector<1x1x16x768xbf16>
    %10 = vector.shape_cast %9 : vector<1x1x16x768xbf16> to vector<16x768xbf16>
    %c48 = arith.constant 48 : index
    %c0_16 = arith.constant 0 : index
    %11 = vector.load %arg6[%c48, %c0_16] : memref<1024x768xbf16, #tpu.memory_space<vmem>>, vector<16x768xbf16>
    tpu.vector_store %arg6[%c48, %c0_16], %10 {strides = array<i32>} : memref<1024x768xbf16, #tpu.memory_space<vmem>>, vector<16x768xbf16>,
    %c0_17 = arith.constant 0 : index
    %c0_18 = arith.constant 0 : index
    %c0_19 = arith.constant 0 : index
    %c81 = arith.constant 81 : index
    %12 = vector.load %arg2[%c0_17, %c0_18, %c0_19, %c81] : memref<1x8x16x891xbf16, #tpu.memory_space<vmem>>, vector<1x1x16x768xbf16>
    %13 = vector.shape_cast %12 : vector<1x1x16x768xbf16> to vector<16x768xbf16>
    %c64 = arith.constant 64 : index
    %c0_20 = arith.constant 0 : index
    %14 = vector.load %arg6[%c64, %c0_20] : memref<1024x768xbf16, #tpu.memory_space<vmem>>, vector<16x768xbf16>
    tpu.vector_store %arg6[%c64, %c0_20], %13 {strides = array<i32>} : memref<1024x768xbf16, #tpu.memory_space<vmem>>, vector<16x768xbf16>,
    %c0_21 = arith.constant 0 : index
    %c0_22 = arith.constant 0 : index
    %c0_23 = arith.constant 0 : index
    %c82 = arith.constant 82 : index
    %15 = vector.load %arg2[%c0_21, %c0_22, %c0_23, %c82] : memref<1x8x16x891xbf16, #tpu.memory_space<vmem>>, vector<1x1x16x768xbf16>
    %16 = vector.shape_cast %15 : vector<1x1x16x768xbf16> to vector<16x768xbf16>
    %c80 = arith.constant 80 : index
    %c0_24 = arith.constant 0 : index
    %17 = vector.load %arg6[%c80, %c0_24] : memref<1024x768xbf16, #tpu.memory_space<vmem>>, vector<16x768xbf16>
    tpu.vector_store %arg6[%c80, %c0_24], %16 {strides = array<i32>} : memref<1024x768xbf16, #tpu.memory_space<vmem>>, vector<16x768xbf16>,
    %c0_25 = arith.constant 0 : index
    %c0_26 = arith.constant 0 : index
    %c0_27 = arith.constant 0 : index
    %c90 = arith.constant 90 : index
    %18 = vector.load %arg2[%c0_25, %c0_26, %c0_27, %c90] : memref<1x8x16x891xbf16, #tpu.memory_space<vmem>>, vector<1x1x16x768xbf16>
    %19 = vector.shape_cast %18 : vector<1x1x16x768xbf16> to vector<16x768xbf16>
    %c96 = arith.constant 96 : index
    %c0_28 = arith.constant 0 : index
    %20 = vector.load %arg6[%c96, %c0_28] : memref<1024x768xbf16, #tpu.memory_space<vmem>>, vector<16x768xbf16>
    tpu.vector_store %arg6[%c96, %c0_28], %19 {strides = array<i32>} : memref<1024x768xbf16, #tpu.memory_space<vmem>>, vector<16x768xbf16>,
    %c0_29 = arith.constant 0 : index
    %c0_30 = arith.constant 0 : index
    %c0_31 = arith.constant 0 : index
    %c91 = arith.constant 91 : index
    %21 = vector.load %arg2[%c0_29, %c0_30, %c0_31, %c91] : memref<1x8x16x891xbf16, #tpu.memory_space<vmem>>, vector<1x1x16x768xbf16>
    %22 = vector.shape_cast %21 : vector<1x1x16x768xbf16> to vector<16x768xbf16>
    %c112 = arith.constant 112 : index
    %c0_32 = arith.constant 0 : index
    %23 = vector.load %arg6[%c112, %c0_32] : memref<1024x768xbf16, #tpu.memory_space<vmem>>, vector<16x768xbf16>
    tpu.vector_store %arg6[%c112, %c0_32], %22 {strides = array<i32>} : memref<1024x768xbf16, #tpu.memory_space<vmem>>, vector<16x768xbf16>,
    %c0_33 = arith.constant 0 : index
    %c1_34 = arith.constant 1 : index
    %c0_35 = arith.constant 0 : index
    %c0_36 = arith.constant 0 : index
    %24 = vector.load %arg2[%c0_33, %c1_34, %c0_35, %c0_36] : memref<1x8x16x891xbf16, #tpu.memory_space<vmem>>, vector<1x1x16x768xbf16>
    %25 = vector.shape_cast %24 : vector<1x1x16x768xbf16> to vector<16x768xbf16>
    %c128 = arith.constant 128 : index
    %c0_37 = arith.constant 0 : index
    %26 = vector.load %arg6[%c128, %c0_37] : memref<1024x768xbf16, #tpu.memory_space<vmem>>, vector<16x768xbf16>
    tpu.vector_store %arg6[%c128, %c0_37], %25 {strides = array<i32>} : memref<1024x768xbf16, #tpu.memory_space<vmem>>, vector<16x768xbf16>,
    %c0_38 = arith.constant 0 : index
    %c1_39 = arith.constant 1 : index
    %c0_40 = arith.constant 0 : index
    %c1_41 = arith.constant 1 : index
    %27 = vector.load %arg2[%c0_38, %c1_39, %c0_40, %c1_41] : memref<1x8x16x891xbf16, #tpu.memory_space<vmem>>, vector<1x1x16x768xbf16>
    %28 = vector.shape_cast %27 : vector<1x1x16x768xbf16> to vector<16x768xbf16>
    %c144 = arith.constant 144 : index
    %c0_42 = arith.constant 0 : index
    %29 = vector.load %arg6[%c144, %c0_42] : memref<1024x768xbf16, #tpu.memory_space<vmem>>, vector<16x768xbf16>
    tpu.vector_store %arg6[%c144, %c0_42], %28 {strides = array<i32>} : memref<1024x768xbf16, #tpu.memory_space<vmem>>, vector<16x768xbf16>,
    %c0_43 = arith.constant 0 : index
    %c1_44 = arith.constant 1 : index
    %c0_45 = arith.constant 0 : index
    %c9_46 = arith.constant 9 : index
    %30 = vector.load %arg2[%c0_43, %c1_44, %c0_45, %c9_46] : memref<1x8x16x891xbf16, #tpu.memory_space<vmem>>, vector<1x1x16x768xbf16>
    %31 = vector.shape_cast %30 : vector<1x1x16x768xbf16> to vector<16x768xbf16>
    %c160 = arith.constant 160 : index
    %c0_47 = arith.constant 0 : index
    %32 = vector.load %arg6[%c160, %c0_47] : memref<1024x768xbf16, #tpu.memory_space<vmem>>, vector<16x768xbf16>
    tpu.vector_store %arg6[%c160, %c0_47], %31 {strides = array<i32>} : memref<1024x768xbf16, #tpu.memory_space<vmem>>, vector<16x768xbf16>,
    %c0_48 = arith.constant 0 : index
    %c1_49 = arith.constant 1 : index
    %c0_50 = arith.constant 0 : index
    %c10_51 = arith.constant 10 : index
    %33 = vector.load %arg2[%c0_48, %c1_49, %c0_50, %c10_51] : memref<1x8x16x891xbf16, #tpu.memory_space<vmem>>, vector<1x1x16x768xbf16>
    %34 = vector.shape_cast %33 : vector<1x1x16x768xbf16> to vector<16x768xbf16>
    %c176 = arith.constant 176 : index
    %c0_52 = arith.constant 0 : index
    %35 = vector.load %arg6[%c176, %c0_52] : memref<1024x768xbf16, #tpu.memory_space<vmem>>, vector<16x768xbf16>
    tpu.vector_store %arg6[%c176, %c0_52], %34 {strides = array<i32>} : memref<1024x768xbf16, #tpu.memory_space<vmem>>, vector<16x768xbf16>,
    %c0_53 = arith.constant 0 : index
    %c1_54 = arith.constant 1 : index
    %c0_55 = arith.constant 0 : index
    %c81_56 = arith.constant 81 : index
    %36 = vector.load %arg2[%c0_53, %c1_54, %c0_55, %c81_56] : memref<1x8x16x891xbf16, #tpu.memory_space<vmem>>, vector<1x1x16x768xbf16>
    %37 = vector.shape_cast %36 : vector<1x1x16x768xbf16> to vector<16x768xbf16>
    %c192 = arith.constant 192 : index
    %c0_57 = arith.constant 0 : index
    %38 = vector.load %arg6[%c192, %c0_57] : memref<1024x768xbf16, #tpu.memory_space<vmem>>, vector<16x768xbf16>
    tpu.vector_store %arg6[%c192, %c0_57], %37 {strides = array<i32>} : memref<1024x768xbf16, #tpu.memory_space<vmem>>, vector<16x768xbf16>,
    %c0_58 = arith.constant 0 : index
    %c1_59 = arith.constant 1 : index
    %c0_60 = arith.constant 0 : index
    %c82_61 = arith.constant 82 : index
    %39 = vector.load %arg2[%c0_58, %c1_59, %c0_60, %c82_61] : memref<1x8x16x891xbf16, #tpu.memory_space<vmem>>, vector<1x1x16x768xbf16>
    %40 = vector.shape_cast %39 : vector<1x1x16x768xbf16> to vector<16x768xbf16>
    %c208 = arith.constant 208 : index
    %c0_62 = arith.constant 0 : index
    %41 = vector.load %arg6[%c208, %c0_62] : memref<1024x768xbf16, #tpu.memory_space<vmem>>, vector<16x768xbf16>
    tpu.vector_store %arg6[%c208, %c0_62], %40 {strides = array<i32>} : memref<1024x768xbf16, #tpu.memory_space<vmem>>, vector<16x768xbf16>,
    %c0_63 = arith.constant 0 : index
    %c1_64 = arith.constant 1 : index
    %c0_65 = arith.constant 0 : index
    %c90_66 = arith.constant 90 : index
    %42 = vector.load %arg2[%c0_63, %c1_64, %c0_65, %c90_66] : memref<1x8x16x891xbf16, #tpu.memory_space<vmem>>, vector<1x1x16x768xbf16>
    %43 = vector.shape_cast %42 : vector<1x1x16x768xbf16> to vector<16x768xbf16>
    %c224 = arith.constant 224 : index
    %c0_67 = arith.constant 0 : index
    %44 = vector.load %arg6[%c224, %c0_67] : memref<1024x768xbf16, #tpu.memory_space<vmem>>, vector<16x768xbf16>
    tpu.vector_store %arg6[%c224, %c0_67], %43 {strides = array<i32>} : memref<1024x768xbf16, #tpu.memory_space<vmem>>, vector<16x768xbf16>,
    %c0_68 = arith.constant 0 : index
    %c1_69 = arith.constant 1 : index
    %c0_70 = arith.constant 0 : index
    %c91_71 = arith.constant 91 : index
    %45 = vector.load %arg2[%c0_68, %c1_69, %c0_70, %c91_71] : memref<1x8x16x891xbf16, #tpu.memory_space<vmem>>, vector<1x1x16x768xbf16>
    %46 = vector.shape_cast %45 : vector<1x1x16x768xbf16> to vector<16x768xbf16>
    %c240 = arith.constant 240 : index
    %c0_72 = arith.constant 0 : index
    %47 = vector.load %arg6[%c240, %c0_72] : memref<1024x768xbf16, #tpu.memory_space<vmem>>, vector<16x768xbf16>
    tpu.vector_store %arg6[%c240, %c0_72], %46 {strides = array<i32>} : memref<1024x768xbf16, #tpu.memory_space<vmem>>, vector<16x768xbf16>,
    %c0_73 = arith.constant 0 : index
    %c2 = arith.constant 2 : index
    %c0_74 = arith.constant 0 : index
    %c0_75 = arith.constant 0 : index
    %48 = vector.load %arg2[%c0_73, %c2, %c0_74, %c0_75] : memref<1x8x16x891xbf16, #tpu.memory_space<vmem>>, vector<1x1x16x768xbf16>
    %49 = vector.shape_cast %48 : vector<1x1x16x768xbf16> to vector<16x768xbf16>
    %c256 = arith.constant 256 : index
    %c0_76 = arith.constant 0 : index
    %50 = vector.load %arg6[%c256, %c0_76] : memref<1024x768xbf16, #tpu.memory_space<vmem>>, vector<16x768xbf16>
    tpu.vector_store %arg6[%c256, %c0_76], %49 {strides = array<i32>} : memref<1024x768xbf16, #tpu.memory_space<vmem>>, vector<16x768xbf16>,
    %c0_77 = arith.constant 0 : index
    %c2_78 = arith.constant 2 : index
    %c0_79 = arith.constant 0 : index
    %c1_80 = arith.constant 1 : index
    %51 = vector.load %arg2[%c0_77, %c2_78, %c0_79, %c1_80] : memref<1x8x16x891xbf16, #tpu.memory_space<vmem>>, vector<1x1x16x768xbf16>
    %52 = vector.shape_cast %51 : vector<1x1x16x768xbf16> to vector<16x768xbf16>
    %c272 = arith.constant 272 : index
    %c0_81 = arith.constant 0 : index
    %53 = vector.load %arg6[%c272, %c0_81] : memref<1024x768xbf16, #tpu.memory_space<vmem>>, vector<16x768xbf16>
    tpu.vector_store %arg6[%c272, %c0_81], %52 {strides = array<i32>} : memref<1024x768xbf16, #tpu.memory_space<vmem>>, vector<16x768xbf16>,
    %c0_82 = arith.constant 0 : index
    %c2_83 = arith.constant 2 : index
    %c0_84 = arith.constant 0 : index
    %c9_85 = arith.constant 9 : index
    %54 = vector.load %arg2[%c0_82, %c2_83, %c0_84, %c9_85] : memref<1x8x16x891xbf16, #tpu.memory_space<vmem>>, vector<1x1x16x768xbf16>
    %55 = vector.shape_cast %54 : vector<1x1x16x768xbf16> to vector<16x768xbf16>
    %c288 = arith.constant 288 : index
    %c0_86 = arith.constant 0 : index
    %56 = vector.load %arg6[%c288, %c0_86] : memref<1024x768xbf16, #tpu.memory_space<vmem>>, vector<16x768xbf16>
    tpu.vector_store %arg6[%c288, %c0_86], %55 {strides = array<i32>} : memref<1024x768xbf16, #tpu.memory_space<vmem>>, vector<16x768xbf16>,
    %c0_87 = arith.constant 0 : index
    %c2_88 = arith.constant 2 : index
    %c0_89 = arith.constant 0 : index
    %c10_90 = arith.constant 10 : index
    %57 = vector.load %arg2[%c0_87, %c2_88, %c0_89, %c10_90] : memref<1x8x16x891xbf16, #tpu.memory_space<vmem>>, vector<1x1x16x768xbf16>
    %58 = vector.shape_cast %57 : vector<1x1x16x768xbf16> to vector<16x768xbf16>
    %c304 = arith.constant 304 : index
    %c0_91 = arith.constant 0 : index
    %59 = vector.load %arg6[%c304, %c0_91] : memref<1024x768xbf16, #tpu.memory_space<vmem>>, vector<16x768xbf16>
    tpu.vector_store %arg6[%c304, %c0_91], %58 {strides = array<i32>} : memref<1024x768xbf16, #tpu.memory_space<vmem>>, vector<16x768xbf16>,
    %c0_92 = arith.constant 0 : index
    %c2_93 = arith.constant 2 : index
    %c0_94 = arith.constant 0 : index
    %c81_95 = arith.constant 81 : index
    %60 = vector.load %arg2[%c0_92, %c2_93, %c0_94, %c81_95] : memref<1x8x16x891xbf16, #tpu.memory_space<vmem>>, vector<1x1x16x768xbf16>
    %61 = vector.shape_cast %60 : vector<1x1x16x768xbf16> to vector<16x768xbf16>
    %c320 = arith.constant 320 : index
    %c0_96 = arith.constant 0 : index
    %62 = vector.load %arg6[%c320, %c0_96] : memref<1024x768xbf16, #tpu.memory_space<vmem>>, vector<16x768xbf16>
    tpu.vector_store %arg6[%c320, %c0_96], %61 {strides = array<i32>} : memref<1024x768xbf16, #tpu.memory_space<vmem>>, vector<16x768xbf16>,
    %c0_97 = arith.constant 0 : index
    %c2_98 = arith.constant 2 : index
    %c0_99 = arith.constant 0 : index
    %c82_100 = arith.constant 82 : index
    %63 = vector.load %arg2[%c0_97, %c2_98, %c0_99, %c82_100] : memref<1x8x16x891xbf16, #tpu.memory_space<vmem>>, vector<1x1x16x768xbf16>
    %64 = vector.shape_cast %63 : vector<1x1x16x768xbf16> to vector<16x768xbf16>
    %c336 = arith.constant 336 : index
    %c0_101 = arith.constant 0 : index
    %65 = vector.load %arg6[%c336, %c0_101] : memref<1024x768xbf16, #tpu.memory_space<vmem>>, vector<16x768xbf16>
    tpu.vector_store %arg6[%c336, %c0_101], %64 {strides = array<i32>} : memref<1024x768xbf16, #tpu.memory_space<vmem>>, vector<16x768xbf16>,
    %c0_102 = arith.constant 0 : index
    %c2_103 = arith.constant 2 : index
    %c0_104 = arith.constant 0 : index
    %c90_105 = arith.constant 90 : index
    %66 = vector.load %arg2[%c0_102, %c2_103, %c0_104, %c90_105] : memref<1x8x16x891xbf16, #tpu.memory_space<vmem>>, vector<1x1x16x768xbf16>
    %67 = vector.shape_cast %66 : vector<1x1x16x768xbf16> to vector<16x768xbf16>
    %c352 = arith.constant 352 : index
    %c0_106 = arith.constant 0 : index
    %68 = vector.load %arg6[%c352, %c0_106] : memref<1024x768xbf16, #tpu.memory_space<vmem>>, vector<16x768xbf16>
    tpu.vector_store %arg6[%c352, %c0_106], %67 {strides = array<i32>} : memref<1024x768xbf16, #tpu.memory_space<vmem>>, vector<16x768xbf16>,
    %c0_107 = arith.constant 0 : index
    %c2_108 = arith.constant 2 : index
    %c0_109 = arith.constant 0 : index
    %c91_110 = arith.constant 91 : index
    %69 = vector.load %arg2[%c0_107, %c2_108, %c0_109, %c91_110] : memref<1x8x16x891xbf16, #tpu.memory_space<vmem>>, vector<1x1x16x768xbf16>
    %70 = vector.shape_cast %69 : vector<1x1x16x768xbf16> to vector<16x768xbf16>
    %c368 = arith.constant 368 : index
    %c0_111 = arith.constant 0 : index
    %71 = vector.load %arg6[%c368, %c0_111] : memref<1024x768xbf16, #tpu.memory_space<vmem>>, vector<16x768xbf16>
    tpu.vector_store %arg6[%c368, %c0_111], %70 {strides = array<i32>} : memref<1024x768xbf16, #tpu.memory_space<vmem>>, vector<16x768xbf16>,
    %c0_112 = arith.constant 0 : index
    %c3 = arith.constant 3 : index
    %c0_113 = arith.constant 0 : index
    %c0_114 = arith.constant 0 : index
    %72 = vector.load %arg2[%c0_112, %c3, %c0_113, %c0_114] : memref<1x8x16x891xbf16, #tpu.memory_space<vmem>>, vector<1x1x16x768xbf16>
    %73 = vector.shape_cast %72 : vector<1x1x16x768xbf16> to vector<16x768xbf16>
    %c384 = arith.constant 384 : index
    %c0_115 = arith.constant 0 : index
    %74 = vector.load %arg6[%c384, %c0_115] : memref<1024x768xbf16, #tpu.memory_space<vmem>>, vector<16x768xbf16>
    tpu.vector_store %arg6[%c384, %c0_115], %73 {strides = array<i32>} : memref<1024x768xbf16, #tpu.memory_space<vmem>>, vector<16x768xbf16>,
    %c0_116 = arith.constant 0 : index
    %c3_117 = arith.constant 3 : index
    %c0_118 = arith.constant 0 : index
    %c1_119 = arith.constant 1 : index
    %75 = vector.load %arg2[%c0_116, %c3_117, %c0_118, %c1_119] : memref<1x8x16x891xbf16, #tpu.memory_space<vmem>>, vector<1x1x16x768xbf16>
    %76 = vector.shape_cast %75 : vector<1x1x16x768xbf16> to vector<16x768xbf16>
    %c400 = arith.constant 400 : index
    %c0_120 = arith.constant 0 : index
    %77 = vector.load %arg6[%c400, %c0_120] : memref<1024x768xbf16, #tpu.memory_space<vmem>>, vector<16x768xbf16>
    tpu.vector_store %arg6[%c400, %c0_120], %76 {strides = array<i32>} : memref<1024x768xbf16, #tpu.memory_space<vmem>>, vector<16x768xbf16>,
    %c0_121 = arith.constant 0 : index
    %c3_122 = arith.constant 3 : index
    %c0_123 = arith.constant 0 : index
    %c9_124 = arith.constant 9 : index
    %78 = vector.load %arg2[%c0_121, %c3_122, %c0_123, %c9_124] : memref<1x8x16x891xbf16, #tpu.memory_space<vmem>>, vector<1x1x16x768xbf16>
    %79 = vector.shape_cast %78 : vector<1x1x16x768xbf16> to vector<16x768xbf16>
    %c416 = arith.constant 416 : index
    %c0_125 = arith.constant 0 : index
    %80 = vector.load %arg6[%c416, %c0_125] : memref<1024x768xbf16, #tpu.memory_space<vmem>>, vector<16x768xbf16>
    tpu.vector_store %arg6[%c416, %c0_125], %79 {strides = array<i32>} : memref<1024x768xbf16, #tpu.memory_space<vmem>>, vector<16x768xbf16>,
    %c0_126 = arith.constant 0 : index
    %c3_127 = arith.constant 3 : index
    %c0_128 = arith.constant 0 : index
    %c10_129 = arith.constant 10 : index
    %81 = vector.load %arg2[%c0_126, %c3_127, %c0_128, %c10_129] : memref<1x8x16x891xbf16, #tpu.memory_space<vmem>>, vector<1x1x16x768xbf16>
    %82 = vector.shape_cast %81 : vector<1x1x16x768xbf16> to vector<16x768xbf16>
    %c432 = arith.constant 432 : index
    %c0_130 = arith.constant 0 : index
    %83 = vector.load %arg6[%c432, %c0_130] : memref<1024x768xbf16, #tpu.memory_space<vmem>>, vector<16x768xbf16>
    tpu.vector_store %arg6[%c432, %c0_130], %82 {strides = array<i32>} : memref<1024x768xbf16, #tpu.memory_space<vmem>>, vector<16x768xbf16>,
    %c0_131 = arith.constant 0 : index
    %c3_132 = arith.constant 3 : index
    %c0_133 = arith.constant 0 : index
    %c81_134 = arith.constant 81 : index
    %84 = vector.load %arg2[%c0_131, %c3_132, %c0_133, %c81_134] : memref<1x8x16x891xbf16, #tpu.memory_space<vmem>>, vector<1x1x16x768xbf16>
    %85 = vector.shape_cast %84 : vector<1x1x16x768xbf16> to vector<16x768xbf16>
    %c448 = arith.constant 448 : index
    %c0_135 = arith.constant 0 : index
    %86 = vector.load %arg6[%c448, %c0_135] : memref<1024x768xbf16, #tpu.memory_space<vmem>>, vector<16x768xbf16>
    tpu.vector_store %arg6[%c448, %c0_135], %85 {strides = array<i32>} : memref<1024x768xbf16, #tpu.memory_space<vmem>>, vector<16x768xbf16>,
    %c0_136 = arith.constant 0 : index
    %c3_137 = arith.constant 3 : index
    %c0_138 = arith.constant 0 : index
    %c82_139 = arith.constant 82 : index
    %87 = vector.load %arg2[%c0_136, %c3_137, %c0_138, %c82_139] : memref<1x8x16x891xbf16, #tpu.memory_space<vmem>>, vector<1x1x16x768xbf16>
    %88 = vector.shape_cast %87 : vector<1x1x16x768xbf16> to vector<16x768xbf16>
    %c464 = arith.constant 464 : index
    %c0_140 = arith.constant 0 : index
    %89 = vector.load %arg6[%c464, %c0_140] : memref<1024x768xbf16, #tpu.memory_space<vmem>>, vector<16x768xbf16>
    tpu.vector_store %arg6[%c464, %c0_140], %88 {strides = array<i32>} : memref<1024x768xbf16, #tpu.memory_space<vmem>>, vector<16x768xbf16>,
    %c0_141 = arith.constant 0 : index
    %c3_142 = arith.constant 3 : index
    %c0_143 = arith.constant 0 : index
    %c90_144 = arith.constant 90 : index
    %90 = vector.load %arg2[%c0_141, %c3_142, %c0_143, %c90_144] : memref<1x8x16x891xbf16, #tpu.memory_space<vmem>>, vector<1x1x16x768xbf16>
    %91 = vector.shape_cast %90 : vector<1x1x16x768xbf16> to vector<16x768xbf16>
    %c480 = arith.constant 480 : index
    %c0_145 = arith.constant 0 : index
    %92 = vector.load %arg6[%c480, %c0_145] : memref<1024x768xbf16, #tpu.memory_space<vmem>>, vector<16x768xbf16>
    tpu.vector_store %arg6[%c480, %c0_145], %91 {strides = array<i32>} : memref<1024x768xbf16, #tpu.memory_space<vmem>>, vector<16x768xbf16>,
    %c0_146 = arith.constant 0 : index
    %c3_147 = arith.constant 3 : index
    %c0_148 = arith.constant 0 : index
    %c91_149 = arith.constant 91 : index
    %93 = vector.load %arg2[%c0_146, %c3_147, %c0_148, %c91_149] : memref<1x8x16x891xbf16, #tpu.memory_space<vmem>>, vector<1x1x16x768xbf16>
    %94 = vector.shape_cast %93 : vector<1x1x16x768xbf16> to vector<16x768xbf16>
    %c496 = arith.constant 496 : index
    %c0_150 = arith.constant 0 : index
    %95 = vector.load %arg6[%c496, %c0_150] : memref<1024x768xbf16, #tpu.memory_space<vmem>>, vector<16x768xbf16>
    tpu.vector_store %arg6[%c496, %c0_150], %94 {strides = array<i32>} : memref<1024x768xbf16, #tpu.memory_space<vmem>>, vector<16x768xbf16>,
    %c0_151 = arith.constant 0 : index
    %c4 = arith.constant 4 : index
    %c0_152 = arith.constant 0 : index
    %c0_153 = arith.constant 0 : index
    %96 = vector.load %arg2[%c0_151, %c4, %c0_152, %c0_153] : memref<1x8x16x891xbf16, #tpu.memory_space<vmem>>, vector<1x1x16x768xbf16>
    %97 = vector.shape_cast %96 : vector<1x1x16x768xbf16> to vector<16x768xbf16>
    %c512 = arith.constant 512 : index
    %c0_154 = arith.constant 0 : index
    %98 = vector.load %arg6[%c512, %c0_154] : memref<1024x768xbf16, #tpu.memory_space<vmem>>, vector<16x768xbf16>
    tpu.vector_store %arg6[%c512, %c0_154], %97 {strides = array<i32>} : memref<1024x768xbf16, #tpu.memory_space<vmem>>, vector<16x768xbf16>,
    %c0_155 = arith.constant 0 : index
    %c4_156 = arith.constant 4 : index
    %c0_157 = arith.constant 0 : index
    %c1_158 = arith.constant 1 : index
    %99 = vector.load %arg2[%c0_155, %c4_156, %c0_157, %c1_158] : memref<1x8x16x891xbf16, #tpu.memory_space<vmem>>, vector<1x1x16x768xbf16>
    %100 = vector.shape_cast %99 : vector<1x1x16x768xbf16> to vector<16x768xbf16>
    %c528 = arith.constant 528 : index
    %c0_159 = arith.constant 0 : index
    %101 = vector.load %arg6[%c528, %c0_159] : memref<1024x768xbf16, #tpu.memory_space<vmem>>, vector<16x768xbf16>
    tpu.vector_store %arg6[%c528, %c0_159], %100 {strides = array<i32>} : memref<1024x768xbf16, #tpu.memory_space<vmem>>, vector<16x768xbf16>,
    %c0_160 = arith.constant 0 : index
    %c4_161 = arith.constant 4 : index
    %c0_162 = arith.constant 0 : index
    %c9_163 = arith.constant 9 : index
    %102 = vector.load %arg2[%c0_160, %c4_161, %c0_162, %c9_163] : memref<1x8x16x891xbf16, #tpu.memory_space<vmem>>, vector<1x1x16x768xbf16>
    %103 = vector.shape_cast %102 : vector<1x1x16x768xbf16> to vector<16x768xbf16>
    %c544 = arith.constant 544 : index
    %c0_164 = arith.constant 0 : index
    %104 = vector.load %arg6[%c544, %c0_164] : memref<1024x768xbf16, #tpu.memory_space<vmem>>, vector<16x768xbf16>
    tpu.vector_store %arg6[%c544, %c0_164], %103 {strides = array<i32>} : memref<1024x768xbf16, #tpu.memory_space<vmem>>, vector<16x768xbf16>,
    %c0_165 = arith.constant 0 : index
    %c4_166 = arith.constant 4 : index
    %c0_167 = arith.constant 0 : index
    %c10_168 = arith.constant 10 : index
    %105 = vector.load %arg2[%c0_165, %c4_166, %c0_167, %c10_168] : memref<1x8x16x891xbf16, #tpu.memory_space<vmem>>, vector<1x1x16x768xbf16>
    %106 = vector.shape_cast %105 : vector<1x1x16x768xbf16> to vector<16x768xbf16>
    %c560 = arith.constant 560 : index
    %c0_169 = arith.constant 0 : index
    %107 = vector.load %arg6[%c560, %c0_169] : memref<1024x768xbf16, #tpu.memory_space<vmem>>, vector<16x768xbf16>
    tpu.vector_store %arg6[%c560, %c0_169], %106 {strides = array<i32>} : memref<1024x768xbf16, #tpu.memory_space<vmem>>, vector<16x768xbf16>,
    %c0_170 = arith.constant 0 : index
    %c4_171 = arith.constant 4 : index
    %c0_172 = arith.constant 0 : index
    %c81_173 = arith.constant 81 : index
    %108 = vector.load %arg2[%c0_170, %c4_171, %c0_172, %c81_173] : memref<1x8x16x891xbf16, #tpu.memory_space<vmem>>, vector<1x1x16x768xbf16>
    %109 = vector.shape_cast %108 : vector<1x1x16x768xbf16> to vector<16x768xbf16>
    %c576 = arith.constant 576 : index
    %c0_174 = arith.constant 0 : index
    %110 = vector.load %arg6[%c576, %c0_174] : memref<1024x768xbf16, #tpu.memory_space<vmem>>, vector<16x768xbf16>
    tpu.vector_store %arg6[%c576, %c0_174], %109 {strides = array<i32>} : memref<1024x768xbf16, #tpu.memory_space<vmem>>, vector<16x768xbf16>,
    %c0_175 = arith.constant 0 : index
    %c4_176 = arith.constant 4 : index
    %c0_177 = arith.constant 0 : index
    %c82_178 = arith.constant 82 : index
    %111 = vector.load %arg2[%c0_175, %c4_176, %c0_177, %c82_178] : memref<1x8x16x891xbf16, #tpu.memory_space<vmem>>, vector<1x1x16x768xbf16>
    %112 = vector.shape_cast %111 : vector<1x1x16x768xbf16> to vector<16x768xbf16>
    %c592 = arith.constant 592 : index
    %c0_179 = arith.constant 0 : index
    %113 = vector.load %arg6[%c592, %c0_179] : memref<1024x768xbf16, #tpu.memory_space<vmem>>, vector<16x768xbf16>
    tpu.vector_store %arg6[%c592, %c0_179], %112 {strides = array<i32>} : memref<1024x768xbf16, #tpu.memory_space<vmem>>, vector<16x768xbf16>,
    %c0_180 = arith.constant 0 : index
    %c4_181 = arith.constant 4 : index
    %c0_182 = arith.constant 0 : index
    %c90_183 = arith.constant 90 : index
    %114 = vector.load %arg2[%c0_180, %c4_181, %c0_182, %c90_183] : memref<1x8x16x891xbf16, #tpu.memory_space<vmem>>, vector<1x1x16x768xbf16>
    %115 = vector.shape_cast %114 : vector<1x1x16x768xbf16> to vector<16x768xbf16>
    %c608 = arith.constant 608 : index
    %c0_184 = arith.constant 0 : index
    %116 = vector.load %arg6[%c608, %c0_184] : memref<1024x768xbf16, #tpu.memory_space<vmem>>, vector<16x768xbf16>
    tpu.vector_store %arg6[%c608, %c0_184], %115 {strides = array<i32>} : memref<1024x768xbf16, #tpu.memory_space<vmem>>, vector<16x768xbf16>,
    %c0_185 = arith.constant 0 : index
    %c4_186 = arith.constant 4 : index
    %c0_187 = arith.constant 0 : index
    %c91_188 = arith.constant 91 : index
    %117 = vector.load %arg2[%c0_185, %c4_186, %c0_187, %c91_188] : memref<1x8x16x891xbf16, #tpu.memory_space<vmem>>, vector<1x1x16x768xbf16>
    %118 = vector.shape_cast %117 : vector<1x1x16x768xbf16> to vector<16x768xbf16>
    %c624 = arith.constant 624 : index
    %c0_189 = arith.constant 0 : index
    %119 = vector.load %arg6[%c624, %c0_189] : memref<1024x768xbf16, #tpu.memory_space<vmem>>, vector<16x768xbf16>
    tpu.vector_store %arg6[%c624, %c0_189], %118 {strides = array<i32>} : memref<1024x768xbf16, #tpu.memory_space<vmem>>, vector<16x768xbf16>,
    %c0_190 = arith.constant 0 : index
    %c5 = arith.constant 5 : index
    %c0_191 = arith.constant 0 : index
    %c0_192 = arith.constant 0 : index
    %120 = vector.load %arg2[%c0_190, %c5, %c0_191, %c0_192] : memref<1x8x16x891xbf16, #tpu.memory_space<vmem>>, vector<1x1x16x768xbf16>
    %121 = vector.shape_cast %120 : vector<1x1x16x768xbf16> to vector<16x768xbf16>
    %c640 = arith.constant 640 : index
    %c0_193 = arith.constant 0 : index
    %122 = vector.load %arg6[%c640, %c0_193] : memref<1024x768xbf16, #tpu.memory_space<vmem>>, vector<16x768xbf16>
    tpu.vector_store %arg6[%c640, %c0_193], %121 {strides = array<i32>} : memref<1024x768xbf16, #tpu.memory_space<vmem>>, vector<16x768xbf16>,
    %c0_194 = arith.constant 0 : index
    %c5_195 = arith.constant 5 : index
    %c0_196 = arith.constant 0 : index
    %c1_197 = arith.constant 1 : index
    %123 = vector.load %arg2[%c0_194, %c5_195, %c0_196, %c1_197] : memref<1x8x16x891xbf16, #tpu.memory_space<vmem>>, vector<1x1x16x768xbf16>
    %124 = vector.shape_cast %123 : vector<1x1x16x768xbf16> to vector<16x768xbf16>
    %c656 = arith.constant 656 : index
    %c0_198 = arith.constant 0 : index
    %125 = vector.load %arg6[%c656, %c0_198] : memref<1024x768xbf16, #tpu.memory_space<vmem>>, vector<16x768xbf16>
    tpu.vector_store %arg6[%c656, %c0_198], %124 {strides = array<i32>} : memref<1024x768xbf16, #tpu.memory_space<vmem>>, vector<16x768xbf16>,
    %c0_199 = arith.constant 0 : index
    %c5_200 = arith.constant 5 : index
    %c0_201 = arith.constant 0 : index
    %c9_202 = arith.constant 9 : index
    %126 = vector.load %arg2[%c0_199, %c5_200, %c0_201, %c9_202] : memref<1x8x16x891xbf16, #tpu.memory_space<vmem>>, vector<1x1x16x768xbf16>
    %127 = vector.shape_cast %126 : vector<1x1x16x768xbf16> to vector<16x768xbf16>
    %c672 = arith.constant 672 : index
    %c0_203 = arith.constant 0 : index
    %128 = vector.load %arg6[%c672, %c0_203] : memref<1024x768xbf16, #tpu.memory_space<vmem>>, vector<16x768xbf16>
    tpu.vector_store %arg6[%c672, %c0_203], %127 {strides = array<i32>} : memref<1024x768xbf16, #tpu.memory_space<vmem>>, vector<16x768xbf16>,
    %c0_204 = arith.constant 0 : index
    %c5_205 = arith.constant 5 : index
    %c0_206 = arith.constant 0 : index
    %c10_207 = arith.constant 10 : index
    %129 = vector.load %arg2[%c0_204, %c5_205, %c0_206, %c10_207] : memref<1x8x16x891xbf16, #tpu.memory_space<vmem>>, vector<1x1x16x768xbf16>
    %130 = vector.shape_cast %129 : vector<1x1x16x768xbf16> to vector<16x768xbf16>
    %c688 = arith.constant 688 : index
    %c0_208 = arith.constant 0 : index
    %131 = vector.load %arg6[%c688, %c0_208] : memref<1024x768xbf16, #tpu.memory_space<vmem>>, vector<16x768xbf16>
    tpu.vector_store %arg6[%c688, %c0_208], %130 {strides = array<i32>} : memref<1024x768xbf16, #tpu.memory_space<vmem>>, vector<16x768xbf16>,
    %c0_209 = arith.constant 0 : index
    %c5_210 = arith.constant 5 : index
    %c0_211 = arith.constant 0 : index
    %c81_212 = arith.constant 81 : index
    %132 = vector.load %arg2[%c0_209, %c5_210, %c0_211, %c81_212] : memref<1x8x16x891xbf16, #tpu.memory_space<vmem>>, vector<1x1x16x768xbf16>
    %133 = vector.shape_cast %132 : vector<1x1x16x768xbf16> to vector<16x768xbf16>
    %c704 = arith.constant 704 : index
    %c0_213 = arith.constant 0 : index
    %134 = vector.load %arg6[%c704, %c0_213] : memref<1024x768xbf16, #tpu.memory_space<vmem>>, vector<16x768xbf16>
    tpu.vector_store %arg6[%c704, %c0_213], %133 {strides = array<i32>} : memref<1024x768xbf16, #tpu.memory_space<vmem>>, vector<16x768xbf16>,
    %c0_214 = arith.constant 0 : index
    %c5_215 = arith.constant 5 : index
    %c0_216 = arith.constant 0 : index
    %c82_217 = arith.constant 82 : index
    %135 = vector.load %arg2[%c0_214, %c5_215, %c0_216, %c82_217] : memref<1x8x16x891xbf16, #tpu.memory_space<vmem>>, vector<1x1x16x768xbf16>
    %136 = vector.shape_cast %135 : vector<1x1x16x768xbf16> to vector<16x768xbf16>
    %c720 = arith.constant 720 : index
    %c0_218 = arith.constant 0 : index
    %137 = vector.load %arg6[%c720, %c0_218] : memref<1024x768xbf16, #tpu.memory_space<vmem>>, vector<16x768xbf16>
    tpu.vector_store %arg6[%c720, %c0_218], %136 {strides = array<i32>} : memref<1024x768xbf16, #tpu.memory_space<vmem>>, vector<16x768xbf16>,
    %c0_219 = arith.constant 0 : index
    %c5_220 = arith.constant 5 : index
    %c0_221 = arith.constant 0 : index
    %c90_222 = arith.constant 90 : index
    %138 = vector.load %arg2[%c0_219, %c5_220, %c0_221, %c90_222] : memref<1x8x16x891xbf16, #tpu.memory_space<vmem>>, vector<1x1x16x768xbf16>
    %139 = vector.shape_cast %138 : vector<1x1x16x768xbf16> to vector<16x768xbf16>
    %c736 = arith.constant 736 : index
    %c0_223 = arith.constant 0 : index
    %140 = vector.load %arg6[%c736, %c0_223] : memref<1024x768xbf16, #tpu.memory_space<vmem>>, vector<16x768xbf16>
    tpu.vector_store %arg6[%c736, %c0_223], %139 {strides = array<i32>} : memref<1024x768xbf16, #tpu.memory_space<vmem>>, vector<16x768xbf16>,
    %c0_224 = arith.constant 0 : index
    %c5_225 = arith.constant 5 : index
    %c0_226 = arith.constant 0 : index
    %c91_227 = arith.constant 91 : index
    %141 = vector.load %arg2[%c0_224, %c5_225, %c0_226, %c91_227] : memref<1x8x16x891xbf16, #tpu.memory_space<vmem>>, vector<1x1x16x768xbf16>
    %142 = vector.shape_cast %141 : vector<1x1x16x768xbf16> to vector<16x768xbf16>
    %c752 = arith.constant 752 : index
    %c0_228 = arith.constant 0 : index
    %143 = vector.load %arg6[%c752, %c0_228] : memref<1024x768xbf16, #tpu.memory_space<vmem>>, vector<16x768xbf16>
    tpu.vector_store %arg6[%c752, %c0_228], %142 {strides = array<i32>} : memref<1024x768xbf16, #tpu.memory_space<vmem>>, vector<16x768xbf16>,
    %c0_229 = arith.constant 0 : index
    %c6 = arith.constant 6 : index
    %c0_230 = arith.constant 0 : index
    %c0_231 = arith.constant 0 : index
    %144 = vector.load %arg2[%c0_229, %c6, %c0_230, %c0_231] : memref<1x8x16x891xbf16, #tpu.memory_space<vmem>>, vector<1x1x16x768xbf16>
    %145 = vector.shape_cast %144 : vector<1x1x16x768xbf16> to vector<16x768xbf16>
    %c768 = arith.constant 768 : index
    %c0_232 = arith.constant 0 : index
    %146 = vector.load %arg6[%c768, %c0_232] : memref<1024x768xbf16, #tpu.memory_space<vmem>>, vector<16x768xbf16>
    tpu.vector_store %arg6[%c768, %c0_232], %145 {strides = array<i32>} : memref<1024x768xbf16, #tpu.memory_space<vmem>>, vector<16x768xbf16>,
    %c0_233 = arith.constant 0 : index
    %c6_234 = arith.constant 6 : index
    %c0_235 = arith.constant 0 : index
    %c1_236 = arith.constant 1 : index
    %147 = vector.load %arg2[%c0_233, %c6_234, %c0_235, %c1_236] : memref<1x8x16x891xbf16, #tpu.memory_space<vmem>>, vector<1x1x16x768xbf16>
    %148 = vector.shape_cast %147 : vector<1x1x16x768xbf16> to vector<16x768xbf16>
    %c784 = arith.constant 784 : index
    %c0_237 = arith.constant 0 : index
    %149 = vector.load %arg6[%c784, %c0_237] : memref<1024x768xbf16, #tpu.memory_space<vmem>>, vector<16x768xbf16>
    tpu.vector_store %arg6[%c784, %c0_237], %148 {strides = array<i32>} : memref<1024x768xbf16, #tpu.memory_space<vmem>>, vector<16x768xbf16>,
    %c0_238 = arith.constant 0 : index
    %c6_239 = arith.constant 6 : index
    %c0_240 = arith.constant 0 : index
    %c9_241 = arith.constant 9 : index
    %150 = vector.load %arg2[%c0_238, %c6_239, %c0_240, %c9_241] : memref<1x8x16x891xbf16, #tpu.memory_space<vmem>>, vector<1x1x16x768xbf16>
    %151 = vector.shape_cast %150 : vector<1x1x16x768xbf16> to vector<16x768xbf16>
    %c800 = arith.constant 800 : index
    %c0_242 = arith.constant 0 : index
    %152 = vector.load %arg6[%c800, %c0_242] : memref<1024x768xbf16, #tpu.memory_space<vmem>>, vector<16x768xbf16>
    tpu.vector_store %arg6[%c800, %c0_242], %151 {strides = array<i32>} : memref<1024x768xbf16, #tpu.memory_space<vmem>>, vector<16x768xbf16>,
    %c0_243 = arith.constant 0 : index
    %c6_244 = arith.constant 6 : index
    %c0_245 = arith.constant 0 : index
    %c10_246 = arith.constant 10 : index
    %153 = vector.load %arg2[%c0_243, %c6_244, %c0_245, %c10_246] : memref<1x8x16x891xbf16, #tpu.memory_space<vmem>>, vector<1x1x16x768xbf16>
    %154 = vector.shape_cast %153 : vector<1x1x16x768xbf16> to vector<16x768xbf16>
    %c816 = arith.constant 816 : index
    %c0_247 = arith.constant 0 : index
    %155 = vector.load %arg6[%c816, %c0_247] : memref<1024x768xbf16, #tpu.memory_space<vmem>>, vector<16x768xbf16>
    tpu.vector_store %arg6[%c816, %c0_247], %154 {strides = array<i32>} : memref<1024x768xbf16, #tpu.memory_space<vmem>>, vector<16x768xbf16>,
    %c0_248 = arith.constant 0 : index
    %c6_249 = arith.constant 6 : index
    %c0_250 = arith.constant 0 : index
    %c81_251 = arith.constant 81 : index
    %156 = vector.load %arg2[%c0_248, %c6_249, %c0_250, %c81_251] : memref<1x8x16x891xbf16, #tpu.memory_space<vmem>>, vector<1x1x16x768xbf16>
    %157 = vector.shape_cast %156 : vector<1x1x16x768xbf16> to vector<16x768xbf16>
    %c832 = arith.constant 832 : index
    %c0_252 = arith.constant 0 : index
    %158 = vector.load %arg6[%c832, %c0_252] : memref<1024x768xbf16, #tpu.memory_space<vmem>>, vector<16x768xbf16>
    tpu.vector_store %arg6[%c832, %c0_252], %157 {strides = array<i32>} : memref<1024x768xbf16, #tpu.memory_space<vmem>>, vector<16x768xbf16>,
    %c0_253 = arith.constant 0 : index
    %c6_254 = arith.constant 6 : index
    %c0_255 = arith.constant 0 : index
    %c82_256 = arith.constant 82 : index
    %159 = vector.load %arg2[%c0_253, %c6_254, %c0_255, %c82_256] : memref<1x8x16x891xbf16, #tpu.memory_space<vmem>>, vector<1x1x16x768xbf16>
    %160 = vector.shape_cast %159 : vector<1x1x16x768xbf16> to vector<16x768xbf16>
    %c848 = arith.constant 848 : index
    %c0_257 = arith.constant 0 : index
    %161 = vector.load %arg6[%c848, %c0_257] : memref<1024x768xbf16, #tpu.memory_space<vmem>>, vector<16x768xbf16>
    tpu.vector_store %arg6[%c848, %c0_257], %160 {strides = array<i32>} : memref<1024x768xbf16, #tpu.memory_space<vmem>>, vector<16x768xbf16>,
    %c0_258 = arith.constant 0 : index
    %c6_259 = arith.constant 6 : index
    %c0_260 = arith.constant 0 : index
    %c90_261 = arith.constant 90 : index
    %162 = vector.load %arg2[%c0_258, %c6_259, %c0_260, %c90_261] : memref<1x8x16x891xbf16, #tpu.memory_space<vmem>>, vector<1x1x16x768xbf16>
    %163 = vector.shape_cast %162 : vector<1x1x16x768xbf16> to vector<16x768xbf16>
    %c864 = arith.constant 864 : index
    %c0_262 = arith.constant 0 : index
    %164 = vector.load %arg6[%c864, %c0_262] : memref<1024x768xbf16, #tpu.memory_space<vmem>>, vector<16x768xbf16>
    tpu.vector_store %arg6[%c864, %c0_262], %163 {strides = array<i32>} : memref<1024x768xbf16, #tpu.memory_space<vmem>>, vector<16x768xbf16>,
    %c0_263 = arith.constant 0 : index
    %c6_264 = arith.constant 6 : index
    %c0_265 = arith.constant 0 : index
    %c91_266 = arith.constant 91 : index
    %165 = vector.load %arg2[%c0_263, %c6_264, %c0_265, %c91_266] : memref<1x8x16x891xbf16, #tpu.memory_space<vmem>>, vector<1x1x16x768xbf16>
    %166 = vector.shape_cast %165 : vector<1x1x16x768xbf16> to vector<16x768xbf16>
    %c880 = arith.constant 880 : index
    %c0_267 = arith.constant 0 : index
    %167 = vector.load %arg6[%c880, %c0_267] : memref<1024x768xbf16, #tpu.memory_space<vmem>>, vector<16x768xbf16>
    tpu.vector_store %arg6[%c880, %c0_267], %166 {strides = array<i32>} : memref<1024x768xbf16, #tpu.memory_space<vmem>>, vector<16x768xbf16>,
    %c0_268 = arith.constant 0 : index
    %c7 = arith.constant 7 : index
    %c0_269 = arith.constant 0 : index
    %c0_270 = arith.constant 0 : index
    %168 = vector.load %arg2[%c0_268, %c7, %c0_269, %c0_270] : memref<1x8x16x891xbf16, #tpu.memory_space<vmem>>, vector<1x1x16x768xbf16>
    %169 = vector.shape_cast %168 : vector<1x1x16x768xbf16> to vector<16x768xbf16>
    %c896 = arith.constant 896 : index
    %c0_271 = arith.constant 0 : index
    %170 = vector.load %arg6[%c896, %c0_271] : memref<1024x768xbf16, #tpu.memory_space<vmem>>, vector<16x768xbf16>
    tpu.vector_store %arg6[%c896, %c0_271], %169 {strides = array<i32>} : memref<1024x768xbf16, #tpu.memory_space<vmem>>, vector<16x768xbf16>,
    %c0_272 = arith.constant 0 : index
    %c7_273 = arith.constant 7 : index
    %c0_274 = arith.constant 0 : index
    %c1_275 = arith.constant 1 : index
    %171 = vector.load %arg2[%c0_272, %c7_273, %c0_274, %c1_275] : memref<1x8x16x891xbf16, #tpu.memory_space<vmem>>, vector<1x1x16x768xbf16>
    %172 = vector.shape_cast %171 : vector<1x1x16x768xbf16> to vector<16x768xbf16>
    %c912 = arith.constant 912 : index
    %c0_276 = arith.constant 0 : index
    %173 = vector.load %arg6[%c912, %c0_276] : memref<1024x768xbf16, #tpu.memory_space<vmem>>, vector<16x768xbf16>
    tpu.vector_store %arg6[%c912, %c0_276], %172 {strides = array<i32>} : memref<1024x768xbf16, #tpu.memory_space<vmem>>, vector<16x768xbf16>,
    %c0_277 = arith.constant 0 : index
    %c7_278 = arith.constant 7 : index
    %c0_279 = arith.constant 0 : index
    %c9_280 = arith.constant 9 : index
    %174 = vector.load %arg2[%c0_277, %c7_278, %c0_279, %c9_280] : memref<1x8x16x891xbf16, #tpu.memory_space<vmem>>, vector<1x1x16x768xbf16>
    %175 = vector.shape_cast %174 : vector<1x1x16x768xbf16> to vector<16x768xbf16>
    %c928 = arith.constant 928 : index
    %c0_281 = arith.constant 0 : index
    %176 = vector.load %arg6[%c928, %c0_281] : memref<1024x768xbf16, #tpu.memory_space<vmem>>, vector<16x768xbf16>
    tpu.vector_store %arg6[%c928, %c0_281], %175 {strides = array<i32>} : memref<1024x768xbf16, #tpu.memory_space<vmem>>, vector<16x768xbf16>,
    %c0_282 = arith.constant 0 : index
    %c7_283 = arith.constant 7 : index
    %c0_284 = arith.constant 0 : index
    %c10_285 = arith.constant 10 : index
    %177 = vector.load %arg2[%c0_282, %c7_283, %c0_284, %c10_285] : memref<1x8x16x891xbf16, #tpu.memory_space<vmem>>, vector<1x1x16x768xbf16>
    %178 = vector.shape_cast %177 : vector<1x1x16x768xbf16> to vector<16x768xbf16>
    %c944 = arith.constant 944 : index
    %c0_286 = arith.constant 0 : index
    %179 = vector.load %arg6[%c944, %c0_286] : memref<1024x768xbf16, #tpu.memory_space<vmem>>, vector<16x768xbf16>
    tpu.vector_store %arg6[%c944, %c0_286], %178 {strides = array<i32>} : memref<1024x768xbf16, #tpu.memory_space<vmem>>, vector<16x768xbf16>,
    %c0_287 = arith.constant 0 : index
    %c7_288 = arith.constant 7 : index
    %c0_289 = arith.constant 0 : index
    %c81_290 = arith.constant 81 : index
    %180 = vector.load %arg2[%c0_287, %c7_288, %c0_289, %c81_290] : memref<1x8x16x891xbf16, #tpu.memory_space<vmem>>, vector<1x1x16x768xbf16>
    %181 = vector.shape_cast %180 : vector<1x1x16x768xbf16> to vector<16x768xbf16>
    %c960 = arith.constant 960 : index
    %c0_291 = arith.constant 0 : index
    %182 = vector.load %arg6[%c960, %c0_291] : memref<1024x768xbf16, #tpu.memory_space<vmem>>, vector<16x768xbf16>
    tpu.vector_store %arg6[%c960, %c0_291], %181 {strides = array<i32>} : memref<1024x768xbf16, #tpu.memory_space<vmem>>, vector<16x768xbf16>,
    %c0_292 = arith.constant 0 : index
    %c7_293 = arith.constant 7 : index
    %c0_294 = arith.constant 0 : index
    %c82_295 = arith.constant 82 : index
    %183 = vector.load %arg2[%c0_292, %c7_293, %c0_294, %c82_295] : memref<1x8x16x891xbf16, #tpu.memory_space<vmem>>, vector<1x1x16x768xbf16>
    %184 = vector.shape_cast %183 : vector<1x1x16x768xbf16> to vector<16x768xbf16>
    %c976 = arith.constant 976 : index
    %c0_296 = arith.constant 0 : index
    %185 = vector.load %arg6[%c976, %c0_296] : memref<1024x768xbf16, #tpu.memory_space<vmem>>, vector<16x768xbf16>
    tpu.vector_store %arg6[%c976, %c0_296], %184 {strides = array<i32>} : memref<1024x768xbf16, #tpu.memory_space<vmem>>, vector<16x768xbf16>,
    %c0_297 = arith.constant 0 : index
    %c7_298 = arith.constant 7 : index
    %c0_299 = arith.constant 0 : index
    %c90_300 = arith.constant 90 : index
    %186 = vector.load %arg2[%c0_297, %c7_298, %c0_299, %c90_300] : memref<1x8x16x891xbf16, #tpu.memory_space<vmem>>, vector<1x1x16x768xbf16>
    %187 = vector.shape_cast %186 : vector<1x1x16x768xbf16> to vector<16x768xbf16>
    %c992 = arith.constant 992 : index
    %c0_301 = arith.constant 0 : index
    %188 = vector.load %arg6[%c992, %c0_301] : memref<1024x768xbf16, #tpu.memory_space<vmem>>, vector<16x768xbf16>
    tpu.vector_store %arg6[%c992, %c0_301], %187 {strides = array<i32>} : memref<1024x768xbf16, #tpu.memory_space<vmem>>, vector<16x768xbf16>,
    %c0_302 = arith.constant 0 : index
    %c7_303 = arith.constant 7 : index
    %c0_304 = arith.constant 0 : index
    %c91_305 = arith.constant 91 : index
    %189 = vector.load %arg2[%c0_302, %c7_303, %c0_304, %c91_305] : memref<1x8x16x891xbf16, #tpu.memory_space<vmem>>, vector<1x1x16x768xbf16>
    %190 = vector.shape_cast %189 : vector<1x1x16x768xbf16> to vector<16x768xbf16>
    %c1008 = arith.constant 1008 : index
    %c0_306 = arith.constant 0 : index
    %191 = vector.load %arg6[%c1008, %c0_306] : memref<1024x768xbf16, #tpu.memory_space<vmem>>, vector<16x768xbf16>
    tpu.vector_store %arg6[%c1008, %c0_306], %190 {strides = array<i32>} : memref<1024x768xbf16, #tpu.memory_space<vmem>>, vector<16x768xbf16>,
    %c0_307 = arith.constant 0 : index
    %c0_308 = arith.constant 0 : index
    %192 = vector.load %arg3[%c0_307, %c0_308] : memref<16x1024xbf16, #tpu.memory_space<vmem>>, vector<16x1024xbf16>
    %c0_309 = arith.constant 0 : index
    %c0_310 = arith.constant 0 : index
    %193 = vector.load %arg6[%c0_309, %c0_310] : memref<1024x768xbf16, #tpu.memory_space<vmem>>, vector<1024x768xbf16>
    %cst = arith.constant dense<0.000000e+00> : vector<16x768xf32>
    %194 = tpu.matmul %192, %193, %cst {dimension_numbers = #tpu.dot_dimension_numbers<[1], [0], [0], [1], [0, 0, 1, 1], [], []>} : vector<16x1024xbf16>, vector<1024x768xbf16>, vector<16x768xf32> -> vector<16x768xf32>
    %c0_311 = arith.constant 0 : index
    %c0_312 = arith.constant 0 : index
    %c0_313 = arith.constant 0 : index
    %195 = vector.load %arg5[%c0_311, %c0_312, %c0_313] : memref<1x16x768xf32, #tpu.memory_space<vmem>>, vector<1x16x768xf32>
    %196 = vector.shape_cast %195 : vector<1x16x768xf32> to vector<16x768xf32>
    %197 = vector.shape_cast %194 : vector<16x768xf32> to vector<1x16x768xf32>
    tpu.vector_store %arg5[%c0_311, %c0_312, %c0_313], %197 {strides = array<i32>} : memref<1x16x768xf32, #tpu.memory_space<vmem>>, vector<1x16x768xf32>,
    %c0_314 = arith.constant 0 : index
    %c0_315 = arith.constant 0 : index
    %c0_316 = arith.constant 0 : index
    %198 = vector.load %arg5[%c0_314, %c0_315, %c0_316] : memref<1x16x768xf32, #tpu.memory_space<vmem>>, vector<1x16x768xf32>
    %199 = vector.shape_cast %198 : vector<1x16x768xf32> to vector<16x768xf32>
    %c0_317 = arith.constant 0 : index
    %c0_318 = arith.constant 0 : index
    %200 = vector.load %arg4[%c0_317, %c0_318] : memref<1x768xf32, #tpu.memory_space<vmem>>, vector<1x768xf32>
    %201 = vector.broadcast %200 : vector<1x768xf32> to vector<16x768xf32>
    %202 = arith.mulf %199, %201 : vector<16x768xf32>
    %cst_319 = arith.constant dense<0.000000e+00> : vector<16xf32>
    %203 = vector.multi_reduction <add>, %202, %cst_319 [1] : vector<16x768xf32> to vector<16xf32>
    %204 = vector.shape_cast %203 : vector<16xf32> to vector<16x1xf32>
    %cst_320 = arith.constant 0.001953125 : f32
    %205 = vector.broadcast %cst_320 : f32 to vector<16x1xf32>
    %206 = arith.mulf %204, %205 : vector<16x1xf32>
    %207 = arith.mulf %202, %199 : vector<16x768xf32>
    %cst_321 = arith.constant dense<0.000000e+00> : vector<16xf32>
    %208 = vector.multi_reduction <add>, %207, %cst_321 [1] : vector<16x768xf32> to vector<16xf32>
    %209 = vector.shape_cast %208 : vector<16xf32> to vector<16x1xf32>
    %cst_322 = arith.constant 0.001953125 : f32
    %210 = vector.broadcast %cst_322 : f32 to vector<16x1xf32>
    %211 = arith.mulf %209, %210 : vector<16x1xf32>
    %212 = arith.mulf %206, %206 : vector<16x1xf32>
    %213 = arith.subf %211, %212 : vector<16x1xf32>
    %214 = vector.broadcast %206 : vector<16x1xf32> to vector<16x768xf32>
    %215 = arith.subf %199, %214 : vector<16x768xf32>
    %cst_323 = arith.constant 9.99999974E-6 : f32
    %216 = vector.broadcast %cst_323 : f32 to vector<16x1xf32>
    %217 = arith.addf %213, %216 : vector<16x1xf32>
    %218 = math.rsqrt %217 : vector<16x1xf32>
    %219 = vector.broadcast %218 : vector<16x1xf32> to vector<16x768xf32>
    %220 = arith.mulf %215, %219 : vector<16x768xf32>
    %cst_324 = arith.constant 0.000000e+00 : f32
    %221 = vector.broadcast %cst_324 : f32 to vector<16x768xf32>
    %222 = arith.cmpf oge, %220, %221 : vector<16x768xf32>
    %cst_325 = arith.constant 2.000000e-01 : f32
    %223 = vector.broadcast %cst_325 : f32 to vector<16x768xf32>
    %224 = arith.mulf %223, %220 : vector<16x768xf32>
    %225 = arith.select %222, %220, %224 : vector<16x768xi1>, vector<16x768xf32>
    %c0_326 = arith.constant 0 : index
    %c0_327 = arith.constant 0 : index
    %c0_328 = arith.constant 0 : index
    %226 = vector.load %arg5[%c0_326, %c0_327, %c0_328] : memref<1x16x768xf32, #tpu.memory_space<vmem>>, vector<1x16x768xf32>
    %227 = vector.shape_cast %226 : vector<1x16x768xf32> to vector<16x768xf32>
    %228 = vector.shape_cast %225 : vector<16x768xf32> to vector<1x16x768xf32>
    tpu.vector_store %arg5[%c0_326, %c0_327, %c0_328], %228 {strides = array<i32>} : memref<1x16x768xf32, #tpu.memory_space<vmem>>, vector<1x16x768xf32>,
    return
  }
  func.func @transform_0(%arg0: i32, %arg1: i32) -> (i32, i32, i32, i32) {
    %c0_i32 = arith.constant 0 : i32
    %c0_i32_0 = arith.constant 0 : i32
    %c0_i32_1 = arith.constant 0 : i32
    %c0_i32_2 = arith.constant 0 : i32
    return %arg0, %c0_i32, %c0_i32_0, %c0_i32_1 : i32, i32, i32, i32
  }
  func.func @transform_1(%arg0: i32, %arg1: i32) -> (i32, i32) {
    %c0_i32 = arith.constant 0 : i32
    %c0_i32_0 = arith.constant 0 : i32
    return %arg1, %c0_i32 : i32, i32
  }
  func.func @transform_2(%arg0: i32, %arg1: i32) -> (i32, i32) {
    %c0_i32 = arith.constant 0 : i32
    %c0_i32_0 = arith.constant 0 : i32
    %c0_i32_1 = arith.constant 0 : i32
    return %c0_i32, %c0_i32_0 : i32, i32
  }
  func.func @transform_3(%arg0: i32, %arg1: i32) -> (i32, i32, i32) {
    %c0_i32 = arith.constant 0 : i32
    %c0_i32_0 = arith.constant 0 : i32
    return %arg0, %arg1, %c0_i32 : i32, i32, i32
  }
}

</mosaic_0001>

<llo_original>
// kernel: tpu_custom_call.1
$region0: #{tpu_custom_call.1}
  #allocation0 [shape = 'u32[]', space=smem, size = 0x4, offset = 0x4, fixed_abs, tag = 'smem constant byte address 0x4 - core index']
  #allocation1 [shape = 'u32[144,128]{1,0:T(1,128)}', space=vmem, size = 0x12000, scoped, tag = 'internal scratch']
  #allocation2 [shape = 'bf16[1024,768]{1,0:T(8,128)(2,1)}', space=vmem, size = 0x180000, scoped, tag = 'scratch operand']
  %s0 = inlined_call_operand.hbm [shape: bf16[2,8,16,891], index: 0, kind: input, shape index: {}]
  %s1 = inlined_call_operand.hbm [shape: bf16[16,1024], index: 1, kind: input, shape index: {}]
  %s2 = inlined_call_operand.hbm [shape: f32[1,768], index: 2, kind: input, shape index: {}]
  %s3 = inlined_call_operand.hbm [shape: f32[2,16,768], index: 3, kind: output, shape index: {}]
  %s4 = sld [smem:[#allocation0]]
  $region57: #{tpu_custom_call.1} parent=0
    _
  %s6 = ssub.s32 1, %s4
  %s7 = scalar_select 0, %s6, %s4
  $region1: #{tpu_custom_call.1} parent=0
    #allocation3 [shape = 'u8[458752]{0}', space=vmem, size = 0x70000, scoped, tag = 'input window, operand 0']
    #allocation4 [shape = 's32[2]{0}', space=sflag, size = 0x8, scoped, tag = 'scoped memory for tpu_custom_call.1']
    #allocation5 [shape = 's32[2]{0}', space=sflag, size = 0x8, scoped, tag = 'scoped memory for tpu_custom_call.1']
    #allocation6 [shape = 'u8[32768]{0}', space=vmem, size = 0x8000, scoped, tag = 'input window, operand 1, single buffered']
    #allocation7 [shape = 's32[1]{0}', space=sflag, size = 0x4, scoped, tag = 'scoped memory for tpu_custom_call.1']
    #allocation8 [shape = 'u8[3072]{0}', space=vmem, size = 0xc00, scoped, tag = 'input window, operand 2, single buffered']
    #allocation9 [shape = 'u8[98304]{0}', space=vmem, size = 0x18000, scoped, tag = 'output window, operand 0']
    %8 = vsyncpa [#allocation4], 0
    %s9 = scalar_lea.sflag [#allocation4], 1
    %10 = vsyncpa %s9, 0
    %11 = vsyncpa [#allocation7], 0
    %12 = vsyncpa [#allocation5], 0
    %s13 = scalar_lea.sflag [#allocation5], 1
    %14 = vsyncpa %s13, 0
    loop: start=0, step=1, limit=4
    $region2: #{tpu_custom_call.1} parent=1 // loop_pre_header
      _
    $region3: #{tpu_custom_call.1} parent=1 // loop_header
      %s16 = sphi 0, %s20
      %p17 = scmp.ge.s32.totalorder %s16, 4
      %s23 = sphi 0, %s35
      %s24 = sphi 0, %s31
      %s25 = sphi 0, %s23
      %s26 = sphi 0, %s24
      %s27 = sphi 0, %s25
      %s28 = sphi 0, %s26
      %s38 = sphi 0, %s40
      %s41 = sphi 0, %s38
      %s42 = sphi 0, %s41
      %s58 = sphi 0, %s42
      %s64 = sphi 0, %s66
      %s67 = sphi 0, %s64
      %s68 = sphi 0, %s67
      %s84 = sphi 0, %s68
      %s88 = sphi 0, %s88
      %s90 = sphi 0, %s88
      %s91 = sphi 0, %s90
      %s105 = sphi 0, %s91
      %s113 = sphi 0, %s115
      %s116 = sphi 0, %s113
      %s117 = sphi 0, %s116
      %s133 = sphi 0, %s117
    $region4: #{tpu_custom_call.1} parent=1 // loop_header_branch
      %19 = sbr.rel (%p17) target = $region8
    $region5: #{tpu_custom_call.1} parent=1 // loop_body
      %s21 = ssub.s32 %s16, 1
      %s22 = ssub.s32 %s16, 2
      %s29 = sadd.s32 1, %s24
      %p30 = scmp.ge.s32.totalorder %s29, 1
      %s31 = scalar_select %p30, 0, %s29
      %s32 = sadd.s32 1, %s23
      %s33 = scalar_select %p30, %s32, %s23
      %p34 = scmp.ge.s32.totalorder %s33, 2
      %s35 = scalar_select %p34, 0, %s33
      %s36 = ssub.s32 %s23, %s35
      %p37 = scmp.eq.s32.totalorder %s36, 0
      %s39 = sadd.s32 %s38, 1
      %s40 = scalar_select %p37, %s38, %s39
      %p43 = pneg %p37
      %p44 = scmp.eq.s32.totalorder %s16, 1
      %p45 = por %p43, %p44
      %p46 = scmp.ne.s32.totalorder %s38, %s41
      %p47 = scmp.eq.s32.totalorder %s16, 0
      %p48 = por %p46, %p47
      %p49 = scmp.ne.s32.totalorder %s38, %s41
      %p50 = scmp.eq.s32.totalorder %s21, 1
      %p51 = por %p49, %p50
      %p52 = scmp.ne.s32.totalorder %s41, %s42
      %p53 = scmp.eq.s32.totalorder %s21, 0
      %p54 = por %p52, %p53
      %p55 = scmp.ne.s32.totalorder %s41, %s42
      %p56 = scmp.eq.s32.totalorder %s22, 1
      %p57 = por %p55, %p56
      %p59 = scmp.ne.s32.totalorder %s42, %s58
      %p60 = scmp.eq.s32.totalorder %s22, 0
      %p61 = por %p59, %p60
      %s62 = ssub.s32 %s24, %s31
      %p63 = scmp.eq.s32.totalorder %s62, 0
      %s65 = sadd.s32 %s64, 1
      %s66 = scalar_select %p63, %s64, %s65
      %p69 = pneg %p63
      %p70 = scmp.eq.s32.totalorder %s16, 1
      %p71 = por %p69, %p70
      %p72 = scmp.ne.s32.totalorder %s64, %s67
      %p73 = scmp.eq.s32.totalorder %s16, 0
      %p74 = por %p72, %p73
      %p75 = scmp.ne.s32.totalorder %s64, %s67
      %p76 = scmp.eq.s32.totalorder %s21, 1
      %p77 = por %p75, %p76
      %p78 = scmp.ne.s32.totalorder %s67, %s68
      %p79 = scmp.eq.s32.totalorder %s21, 0
      %p80 = por %p78, %p79
      %p81 = scmp.ne.s32.totalorder %s67, %s68
      %p82 = scmp.eq.s32.totalorder %s22, 1
      %p83 = por %p81, %p82
      %p85 = scmp.ne.s32.totalorder %s68, %s84
      %p86 = scmp.eq.s32.totalorder %s22, 0
      %p87 = por %p85, %p86
      %s89 = sadd.s32 %s88, 1
      %p92 = scmp.eq.s32.totalorder %s16, 1
      %p93 = scmp.ne.s32.totalorder %s88, %s90
      %p94 = scmp.eq.s32.totalorder %s16, 0
      %p95 = por %p93, %p94
      %p96 = scmp.ne.s32.totalorder %s88, %s90
      %p97 = scmp.eq.s32.totalorder %s21, 1
      %p98 = por %p96, %p97
      %p99 = scmp.ne.s32.totalorder %s90, %s91
      %p100 = scmp.eq.s32.totalorder %s21, 0
      %p101 = por %p99, %p100
      %p102 = scmp.ne.s32.totalorder %s90, %s91
      %p103 = scmp.eq.s32.totalorder %s22, 1
      %p104 = por %p102, %p103
      %p106 = scmp.ne.s32.totalorder %s91, %s105
      %p107 = scmp.eq.s32.totalorder %s22, 0
      %p108 = por %p106, %p107
      %s109 = ssub.s32 %s23, %s35
      %s110 = ssub.s32 %s24, %s31
      %s111 = sor.u32 %s109, %s110
      %p112 = scmp.eq.s32.totalorder %s111, 0
      %s114 = sadd.s32 %s113, 1
      %s115 = scalar_select %p112, %s113, %s114
      %p118 = pneg %p112
      %p119 = scmp.eq.s32.totalorder %s16, 1
      %p120 = por %p118, %p119
      %p121 = scmp.ne.s32.totalorder %s113, %s116
      %p122 = scmp.eq.s32.totalorder %s16, 0
      %p123 = por %p121, %p122
      %p124 = scmp.ne.s32.totalorder %s113, %s116
      %p125 = scmp.eq.s32.totalorder %s21, 1
      %p126 = por %p124, %p125
      %p127 = scmp.ne.s32.totalorder %s116, %s117
      %p128 = scmp.eq.s32.totalorder %s21, 0
      %p129 = por %p127, %p128
      %p130 = scmp.ne.s32.totalorder %s116, %s117
      %p131 = scmp.eq.s32.totalorder %s22, 1
      %p132 = por %p130, %p131
      %p134 = scmp.ne.s32.totalorder %s117, %s133
      %p135 = scmp.eq.s32.totalorder %s22, 0
      %p136 = por %p134, %p135
      %p137 = scmp.le.s32.totalorder 1, %s16
      %p138 = scmp.lt.s32.totalorder %s16, 3
      %p139 = pnand %p137, %p138
      %p140 = pneg %p139
      // Predicated region
      $region9: #{tpu_custom_call.1} parent=5 // pred_check
        _
      $region10: #{tpu_custom_call.1} parent=5 // pred_check_branch
        %142 = sbr.rel (%p139) target = $region12
      $region11: #{tpu_custom_call.1} parent=5 // pred_region
        %s143 = ssub.s32 %s16, 1
        // Predicated region
        $region13: #{tpu_custom_call.1} parent=11 // pred_check
          %p144 = pneg %p80
        $region14: #{tpu_custom_call.1} parent=11 // pred_check_branch
          %146 = sbr.rel (%p144) target = $region16
        $region15: #{tpu_custom_call.1} parent=11 // pred_region
          %s147 = smul.u32 2, %s26
          %s149 = ssub.s32 1024, 1024
          %150 = vsyncadd [#allocation7], %s149
          %s151 = smul.addr %s147, 8
          %s152 = smul.addr %s151, 64
          %s153 = scalar_lea.hbm %s1, %s152
          %s154 = sshll.u32 [#allocation6], 4
          %s155 = int_to_ptr.vmem [resolvable:$true] %s154
          %160 = dma.hbm_to_vmem [thread:$0]  %s153, 1024, %s155, [#allocation7], 512, 512, 32
        $region16: #{tpu_custom_call.1} parent=11 // pred_fallthru
          _
        // Predicated region
        $region17: #{tpu_custom_call.1} parent=11 // pred_check
          %p161 = pneg %p101
        $region18: #{tpu_custom_call.1} parent=11 // pred_check_branch
          %163 = sbr.rel (%p161) target = $region20
        $region19: #{tpu_custom_call.1} parent=11 // pred_region
          %s165 = ssub.s32 96, 96
          %166 = vsyncadd [#allocation7], %s165
          %s168 = sshll.u32 [#allocation8], 4
          %s169 = int_to_ptr.vmem [resolvable:$true] %s168
          %171 = dma.hbm_to_vmem [thread:$0]  %s2, 96, %s169, [#allocation7]
        $region20: #{tpu_custom_call.1} parent=11 // pred_fallthru
          _
      $region12: #{tpu_custom_call.1} parent=5 // pred_fallthru
        _
      %p172 = scmp.lt.s32.totalorder %s16, 2
      // Predicated region
      $region21: #{tpu_custom_call.1} parent=5 // pred_check
        %p173 = pneg %p172
      $region22: #{tpu_custom_call.1} parent=5 // pred_check_branch
        %175 = sbr.rel (%p173) target = $region24
      $region23: #{tpu_custom_call.1} parent=5 // pred_region
        // Predicated region
        $region25: #{tpu_custom_call.1} parent=23 // pred_check
          %p176 = pneg %p48
        $region26: #{tpu_custom_call.1} parent=23 // pred_check_branch
          %178 = sbr.rel (%p176) target = $region28
        $region27: #{tpu_custom_call.1} parent=23 // pred_region
          %s179 = sand.u32 %s38, 1
          %s180 = scalar_lea.sflag [#allocation4], %s179
          %s181 = sand.u32 %s38, 1
          %s182 = smul.addr %s181, 448
          %s183 = scalar_lea.vmem [#allocation3], %s182
          %s185 = ssub.s32 7168, 7168
          %186 = vsyncadd %s180, %s185
          %s187 = smul.addr %s23, 112
          %s188 = smul.addr %s187, 64
          %s189 = scalar_lea.hbm %s0, %s188
          %s190 = sshll.u32 %s183, 4
          %s191 = int_to_ptr.vmem [resolvable:$true] %s190
          %196 = dma.hbm_to_vmem [thread:$0]  %s189, 7168, %s191, %s180, 448, 448, 28
        $region28: #{tpu_custom_call.1} parent=23 // pred_fallthru
          _
      $region24: #{tpu_custom_call.1} parent=5 // pred_fallthru
        _
      %p197 = scmp.le.s32.totalorder 1, %s16
      %p198 = scmp.lt.s32.totalorder %s16, 3
      %p199 = pnand %p197, %p198
      %p200 = pneg %p199
      // Predicated region
      $region29: #{tpu_custom_call.1} parent=5 // pred_check
        _
      $region30: #{tpu_custom_call.1} parent=5 // pred_check_branch
        %202 = sbr.rel (%p199) target = $region32
      $region31: #{tpu_custom_call.1} parent=5 // pred_region
        %s203 = ssub.s32 %s16, 1
        %s204 = sand.u32 %s41, 1
        %s205 = scalar_lea.sflag [#allocation4], %s204
        %s206 = sand.u32 %s41, 1
        %s207 = smul.addr %s206, 448
        %s208 = scalar_lea.vmem [#allocation3], %s207
        // Predicated region
        $region33: #{tpu_custom_call.1} parent=31 // pred_check
          %p209 = pneg %p54
        $region34: #{tpu_custom_call.1} parent=31 // pred_check_branch
          %211 = sbr.rel (%p209) target = $region36
        $region35: #{tpu_custom_call.1} parent=31 // pred_region
          %212 = dma.done %s205, 7168
        $region36: #{tpu_custom_call.1} parent=31 // pred_fallthru
          _
        // Predicated region
        $region37: #{tpu_custom_call.1} parent=31 // pred_check
          %p213 = pneg %p80
        $region38: #{tpu_custom_call.1} parent=31 // pred_check_branch
          %215 = sbr.rel (%p213) target = $region40
        $region39: #{tpu_custom_call.1} parent=31 // pred_region
          %216 = dma.done [#allocation7], 1024
        $region40: #{tpu_custom_call.1} parent=31 // pred_fallthru
          _
        // Predicated region
        $region41: #{tpu_custom_call.1} parent=31 // pred_check
          %p217 = pneg %p101
        $region42: #{tpu_custom_call.1} parent=31 // pred_check_branch
          %219 = sbr.rel (%p217) target = $region44
        $region43: #{tpu_custom_call.1} parent=31 // pred_region
          %220 = dma.done [#allocation7], 96
        $region44: #{tpu_custom_call.1} parent=31 // pred_fallthru
          _
        %s221 = sand.u32 %s41, 1
        %s222 = scalar_lea.sflag [#allocation4], %s221
        %s223 = sand.u32 %s41, 1
        %s224 = smul.addr %s223, 448
        %s225 = scalar_lea.vmem [#allocation3], %s224
        %p226 = pneg %p54
        %p227 = pneg %p51
        %p228 = pneg %p80
        %p229 = pneg %p77
        %p230 = pneg %p101
        %p231 = pneg %p98
        %p232 = pneg %p129
        %p233 = pneg %p126
        %s234 = sand.u32 %s116, 1
        %s235 = scalar_lea.sflag [#allocation5], %s234
        %s236 = sand.u32 %s116, 1
        %s237 = smul.addr %s236, 96
        %s238 = scalar_lea.vmem [#allocation9], %s237
        %s239 = smul.u32 2, %s26
        %s240 = smul.u32 2, %s26
        %v241 = vld [vmem:[%s208] sm:$0xff]
        %v242 = vld [vmem:[%s208 + $0x8] sm:$0xff]
        %v243 = vld [vmem:[%s208 + $0x10] sm:$0xff]
        %v244 = vld [vmem:[%s208 + $0x1c] sm:$0xff]
        %v245 = vld [vmem:[%s208 + $0x24] sm:$0xff]
        %v246 = vld [vmem:[%s208 + $0x2c] sm:$0xff]
        %247 = vst [vmem:[#allocation2] sm:$0xff] %v241
        %248 = vst [vmem:[#allocation2 + $0x8] sm:$0xff] %v242
        %249 = vst [vmem:[#allocation2 + $0x10] sm:$0xff] %v243
        %250 = vst [vmem:[#allocation2 + $0x18] sm:$0xff] %v244
        %251 = vst [vmem:[#allocation2 + $0x20] sm:$0xff] %v245
        %252 = vst [vmem:[#allocation2 + $0x28] sm:$0xff] %v246
        %v253 = vld [vmem:[%s208] sm:$0xff]
        %v254 = vld [vmem:[%s208 + $0x8] sm:$0xff]
        %v255 = vld [vmem:[%s208 + $0x10] sm:$0xff]
        %v256 = vld [vmem:[%s208 + $0x18] sm:$0xf]
        %v257 = vld [vmem:[%s208 + $0x1c] sm:$0xff]
        %v258 = vld [vmem:[%s208 + $0x24] sm:$0xff]
        %v259 = vld [vmem:[%s208 + $0x2c] sm:$0xff]
        %v260 = vld [vmem:[%s208 + $0x34] sm:$0xf]
        %269 = vrot.lane.b32.xlu0 %v253, 127
        %v270 = vpop.permute.xlu0 %269
        %271 = vrot.lane.b32.xlu0 %v254, 127
        %v272 = vpop.permute.xlu0 %271
        %273 = vrot.lane.b32.xlu0 %v255, 127
        %v274 = vpop.permute.xlu0 %273
        %275 = vrot.lane.b32.xlu0 %v256, 127
        %v276 = vpop.permute.xlu0 %275
        %277 = vrot.lane.b32.xlu0 %v257, 127
        %v278 = vpop.permute.xlu0 %277
        %279 = vrot.lane.b32.xlu0 %v258, 127
        %v280 = vpop.permute.xlu0 %279
        %281 = vrot.lane.b32.xlu0 %v259, 127
        %v282 = vpop.permute.xlu0 %281
        %283 = vrot.lane.b32.xlu0 %v260, 127
        %v284 = vpop.permute.xlu0 %283
        %v285 = vrot.slane %v270, 4
        %v286 = vrot.slane %v272, 4
        %v287 = vrot.slane %v274, 4
        %v288 = vrot.slane %v276, 4
        %v289 = vrot.slane %v278, 4
        %v290 = vrot.slane %v280, 4
        %v291 = vrot.slane %v282, 4
        %v292 = vrot.slane %v284, 4
        %vm293 = vcmask 1043456
        %v294 = vsel %vm293, %v285, %v286
        %vm295 = vcmask 1039360
        %v296 = vsel %vm295, %v270, %v294
        %v297 = vsel %vm293, %v286, %v287
        %v298 = vsel %vm295, %v272, %v297
        %v299 = vsel %vm293, %v287, %v288
        %v300 = vsel %vm295, %v274, %v299
        %v301 = vsel %vm293, %v289, %v290
        %v302 = vsel %vm295, %v278, %v301
        %v303 = vsel %vm293, %v290, %v291
        %v304 = vsel %vm295, %v280, %v303
        %v305 = vsel %vm293, %v291, %v292
        %v306 = vsel %vm295, %v282, %v305
        %313 = vst [vmem:[#allocation2 + $0x30] sm:$0xff] %v296
        %314 = vst [vmem:[#allocation2 + $0x38] sm:$0xff] %v298
        %315 = vst [vmem:[#allocation2 + $0x40] sm:$0xff] %v300
        %316 = vst [vmem:[#allocation2 + $0x48] sm:$0xff] %v302
        %317 = vst [vmem:[#allocation2 + $0x50] sm:$0xff] %v304
        %318 = vst [vmem:[#allocation2 + $0x58] sm:$0xff] %v306
        %v319 = vld [vmem:[%s208] sm:$0xff]
        %v320 = vld [vmem:[%s208 + $0x8] sm:$0xff]
        %v321 = vld [vmem:[%s208 + $0x10] sm:$0xff]
        %v322 = vld [vmem:[%s208 + $0x18] sm:$0xf]
        %v323 = vld [vmem:[%s208 + $0x1c] sm:$0xff]
        %v324 = vld [vmem:[%s208 + $0x24] sm:$0xff]
        %v325 = vld [vmem:[%s208 + $0x2c] sm:$0xff]
        %v326 = vld [vmem:[%s208 + $0x34] sm:$0xf]
        %335 = vrot.lane.b32.xlu0 %v319, 119
        %v336 = vpop.permute.xlu0 %335
        %337 = vrot.lane.b32.xlu0 %v320, 119
        %v338 = vpop.permute.xlu0 %337
        %339 = vrot.lane.b32.xlu0 %v321, 119
        %v340 = vpop.permute.xlu0 %339
        %341 = vrot.lane.b32.xlu0 %v322, 119
        %v342 = vpop.permute.xlu0 %341
        %343 = vrot.lane.b32.xlu0 %v323, 119
        %v344 = vpop.permute.xlu0 %343
        %345 = vrot.lane.b32.xlu0 %v324, 119
        %v346 = vpop.permute.xlu0 %345
        %347 = vrot.lane.b32.xlu0 %v325, 119
        %v348 = vpop.permute.xlu0 %347
        %349 = vrot.lane.b32.xlu0 %v326, 119
        %v350 = vpop.permute.xlu0 %349
        %v351 = vrot.slane %v336, 4
        %v352 = vrot.slane %v338, 4
        %v353 = vrot.slane %v340, 4
        %v354 = vrot.slane %v342, 4
        %v355 = vrot.slane %v344, 4
        %v356 = vrot.slane %v346, 4
        %v357 = vrot.slane %v348, 4
        %v358 = vrot.slane %v350, 4
        %v359 = vsel %vm293, %v351, %v352
        %vm360 = vcmask 973824
        %v361 = vsel %vm360, %v336, %v359
        %v362 = vsel %vm293, %v352, %v353
        %v363 = vsel %vm360, %v338, %v362
        %v364 = vsel %vm293, %v353, %v354
        %v365 = vsel %vm360, %v340, %v364
        %v366 = vsel %vm293, %v355, %v356
        %v367 = vsel %vm360, %v344, %v366
        %v368 = vsel %vm293, %v356, %v357
        %v369 = vsel %vm360, %v346, %v368
        %v370 = vsel %vm293, %v357, %v358
        %v371 = vsel %vm360, %v348, %v370
        %378 = vst [vmem:[#allocation2 + $0x60] sm:$0xff] %v361
        %379 = vst [vmem:[#allocation2 + $0x68] sm:$0xff] %v363
        %380 = vst [vmem:[#allocation2 + $0x70] sm:$0xff] %v365
        %381 = vst [vmem:[#allocation2 + $0x78] sm:$0xff] %v367
        %382 = vst [vmem:[#allocation2 + $0x80] sm:$0xff] %v369
        %383 = vst [vmem:[#allocation2 + $0x88] sm:$0xff] %v371
        %v384 = vld [vmem:[%s208] sm:$0xff]
        %v385 = vld [vmem:[%s208 + $0x8] sm:$0xff]
        %v386 = vld [vmem:[%s208 + $0x10] sm:$0xff]
        %v387 = vld [vmem:[%s208 + $0x18] sm:$0xf]
        %v388 = vld [vmem:[%s208 + $0x1c] sm:$0xff]
        %v389 = vld [vmem:[%s208 + $0x24] sm:$0xff]
        %v390 = vld [vmem:[%s208 + $0x2c] sm:$0xff]
        %v391 = vld [vmem:[%s208 + $0x34] sm:$0xf]
        %400 = vrot.lane.b32.xlu0 %v384, 118
        %v401 = vpop.permute.xlu0 %400
        %402 = vrot.lane.b32.xlu0 %v385, 118
        %v403 = vpop.permute.xlu0 %402
        %404 = vrot.lane.b32.xlu0 %v386, 118
        %v405 = vpop.permute.xlu0 %404
        %406 = vrot.lane.b32.xlu0 %v387, 118
        %v407 = vpop.permute.xlu0 %406
        %408 = vrot.lane.b32.xlu0 %v388, 118
        %v409 = vpop.permute.xlu0 %408
        %410 = vrot.lane.b32.xlu0 %v389, 118
        %v411 = vpop.permute.xlu0 %410
        %412 = vrot.lane.b32.xlu0 %v390, 118
        %v413 = vpop.permute.xlu0 %412
        %414 = vrot.lane.b32.xlu0 %v391, 118
        %v415 = vpop.permute.xlu0 %414
        %v416 = vrot.slane %v401, 4
        %v417 = vrot.slane %v403, 4
        %v418 = vrot.slane %v405, 4
        %v419 = vrot.slane %v407, 4
        %v420 = vrot.slane %v409, 4
        %v421 = vrot.slane %v411, 4
        %v422 = vrot.slane %v413, 4
        %v423 = vrot.slane %v415, 4
        %v424 = vsel %vm293, %v416, %v417
        %vm425 = vcmask 965632
        %v426 = vsel %vm425, %v401, %v424
        %v427 = vsel %vm293, %v417, %v418
        %v428 = vsel %vm425, %v403, %v427
        %v429 = vsel %vm293, %v418, %v419
        %v430 = vsel %vm425, %v405, %v429
        %v431 = vsel %vm293, %v420, %v421
        %v432 = vsel %vm425, %v409, %v431
        %v433 = vsel %vm293, %v421, %v422
        %v434 = vsel %vm425, %v411, %v433
        %v435 = vsel %vm293, %v422, %v423
        %v436 = vsel %vm425, %v413, %v435
        %443 = vst [vmem:[#allocation2 + $0x90] sm:$0xff] %v426
        %444 = vst [vmem:[#allocation2 + $0x98] sm:$0xff] %v428
        %445 = vst [vmem:[#allocation2 + $0xa0] sm:$0xff] %v430
        %446 = vst [vmem:[#allocation2 + $0xa8] sm:$0xff] %v432
        %447 = vst [vmem:[#allocation2 + $0xb0] sm:$0xff] %v434
        %448 = vst [vmem:[#allocation2 + $0xb8] sm:$0xff] %v436
        %v449 = vld [vmem:[%s208] sm:$0xff]
        %v450 = vld [vmem:[%s208 + $0x8] sm:$0xff]
        %v451 = vld [vmem:[%s208 + $0x10] sm:$0xff]
        %v452 = vld [vmem:[%s208 + $0x18] sm:$0xf]
        %v453 = vld [vmem:[%s208 + $0x1c] sm:$0xff]
        %v454 = vld [vmem:[%s208 + $0x24] sm:$0xff]
        %v455 = vld [vmem:[%s208 + $0x2c] sm:$0xff]
        %v456 = vld [vmem:[%s208 + $0x34] sm:$0xf]
        %465 = vrot.lane.b32.xlu0 %v449, 47
        %v466 = vpop.permute.xlu0 %465
        %467 = vrot.lane.b32.xlu0 %v450, 47
        %v468 = vpop.permute.xlu0 %467
        %469 = vrot.lane.b32.xlu0 %v451, 47
        %v470 = vpop.permute.xlu0 %469
        %471 = vrot.lane.b32.xlu0 %v452, 47
        %v472 = vpop.permute.xlu0 %471
        %473 = vrot.lane.b32.xlu0 %v453, 47
        %v474 = vpop.permute.xlu0 %473
        %475 = vrot.lane.b32.xlu0 %v454, 47
        %v476 = vpop.permute.xlu0 %475
        %477 = vrot.lane.b32.xlu0 %v455, 47
        %v478 = vpop.permute.xlu0 %477
        %479 = vrot.lane.b32.xlu0 %v456, 47
        %v480 = vpop.permute.xlu0 %479
        %v481 = vrot.slane %v466, 4
        %v482 = vrot.slane %v468, 4
        %v483 = vrot.slane %v470, 4
        %v484 = vrot.slane %v472, 4
        %v485 = vrot.slane %v474, 4
        %v486 = vrot.slane %v476, 4
        %v487 = vrot.slane %v478, 4
        %v488 = vrot.slane %v480, 4
        %v489 = vsel %vm293, %v481, %v482
        %vm490 = vcmask 384000
        %v491 = vsel %vm490, %v466, %v489
        %v492 = vsel %vm293, %v482, %v483
        %v493 = vsel %vm490, %v468, %v492
        %v494 = vsel %vm293, %v483, %v484
        %v495 = vsel %vm490, %v470, %v494
        %v496 = vsel %vm293, %v485, %v486
        %v497 = vsel %vm490, %v474, %v496
        %v498 = vsel %vm293, %v486, %v487
        %v499 = vsel %vm490, %v476, %v498
        %v500 = vsel %vm293, %v487, %v488
        %v501 = vsel %vm490, %v478, %v500
        %508 = vst [vmem:[#allocation2 + $0xc0] sm:$0xff] %v491
        %509 = vst [vmem:[#allocation2 + $0xc8] sm:$0xff] %v493
        %510 = vst [vmem:[#allocation2 + $0xd0] sm:$0xff] %v495
        %511 = vst [vmem:[#allocation2 + $0xd8] sm:$0xff] %v497
        %512 = vst [vmem:[#allocation2 + $0xe0] sm:$0xff] %v499
        %513 = vst [vmem:[#allocation2 + $0xe8] sm:$0xff] %v501
        %v514 = vld [vmem:[%s208] sm:$0xff]
        %v515 = vld [vmem:[%s208 + $0x8] sm:$0xff]
        %v516 = vld [vmem:[%s208 + $0x10] sm:$0xff]
        %v517 = vld [vmem:[%s208 + $0x18] sm:$0xf]
        %v518 = vld [vmem:[%s208 + $0x1c] sm:$0xff]
        %v519 = vld [vmem:[%s208 + $0x24] sm:$0xff]
        %v520 = vld [vmem:[%s208 + $0x2c] sm:$0xff]
        %v521 = vld [vmem:[%s208 + $0x34] sm:$0xf]
        %530 = vrot.lane.b32.xlu0 %v514, 46
        %v531 = vpop.permute.xlu0 %530
        %532 = vrot.lane.b32.xlu0 %v515, 46
        %v533 = vpop.permute.xlu0 %532
        %534 = vrot.lane.b32.xlu0 %v516, 46
        %v535 = vpop.permute.xlu0 %534
        %536 = vrot.lane.b32.xlu0 %v517, 46
        %v537 = vpop.permute.xlu0 %536
        %538 = vrot.lane.b32.xlu0 %v518, 46
        %v539 = vpop.permute.xlu0 %538
        %540 = vrot.lane.b32.xlu0 %v519, 46
        %v541 = vpop.permute.xlu0 %540
        %542 = vrot.lane.b32.xlu0 %v520, 46
        %v543 = vpop.permute.xlu0 %542
        %544 = vrot.lane.b32.xlu0 %v521, 46
        %v545 = vpop.permute.xlu0 %544
        %v546 = vrot.slane %v531, 4
        %v547 = vrot.slane %v533, 4
        %v548 = vrot.slane %v535, 4
        %v549 = vrot.slane %v537, 4
        %v550 = vrot.slane %v539, 4
        %v551 = vrot.slane %v541, 4
        %v552 = vrot.slane %v543, 4
        %v553 = vrot.slane %v545, 4
        %v554 = vsel %vm293, %v546, %v547
        %vm555 = vcmask 375808
        %v556 = vsel %vm555, %v531, %v554
        %v557 = vsel %vm293, %v547, %v548
        %v558 = vsel %vm555, %v533, %v557
        %v559 = vsel %vm293, %v548, %v549
        %v560 = vsel %vm555, %v535, %v559
        %v561 = vsel %vm293, %v550, %v551
        %v562 = vsel %vm555, %v539, %v561
        %v563 = vsel %vm293, %v551, %v552
        %v564 = vsel %vm555, %v541, %v563
        %v565 = vsel %vm293, %v552, %v553
        %v566 = vsel %vm555, %v543, %v565
        %573 = vst [vmem:[#allocation2 + $0xf0] sm:$0xff] %v556
        %574 = vst [vmem:[#allocation2 + $0xf8] sm:$0xff] %v558
        %575 = vst [vmem:[#allocation2 + $0x100] sm:$0xff] %v560
        %576 = vst [vmem:[#allocation2 + $0x108] sm:$0xff] %v562
        %577 = vst [vmem:[#allocation2 + $0x110] sm:$0xff] %v564
        %578 = vst [vmem:[#allocation2 + $0x118] sm:$0xff] %v566
        %v579 = vld [vmem:[%s208] sm:$0xff]
        %v580 = vld [vmem:[%s208 + $0x8] sm:$0xff]
        %v581 = vld [vmem:[%s208 + $0x10] sm:$0xff]
        %v582 = vld [vmem:[%s208 + $0x18] sm:$0xf]
        %v583 = vld [vmem:[%s208 + $0x1c] sm:$0xff]
        %v584 = vld [vmem:[%s208 + $0x24] sm:$0xff]
        %v585 = vld [vmem:[%s208 + $0x2c] sm:$0xff]
        %v586 = vld [vmem:[%s208 + $0x34] sm:$0xf]
        %595 = vrot.lane.b32.xlu0 %v579, 38
        %v596 = vpop.permute.xlu0 %595
        %597 = vrot.lane.b32.xlu0 %v580, 38
        %v598 = vpop.permute.xlu0 %597
        %599 = vrot.lane.b32.xlu0 %v581, 38
        %v600 = vpop.permute.xlu0 %599
        %601 = vrot.lane.b32.xlu0 %v582, 38
        %v602 = vpop.permute.xlu0 %601
        %603 = vrot.lane.b32.xlu0 %v583, 38
        %v604 = vpop.permute.xlu0 %603
        %605 = vrot.lane.b32.xlu0 %v584, 38
        %v606 = vpop.permute.xlu0 %605
        %607 = vrot.lane.b32.xlu0 %v585, 38
        %v608 = vpop.permute.xlu0 %607
        %609 = vrot.lane.b32.xlu0 %v586, 38
        %v610 = vpop.permute.xlu0 %609
        %v611 = vrot.slane %v596, 4
        %v612 = vrot.slane %v598, 4
        %v613 = vrot.slane %v600, 4
        %v614 = vrot.slane %v602, 4
        %v615 = vrot.slane %v604, 4
        %v616 = vrot.slane %v606, 4
        %v617 = vrot.slane %v608, 4
        %v618 = vrot.slane %v610, 4
        %v619 = vsel %vm293, %v611, %v612
        %vm620 = vcmask 310272
        %v621 = vsel %vm620, %v596, %v619
        %v622 = vsel %vm293, %v612, %v613
        %v623 = vsel %vm620, %v598, %v622
        %v624 = vsel %vm293, %v613, %v614
        %v625 = vsel %vm620, %v600, %v624
        %v626 = vsel %vm293, %v615, %v616
        %v627 = vsel %vm620, %v604, %v626
        %v628 = vsel %vm293, %v616, %v617
        %v629 = vsel %vm620, %v606, %v628
        %v630 = vsel %vm293, %v617, %v618
        %v631 = vsel %vm620, %v608, %v630
        %638 = vst [vmem:[#allocation2 + $0x120] sm:$0xff] %v621
        %639 = vst [vmem:[#allocation2 + $0x128] sm:$0xff] %v623
        %640 = vst [vmem:[#allocation2 + $0x130] sm:$0xff] %v625
        %641 = vst [vmem:[#allocation2 + $0x138] sm:$0xff] %v627
        %642 = vst [vmem:[#allocation2 + $0x140] sm:$0xff] %v629
        %643 = vst [vmem:[#allocation2 + $0x148] sm:$0xff] %v631
        %v644 = vld [vmem:[%s208] sm:$0xff]
        %v645 = vld [vmem:[%s208 + $0x8] sm:$0xff]
        %v646 = vld [vmem:[%s208 + $0x10] sm:$0xff]
        %v647 = vld [vmem:[%s208 + $0x18] sm:$0xf]
        %v648 = vld [vmem:[%s208 + $0x1c] sm:$0xff]
        %v649 = vld [vmem:[%s208 + $0x24] sm:$0xff]
        %v650 = vld [vmem:[%s208 + $0x2c] sm:$0xff]
        %v651 = vld [vmem:[%s208 + $0x34] sm:$0xf]
        %660 = vrot.lane.b32.xlu0 %v644, 37
        %v661 = vpop.permute.xlu0 %660
        %662 = vrot.lane.b32.xlu0 %v645, 37
        %v663 = vpop.permute.xlu0 %662
        %664 = vrot.lane.b32.xlu0 %v646, 37
        %v665 = vpop.permute.xlu0 %664
        %666 = vrot.lane.b32.xlu0 %v647, 37
        %v667 = vpop.permute.xlu0 %666
        %668 = vrot.lane.b32.xlu0 %v648, 37
        %v669 = vpop.permute.xlu0 %668
        %670 = vrot.lane.b32.xlu0 %v649, 37
        %v671 = vpop.permute.xlu0 %670
        %672 = vrot.lane.b32.xlu0 %v650, 37
        %v673 = vpop.permute.xlu0 %672
        %674 = vrot.lane.b32.xlu0 %v651, 37
        %v675 = vpop.permute.xlu0 %674
        %v676 = vrot.slane %v661, 4
        %v677 = vrot.slane %v663, 4
        %v678 = vrot.slane %v665, 4
        %v679 = vrot.slane %v667, 4
        %v680 = vrot.slane %v669, 4
        %v681 = vrot.slane %v671, 4
        %v682 = vrot.slane %v673, 4
        %v683 = vrot.slane %v675, 4
        %v684 = vsel %vm293, %v676, %v677
        %vm685 = vcmask 302080
        %v686 = vsel %vm685, %v661, %v684
        %v687 = vsel %vm293, %v677, %v678
        %v688 = vsel %vm685, %v663, %v687
        %v689 = vsel %vm293, %v678, %v679
        %v690 = vsel %vm685, %v665, %v689
        %v691 = vsel %vm293, %v680, %v681
        %v692 = vsel %vm685, %v669, %v691
        %v693 = vsel %vm293, %v681, %v682
        %v694 = vsel %vm685, %v671, %v693
        %v695 = vsel %vm293, %v682, %v683
        %v696 = vsel %vm685, %v673, %v695
        %703 = vst [vmem:[#allocation2 + $0x150] sm:$0xff] %v686
        %704 = vst [vmem:[#allocation2 + $0x158] sm:$0xff] %v688
        %705 = vst [vmem:[#allocation2 + $0x160] sm:$0xff] %v690
        %706 = vst [vmem:[#allocation2 + $0x168] sm:$0xff] %v692
        %707 = vst [vmem:[#allocation2 + $0x170] sm:$0xff] %v694
        %708 = vst [vmem:[#allocation2 + $0x178] sm:$0xff] %v696
        %s709 = scalar_lea.vmem %s208, 56 [#allocation3]
        %v710 = vld [vmem:[%s709] sm:$0xff]
        %v711 = vld [vmem:[%s709 + $0x8] sm:$0xff]
        %v712 = vld [vmem:[%s709 + $0x10] sm:$0xff]
        %v713 = vld [vmem:[%s709 + $0x1c] sm:$0xff]
        %v714 = vld [vmem:[%s709 + $0x24] sm:$0xff]
        %v715 = vld [vmem:[%s709 + $0x2c] sm:$0xff]
        %716 = vst [vmem:[#allocation2 + $0x180] sm:$0xff] %v710
        %717 = vst [vmem:[#allocation2 + $0x188] sm:$0xff] %v711
        %718 = vst [vmem:[#allocation2 + $0x190] sm:$0xff] %v712
        %719 = vst [vmem:[#allocation2 + $0x198] sm:$0xff] %v713
        %720 = vst [vmem:[#allocation2 + $0x1a0] sm:$0xff] %v714
        %721 = vst [vmem:[#allocation2 + $0x1a8] sm:$0xff] %v715
        %v722 = vld [vmem:[%s709] sm:$0xff]
        %v723 = vld [vmem:[%s709 + $0x8] sm:$0xff]
        %v724 = vld [vmem:[%s709 + $0x10] sm:$0xff]
        %v725 = vld [vmem:[%s709 + $0x18] sm:$0xf]
        %v726 = vld [vmem:[%s709 + $0x1c] sm:$0xff]
        %v727 = vld [vmem:[%s709 + $0x24] sm:$0xff]
        %v728 = vld [vmem:[%s709 + $0x2c] sm:$0xff]
        %v729 = vld [vmem:[%s709 + $0x34] sm:$0xf]
        %738 = vrot.lane.b32.xlu0 %v722, 127
        %v739 = vpop.permute.xlu0 %738
        %740 = vrot.lane.b32.xlu0 %v723, 127
        %v741 = vpop.permute.xlu0 %740
        %742 = vrot.lane.b32.xlu0 %v724, 127
        %v743 = vpop.permute.xlu0 %742
        %744 = vrot.lane.b32.xlu0 %v725, 127
        %v745 = vpop.permute.xlu0 %744
        %746 = vrot.lane.b32.xlu0 %v726, 127
        %v747 = vpop.permute.xlu0 %746
        %748 = vrot.lane.b32.xlu0 %v727, 127
        %v749 = vpop.permute.xlu0 %748
        %750 = vrot.lane.b32.xlu0 %v728, 127
        %v751 = vpop.permute.xlu0 %750
        %752 = vrot.lane.b32.xlu0 %v729, 127
        %v753 = vpop.permute.xlu0 %752
        %v754 = vrot.slane %v739, 4
        %v755 = vrot.slane %v741, 4
        %v756 = vrot.slane %v743, 4
        %v757 = vrot.slane %v745, 4
        %v758 = vrot.slane %v747, 4
        %v759 = vrot.slane %v749, 4
        %v760 = vrot.slane %v751, 4
        %v761 = vrot.slane %v753, 4
        %v762 = vsel %vm293, %v754, %v755
        %v763 = vsel %vm295, %v739, %v762
        %v764 = vsel %vm293, %v755, %v756
        %v765 = vsel %vm295, %v741, %v764
        %v766 = vsel %vm293, %v756, %v757
        %v767 = vsel %vm295, %v743, %v766
        %v768 = vsel %vm293, %v758, %v759
        %v769 = vsel %vm295, %v747, %v768
        %v770 = vsel %vm293, %v759, %v760
        %v771 = vsel %vm295, %v749, %v770
        %v772 = vsel %vm293, %v760, %v761
        %v773 = vsel %vm295, %v751, %v772
        %780 = vst [vmem:[#allocation2 + $0x1b0] sm:$0xff] %v763
        %781 = vst [vmem:[#allocation2 + $0x1b8] sm:$0xff] %v765
        %782 = vst [vmem:[#allocation2 + $0x1c0] sm:$0xff] %v767
        %783 = vst [vmem:[#allocation2 + $0x1c8] sm:$0xff] %v769
        %784 = vst [vmem:[#allocation2 + $0x1d0] sm:$0xff] %v771
        %785 = vst [vmem:[#allocation2 + $0x1d8] sm:$0xff] %v773
        %v786 = vld [vmem:[%s709] sm:$0xff]
        %v787 = vld [vmem:[%s709 + $0x8] sm:$0xff]
        %v788 = vld [vmem:[%s709 + $0x10] sm:$0xff]
        %v789 = vld [vmem:[%s709 + $0x18] sm:$0xf]
        %v790 = vld [vmem:[%s709 + $0x1c] sm:$0xff]
        %v791 = vld [vmem:[%s709 + $0x24] sm:$0xff]
        %v792 = vld [vmem:[%s709 + $0x2c] sm:$0xff]
        %v793 = vld [vmem:[%s709 + $0x34] sm:$0xf]
        %802 = vrot.lane.b32.xlu0 %v786, 119
        %v803 = vpop.permute.xlu0 %802
        %804 = vrot.lane.b32.xlu0 %v787, 119
        %v805 = vpop.permute.xlu0 %804
        %806 = vrot.lane.b32.xlu0 %v788, 119
        %v807 = vpop.permute.xlu0 %806
        %808 = vrot.lane.b32.xlu0 %v789, 119
        %v809 = vpop.permute.xlu0 %808
        %810 = vrot.lane.b32.xlu0 %v790, 119
        %v811 = vpop.permute.xlu0 %810
        %812 = vrot.lane.b32.xlu0 %v791, 119
        %v813 = vpop.permute.xlu0 %812
        %814 = vrot.lane.b32.xlu0 %v792, 119
        %v815 = vpop.permute.xlu0 %814
        %816 = vrot.lane.b32.xlu0 %v793, 119
        %v817 = vpop.permute.xlu0 %816
        %v818 = vrot.slane %v803, 4
        %v819 = vrot.slane %v805, 4
        %v820 = vrot.slane %v807, 4
        %v821 = vrot.slane %v809, 4
        %v822 = vrot.slane %v811, 4
        %v823 = vrot.slane %v813, 4
        %v824 = vrot.slane %v815, 4
        %v825 = vrot.slane %v817, 4
        %v826 = vsel %vm293, %v818, %v819
        %v827 = vsel %vm360, %v803, %v826
        %v828 = vsel %vm293, %v819, %v820
        %v829 = vsel %vm360, %v805, %v828
        %v830 = vsel %vm293, %v820, %v821
        %v831 = vsel %vm360, %v807, %v830
        %v832 = vsel %vm293, %v822, %v823
        %v833 = vsel %vm360, %v811, %v832
        %v834 = vsel %vm293, %v823, %v824
        %v835 = vsel %vm360, %v813, %v834
        %v836 = vsel %vm293, %v824, %v825
        %v837 = vsel %vm360, %v815, %v836
        %844 = vst [vmem:[#allocation2 + $0x1e0] sm:$0xff] %v827
        %845 = vst [vmem:[#allocation2 + $0x1e8] sm:$0xff] %v829
        %846 = vst [vmem:[#allocation2 + $0x1f0] sm:$0xff] %v831
        %847 = vst [vmem:[#allocation2 + $0x1f8] sm:$0xff] %v833
        %848 = vst [vmem:[#allocation2 + $0x200] sm:$0xff] %v835
        %849 = vst [vmem:[#allocation2 + $0x208] sm:$0xff] %v837
        %v850 = vld [vmem:[%s709] sm:$0xff]
        %v851 = vld [vmem:[%s709 + $0x8] sm:$0xff]
        %v852 = vld [vmem:[%s709 + $0x10] sm:$0xff]
        %v853 = vld [vmem:[%s709 + $0x18] sm:$0xf]
        %v854 = vld [vmem:[%s709 + $0x1c] sm:$0xff]
        %v855 = vld [vmem:[%s709 + $0x24] sm:$0xff]
        %v856 = vld [vmem:[%s709 + $0x2c] sm:$0xff]
        %v857 = vld [vmem:[%s709 + $0x34] sm:$0xf]
        %866 = vrot.lane.b32.xlu0 %v850, 118
        %v867 = vpop.permute.xlu0 %866
        %868 = vrot.lane.b32.xlu0 %v851, 118
        %v869 = vpop.permute.xlu0 %868
        %870 = vrot.lane.b32.xlu0 %v852, 118
        %v871 = vpop.permute.xlu0 %870
        %872 = vrot.lane.b32.xlu0 %v853, 118
        %v873 = vpop.permute.xlu0 %872
        %874 = vrot.lane.b32.xlu0 %v854, 118
        %v875 = vpop.permute.xlu0 %874
        %876 = vrot.lane.b32.xlu0 %v855, 118
        %v877 = vpop.permute.xlu0 %876
        %878 = vrot.lane.b32.xlu0 %v856, 118
        %v879 = vpop.permute.xlu0 %878
        %880 = vrot.lane.b32.xlu0 %v857, 118
        %v881 = vpop.permute.xlu0 %880
        %v882 = vrot.slane %v867, 4
        %v883 = vrot.slane %v869, 4
        %v884 = vrot.slane %v871, 4
        %v885 = vrot.slane %v873, 4
        %v886 = vrot.slane %v875, 4
        %v887 = vrot.slane %v877, 4
        %v888 = vrot.slane %v879, 4
        %v889 = vrot.slane %v881, 4
        %v890 = vsel %vm293, %v882, %v883
        %v891 = vsel %vm425, %v867, %v890
        %v892 = vsel %vm293, %v883, %v884
        %v893 = vsel %vm425, %v869, %v892
        %v894 = vsel %vm293, %v884, %v885
        %v895 = vsel %vm425, %v871, %v894
        %v896 = vsel %vm293, %v886, %v887
        %v897 = vsel %vm425, %v875, %v896
        %v898 = vsel %vm293, %v887, %v888
        %v899 = vsel %vm425, %v877, %v898
        %v900 = vsel %vm293, %v888, %v889
        %v901 = vsel %vm425, %v879, %v900
        %908 = vst [vmem:[#allocation2 + $0x210] sm:$0xff] %v891
        %909 = vst [vmem:[#allocation2 + $0x218] sm:$0xff] %v893
        %910 = vst [vmem:[#allocation2 + $0x220] sm:$0xff] %v895
        %911 = vst [vmem:[#allocation2 + $0x228] sm:$0xff] %v897
        %912 = vst [vmem:[#allocation2 + $0x230] sm:$0xff] %v899
        %913 = vst [vmem:[#allocation2 + $0x238] sm:$0xff] %v901
        %v914 = vld [vmem:[%s709] sm:$0xff]
        %v915 = vld [vmem:[%s709 + $0x8] sm:$0xff]
        %v916 = vld [vmem:[%s709 + $0x10] sm:$0xff]
        %v917 = vld [vmem:[%s709 + $0x18] sm:$0xf]
        %v918 = vld [vmem:[%s709 + $0x1c] sm:$0xff]
        %v919 = vld [vmem:[%s709 + $0x24] sm:$0xff]
        %v920 = vld [vmem:[%s709 + $0x2c] sm:$0xff]
        %v921 = vld [vmem:[%s709 + $0x34] sm:$0xf]
        %930 = vrot.lane.b32.xlu0 %v914, 47
        %v931 = vpop.permute.xlu0 %930
        %932 = vrot.lane.b32.xlu0 %v915, 47
        %v933 = vpop.permute.xlu0 %932
        %934 = vrot.lane.b32.xlu0 %v916, 47
        %v935 = vpop.permute.xlu0 %934
        %936 = vrot.lane.b32.xlu0 %v917, 47
        %v937 = vpop.permute.xlu0 %936
        %938 = vrot.lane.b32.xlu0 %v918, 47
        %v939 = vpop.permute.xlu0 %938
        %940 = vrot.lane.b32.xlu0 %v919, 47
        %v941 = vpop.permute.xlu0 %940
        %942 = vrot.lane.b32.xlu0 %v920, 47
        %v943 = vpop.permute.xlu0 %942
        %944 = vrot.lane.b32.xlu0 %v921, 47
        %v945 = vpop.permute.xlu0 %944
        %v946 = vrot.slane %v931, 4
        %v947 = vrot.slane %v933, 4
        %v948 = vrot.slane %v935, 4
        %v949 = vrot.slane %v937, 4
        %v950 = vrot.slane %v939, 4
        %v951 = vrot.slane %v941, 4
        %v952 = vrot.slane %v943, 4
        %v953 = vrot.slane %v945, 4
        %v954 = vsel %vm293, %v946, %v947
        %v955 = vsel %vm490, %v931, %v954
        %v956 = vsel %vm293, %v947, %v948
        %v957 = vsel %vm490, %v933, %v956
        %v958 = vsel %vm293, %v948, %v949
        %v959 = vsel %vm490, %v935, %v958
        %v960 = vsel %vm293, %v950, %v951
        %v961 = vsel %vm490, %v939, %v960
        %v962 = vsel %vm293, %v951, %v952
        %v963 = vsel %vm490, %v941, %v962
        %v964 = vsel %vm293, %v952, %v953
        %v965 = vsel %vm490, %v943, %v964
        %972 = vst [vmem:[#allocation2 + $0x240] sm:$0xff] %v955
        %973 = vst [vmem:[#allocation2 + $0x248] sm:$0xff] %v957
        %974 = vst [vmem:[#allocation2 + $0x250] sm:$0xff] %v959
        %975 = vst [vmem:[#allocation2 + $0x258] sm:$0xff] %v961
        %976 = vst [vmem:[#allocation2 + $0x260] sm:$0xff] %v963
        %977 = vst [vmem:[#allocation2 + $0x268] sm:$0xff] %v965
        %v978 = vld [vmem:[%s709] sm:$0xff]
        %v979 = vld [vmem:[%s709 + $0x8] sm:$0xff]
        %v980 = vld [vmem:[%s709 + $0x10] sm:$0xff]
        %v981 = vld [vmem:[%s709 + $0x18] sm:$0xf]
        %v982 = vld [vmem:[%s709 + $0x1c] sm:$0xff]
        %v983 = vld [vmem:[%s709 + $0x24] sm:$0xff]
        %v984 = vld [vmem:[%s709 + $0x2c] sm:$0xff]
        %v985 = vld [vmem:[%s709 + $0x34] sm:$0xf]
        %994 = vrot.lane.b32.xlu0 %v978, 46
        %v995 = vpop.permute.xlu0 %994
        %996 = vrot.lane.b32.xlu0 %v979, 46
        %v997 = vpop.permute.xlu0 %996
        %998 = vrot.lane.b32.xlu0 %v980, 46
        %v999 = vpop.permute.xlu0 %998
        %1000 = vrot.lane.b32.xlu0 %v981, 46
        %v1001 = vpop.permute.xlu0 %1000
        %1002 = vrot.lane.b32.xlu0 %v982, 46
        %v1003 = vpop.permute.xlu0 %1002
        %1004 = vrot.lane.b32.xlu0 %v983, 46
        %v1005 = vpop.permute.xlu0 %1004
        %1006 = vrot.lane.b32.xlu0 %v984, 46
        %v1007 = vpop.permute.xlu0 %1006
        %1008 = vrot.lane.b32.xlu0 %v985, 46
        %v1009 = vpop.permute.xlu0 %1008
        %v1010 = vrot.slane %v995, 4
        %v1011 = vrot.slane %v997, 4
        %v1012 = vrot.slane %v999, 4
        %v1013 = vrot.slane %v1001, 4
        %v1014 = vrot.slane %v1003, 4
        %v1015 = vrot.slane %v1005, 4
        %v1016 = vrot.slane %v1007, 4
        %v1017 = vrot.slane %v1009, 4
        %v1018 = vsel %vm293, %v1010, %v1011
        %v1019 = vsel %vm555, %v995, %v1018
        %v1020 = vsel %vm293, %v1011, %v1012
        %v1021 = vsel %vm555, %v997, %v1020
        %v1022 = vsel %vm293, %v1012, %v1013
        %v1023 = vsel %vm555, %v999, %v1022
        %v1024 = vsel %vm293, %v1014, %v1015
        %v1025 = vsel %vm555, %v1003, %v1024
        %v1026 = vsel %vm293, %v1015, %v1016
        %v1027 = vsel %vm555, %v1005, %v1026
        %v1028 = vsel %vm293, %v1016, %v1017
        %v1029 = vsel %vm555, %v1007, %v1028
        %1036 = vst [vmem:[#allocation2 + $0x270] sm:$0xff] %v1019
        %1037 = vst [vmem:[#allocation2 + $0x278] sm:$0xff] %v1021
        %1038 = vst [vmem:[#allocation2 + $0x280] sm:$0xff] %v1023
        %1039 = vst [vmem:[#allocation2 + $0x288] sm:$0xff] %v1025
        %1040 = vst [vmem:[#allocation2 + $0x290] sm:$0xff] %v1027
        %1041 = vst [vmem:[#allocation2 + $0x298] sm:$0xff] %v1029
        %v1042 = vld [vmem:[%s709] sm:$0xff]
        %v1043 = vld [vmem:[%s709 + $0x8] sm:$0xff]
        %v1044 = vld [vmem:[%s709 + $0x10] sm:$0xff]
        %v1045 = vld [vmem:[%s709 + $0x18] sm:$0xf]
        %v1046 = vld [vmem:[%s709 + $0x1c] sm:$0xff]
        %v1047 = vld [vmem:[%s709 + $0x24] sm:$0xff]
        %v1048 = vld [vmem:[%s709 + $0x2c] sm:$0xff]
        %v1049 = vld [vmem:[%s709 + $0x34] sm:$0xf]
        %1058 = vrot.lane.b32.xlu0 %v1042, 38
        %v1059 = vpop.permute.xlu0 %1058
        %1060 = vrot.lane.b32.xlu0 %v1043, 38
        %v1061 = vpop.permute.xlu0 %1060
        %1062 = vrot.lane.b32.xlu0 %v1044, 38
        %v1063 = vpop.permute.xlu0 %1062
        %1064 = vrot.lane.b32.xlu0 %v1045, 38
        %v1065 = vpop.permute.xlu0 %1064
        %1066 = vrot.lane.b32.xlu0 %v1046, 38
        %v1067 = vpop.permute.xlu0 %1066
        %1068 = vrot.lane.b32.xlu0 %v1047, 38
        %v1069 = vpop.permute.xlu0 %1068
        %1070 = vrot.lane.b32.xlu0 %v1048, 38
        %v1071 = vpop.permute.xlu0 %1070
        %1072 = vrot.lane.b32.xlu0 %v1049, 38
        %v1073 = vpop.permute.xlu0 %1072
        %v1074 = vrot.slane %v1059, 4
        %v1075 = vrot.slane %v1061, 4
        %v1076 = vrot.slane %v1063, 4
        %v1077 = vrot.slane %v1065, 4
        %v1078 = vrot.slane %v1067, 4
        %v1079 = vrot.slane %v1069, 4
        %v1080 = vrot.slane %v1071, 4
        %v1081 = vrot.slane %v1073, 4
        %v1082 = vsel %vm293, %v1074, %v1075
        %v1083 = vsel %vm620, %v1059, %v1082
        %v1084 = vsel %vm293, %v1075, %v1076
        %v1085 = vsel %vm620, %v1061, %v1084
        %v1086 = vsel %vm293, %v1076, %v1077
        %v1087 = vsel %vm620, %v1063, %v1086
        %v1088 = vsel %vm293, %v1078, %v1079
        %v1089 = vsel %vm620, %v1067, %v1088
        %v1090 = vsel %vm293, %v1079, %v1080
        %v1091 = vsel %vm620, %v1069, %v1090
        %v1092 = vsel %vm293, %v1080, %v1081
        %v1093 = vsel %vm620, %v1071, %v1092
        %1100 = vst [vmem:[#allocation2 + $0x2a0] sm:$0xff] %v1083
        %1101 = vst [vmem:[#allocation2 + $0x2a8] sm:$0xff] %v1085
        %1102 = vst [vmem:[#allocation2 + $0x2b0] sm:$0xff] %v1087
        %1103 = vst [vmem:[#allocation2 + $0x2b8] sm:$0xff] %v1089
        %1104 = vst [vmem:[#allocation2 + $0x2c0] sm:$0xff] %v1091
        %1105 = vst [vmem:[#allocation2 + $0x2c8] sm:$0xff] %v1093
        %v1106 = vld [vmem:[%s709] sm:$0xff]
        %v1107 = vld [vmem:[%s709 + $0x8] sm:$0xff]
        %v1108 = vld [vmem:[%s709 + $0x10] sm:$0xff]
        %v1109 = vld [vmem:[%s709 + $0x18] sm:$0xf]
        %v1110 = vld [vmem:[%s709 + $0x1c] sm:$0xff]
        %v1111 = vld [vmem:[%s709 + $0x24] sm:$0xff]
        %v1112 = vld [vmem:[%s709 + $0x2c] sm:$0xff]
        %v1113 = vld [vmem:[%s709 + $0x34] sm:$0xf]
        %1122 = vrot.lane.b32.xlu0 %v1106, 37
        %v1123 = vpop.permute.xlu0 %1122
        %1124 = vrot.lane.b32.xlu0 %v1107, 37
        %v1125 = vpop.permute.xlu0 %1124
        %1126 = vrot.lane.b32.xlu0 %v1108, 37
        %v1127 = vpop.permute.xlu0 %1126
        %1128 = vrot.lane.b32.xlu0 %v1109, 37
        %v1129 = vpop.permute.xlu0 %1128
        %1130 = vrot.lane.b32.xlu0 %v1110, 37
        %v1131 = vpop.permute.xlu0 %1130
        %1132 = vrot.lane.b32.xlu0 %v1111, 37
        %v1133 = vpop.permute.xlu0 %1132
        %1134 = vrot.lane.b32.xlu0 %v1112, 37
        %v1135 = vpop.permute.xlu0 %1134
        %1136 = vrot.lane.b32.xlu0 %v1113, 37
        %v1137 = vpop.permute.xlu0 %1136
        %v1138 = vrot.slane %v1123, 4
        %v1139 = vrot.slane %v1125, 4
        %v1140 = vrot.slane %v1127, 4
        %v1141 = vrot.slane %v1129, 4
        %v1142 = vrot.slane %v1131, 4
        %v1143 = vrot.slane %v1133, 4
        %v1144 = vrot.slane %v1135, 4
        %v1145 = vrot.slane %v1137, 4
        %v1146 = vsel %vm293, %v1138, %v1139
        %v1147 = vsel %vm685, %v1123, %v1146
        %v1148 = vsel %vm293, %v1139, %v1140
        %v1149 = vsel %vm685, %v1125, %v1148
        %v1150 = vsel %vm293, %v1140, %v1141
        %v1151 = vsel %vm685, %v1127, %v1150
        %v1152 = vsel %vm293, %v1142, %v1143
        %v1153 = vsel %vm685, %v1131, %v1152
        %v1154 = vsel %vm293, %v1143, %v1144
        %v1155 = vsel %vm685, %v1133, %v1154
        %v1156 = vsel %vm293, %v1144, %v1145
        %v1157 = vsel %vm685, %v1135, %v1156
        %1164 = vst [vmem:[#allocation2 + $0x2d0] sm:$0xff] %v1147
        %1165 = vst [vmem:[#allocation2 + $0x2d8] sm:$0xff] %v1149
        %1166 = vst [vmem:[#allocation2 + $0x2e0] sm:$0xff] %v1151
        %1167 = vst [vmem:[#allocation2 + $0x2e8] sm:$0xff] %v1153
        %1168 = vst [vmem:[#allocation2 + $0x2f0] sm:$0xff] %v1155
        %1169 = vst [vmem:[#allocation2 + $0x2f8] sm:$0xff] %v1157
        %s1170 = scalar_lea.vmem %s208, 112 [#allocation3]
        %v1171 = vld [vmem:[%s1170] sm:$0xff]
        %v1172 = vld [vmem:[%s1170 + $0x8] sm:$0xff]
        %v1173 = vld [vmem:[%s1170 + $0x10] sm:$0xff]
        %v1174 = vld [vmem:[%s1170 + $0x1c] sm:$0xff]
        %v1175 = vld [vmem:[%s1170 + $0x24] sm:$0xff]
        %v1176 = vld [vmem:[%s1170 + $0x2c] sm:$0xff]
        %1177 = vst [vmem:[#allocation2 + $0x300] sm:$0xff] %v1171
        %1178 = vst [vmem:[#allocation2 + $0x308] sm:$0xff] %v1172
        %1179 = vst [vmem:[#allocation2 + $0x310] sm:$0xff] %v1173
        %1180 = vst [vmem:[#allocation2 + $0x318] sm:$0xff] %v1174
        %1181 = vst [vmem:[#allocation2 + $0x320] sm:$0xff] %v1175
        %1182 = vst [vmem:[#allocation2 + $0x328] sm:$0xff] %v1176
        %v1183 = vld [vmem:[%s1170] sm:$0xff]
        %v1184 = vld [vmem:[%s1170 + $0x8] sm:$0xff]
        %v1185 = vld [vmem:[%s1170 + $0x10] sm:$0xff]
        %v1186 = vld [vmem:[%s1170 + $0x18] sm:$0xf]
        %v1187 = vld [vmem:[%s1170 + $0x1c] sm:$0xff]
        %v1188 = vld [vmem:[%s1170 + $0x24] sm:$0xff]
        %v1189 = vld [vmem:[%s1170 + $0x2c] sm:$0xff]
        %v1190 = vld [vmem:[%s1170 + $0x34] sm:$0xf]
        %1199 = vrot.lane.b32.xlu0 %v1183, 127
        %v1200 = vpop.permute.xlu0 %1199
        %1201 = vrot.lane.b32.xlu0 %v1184, 127
        %v1202 = vpop.permute.xlu0 %1201
        %1203 = vrot.lane.b32.xlu0 %v1185, 127
        %v1204 = vpop.permute.xlu0 %1203
        %1205 = vrot.lane.b32.xlu0 %v1186, 127
        %v1206 = vpop.permute.xlu0 %1205
        %1207 = vrot.lane.b32.xlu0 %v1187, 127
        %v1208 = vpop.permute.xlu0 %1207
        %1209 = vrot.lane.b32.xlu0 %v1188, 127
        %v1210 = vpop.permute.xlu0 %1209
        %1211 = vrot.lane.b32.xlu0 %v1189, 127
        %v1212 = vpop.permute.xlu0 %1211
        %1213 = vrot.lane.b32.xlu0 %v1190, 127
        %v1214 = vpop.permute.xlu0 %1213
        %v1215 = vrot.slane %v1200, 4
        %v1216 = vrot.slane %v1202, 4
        %v1217 = vrot.slane %v1204, 4
        %v1218 = vrot.slane %v1206, 4
        %v1219 = vrot.slane %v1208, 4
        %v1220 = vrot.slane %v1210, 4
        %v1221 = vrot.slane %v1212, 4
        %v1222 = vrot.slane %v1214, 4
        %v1223 = vsel %vm293, %v1215, %v1216
        %v1224 = vsel %vm295, %v1200, %v1223
        %v1225 = vsel %vm293, %v1216, %v1217
        %v1226 = vsel %vm295, %v1202, %v1225
        %v1227 = vsel %vm293, %v1217, %v1218
        %v1228 = vsel %vm295, %v1204, %v1227
        %v1229 = vsel %vm293, %v1219, %v1220
        %v1230 = vsel %vm295, %v1208, %v1229
        %v1231 = vsel %vm293, %v1220, %v1221
        %v1232 = vsel %vm295, %v1210, %v1231
        %v1233 = vsel %vm293, %v1221, %v1222
        %v1234 = vsel %vm295, %v1212, %v1233
        %1241 = vst [vmem:[#allocation2 + $0x330] sm:$0xff] %v1224
        %1242 = vst [vmem:[#allocation2 + $0x338] sm:$0xff] %v1226
        %1243 = vst [vmem:[#allocation2 + $0x340] sm:$0xff] %v1228
        %1244 = vst [vmem:[#allocation2 + $0x348] sm:$0xff] %v1230
        %1245 = vst [vmem:[#allocation2 + $0x350] sm:$0xff] %v1232
        %1246 = vst [vmem:[#allocation2 + $0x358] sm:$0xff] %v1234
        %v1247 = vld [vmem:[%s1170] sm:$0xff]
        %v1248 = vld [vmem:[%s1170 + $0x8] sm:$0xff]
        %v1249 = vld [vmem:[%s1170 + $0x10] sm:$0xff]
        %v1250 = vld [vmem:[%s1170 + $0x18] sm:$0xf]
        %v1251 = vld [vmem:[%s1170 + $0x1c] sm:$0xff]
        %v1252 = vld [vmem:[%s1170 + $0x24] sm:$0xff]
        %v1253 = vld [vmem:[%s1170 + $0x2c] sm:$0xff]
        %v1254 = vld [vmem:[%s1170 + $0x34] sm:$0xf]
        %1263 = vrot.lane.b32.xlu0 %v1247, 119
        %v1264 = vpop.permute.xlu0 %1263
        %1265 = vrot.lane.b32.xlu0 %v1248, 119
        %v1266 = vpop.permute.xlu0 %1265
        %1267 = vrot.lane.b32.xlu0 %v1249, 119
        %v1268 = vpop.permute.xlu0 %1267
        %1269 = vrot.lane.b32.xlu0 %v1250, 119
        %v1270 = vpop.permute.xlu0 %1269
        %1271 = vrot.lane.b32.xlu0 %v1251, 119
        %v1272 = vpop.permute.xlu0 %1271
        %1273 = vrot.lane.b32.xlu0 %v1252, 119
        %v1274 = vpop.permute.xlu0 %1273
        %1275 = vrot.lane.b32.xlu0 %v1253, 119
        %v1276 = vpop.permute.xlu0 %1275
        %1277 = vrot.lane.b32.xlu0 %v1254, 119
        %v1278 = vpop.permute.xlu0 %1277
        %v1279 = vrot.slane %v1264, 4
        %v1280 = vrot.slane %v1266, 4
        %v1281 = vrot.slane %v1268, 4
        %v1282 = vrot.slane %v1270, 4
        %v1283 = vrot.slane %v1272, 4
        %v1284 = vrot.slane %v1274, 4
        %v1285 = vrot.slane %v1276, 4
        %v1286 = vrot.slane %v1278, 4
        %v1287 = vsel %vm293, %v1279, %v1280
        %v1288 = vsel %vm360, %v1264, %v1287
        %v1289 = vsel %vm293, %v1280, %v1281
        %v1290 = vsel %vm360, %v1266, %v1289
        %v1291 = vsel %vm293, %v1281, %v1282
        %v1292 = vsel %vm360, %v1268, %v1291
        %v1293 = vsel %vm293, %v1283, %v1284
        %v1294 = vsel %vm360, %v1272, %v1293
        %v1295 = vsel %vm293, %v1284, %v1285
        %v1296 = vsel %vm360, %v1274, %v1295
        %v1297 = vsel %vm293, %v1285, %v1286
        %v1298 = vsel %vm360, %v1276, %v1297
        %1305 = vst [vmem:[#allocation2 + $0x360] sm:$0xff] %v1288
        %1306 = vst [vmem:[#allocation2 + $0x368] sm:$0xff] %v1290
        %1307 = vst [vmem:[#allocation2 + $0x370] sm:$0xff] %v1292
        %1308 = vst [vmem:[#allocation2 + $0x378] sm:$0xff] %v1294
        %1309 = vst [vmem:[#allocation2 + $0x380] sm:$0xff] %v1296
        %1310 = vst [vmem:[#allocation2 + $0x388] sm:$0xff] %v1298
        %v1311 = vld [vmem:[%s1170] sm:$0xff]
        %v1312 = vld [vmem:[%s1170 + $0x8] sm:$0xff]
        %v1313 = vld [vmem:[%s1170 + $0x10] sm:$0xff]
        %v1314 = vld [vmem:[%s1170 + $0x18] sm:$0xf]
        %v1315 = vld [vmem:[%s1170 + $0x1c] sm:$0xff]
        %v1316 = vld [vmem:[%s1170 + $0x24] sm:$0xff]
        %v1317 = vld [vmem:[%s1170 + $0x2c] sm:$0xff]
        %v1318 = vld [vmem:[%s1170 + $0x34] sm:$0xf]
        %1327 = vrot.lane.b32.xlu0 %v1311, 118
        %v1328 = vpop.permute.xlu0 %1327
        %1329 = vrot.lane.b32.xlu0 %v1312, 118
        %v1330 = vpop.permute.xlu0 %1329
        %1331 = vrot.lane.b32.xlu0 %v1313, 118
        %v1332 = vpop.permute.xlu0 %1331
        %1333 = vrot.lane.b32.xlu0 %v1314, 118
        %v1334 = vpop.permute.xlu0 %1333
        %1335 = vrot.lane.b32.xlu0 %v1315, 118
        %v1336 = vpop.permute.xlu0 %1335
        %1337 = vrot.lane.b32.xlu0 %v1316, 118
        %v1338 = vpop.permute.xlu0 %1337
        %1339 = vrot.lane.b32.xlu0 %v1317, 118
        %v1340 = vpop.permute.xlu0 %1339
        %1341 = vrot.lane.b32.xlu0 %v1318, 118
        %v1342 = vpop.permute.xlu0 %1341
        %v1343 = vrot.slane %v1328, 4
        %v1344 = vrot.slane %v1330, 4
        %v1345 = vrot.slane %v1332, 4
        %v1346 = vrot.slane %v1334, 4
        %v1347 = vrot.slane %v1336, 4
        %v1348 = vrot.slane %v1338, 4
        %v1349 = vrot.slane %v1340, 4
        %v1350 = vrot.slane %v1342, 4
        %v1351 = vsel %vm293, %v1343, %v1344
        %v1352 = vsel %vm425, %v1328, %v1351
        %v1353 = vsel %vm293, %v1344, %v1345
        %v1354 = vsel %vm425, %v1330, %v1353
        %v1355 = vsel %vm293, %v1345, %v1346
        %v1356 = vsel %vm425, %v1332, %v1355
        %v1357 = vsel %vm293, %v1347, %v1348
        %v1358 = vsel %vm425, %v1336, %v1357
        %v1359 = vsel %vm293, %v1348, %v1349
        %v1360 = vsel %vm425, %v1338, %v1359
        %v1361 = vsel %vm293, %v1349, %v1350
        %v1362 = vsel %vm425, %v1340, %v1361
        %1369 = vst [vmem:[#allocation2 + $0x390] sm:$0xff] %v1352
        %1370 = vst [vmem:[#allocation2 + $0x398] sm:$0xff] %v1354
        %1371 = vst [vmem:[#allocation2 + $0x3a0] sm:$0xff] %v1356
        %1372 = vst [vmem:[#allocation2 + $0x3a8] sm:$0xff] %v1358
        %1373 = vst [vmem:[#allocation2 + $0x3b0] sm:$0xff] %v1360
        %1374 = vst [vmem:[#allocation2 + $0x3b8] sm:$0xff] %v1362
        %v1375 = vld [vmem:[%s1170] sm:$0xff]
        %v1376 = vld [vmem:[%s1170 + $0x8] sm:$0xff]
        %v1377 = vld [vmem:[%s1170 + $0x10] sm:$0xff]
        %v1378 = vld [vmem:[%s1170 + $0x18] sm:$0xf]
        %v1379 = vld [vmem:[%s1170 + $0x1c] sm:$0xff]
        %v1380 = vld [vmem:[%s1170 + $0x24] sm:$0xff]
        %v1381 = vld [vmem:[%s1170 + $0x2c] sm:$0xff]
        %v1382 = vld [vmem:[%s1170 + $0x34] sm:$0xf]
        %1391 = vrot.lane.b32.xlu0 %v1375, 47
        %v1392 = vpop.permute.xlu0 %1391
        %1393 = vrot.lane.b32.xlu0 %v1376, 47
        %v1394 = vpop.permute.xlu0 %1393
        %1395 = vrot.lane.b32.xlu0 %v1377, 47
        %v1396 = vpop.permute.xlu0 %1395
        %1397 = vrot.lane.b32.xlu0 %v1378, 47
        %v1398 = vpop.permute.xlu0 %1397
        %1399 = vrot.lane.b32.xlu0 %v1379, 47
        %v1400 = vpop.permute.xlu0 %1399
        %1401 = vrot.lane.b32.xlu0 %v1380, 47
        %v1402 = vpop.permute.xlu0 %1401
        %1403 = vrot.lane.b32.xlu0 %v1381, 47
        %v1404 = vpop.permute.xlu0 %1403
        %1405 = vrot.lane.b32.xlu0 %v1382, 47
        %v1406 = vpop.permute.xlu0 %1405
        %v1407 = vrot.slane %v1392, 4
        %v1408 = vrot.slane %v1394, 4
        %v1409 = vrot.slane %v1396, 4
        %v1410 = vrot.slane %v1398, 4
        %v1411 = vrot.slane %v1400, 4
        %v1412 = vrot.slane %v1402, 4
        %v1413 = vrot.slane %v1404, 4
        %v1414 = vrot.slane %v1406, 4
        %v1415 = vsel %vm293, %v1407, %v1408
        %v1416 = vsel %vm490, %v1392, %v1415
        %v1417 = vsel %vm293, %v1408, %v1409
        %v1418 = vsel %vm490, %v1394, %v1417
        %v1419 = vsel %vm293, %v1409, %v1410
        %v1420 = vsel %vm490, %v1396, %v1419
        %v1421 = vsel %vm293, %v1411, %v1412
        %v1422 = vsel %vm490, %v1400, %v1421
        %v1423 = vsel %vm293, %v1412, %v1413
        %v1424 = vsel %vm490, %v1402, %v1423
        %v1425 = vsel %vm293, %v1413, %v1414
        %v1426 = vsel %vm490, %v1404, %v1425
        %1433 = vst [vmem:[#allocation2 + $0x3c0] sm:$0xff] %v1416
        %1434 = vst [vmem:[#allocation2 + $0x3c8] sm:$0xff] %v1418
        %1435 = vst [vmem:[#allocation2 + $0x3d0] sm:$0xff] %v1420
        %1436 = vst [vmem:[#allocation2 + $0x3d8] sm:$0xff] %v1422
        %1437 = vst [vmem:[#allocation2 + $0x3e0] sm:$0xff] %v1424
        %1438 = vst [vmem:[#allocation2 + $0x3e8] sm:$0xff] %v1426
        %v1439 = vld [vmem:[%s1170] sm:$0xff]
        %v1440 = vld [vmem:[%s1170 + $0x8] sm:$0xff]
        %v1441 = vld [vmem:[%s1170 + $0x10] sm:$0xff]
        %v1442 = vld [vmem:[%s1170 + $0x18] sm:$0xf]
        %v1443 = vld [vmem:[%s1170 + $0x1c] sm:$0xff]
        %v1444 = vld [vmem:[%s1170 + $0x24] sm:$0xff]
        %v1445 = vld [vmem:[%s1170 + $0x2c] sm:$0xff]
        %v1446 = vld [vmem:[%s1170 + $0x34] sm:$0xf]
        %1455 = vrot.lane.b32.xlu0 %v1439, 46
        %v1456 = vpop.permute.xlu0 %1455
        %1457 = vrot.lane.b32.xlu0 %v1440, 46
        %v1458 = vpop.permute.xlu0 %1457
        %1459 = vrot.lane.b32.xlu0 %v1441, 46
        %v1460 = vpop.permute.xlu0 %1459
        %1461 = vrot.lane.b32.xlu0 %v1442, 46
        %v1462 = vpop.permute.xlu0 %1461
        %1463 = vrot.lane.b32.xlu0 %v1443, 46
        %v1464 = vpop.permute.xlu0 %1463
        %1465 = vrot.lane.b32.xlu0 %v1444, 46
        %v1466 = vpop.permute.xlu0 %1465
        %1467 = vrot.lane.b32.xlu0 %v1445, 46
        %v1468 = vpop.permute.xlu0 %1467
        %1469 = vrot.lane.b32.xlu0 %v1446, 46
        %v1470 = vpop.permute.xlu0 %1469
        %v1471 = vrot.slane %v1456, 4
        %v1472 = vrot.slane %v1458, 4
        %v1473 = vrot.slane %v1460, 4
        %v1474 = vrot.slane %v1462, 4
        %v1475 = vrot.slane %v1464, 4
        %v1476 = vrot.slane %v1466, 4
        %v1477 = vrot.slane %v1468, 4
        %v1478 = vrot.slane %v1470, 4
        %v1479 = vsel %vm293, %v1471, %v1472
        %v1480 = vsel %vm555, %v1456, %v1479
        %v1481 = vsel %vm293, %v1472, %v1473
        %v1482 = vsel %vm555, %v1458, %v1481
        %v1483 = vsel %vm293, %v1473, %v1474
        %v1484 = vsel %vm555, %v1460, %v1483
        %v1485 = vsel %vm293, %v1475, %v1476
        %v1486 = vsel %vm555, %v1464, %v1485
        %v1487 = vsel %vm293, %v1476, %v1477
        %v1488 = vsel %vm555, %v1466, %v1487
        %v1489 = vsel %vm293, %v1477, %v1478
        %v1490 = vsel %vm555, %v1468, %v1489
        %1497 = vst [vmem:[#allocation2 + $0x3f0] sm:$0xff] %v1480
        %1498 = vst [vmem:[#allocation2 + $0x3f8] sm:$0xff] %v1482
        %1499 = vst [vmem:[#allocation2 + $0x400] sm:$0xff] %v1484
        %1500 = vst [vmem:[#allocation2 + $0x408] sm:$0xff] %v1486
        %1501 = vst [vmem:[#allocation2 + $0x410] sm:$0xff] %v1488
        %1502 = vst [vmem:[#allocation2 + $0x418] sm:$0xff] %v1490
        %v1503 = vld [vmem:[%s1170] sm:$0xff]
        %v1504 = vld [vmem:[%s1170 + $0x8] sm:$0xff]
        %v1505 = vld [vmem:[%s1170 + $0x10] sm:$0xff]
        %v1506 = vld [vmem:[%s1170 + $0x18] sm:$0xf]
        %v1507 = vld [vmem:[%s1170 + $0x1c] sm:$0xff]
        %v1508 = vld [vmem:[%s1170 + $0x24] sm:$0xff]
        %v1509 = vld [vmem:[%s1170 + $0x2c] sm:$0xff]
        %v1510 = vld [vmem:[%s1170 + $0x34] sm:$0xf]
        %1519 = vrot.lane.b32.xlu0 %v1503, 38
        %v1520 = vpop.permute.xlu0 %1519
        %1521 = vrot.lane.b32.xlu0 %v1504, 38
        %v1522 = vpop.permute.xlu0 %1521
        %1523 = vrot.lane.b32.xlu0 %v1505, 38
        %v1524 = vpop.permute.xlu0 %1523
        %1525 = vrot.lane.b32.xlu0 %v1506, 38
        %v1526 = vpop.permute.xlu0 %1525
        %1527 = vrot.lane.b32.xlu0 %v1507, 38
        %v1528 = vpop.permute.xlu0 %1527
        %1529 = vrot.lane.b32.xlu0 %v1508, 38
        %v1530 = vpop.permute.xlu0 %1529
        %1531 = vrot.lane.b32.xlu0 %v1509, 38
        %v1532 = vpop.permute.xlu0 %1531
        %1533 = vrot.lane.b32.xlu0 %v1510, 38
        %v1534 = vpop.permute.xlu0 %1533
        %v1535 = vrot.slane %v1520, 4
        %v1536 = vrot.slane %v1522, 4
        %v1537 = vrot.slane %v1524, 4
        %v1538 = vrot.slane %v1526, 4
        %v1539 = vrot.slane %v1528, 4
        %v1540 = vrot.slane %v1530, 4
        %v1541 = vrot.slane %v1532, 4
        %v1542 = vrot.slane %v1534, 4
        %v1543 = vsel %vm293, %v1535, %v1536
        %v1544 = vsel %vm620, %v1520, %v1543
        %v1545 = vsel %vm293, %v1536, %v1537
        %v1546 = vsel %vm620, %v1522, %v1545
        %v1547 = vsel %vm293, %v1537, %v1538
        %v1548 = vsel %vm620, %v1524, %v1547
        %v1549 = vsel %vm293, %v1539, %v1540
        %v1550 = vsel %vm620, %v1528, %v1549
        %v1551 = vsel %vm293, %v1540, %v1541
        %v1552 = vsel %vm620, %v1530, %v1551
        %v1553 = vsel %vm293, %v1541, %v1542
        %v1554 = vsel %vm620, %v1532, %v1553
        %1561 = vst [vmem:[#allocation2 + $0x420] sm:$0xff] %v1544
        %1562 = vst [vmem:[#allocation2 + $0x428] sm:$0xff] %v1546
        %1563 = vst [vmem:[#allocation2 + $0x430] sm:$0xff] %v1548
        %1564 = vst [vmem:[#allocation2 + $0x438] sm:$0xff] %v1550
        %1565 = vst [vmem:[#allocation2 + $0x440] sm:$0xff] %v1552
        %1566 = vst [vmem:[#allocation2 + $0x448] sm:$0xff] %v1554
        %v1567 = vld [vmem:[%s1170] sm:$0xff]
        %v1568 = vld [vmem:[%s1170 + $0x8] sm:$0xff]
        %v1569 = vld [vmem:[%s1170 + $0x10] sm:$0xff]
        %v1570 = vld [vmem:[%s1170 + $0x18] sm:$0xf]
        %v1571 = vld [vmem:[%s1170 + $0x1c] sm:$0xff]
        %v1572 = vld [vmem:[%s1170 + $0x24] sm:$0xff]
        %v1573 = vld [vmem:[%s1170 + $0x2c] sm:$0xff]
        %v1574 = vld [vmem:[%s1170 + $0x34] sm:$0xf]
        %1583 = vrot.lane.b32.xlu0 %v1567, 37
        %v1584 = vpop.permute.xlu0 %1583
        %1585 = vrot.lane.b32.xlu0 %v1568, 37
        %v1586 = vpop.permute.xlu0 %1585
        %1587 = vrot.lane.b32.xlu0 %v1569, 37
        %v1588 = vpop.permute.xlu0 %1587
        %1589 = vrot.lane.b32.xlu0 %v1570, 37
        %v1590 = vpop.permute.xlu0 %1589
        %1591 = vrot.lane.b32.xlu0 %v1571, 37
        %v1592 = vpop.permute.xlu0 %1591
        %1593 = vrot.lane.b32.xlu0 %v1572, 37
        %v1594 = vpop.permute.xlu0 %1593
        %1595 = vrot.lane.b32.xlu0 %v1573, 37
        %v1596 = vpop.permute.xlu0 %1595
        %1597 = vrot.lane.b32.xlu0 %v1574, 37
        %v1598 = vpop.permute.xlu0 %1597
        %v1599 = vrot.slane %v1584, 4
        %v1600 = vrot.slane %v1586, 4
        %v1601 = vrot.slane %v1588, 4
        %v1602 = vrot.slane %v1590, 4
        %v1603 = vrot.slane %v1592, 4
        %v1604 = vrot.slane %v1594, 4
        %v1605 = vrot.slane %v1596, 4
        %v1606 = vrot.slane %v1598, 4
        %v1607 = vsel %vm293, %v1599, %v1600
        %v1608 = vsel %vm685, %v1584, %v1607
        %v1609 = vsel %vm293, %v1600, %v1601
        %v1610 = vsel %vm685, %v1586, %v1609
        %v1611 = vsel %vm293, %v1601, %v1602
        %v1612 = vsel %vm685, %v1588, %v1611
        %v1613 = vsel %vm293, %v1603, %v1604
        %v1614 = vsel %vm685, %v1592, %v1613
        %v1615 = vsel %vm293, %v1604, %v1605
        %v1616 = vsel %vm685, %v1594, %v1615
        %v1617 = vsel %vm293, %v1605, %v1606
        %v1618 = vsel %vm685, %v1596, %v1617
        %1625 = vst [vmem:[#allocation2 + $0x450] sm:$0xff] %v1608
        %1626 = vst [vmem:[#allocation2 + $0x458] sm:$0xff] %v1610
        %1627 = vst [vmem:[#allocation2 + $0x460] sm:$0xff] %v1612
        %1628 = vst [vmem:[#allocation2 + $0x468] sm:$0xff] %v1614
        %1629 = vst [vmem:[#allocation2 + $0x470] sm:$0xff] %v1616
        %1630 = vst [vmem:[#allocation2 + $0x478] sm:$0xff] %v1618
        %s1631 = scalar_lea.vmem %s208, 168 [#allocation3]
        %v1632 = vld [vmem:[%s1631] sm:$0xff]
        %v1633 = vld [vmem:[%s1631 + $0x8] sm:$0xff]
        %v1634 = vld [vmem:[%s1631 + $0x10] sm:$0xff]
        %v1635 = vld [vmem:[%s1631 + $0x1c] sm:$0xff]
        %v1636 = vld [vmem:[%s1631 + $0x24] sm:$0xff]
        %v1637 = vld [vmem:[%s1631 + $0x2c] sm:$0xff]
        %1638 = vst [vmem:[#allocation2 + $0x480] sm:$0xff] %v1632
        %1639 = vst [vmem:[#allocation2 + $0x488] sm:$0xff] %v1633
        %1640 = vst [vmem:[#allocation2 + $0x490] sm:$0xff] %v1634
        %1641 = vst [vmem:[#allocation2 + $0x498] sm:$0xff] %v1635
        %1642 = vst [vmem:[#allocation2 + $0x4a0] sm:$0xff] %v1636
        %1643 = vst [vmem:[#allocation2 + $0x4a8] sm:$0xff] %v1637
        %v1644 = vld [vmem:[%s1631] sm:$0xff]
        %v1645 = vld [vmem:[%s1631 + $0x8] sm:$0xff]
        %v1646 = vld [vmem:[%s1631 + $0x10] sm:$0xff]
        %v1647 = vld [vmem:[%s1631 + $0x18] sm:$0xf]
        %v1648 = vld [vmem:[%s1631 + $0x1c] sm:$0xff]
        %v1649 = vld [vmem:[%s1631 + $0x24] sm:$0xff]
        %v1650 = vld [vmem:[%s1631 + $0x2c] sm:$0xff]
        %v1651 = vld [vmem:[%s1631 + $0x34] sm:$0xf]
        %1660 = vrot.lane.b32.xlu0 %v1644, 127
        %v1661 = vpop.permute.xlu0 %1660
        %1662 = vrot.lane.b32.xlu0 %v1645, 127
        %v1663 = vpop.permute.xlu0 %1662
        %1664 = vrot.lane.b32.xlu0 %v1646, 127
        %v1665 = vpop.permute.xlu0 %1664
        %1666 = vrot.lane.b32.xlu0 %v1647, 127
        %v1667 = vpop.permute.xlu0 %1666
        %1668 = vrot.lane.b32.xlu0 %v1648, 127
        %v1669 = vpop.permute.xlu0 %1668
        %1670 = vrot.lane.b32.xlu0 %v1649, 127
        %v1671 = vpop.permute.xlu0 %1670
        %1672 = vrot.lane.b32.xlu0 %v1650, 127
        %v1673 = vpop.permute.xlu0 %1672
        %1674 = vrot.lane.b32.xlu0 %v1651, 127
        %v1675 = vpop.permute.xlu0 %1674
        %v1676 = vrot.slane %v1661, 4
        %v1677 = vrot.slane %v1663, 4
        %v1678 = vrot.slane %v1665, 4
        %v1679 = vrot.slane %v1667, 4
        %v1680 = vrot.slane %v1669, 4
        %v1681 = vrot.slane %v1671, 4
        %v1682 = vrot.slane %v1673, 4
        %v1683 = vrot.slane %v1675, 4
        %v1684 = vsel %vm293, %v1676, %v1677
        %v1685 = vsel %vm295, %v1661, %v1684
        %v1686 = vsel %vm293, %v1677, %v1678
        %v1687 = vsel %vm295, %v1663, %v1686
        %v1688 = vsel %vm293, %v1678, %v1679
        %v1689 = vsel %vm295, %v1665, %v1688
        %v1690 = vsel %vm293, %v1680, %v1681
        %v1691 = vsel %vm295, %v1669, %v1690
        %v1692 = vsel %vm293, %v1681, %v1682
        %v1693 = vsel %vm295, %v1671, %v1692
        %v1694 = vsel %vm293, %v1682, %v1683
        %v1695 = vsel %vm295, %v1673, %v1694
        %1702 = vst [vmem:[#allocation2 + $0x4b0] sm:$0xff] %v1685
        %1703 = vst [vmem:[#allocation2 + $0x4b8] sm:$0xff] %v1687
        %1704 = vst [vmem:[#allocation2 + $0x4c0] sm:$0xff] %v1689
        %1705 = vst [vmem:[#allocation2 + $0x4c8] sm:$0xff] %v1691
        %1706 = vst [vmem:[#allocation2 + $0x4d0] sm:$0xff] %v1693
        %1707 = vst [vmem:[#allocation2 + $0x4d8] sm:$0xff] %v1695
        %v1708 = vld [vmem:[%s1631] sm:$0xff]
        %v1709 = vld [vmem:[%s1631 + $0x8] sm:$0xff]
        %v1710 = vld [vmem:[%s1631 + $0x10] sm:$0xff]
        %v1711 = vld [vmem:[%s1631 + $0x18] sm:$0xf]
        %v1712 = vld [vmem:[%s1631 + $0x1c] sm:$0xff]
        %v1713 = vld [vmem:[%s1631 + $0x24] sm:$0xff]
        %v1714 = vld [vmem:[%s1631 + $0x2c] sm:$0xff]
        %v1715 = vld [vmem:[%s1631 + $0x34] sm:$0xf]
        %1724 = vrot.lane.b32.xlu0 %v1708, 119
        %v1725 = vpop.permute.xlu0 %1724
        %1726 = vrot.lane.b32.xlu0 %v1709, 119
        %v1727 = vpop.permute.xlu0 %1726
        %1728 = vrot.lane.b32.xlu0 %v1710, 119
        %v1729 = vpop.permute.xlu0 %1728
        %1730 = vrot.lane.b32.xlu0 %v1711, 119
        %v1731 = vpop.permute.xlu0 %1730
        %1732 = vrot.lane.b32.xlu0 %v1712, 119
        %v1733 = vpop.permute.xlu0 %1732
        %1734 = vrot.lane.b32.xlu0 %v1713, 119
        %v1735 = vpop.permute.xlu0 %1734
        %1736 = vrot.lane.b32.xlu0 %v1714, 119
        %v1737 = vpop.permute.xlu0 %1736
        %1738 = vrot.lane.b32.xlu0 %v1715, 119
        %v1739 = vpop.permute.xlu0 %1738
        %v1740 = vrot.slane %v1725, 4
        %v1741 = vrot.slane %v1727, 4
        %v1742 = vrot.slane %v1729, 4
        %v1743 = vrot.slane %v1731, 4
        %v1744 = vrot.slane %v1733, 4
        %v1745 = vrot.slane %v1735, 4
        %v1746 = vrot.slane %v1737, 4
        %v1747 = vrot.slane %v1739, 4
        %v1748 = vsel %vm293, %v1740, %v1741
        %v1749 = vsel %vm360, %v1725, %v1748
        %v1750 = vsel %vm293, %v1741, %v1742
        %v1751 = vsel %vm360, %v1727, %v1750
        %v1752 = vsel %vm293, %v1742, %v1743
        %v1753 = vsel %vm360, %v1729, %v1752
        %v1754 = vsel %vm293, %v1744, %v1745
        %v1755 = vsel %vm360, %v1733, %v1754
        %v1756 = vsel %vm293, %v1745, %v1746
        %v1757 = vsel %vm360, %v1735, %v1756
        %v1758 = vsel %vm293, %v1746, %v1747
        %v1759 = vsel %vm360, %v1737, %v1758
        %1766 = vst [vmem:[#allocation2 + $0x4e0] sm:$0xff] %v1749
        %1767 = vst [vmem:[#allocation2 + $0x4e8] sm:$0xff] %v1751
        %1768 = vst [vmem:[#allocation2 + $0x4f0] sm:$0xff] %v1753
        %1769 = vst [vmem:[#allocation2 + $0x4f8] sm:$0xff] %v1755
        %1770 = vst [vmem:[#allocation2 + $0x500] sm:$0xff] %v1757
        %1771 = vst [vmem:[#allocation2 + $0x508] sm:$0xff] %v1759
        %v1772 = vld [vmem:[%s1631] sm:$0xff]
        %v1773 = vld [vmem:[%s1631 + $0x8] sm:$0xff]
        %v1774 = vld [vmem:[%s1631 + $0x10] sm:$0xff]
        %v1775 = vld [vmem:[%s1631 + $0x18] sm:$0xf]
        %v1776 = vld [vmem:[%s1631 + $0x1c] sm:$0xff]
        %v1777 = vld [vmem:[%s1631 + $0x24] sm:$0xff]
        %v1778 = vld [vmem:[%s1631 + $0x2c] sm:$0xff]
        %v1779 = vld [vmem:[%s1631 + $0x34] sm:$0xf]
        %1788 = vrot.lane.b32.xlu0 %v1772, 118
        %v1789 = vpop.permute.xlu0 %1788
        %1790 = vrot.lane.b32.xlu0 %v1773, 118
        %v1791 = vpop.permute.xlu0 %1790
        %1792 = vrot.lane.b32.xlu0 %v1774, 118
        %v1793 = vpop.permute.xlu0 %1792
        %1794 = vrot.lane.b32.xlu0 %v1775, 118
        %v1795 = vpop.permute.xlu0 %1794
        %1796 = vrot.lane.b32.xlu0 %v1776, 118
        %v1797 = vpop.permute.xlu0 %1796
        %1798 = vrot.lane.b32.xlu0 %v1777, 118
        %v1799 = vpop.permute.xlu0 %1798
        %1800 = vrot.lane.b32.xlu0 %v1778, 118
        %v1801 = vpop.permute.xlu0 %1800
        %1802 = vrot.lane.b32.xlu0 %v1779, 118
        %v1803 = vpop.permute.xlu0 %1802
        %v1804 = vrot.slane %v1789, 4
        %v1805 = vrot.slane %v1791, 4
        %v1806 = vrot.slane %v1793, 4
        %v1807 = vrot.slane %v1795, 4
        %v1808 = vrot.slane %v1797, 4
        %v1809 = vrot.slane %v1799, 4
        %v1810 = vrot.slane %v1801, 4
        %v1811 = vrot.slane %v1803, 4
        %v1812 = vsel %vm293, %v1804, %v1805
        %v1813 = vsel %vm425, %v1789, %v1812
        %v1814 = vsel %vm293, %v1805, %v1806
        %v1815 = vsel %vm425, %v1791, %v1814
        %v1816 = vsel %vm293, %v1806, %v1807
        %v1817 = vsel %vm425, %v1793, %v1816
        %v1818 = vsel %vm293, %v1808, %v1809
        %v1819 = vsel %vm425, %v1797, %v1818
        %v1820 = vsel %vm293, %v1809, %v1810
        %v1821 = vsel %vm425, %v1799, %v1820
        %v1822 = vsel %vm293, %v1810, %v1811
        %v1823 = vsel %vm425, %v1801, %v1822
        %1830 = vst [vmem:[#allocation2 + $0x510] sm:$0xff] %v1813
        %1831 = vst [vmem:[#allocation2 + $0x518] sm:$0xff] %v1815
        %1832 = vst [vmem:[#allocation2 + $0x520] sm:$0xff] %v1817
        %1833 = vst [vmem:[#allocation2 + $0x528] sm:$0xff] %v1819
        %1834 = vst [vmem:[#allocation2 + $0x530] sm:$0xff] %v1821
        %1835 = vst [vmem:[#allocation2 + $0x538] sm:$0xff] %v1823
        %v1836 = vld [vmem:[%s1631] sm:$0xff]
        %v1837 = vld [vmem:[%s1631 + $0x8] sm:$0xff]
        %v1838 = vld [vmem:[%s1631 + $0x10] sm:$0xff]
        %v1839 = vld [vmem:[%s1631 + $0x18] sm:$0xf]
        %v1840 = vld [vmem:[%s1631 + $0x1c] sm:$0xff]
        %v1841 = vld [vmem:[%s1631 + $0x24] sm:$0xff]
        %v1842 = vld [vmem:[%s1631 + $0x2c] sm:$0xff]
        %v1843 = vld [vmem:[%s1631 + $0x34] sm:$0xf]
        %1852 = vrot.lane.b32.xlu0 %v1836, 47
        %v1853 = vpop.permute.xlu0 %1852
        %1854 = vrot.lane.b32.xlu0 %v1837, 47
        %v1855 = vpop.permute.xlu0 %1854
        %1856 = vrot.lane.b32.xlu0 %v1838, 47
        %v1857 = vpop.permute.xlu0 %1856
        %1858 = vrot.lane.b32.xlu0 %v1839, 47
        %v1859 = vpop.permute.xlu0 %1858
        %1860 = vrot.lane.b32.xlu0 %v1840, 47
        %v1861 = vpop.permute.xlu0 %1860
        %1862 = vrot.lane.b32.xlu0 %v1841, 47
        %v1863 = vpop.permute.xlu0 %1862
        %1864 = vrot.lane.b32.xlu0 %v1842, 47
        %v1865 = vpop.permute.xlu0 %1864
        %1866 = vrot.lane.b32.xlu0 %v1843, 47
        %v1867 = vpop.permute.xlu0 %1866
        %v1868 = vrot.slane %v1853, 4
        %v1869 = vrot.slane %v1855, 4
        %v1870 = vrot.slane %v1857, 4
        %v1871 = vrot.slane %v1859, 4
        %v1872 = vrot.slane %v1861, 4
        %v1873 = vrot.slane %v1863, 4
        %v1874 = vrot.slane %v1865, 4
        %v1875 = vrot.slane %v1867, 4
        %v1876 = vsel %vm293, %v1868, %v1869
        %v1877 = vsel %vm490, %v1853, %v1876
        %v1878 = vsel %vm293, %v1869, %v1870
        %v1879 = vsel %vm490, %v1855, %v1878
        %v1880 = vsel %vm293, %v1870, %v1871
        %v1881 = vsel %vm490, %v1857, %v1880
        %v1882 = vsel %vm293, %v1872, %v1873
        %v1883 = vsel %vm490, %v1861, %v1882
        %v1884 = vsel %vm293, %v1873, %v1874
        %v1885 = vsel %vm490, %v1863, %v1884
        %v1886 = vsel %vm293, %v1874, %v1875
        %v1887 = vsel %vm490, %v1865, %v1886
        %1894 = vst [vmem:[#allocation2 + $0x540] sm:$0xff] %v1877
        %1895 = vst [vmem:[#allocation2 + $0x548] sm:$0xff] %v1879
        %1896 = vst [vmem:[#allocation2 + $0x550] sm:$0xff] %v1881
        %1897 = vst [vmem:[#allocation2 + $0x558] sm:$0xff] %v1883
        %1898 = vst [vmem:[#allocation2 + $0x560] sm:$0xff] %v1885
        %1899 = vst [vmem:[#allocation2 + $0x568] sm:$0xff] %v1887
        %v1900 = vld [vmem:[%s1631] sm:$0xff]
        %v1901 = vld [vmem:[%s1631 + $0x8] sm:$0xff]
        %v1902 = vld [vmem:[%s1631 + $0x10] sm:$0xff]
        %v1903 = vld [vmem:[%s1631 + $0x18] sm:$0xf]
        %v1904 = vld [vmem:[%s1631 + $0x1c] sm:$0xff]
        %v1905 = vld [vmem:[%s1631 + $0x24] sm:$0xff]
        %v1906 = vld [vmem:[%s1631 + $0x2c] sm:$0xff]
        %v1907 = vld [vmem:[%s1631 + $0x34] sm:$0xf]
        %1916 = vrot.lane.b32.xlu0 %v1900, 46
        %v1917 = vpop.permute.xlu0 %1916
        %1918 = vrot.lane.b32.xlu0 %v1901, 46
        %v1919 = vpop.permute.xlu0 %1918
        %1920 = vrot.lane.b32.xlu0 %v1902, 46
        %v1921 = vpop.permute.xlu0 %1920
        %1922 = vrot.lane.b32.xlu0 %v1903, 46
        %v1923 = vpop.permute.xlu0 %1922
        %1924 = vrot.lane.b32.xlu0 %v1904, 46
        %v1925 = vpop.permute.xlu0 %1924
        %1926 = vrot.lane.b32.xlu0 %v1905, 46
        %v1927 = vpop.permute.xlu0 %1926
        %1928 = vrot.lane.b32.xlu0 %v1906, 46
        %v1929 = vpop.permute.xlu0 %1928
        %1930 = vrot.lane.b32.xlu0 %v1907, 46
        %v1931 = vpop.permute.xlu0 %1930
        %v1932 = vrot.slane %v1917, 4
        %v1933 = vrot.slane %v1919, 4
        %v1934 = vrot.slane %v1921, 4
        %v1935 = vrot.slane %v1923, 4
        %v1936 = vrot.slane %v1925, 4
        %v1937 = vrot.slane %v1927, 4
        %v1938 = vrot.slane %v1929, 4
        %v1939 = vrot.slane %v1931, 4
        %v1940 = vsel %vm293, %v1932, %v1933
        %v1941 = vsel %vm555, %v1917, %v1940
        %v1942 = vsel %vm293, %v1933, %v1934
        %v1943 = vsel %vm555, %v1919, %v1942
        %v1944 = vsel %vm293, %v1934, %v1935
        %v1945 = vsel %vm555, %v1921, %v1944
        %v1946 = vsel %vm293, %v1936, %v1937
        %v1947 = vsel %vm555, %v1925, %v1946
        %v1948 = vsel %vm293, %v1937, %v1938
        %v1949 = vsel %vm555, %v1927, %v1948
        %v1950 = vsel %vm293, %v1938, %v1939
        %v1951 = vsel %vm555, %v1929, %v1950
        %1958 = vst [vmem:[#allocation2 + $0x570] sm:$0xff] %v1941
        %1959 = vst [vmem:[#allocation2 + $0x578] sm:$0xff] %v1943
        %1960 = vst [vmem:[#allocation2 + $0x580] sm:$0xff] %v1945
        %1961 = vst [vmem:[#allocation2 + $0x588] sm:$0xff] %v1947
        %1962 = vst [vmem:[#allocation2 + $0x590] sm:$0xff] %v1949
        %1963 = vst [vmem:[#allocation2 + $0x598] sm:$0xff] %v1951
        %v1964 = vld [vmem:[%s1631] sm:$0xff]
        %v1965 = vld [vmem:[%s1631 + $0x8] sm:$0xff]
        %v1966 = vld [vmem:[%s1631 + $0x10] sm:$0xff]
        %v1967 = vld [vmem:[%s1631 + $0x18] sm:$0xf]
        %v1968 = vld [vmem:[%s1631 + $0x1c] sm:$0xff]
        %v1969 = vld [vmem:[%s1631 + $0x24] sm:$0xff]
        %v1970 = vld [vmem:[%s1631 + $0x2c] sm:$0xff]
        %v1971 = vld [vmem:[%s1631 + $0x34] sm:$0xf]
        %1980 = vrot.lane.b32.xlu0 %v1964, 38
        %v1981 = vpop.permute.xlu0 %1980
        %1982 = vrot.lane.b32.xlu0 %v1965, 38
        %v1983 = vpop.permute.xlu0 %1982
        %1984 = vrot.lane.b32.xlu0 %v1966, 38
        %v1985 = vpop.permute.xlu0 %1984
        %1986 = vrot.lane.b32.xlu0 %v1967, 38
        %v1987 = vpop.permute.xlu0 %1986
        %1988 = vrot.lane.b32.xlu0 %v1968, 38
        %v1989 = vpop.permute.xlu0 %1988
        %1990 = vrot.lane.b32.xlu0 %v1969, 38
        %v1991 = vpop.permute.xlu0 %1990
        %1992 = vrot.lane.b32.xlu0 %v1970, 38
        %v1993 = vpop.permute.xlu0 %1992
        %1994 = vrot.lane.b32.xlu0 %v1971, 38
        %v1995 = vpop.permute.xlu0 %1994
        %v1996 = vrot.slane %v1981, 4
        %v1997 = vrot.slane %v1983, 4
        %v1998 = vrot.slane %v1985, 4
        %v1999 = vrot.slane %v1987, 4
        %v2000 = vrot.slane %v1989, 4
        %v2001 = vrot.slane %v1991, 4
        %v2002 = vrot.slane %v1993, 4
        %v2003 = vrot.slane %v1995, 4
        %v2004 = vsel %vm293, %v1996, %v1997
        %v2005 = vsel %vm620, %v1981, %v2004
        %v2006 = vsel %vm293, %v1997, %v1998
        %v2007 = vsel %vm620, %v1983, %v2006
        %v2008 = vsel %vm293, %v1998, %v1999
        %v2009 = vsel %vm620, %v1985, %v2008
        %v2010 = vsel %vm293, %v2000, %v2001
        %v2011 = vsel %vm620, %v1989, %v2010
        %v2012 = vsel %vm293, %v2001, %v2002
        %v2013 = vsel %vm620, %v1991, %v2012
        %v2014 = vsel %vm293, %v2002, %v2003
        %v2015 = vsel %vm620, %v1993, %v2014
        %2022 = vst [vmem:[#allocation2 + $0x5a0] sm:$0xff] %v2005
        %2023 = vst [vmem:[#allocation2 + $0x5a8] sm:$0xff] %v2007
        %2024 = vst [vmem:[#allocation2 + $0x5b0] sm:$0xff] %v2009
        %2025 = vst [vmem:[#allocation2 + $0x5b8] sm:$0xff] %v2011
        %2026 = vst [vmem:[#allocation2 + $0x5c0] sm:$0xff] %v2013
        %2027 = vst [vmem:[#allocation2 + $0x5c8] sm:$0xff] %v2015
        %v2028 = vld [vmem:[%s1631] sm:$0xff]
        %v2029 = vld [vmem:[%s1631 + $0x8] sm:$0xff]
        %v2030 = vld [vmem:[%s1631 + $0x10] sm:$0xff]
        %v2031 = vld [vmem:[%s1631 + $0x18] sm:$0xf]
        %v2032 = vld [vmem:[%s1631 + $0x1c] sm:$0xff]
        %v2033 = vld [vmem:[%s1631 + $0x24] sm:$0xff]
        %v2034 = vld [vmem:[%s1631 + $0x2c] sm:$0xff]
        %v2035 = vld [vmem:[%s1631 + $0x34] sm:$0xf]
        %2044 = vrot.lane.b32.xlu0 %v2028, 37
        %v2045 = vpop.permute.xlu0 %2044
        %2046 = vrot.lane.b32.xlu0 %v2029, 37
        %v2047 = vpop.permute.xlu0 %2046
        %2048 = vrot.lane.b32.xlu0 %v2030, 37
        %v2049 = vpop.permute.xlu0 %2048
        %2050 = vrot.lane.b32.xlu0 %v2031, 37
        %v2051 = vpop.permute.xlu0 %2050
        %2052 = vrot.lane.b32.xlu0 %v2032, 37
        %v2053 = vpop.permute.xlu0 %2052
        %2054 = vrot.lane.b32.xlu0 %v2033, 37
        %v2055 = vpop.permute.xlu0 %2054
        %2056 = vrot.lane.b32.xlu0 %v2034, 37
        %v2057 = vpop.permute.xlu0 %2056
        %2058 = vrot.lane.b32.xlu0 %v2035, 37
        %v2059 = vpop.permute.xlu0 %2058
        %v2060 = vrot.slane %v2045, 4
        %v2061 = vrot.slane %v2047, 4
        %v2062 = vrot.slane %v2049, 4
        %v2063 = vrot.slane %v2051, 4
        %v2064 = vrot.slane %v2053, 4
        %v2065 = vrot.slane %v2055, 4
        %v2066 = vrot.slane %v2057, 4
        %v2067 = vrot.slane %v2059, 4
        %v2068 = vsel %vm293, %v2060, %v2061
        %v2069 = vsel %vm685, %v2045, %v2068
        %v2070 = vsel %vm293, %v2061, %v2062
        %v2071 = vsel %vm685, %v2047, %v2070
        %v2072 = vsel %vm293, %v2062, %v2063
        %v2073 = vsel %vm685, %v2049, %v2072
        %v2074 = vsel %vm293, %v2064, %v2065
        %v2075 = vsel %vm685, %v2053, %v2074
        %v2076 = vsel %vm293, %v2065, %v2066
        %v2077 = vsel %vm685, %v2055, %v2076
        %v2078 = vsel %vm293, %v2066, %v2067
        %v2079 = vsel %vm685, %v2057, %v2078
        %2086 = vst [vmem:[#allocation2 + $0x5d0] sm:$0xff] %v2069
        %2087 = vst [vmem:[#allocation2 + $0x5d8] sm:$0xff] %v2071
        %2088 = vst [vmem:[#allocation2 + $0x5e0] sm:$0xff] %v2073
        %2089 = vst [vmem:[#allocation2 + $0x5e8] sm:$0xff] %v2075
        %2090 = vst [vmem:[#allocation2 + $0x5f0] sm:$0xff] %v2077
        %2091 = vst [vmem:[#allocation2 + $0x5f8] sm:$0xff] %v2079
        %s2092 = scalar_lea.vmem %s208, 224 [#allocation3]
        %v2093 = vld [vmem:[%s2092] sm:$0xff]
        %v2094 = vld [vmem:[%s2092 + $0x8] sm:$0xff]
        %v2095 = vld [vmem:[%s2092 + $0x10] sm:$0xff]
        %v2096 = vld [vmem:[%s2092 + $0x1c] sm:$0xff]
        %v2097 = vld [vmem:[%s2092 + $0x24] sm:$0xff]
        %v2098 = vld [vmem:[%s2092 + $0x2c] sm:$0xff]
        %2099 = vst [vmem:[#allocation2 + $0x600] sm:$0xff] %v2093
        %2100 = vst [vmem:[#allocation2 + $0x608] sm:$0xff] %v2094
        %2101 = vst [vmem:[#allocation2 + $0x610] sm:$0xff] %v2095
        %2102 = vst [vmem:[#allocation2 + $0x618] sm:$0xff] %v2096
        %2103 = vst [vmem:[#allocation2 + $0x620] sm:$0xff] %v2097
        %2104 = vst [vmem:[#allocation2 + $0x628] sm:$0xff] %v2098
        %v2105 = vld [vmem:[%s2092] sm:$0xff]
        %v2106 = vld [vmem:[%s2092 + $0x8] sm:$0xff]
        %v2107 = vld [vmem:[%s2092 + $0x10] sm:$0xff]
        %v2108 = vld [vmem:[%s2092 + $0x18] sm:$0xf]
        %v2109 = vld [vmem:[%s2092 + $0x1c] sm:$0xff]
        %v2110 = vld [vmem:[%s2092 + $0x24] sm:$0xff]
        %v2111 = vld [vmem:[%s2092 + $0x2c] sm:$0xff]
        %v2112 = vld [vmem:[%s2092 + $0x34] sm:$0xf]
        %2121 = vrot.lane.b32.xlu0 %v2105, 127
        %v2122 = vpop.permute.xlu0 %2121
        %2123 = vrot.lane.b32.xlu0 %v2106, 127
        %v2124 = vpop.permute.xlu0 %2123
        %2125 = vrot.lane.b32.xlu0 %v2107, 127
        %v2126 = vpop.permute.xlu0 %2125
        %2127 = vrot.lane.b32.xlu0 %v2108, 127
        %v2128 = vpop.permute.xlu0 %2127
        %2129 = vrot.lane.b32.xlu0 %v2109, 127
        %v2130 = vpop.permute.xlu0 %2129
        %2131 = vrot.lane.b32.xlu0 %v2110, 127
        %v2132 = vpop.permute.xlu0 %2131
        %2133 = vrot.lane.b32.xlu0 %v2111, 127
        %v2134 = vpop.permute.xlu0 %2133
        %2135 = vrot.lane.b32.xlu0 %v2112, 127
        %v2136 = vpop.permute.xlu0 %2135
        %v2137 = vrot.slane %v2122, 4
        %v2138 = vrot.slane %v2124, 4
        %v2139 = vrot.slane %v2126, 4
        %v2140 = vrot.slane %v2128, 4
        %v2141 = vrot.slane %v2130, 4
        %v2142 = vrot.slane %v2132, 4
        %v2143 = vrot.slane %v2134, 4
        %v2144 = vrot.slane %v2136, 4
        %v2145 = vsel %vm293, %v2137, %v2138
        %v2146 = vsel %vm295, %v2122, %v2145
        %v2147 = vsel %vm293, %v2138, %v2139
        %v2148 = vsel %vm295, %v2124, %v2147
        %v2149 = vsel %vm293, %v2139, %v2140
        %v2150 = vsel %vm295, %v2126, %v2149
        %v2151 = vsel %vm293, %v2141, %v2142
        %v2152 = vsel %vm295, %v2130, %v2151
        %v2153 = vsel %vm293, %v2142, %v2143
        %v2154 = vsel %vm295, %v2132, %v2153
        %v2155 = vsel %vm293, %v2143, %v2144
        %v2156 = vsel %vm295, %v2134, %v2155
        %2163 = vst [vmem:[#allocation2 + $0x630] sm:$0xff] %v2146
        %2164 = vst [vmem:[#allocation2 + $0x638] sm:$0xff] %v2148
        %2165 = vst [vmem:[#allocation2 + $0x640] sm:$0xff] %v2150
        %2166 = vst [vmem:[#allocation2 + $0x648] sm:$0xff] %v2152
        %2167 = vst [vmem:[#allocation2 + $0x650] sm:$0xff] %v2154
        %2168 = vst [vmem:[#allocation2 + $0x658] sm:$0xff] %v2156
        %v2169 = vld [vmem:[%s2092] sm:$0xff]
        %v2170 = vld [vmem:[%s2092 + $0x8] sm:$0xff]
        %v2171 = vld [vmem:[%s2092 + $0x10] sm:$0xff]
        %v2172 = vld [vmem:[%s2092 + $0x18] sm:$0xf]
        %v2173 = vld [vmem:[%s2092 + $0x1c] sm:$0xff]
        %v2174 = vld [vmem:[%s2092 + $0x24] sm:$0xff]
        %v2175 = vld [vmem:[%s2092 + $0x2c] sm:$0xff]
        %v2176 = vld [vmem:[%s2092 + $0x34] sm:$0xf]
        %2185 = vrot.lane.b32.xlu0 %v2169, 119
        %v2186 = vpop.permute.xlu0 %2185
        %2187 = vrot.lane.b32.xlu0 %v2170, 119
        %v2188 = vpop.permute.xlu0 %2187
        %2189 = vrot.lane.b32.xlu0 %v2171, 119
        %v2190 = vpop.permute.xlu0 %2189
        %2191 = vrot.lane.b32.xlu0 %v2172, 119
        %v2192 = vpop.permute.xlu0 %2191
        %2193 = vrot.lane.b32.xlu0 %v2173, 119
        %v2194 = vpop.permute.xlu0 %2193
        %2195 = vrot.lane.b32.xlu0 %v2174, 119
        %v2196 = vpop.permute.xlu0 %2195
        %2197 = vrot.lane.b32.xlu0 %v2175, 119
        %v2198 = vpop.permute.xlu0 %2197
        %2199 = vrot.lane.b32.xlu0 %v2176, 119
        %v2200 = vpop.permute.xlu0 %2199
        %v2201 = vrot.slane %v2186, 4
        %v2202 = vrot.slane %v2188, 4
        %v2203 = vrot.slane %v2190, 4
        %v2204 = vrot.slane %v2192, 4
        %v2205 = vrot.slane %v2194, 4
        %v2206 = vrot.slane %v2196, 4
        %v2207 = vrot.slane %v2198, 4
        %v2208 = vrot.slane %v2200, 4
        %v2209 = vsel %vm293, %v2201, %v2202
        %v2210 = vsel %vm360, %v2186, %v2209
        %v2211 = vsel %vm293, %v2202, %v2203
        %v2212 = vsel %vm360, %v2188, %v2211
        %v2213 = vsel %vm293, %v2203, %v2204
        %v2214 = vsel %vm360, %v2190, %v2213
        %v2215 = vsel %vm293, %v2205, %v2206
        %v2216 = vsel %vm360, %v2194, %v2215
        %v2217 = vsel %vm293, %v2206, %v2207
        %v2218 = vsel %vm360, %v2196, %v2217
        %v2219 = vsel %vm293, %v2207, %v2208
        %v2220 = vsel %vm360, %v2198, %v2219
        %2227 = vst [vmem:[#allocation2 + $0x660] sm:$0xff] %v2210
        %2228 = vst [vmem:[#allocation2 + $0x668] sm:$0xff] %v2212
        %2229 = vst [vmem:[#allocation2 + $0x670] sm:$0xff] %v2214
        %2230 = vst [vmem:[#allocation2 + $0x678] sm:$0xff] %v2216
        %2231 = vst [vmem:[#allocation2 + $0x680] sm:$0xff] %v2218
        %2232 = vst [vmem:[#allocation2 + $0x688] sm:$0xff] %v2220
        %v2233 = vld [vmem:[%s2092] sm:$0xff]
        %v2234 = vld [vmem:[%s2092 + $0x8] sm:$0xff]
        %v2235 = vld [vmem:[%s2092 + $0x10] sm:$0xff]
        %v2236 = vld [vmem:[%s2092 + $0x18] sm:$0xf]
        %v2237 = vld [vmem:[%s2092 + $0x1c] sm:$0xff]
        %v2238 = vld [vmem:[%s2092 + $0x24] sm:$0xff]
        %v2239 = vld [vmem:[%s2092 + $0x2c] sm:$0xff]
        %v2240 = vld [vmem:[%s2092 + $0x34] sm:$0xf]
        %2249 = vrot.lane.b32.xlu0 %v2233, 118
        %v2250 = vpop.permute.xlu0 %2249
        %2251 = vrot.lane.b32.xlu0 %v2234, 118
        %v2252 = vpop.permute.xlu0 %2251
        %2253 = vrot.lane.b32.xlu0 %v2235, 118
        %v2254 = vpop.permute.xlu0 %2253
        %2255 = vrot.lane.b32.xlu0 %v2236, 118
        %v2256 = vpop.permute.xlu0 %2255
        %2257 = vrot.lane.b32.xlu0 %v2237, 118
        %v2258 = vpop.permute.xlu0 %2257
        %2259 = vrot.lane.b32.xlu0 %v2238, 118
        %v2260 = vpop.permute.xlu0 %2259
        %2261 = vrot.lane.b32.xlu0 %v2239, 118
        %v2262 = vpop.permute.xlu0 %2261
        %2263 = vrot.lane.b32.xlu0 %v2240, 118
        %v2264 = vpop.permute.xlu0 %2263
        %v2265 = vrot.slane %v2250, 4
        %v2266 = vrot.slane %v2252, 4
        %v2267 = vrot.slane %v2254, 4
        %v2268 = vrot.slane %v2256, 4
        %v2269 = vrot.slane %v2258, 4
        %v2270 = vrot.slane %v2260, 4
        %v2271 = vrot.slane %v2262, 4
        %v2272 = vrot.slane %v2264, 4
        %v2273 = vsel %vm293, %v2265, %v2266
        %v2274 = vsel %vm425, %v2250, %v2273
        %v2275 = vsel %vm293, %v2266, %v2267
        %v2276 = vsel %vm425, %v2252, %v2275
        %v2277 = vsel %vm293, %v2267, %v2268
        %v2278 = vsel %vm425, %v2254, %v2277
        %v2279 = vsel %vm293, %v2269, %v2270
        %v2280 = vsel %vm425, %v2258, %v2279
        %v2281 = vsel %vm293, %v2270, %v2271
        %v2282 = vsel %vm425, %v2260, %v2281
        %v2283 = vsel %vm293, %v2271, %v2272
        %v2284 = vsel %vm425, %v2262, %v2283
        %2291 = vst [vmem:[#allocation2 + $0x690] sm:$0xff] %v2274
        %2292 = vst [vmem:[#allocation2 + $0x698] sm:$0xff] %v2276
        %2293 = vst [vmem:[#allocation2 + $0x6a0] sm:$0xff] %v2278
        %2294 = vst [vmem:[#allocation2 + $0x6a8] sm:$0xff] %v2280
        %2295 = vst [vmem:[#allocation2 + $0x6b0] sm:$0xff] %v2282
        %2296 = vst [vmem:[#allocation2 + $0x6b8] sm:$0xff] %v2284
        %v2297 = vld [vmem:[%s2092] sm:$0xff]
        %v2298 = vld [vmem:[%s2092 + $0x8] sm:$0xff]
        %v2299 = vld [vmem:[%s2092 + $0x10] sm:$0xff]
        %v2300 = vld [vmem:[%s2092 + $0x18] sm:$0xf]
        %v2301 = vld [vmem:[%s2092 + $0x1c] sm:$0xff]
        %v2302 = vld [vmem:[%s2092 + $0x24] sm:$0xff]
        %v2303 = vld [vmem:[%s2092 + $0x2c] sm:$0xff]
        %v2304 = vld [vmem:[%s2092 + $0x34] sm:$0xf]
        %2313 = vrot.lane.b32.xlu0 %v2297, 47
        %v2314 = vpop.permute.xlu0 %2313
        %2315 = vrot.lane.b32.xlu0 %v2298, 47
        %v2316 = vpop.permute.xlu0 %2315
        %2317 = vrot.lane.b32.xlu0 %v2299, 47
        %v2318 = vpop.permute.xlu0 %2317
        %2319 = vrot.lane.b32.xlu0 %v2300, 47
        %v2320 = vpop.permute.xlu0 %2319
        %2321 = vrot.lane.b32.xlu0 %v2301, 47
        %v2322 = vpop.permute.xlu0 %2321
        %2323 = vrot.lane.b32.xlu0 %v2302, 47
        %v2324 = vpop.permute.xlu0 %2323
        %2325 = vrot.lane.b32.xlu0 %v2303, 47
        %v2326 = vpop.permute.xlu0 %2325
        %2327 = vrot.lane.b32.xlu0 %v2304, 47
        %v2328 = vpop.permute.xlu0 %2327
        %v2329 = vrot.slane %v2314, 4
        %v2330 = vrot.slane %v2316, 4
        %v2331 = vrot.slane %v2318, 4
        %v2332 = vrot.slane %v2320, 4
        %v2333 = vrot.slane %v2322, 4
        %v2334 = vrot.slane %v2324, 4
        %v2335 = vrot.slane %v2326, 4
        %v2336 = vrot.slane %v2328, 4
        %v2337 = vsel %vm293, %v2329, %v2330
        %v2338 = vsel %vm490, %v2314, %v2337
        %v2339 = vsel %vm293, %v2330, %v2331
        %v2340 = vsel %vm490, %v2316, %v2339
        %v2341 = vsel %vm293, %v2331, %v2332
        %v2342 = vsel %vm490, %v2318, %v2341
        %v2343 = vsel %vm293, %v2333, %v2334
        %v2344 = vsel %vm490, %v2322, %v2343
        %v2345 = vsel %vm293, %v2334, %v2335
        %v2346 = vsel %vm490, %v2324, %v2345
        %v2347 = vsel %vm293, %v2335, %v2336
        %v2348 = vsel %vm490, %v2326, %v2347
        %2355 = vst [vmem:[#allocation2 + $0x6c0] sm:$0xff] %v2338
        %2356 = vst [vmem:[#allocation2 + $0x6c8] sm:$0xff] %v2340
        %2357 = vst [vmem:[#allocation2 + $0x6d0] sm:$0xff] %v2342
        %2358 = vst [vmem:[#allocation2 + $0x6d8] sm:$0xff] %v2344
        %2359 = vst [vmem:[#allocation2 + $0x6e0] sm:$0xff] %v2346
        %2360 = vst [vmem:[#allocation2 + $0x6e8] sm:$0xff] %v2348
        %v2361 = vld [vmem:[%s2092] sm:$0xff]
        %v2362 = vld [vmem:[%s2092 + $0x8] sm:$0xff]
        %v2363 = vld [vmem:[%s2092 + $0x10] sm:$0xff]
        %v2364 = vld [vmem:[%s2092 + $0x18] sm:$0xf]
        %v2365 = vld [vmem:[%s2092 + $0x1c] sm:$0xff]
        %v2366 = vld [vmem:[%s2092 + $0x24] sm:$0xff]
        %v2367 = vld [vmem:[%s2092 + $0x2c] sm:$0xff]
        %v2368 = vld [vmem:[%s2092 + $0x34] sm:$0xf]
        %2377 = vrot.lane.b32.xlu0 %v2361, 46
        %v2378 = vpop.permute.xlu0 %2377
        %2379 = vrot.lane.b32.xlu0 %v2362, 46
        %v2380 = vpop.permute.xlu0 %2379
        %2381 = vrot.lane.b32.xlu0 %v2363, 46
        %v2382 = vpop.permute.xlu0 %2381
        %2383 = vrot.lane.b32.xlu0 %v2364, 46
        %v2384 = vpop.permute.xlu0 %2383
        %2385 = vrot.lane.b32.xlu0 %v2365, 46
        %v2386 = vpop.permute.xlu0 %2385
        %2387 = vrot.lane.b32.xlu0 %v2366, 46
        %v2388 = vpop.permute.xlu0 %2387
        %2389 = vrot.lane.b32.xlu0 %v2367, 46
        %v2390 = vpop.permute.xlu0 %2389
        %2391 = vrot.lane.b32.xlu0 %v2368, 46
        %v2392 = vpop.permute.xlu0 %2391
        %v2393 = vrot.slane %v2378, 4
        %v2394 = vrot.slane %v2380, 4
        %v2395 = vrot.slane %v2382, 4
        %v2396 = vrot.slane %v2384, 4
        %v2397 = vrot.slane %v2386, 4
        %v2398 = vrot.slane %v2388, 4
        %v2399 = vrot.slane %v2390, 4
        %v2400 = vrot.slane %v2392, 4
        %v2401 = vsel %vm293, %v2393, %v2394
        %v2402 = vsel %vm555, %v2378, %v2401
        %v2403 = vsel %vm293, %v2394, %v2395
        %v2404 = vsel %vm555, %v2380, %v2403
        %v2405 = vsel %vm293, %v2395, %v2396
        %v2406 = vsel %vm555, %v2382, %v2405
        %v2407 = vsel %vm293, %v2397, %v2398
        %v2408 = vsel %vm555, %v2386, %v2407
        %v2409 = vsel %vm293, %v2398, %v2399
        %v2410 = vsel %vm555, %v2388, %v2409
        %v2411 = vsel %vm293, %v2399, %v2400
        %v2412 = vsel %vm555, %v2390, %v2411
        %2419 = vst [vmem:[#allocation2 + $0x6f0] sm:$0xff] %v2402
        %2420 = vst [vmem:[#allocation2 + $0x6f8] sm:$0xff] %v2404
        %2421 = vst [vmem:[#allocation2 + $0x700] sm:$0xff] %v2406
        %2422 = vst [vmem:[#allocation2 + $0x708] sm:$0xff] %v2408
        %2423 = vst [vmem:[#allocation2 + $0x710] sm:$0xff] %v2410
        %2424 = vst [vmem:[#allocation2 + $0x718] sm:$0xff] %v2412
        %v2425 = vld [vmem:[%s2092] sm:$0xff]
        %v2426 = vld [vmem:[%s2092 + $0x8] sm:$0xff]
        %v2427 = vld [vmem:[%s2092 + $0x10] sm:$0xff]
        %v2428 = vld [vmem:[%s2092 + $0x18] sm:$0xf]
        %v2429 = vld [vmem:[%s2092 + $0x1c] sm:$0xff]
        %v2430 = vld [vmem:[%s2092 + $0x24] sm:$0xff]
        %v2431 = vld [vmem:[%s2092 + $0x2c] sm:$0xff]
        %v2432 = vld [vmem:[%s2092 + $0x34] sm:$0xf]
        %2441 = vrot.lane.b32.xlu0 %v2425, 38
        %v2442 = vpop.permute.xlu0 %2441
        %2443 = vrot.lane.b32.xlu0 %v2426, 38
        %v2444 = vpop.permute.xlu0 %2443
        %2445 = vrot.lane.b32.xlu0 %v2427, 38
        %v2446 = vpop.permute.xlu0 %2445
        %2447 = vrot.lane.b32.xlu0 %v2428, 38
        %v2448 = vpop.permute.xlu0 %2447
        %2449 = vrot.lane.b32.xlu0 %v2429, 38
        %v2450 = vpop.permute.xlu0 %2449
        %2451 = vrot.lane.b32.xlu0 %v2430, 38
        %v2452 = vpop.permute.xlu0 %2451
        %2453 = vrot.lane.b32.xlu0 %v2431, 38
        %v2454 = vpop.permute.xlu0 %2453
        %2455 = vrot.lane.b32.xlu0 %v2432, 38
        %v2456 = vpop.permute.xlu0 %2455
        %v2457 = vrot.slane %v2442, 4
        %v2458 = vrot.slane %v2444, 4
        %v2459 = vrot.slane %v2446, 4
        %v2460 = vrot.slane %v2448, 4
        %v2461 = vrot.slane %v2450, 4
        %v2462 = vrot.slane %v2452, 4
        %v2463 = vrot.slane %v2454, 4
        %v2464 = vrot.slane %v2456, 4
        %v2465 = vsel %vm293, %v2457, %v2458
        %v2466 = vsel %vm620, %v2442, %v2465
        %v2467 = vsel %vm293, %v2458, %v2459
        %v2468 = vsel %vm620, %v2444, %v2467
        %v2469 = vsel %vm293, %v2459, %v2460
        %v2470 = vsel %vm620, %v2446, %v2469
        %v2471 = vsel %vm293, %v2461, %v2462
        %v2472 = vsel %vm620, %v2450, %v2471
        %v2473 = vsel %vm293, %v2462, %v2463
        %v2474 = vsel %vm620, %v2452, %v2473
        %v2475 = vsel %vm293, %v2463, %v2464
        %v2476 = vsel %vm620, %v2454, %v2475
        %2483 = vst [vmem:[#allocation2 + $0x720] sm:$0xff] %v2466
        %2484 = vst [vmem:[#allocation2 + $0x728] sm:$0xff] %v2468
        %2485 = vst [vmem:[#allocation2 + $0x730] sm:$0xff] %v2470
        %2486 = vst [vmem:[#allocation2 + $0x738] sm:$0xff] %v2472
        %2487 = vst [vmem:[#allocation2 + $0x740] sm:$0xff] %v2474
        %2488 = vst [vmem:[#allocation2 + $0x748] sm:$0xff] %v2476
        %v2489 = vld [vmem:[%s2092] sm:$0xff]
        %v2490 = vld [vmem:[%s2092 + $0x8] sm:$0xff]
        %v2491 = vld [vmem:[%s2092 + $0x10] sm:$0xff]
        %v2492 = vld [vmem:[%s2092 + $0x18] sm:$0xf]
        %v2493 = vld [vmem:[%s2092 + $0x1c] sm:$0xff]
        %v2494 = vld [vmem:[%s2092 + $0x24] sm:$0xff]
        %v2495 = vld [vmem:[%s2092 + $0x2c] sm:$0xff]
        %v2496 = vld [vmem:[%s2092 + $0x34] sm:$0xf]
        %2505 = vrot.lane.b32.xlu0 %v2489, 37
        %v2506 = vpop.permute.xlu0 %2505
        %2507 = vrot.lane.b32.xlu0 %v2490, 37
        %v2508 = vpop.permute.xlu0 %2507
        %2509 = vrot.lane.b32.xlu0 %v2491, 37
        %v2510 = vpop.permute.xlu0 %2509
        %2511 = vrot.lane.b32.xlu0 %v2492, 37
        %v2512 = vpop.permute.xlu0 %2511
        %2513 = vrot.lane.b32.xlu0 %v2493, 37
        %v2514 = vpop.permute.xlu0 %2513
        %2515 = vrot.lane.b32.xlu0 %v2494, 37
        %v2516 = vpop.permute.xlu0 %2515
        %2517 = vrot.lane.b32.xlu0 %v2495, 37
        %v2518 = vpop.permute.xlu0 %2517
        %2519 = vrot.lane.b32.xlu0 %v2496, 37
        %v2520 = vpop.permute.xlu0 %2519
        %v2521 = vrot.slane %v2506, 4
        %v2522 = vrot.slane %v2508, 4
        %v2523 = vrot.slane %v2510, 4
        %v2524 = vrot.slane %v2512, 4
        %v2525 = vrot.slane %v2514, 4
        %v2526 = vrot.slane %v2516, 4
        %v2527 = vrot.slane %v2518, 4
        %v2528 = vrot.slane %v2520, 4
        %v2529 = vsel %vm293, %v2521, %v2522
        %v2530 = vsel %vm685, %v2506, %v2529
        %v2531 = vsel %vm293, %v2522, %v2523
        %v2532 = vsel %vm685, %v2508, %v2531
        %v2533 = vsel %vm293, %v2523, %v2524
        %v2534 = vsel %vm685, %v2510, %v2533
        %v2535 = vsel %vm293, %v2525, %v2526
        %v2536 = vsel %vm685, %v2514, %v2535
        %v2537 = vsel %vm293, %v2526, %v2527
        %v2538 = vsel %vm685, %v2516, %v2537
        %v2539 = vsel %vm293, %v2527, %v2528
        %v2540 = vsel %vm685, %v2518, %v2539
        %2547 = vst [vmem:[#allocation2 + $0x750] sm:$0xff] %v2530
        %2548 = vst [vmem:[#allocation2 + $0x758] sm:$0xff] %v2532
        %2549 = vst [vmem:[#allocation2 + $0x760] sm:$0xff] %v2534
        %2550 = vst [vmem:[#allocation2 + $0x768] sm:$0xff] %v2536
        %2551 = vst [vmem:[#allocation2 + $0x770] sm:$0xff] %v2538
        %2552 = vst [vmem:[#allocation2 + $0x778] sm:$0xff] %v2540
        %s2553 = scalar_lea.vmem %s208, 280 [#allocation3]
        %v2554 = vld [vmem:[%s2553] sm:$0xff]
        %v2555 = vld [vmem:[%s2553 + $0x8] sm:$0xff]
        %v2556 = vld [vmem:[%s2553 + $0x10] sm:$0xff]
        %v2557 = vld [vmem:[%s2553 + $0x1c] sm:$0xff]
        %v2558 = vld [vmem:[%s2553 + $0x24] sm:$0xff]
        %v2559 = vld [vmem:[%s2553 + $0x2c] sm:$0xff]
        %2560 = vst [vmem:[#allocation2 + $0x780] sm:$0xff] %v2554
        %2561 = vst [vmem:[#allocation2 + $0x788] sm:$0xff] %v2555
        %2562 = vst [vmem:[#allocation2 + $0x790] sm:$0xff] %v2556
        %2563 = vst [vmem:[#allocation2 + $0x798] sm:$0xff] %v2557
        %2564 = vst [vmem:[#allocation2 + $0x7a0] sm:$0xff] %v2558
        %2565 = vst [vmem:[#allocation2 + $0x7a8] sm:$0xff] %v2559
        %v2566 = vld [vmem:[%s2553] sm:$0xff]
        %v2567 = vld [vmem:[%s2553 + $0x8] sm:$0xff]
        %v2568 = vld [vmem:[%s2553 + $0x10] sm:$0xff]
        %v2569 = vld [vmem:[%s2553 + $0x18] sm:$0xf]
        %v2570 = vld [vmem:[%s2553 + $0x1c] sm:$0xff]
        %v2571 = vld [vmem:[%s2553 + $0x24] sm:$0xff]
        %v2572 = vld [vmem:[%s2553 + $0x2c] sm:$0xff]
        %v2573 = vld [vmem:[%s2553 + $0x34] sm:$0xf]
        %2582 = vrot.lane.b32.xlu0 %v2566, 127
        %v2583 = vpop.permute.xlu0 %2582
        %2584 = vrot.lane.b32.xlu0 %v2567, 127
        %v2585 = vpop.permute.xlu0 %2584
        %2586 = vrot.lane.b32.xlu0 %v2568, 127
        %v2587 = vpop.permute.xlu0 %2586
        %2588 = vrot.lane.b32.xlu0 %v2569, 127
        %v2589 = vpop.permute.xlu0 %2588
        %2590 = vrot.lane.b32.xlu0 %v2570, 127
        %v2591 = vpop.permute.xlu0 %2590
        %2592 = vrot.lane.b32.xlu0 %v2571, 127
        %v2593 = vpop.permute.xlu0 %2592
        %2594 = vrot.lane.b32.xlu0 %v2572, 127
        %v2595 = vpop.permute.xlu0 %2594
        %2596 = vrot.lane.b32.xlu0 %v2573, 127
        %v2597 = vpop.permute.xlu0 %2596
        %v2598 = vrot.slane %v2583, 4
        %v2599 = vrot.slane %v2585, 4
        %v2600 = vrot.slane %v2587, 4
        %v2601 = vrot.slane %v2589, 4
        %v2602 = vrot.slane %v2591, 4
        %v2603 = vrot.slane %v2593, 4
        %v2604 = vrot.slane %v2595, 4
        %v2605 = vrot.slane %v2597, 4
        %v2606 = vsel %vm293, %v2598, %v2599
        %v2607 = vsel %vm295, %v2583, %v2606
        %v2608 = vsel %vm293, %v2599, %v2600
        %v2609 = vsel %vm295, %v2585, %v2608
        %v2610 = vsel %vm293, %v2600, %v2601
        %v2611 = vsel %vm295, %v2587, %v2610
        %v2612 = vsel %vm293, %v2602, %v2603
        %v2613 = vsel %vm295, %v2591, %v2612
        %v2614 = vsel %vm293, %v2603, %v2604
        %v2615 = vsel %vm295, %v2593, %v2614
        %v2616 = vsel %vm293, %v2604, %v2605
        %v2617 = vsel %vm295, %v2595, %v2616
        %2624 = vst [vmem:[#allocation2 + $0x7b0] sm:$0xff] %v2607
        %2625 = vst [vmem:[#allocation2 + $0x7b8] sm:$0xff] %v2609
        %2626 = vst [vmem:[#allocation2 + $0x7c0] sm:$0xff] %v2611
        %2627 = vst [vmem:[#allocation2 + $0x7c8] sm:$0xff] %v2613
        %2628 = vst [vmem:[#allocation2 + $0x7d0] sm:$0xff] %v2615
        %2629 = vst [vmem:[#allocation2 + $0x7d8] sm:$0xff] %v2617
        %v2630 = vld [vmem:[%s2553] sm:$0xff]
        %v2631 = vld [vmem:[%s2553 + $0x8] sm:$0xff]
        %v2632 = vld [vmem:[%s2553 + $0x10] sm:$0xff]
        %v2633 = vld [vmem:[%s2553 + $0x18] sm:$0xf]
        %v2634 = vld [vmem:[%s2553 + $0x1c] sm:$0xff]
        %v2635 = vld [vmem:[%s2553 + $0x24] sm:$0xff]
        %v2636 = vld [vmem:[%s2553 + $0x2c] sm:$0xff]
        %v2637 = vld [vmem:[%s2553 + $0x34] sm:$0xf]
        %2646 = vrot.lane.b32.xlu0 %v2630, 119
        %v2647 = vpop.permute.xlu0 %2646
        %2648 = vrot.lane.b32.xlu0 %v2631, 119
        %v2649 = vpop.permute.xlu0 %2648
        %2650 = vrot.lane.b32.xlu0 %v2632, 119
        %v2651 = vpop.permute.xlu0 %2650
        %2652 = vrot.lane.b32.xlu0 %v2633, 119
        %v2653 = vpop.permute.xlu0 %2652
        %2654 = vrot.lane.b32.xlu0 %v2634, 119
        %v2655 = vpop.permute.xlu0 %2654
        %2656 = vrot.lane.b32.xlu0 %v2635, 119
        %v2657 = vpop.permute.xlu0 %2656
        %2658 = vrot.lane.b32.xlu0 %v2636, 119
        %v2659 = vpop.permute.xlu0 %2658
        %2660 = vrot.lane.b32.xlu0 %v2637, 119
        %v2661 = vpop.permute.xlu0 %2660
        %v2662 = vrot.slane %v2647, 4
        %v2663 = vrot.slane %v2649, 4
        %v2664 = vrot.slane %v2651, 4
        %v2665 = vrot.slane %v2653, 4
        %v2666 = vrot.slane %v2655, 4
        %v2667 = vrot.slane %v2657, 4
        %v2668 = vrot.slane %v2659, 4
        %v2669 = vrot.slane %v2661, 4
        %v2670 = vsel %vm293, %v2662, %v2663
        %v2671 = vsel %vm360, %v2647, %v2670
        %v2672 = vsel %vm293, %v2663, %v2664
        %v2673 = vsel %vm360, %v2649, %v2672
        %v2674 = vsel %vm293, %v2664, %v2665
        %v2675 = vsel %vm360, %v2651, %v2674
        %v2676 = vsel %vm293, %v2666, %v2667
        %v2677 = vsel %vm360, %v2655, %v2676
        %v2678 = vsel %vm293, %v2667, %v2668
        %v2679 = vsel %vm360, %v2657, %v2678
        %v2680 = vsel %vm293, %v2668, %v2669
        %v2681 = vsel %vm360, %v2659, %v2680
        %2688 = vst [vmem:[#allocation2 + $0x7e0] sm:$0xff] %v2671
        %2689 = vst [vmem:[#allocation2 + $0x7e8] sm:$0xff] %v2673
        %2690 = vst [vmem:[#allocation2 + $0x7f0] sm:$0xff] %v2675
        %2691 = vst [vmem:[#allocation2 + $0x7f8] sm:$0xff] %v2677
        %2692 = vst [vmem:[#allocation2 + $0x800] sm:$0xff] %v2679
        %2693 = vst [vmem:[#allocation2 + $0x808] sm:$0xff] %v2681
        %v2694 = vld [vmem:[%s2553] sm:$0xff]
        %v2695 = vld [vmem:[%s2553 + $0x8] sm:$0xff]
        %v2696 = vld [vmem:[%s2553 + $0x10] sm:$0xff]
        %v2697 = vld [vmem:[%s2553 + $0x18] sm:$0xf]
        %v2698 = vld [vmem:[%s2553 + $0x1c] sm:$0xff]
        %v2699 = vld [vmem:[%s2553 + $0x24] sm:$0xff]
        %v2700 = vld [vmem:[%s2553 + $0x2c] sm:$0xff]
        %v2701 = vld [vmem:[%s2553 + $0x34] sm:$0xf]
        %2710 = vrot.lane.b32.xlu0 %v2694, 118
        %v2711 = vpop.permute.xlu0 %2710
        %2712 = vrot.lane.b32.xlu0 %v2695, 118
        %v2713 = vpop.permute.xlu0 %2712
        %2714 = vrot.lane.b32.xlu0 %v2696, 118
        %v2715 = vpop.permute.xlu0 %2714
        %2716 = vrot.lane.b32.xlu0 %v2697, 118
        %v2717 = vpop.permute.xlu0 %2716
        %2718 = vrot.lane.b32.xlu0 %v2698, 118
        %v2719 = vpop.permute.xlu0 %2718
        %2720 = vrot.lane.b32.xlu0 %v2699, 118
        %v2721 = vpop.permute.xlu0 %2720
        %2722 = vrot.lane.b32.xlu0 %v2700, 118
        %v2723 = vpop.permute.xlu0 %2722
        %2724 = vrot.lane.b32.xlu0 %v2701, 118
        %v2725 = vpop.permute.xlu0 %2724
        %v2726 = vrot.slane %v2711, 4
        %v2727 = vrot.slane %v2713, 4
        %v2728 = vrot.slane %v2715, 4
        %v2729 = vrot.slane %v2717, 4
        %v2730 = vrot.slane %v2719, 4
        %v2731 = vrot.slane %v2721, 4
        %v2732 = vrot.slane %v2723, 4
        %v2733 = vrot.slane %v2725, 4
        %v2734 = vsel %vm293, %v2726, %v2727
        %v2735 = vsel %vm425, %v2711, %v2734
        %v2736 = vsel %vm293, %v2727, %v2728
        %v2737 = vsel %vm425, %v2713, %v2736
        %v2738 = vsel %vm293, %v2728, %v2729
        %v2739 = vsel %vm425, %v2715, %v2738
        %v2740 = vsel %vm293, %v2730, %v2731
        %v2741 = vsel %vm425, %v2719, %v2740
        %v2742 = vsel %vm293, %v2731, %v2732
        %v2743 = vsel %vm425, %v2721, %v2742
        %v2744 = vsel %vm293, %v2732, %v2733
        %v2745 = vsel %vm425, %v2723, %v2744
        %2752 = vst [vmem:[#allocation2 + $0x810] sm:$0xff] %v2735
        %2753 = vst [vmem:[#allocation2 + $0x818] sm:$0xff] %v2737
        %2754 = vst [vmem:[#allocation2 + $0x820] sm:$0xff] %v2739
        %2755 = vst [vmem:[#allocation2 + $0x828] sm:$0xff] %v2741
        %2756 = vst [vmem:[#allocation2 + $0x830] sm:$0xff] %v2743
        %2757 = vst [vmem:[#allocation2 + $0x838] sm:$0xff] %v2745
        %v2758 = vld [vmem:[%s2553] sm:$0xff]
        %v2759 = vld [vmem:[%s2553 + $0x8] sm:$0xff]
        %v2760 = vld [vmem:[%s2553 + $0x10] sm:$0xff]
        %v2761 = vld [vmem:[%s2553 + $0x18] sm:$0xf]
        %v2762 = vld [vmem:[%s2553 + $0x1c] sm:$0xff]
        %v2763 = vld [vmem:[%s2553 + $0x24] sm:$0xff]
        %v2764 = vld [vmem:[%s2553 + $0x2c] sm:$0xff]
        %v2765 = vld [vmem:[%s2553 + $0x34] sm:$0xf]
        %2774 = vrot.lane.b32.xlu0 %v2758, 47
        %v2775 = vpop.permute.xlu0 %2774
        %2776 = vrot.lane.b32.xlu0 %v2759, 47
        %v2777 = vpop.permute.xlu0 %2776
        %2778 = vrot.lane.b32.xlu0 %v2760, 47
        %v2779 = vpop.permute.xlu0 %2778
        %2780 = vrot.lane.b32.xlu0 %v2761, 47
        %v2781 = vpop.permute.xlu0 %2780
        %2782 = vrot.lane.b32.xlu0 %v2762, 47
        %v2783 = vpop.permute.xlu0 %2782
        %2784 = vrot.lane.b32.xlu0 %v2763, 47
        %v2785 = vpop.permute.xlu0 %2784
        %2786 = vrot.lane.b32.xlu0 %v2764, 47
        %v2787 = vpop.permute.xlu0 %2786
        %2788 = vrot.lane.b32.xlu0 %v2765, 47
        %v2789 = vpop.permute.xlu0 %2788
        %v2790 = vrot.slane %v2775, 4
        %v2791 = vrot.slane %v2777, 4
        %v2792 = vrot.slane %v2779, 4
        %v2793 = vrot.slane %v2781, 4
        %v2794 = vrot.slane %v2783, 4
        %v2795 = vrot.slane %v2785, 4
        %v2796 = vrot.slane %v2787, 4
        %v2797 = vrot.slane %v2789, 4
        %v2798 = vsel %vm293, %v2790, %v2791
        %v2799 = vsel %vm490, %v2775, %v2798
        %v2800 = vsel %vm293, %v2791, %v2792
        %v2801 = vsel %vm490, %v2777, %v2800
        %v2802 = vsel %vm293, %v2792, %v2793
        %v2803 = vsel %vm490, %v2779, %v2802
        %v2804 = vsel %vm293, %v2794, %v2795
        %v2805 = vsel %vm490, %v2783, %v2804
        %v2806 = vsel %vm293, %v2795, %v2796
        %v2807 = vsel %vm490, %v2785, %v2806
        %v2808 = vsel %vm293, %v2796, %v2797
        %v2809 = vsel %vm490, %v2787, %v2808
        %2816 = vst [vmem:[#allocation2 + $0x840] sm:$0xff] %v2799
        %2817 = vst [vmem:[#allocation2 + $0x848] sm:$0xff] %v2801
        %2818 = vst [vmem:[#allocation2 + $0x850] sm:$0xff] %v2803
        %2819 = vst [vmem:[#allocation2 + $0x858] sm:$0xff] %v2805
        %2820 = vst [vmem:[#allocation2 + $0x860] sm:$0xff] %v2807
        %2821 = vst [vmem:[#allocation2 + $0x868] sm:$0xff] %v2809
        %v2822 = vld [vmem:[%s2553] sm:$0xff]
        %v2823 = vld [vmem:[%s2553 + $0x8] sm:$0xff]
        %v2824 = vld [vmem:[%s2553 + $0x10] sm:$0xff]
        %v2825 = vld [vmem:[%s2553 + $0x18] sm:$0xf]
        %v2826 = vld [vmem:[%s2553 + $0x1c] sm:$0xff]
        %v2827 = vld [vmem:[%s2553 + $0x24] sm:$0xff]
        %v2828 = vld [vmem:[%s2553 + $0x2c] sm:$0xff]
        %v2829 = vld [vmem:[%s2553 + $0x34] sm:$0xf]
        %2838 = vrot.lane.b32.xlu0 %v2822, 46
        %v2839 = vpop.permute.xlu0 %2838
        %2840 = vrot.lane.b32.xlu0 %v2823, 46
        %v2841 = vpop.permute.xlu0 %2840
        %2842 = vrot.lane.b32.xlu0 %v2824, 46
        %v2843 = vpop.permute.xlu0 %2842
        %2844 = vrot.lane.b32.xlu0 %v2825, 46
        %v2845 = vpop.permute.xlu0 %2844
        %2846 = vrot.lane.b32.xlu0 %v2826, 46
        %v2847 = vpop.permute.xlu0 %2846
        %2848 = vrot.lane.b32.xlu0 %v2827, 46
        %v2849 = vpop.permute.xlu0 %2848
        %2850 = vrot.lane.b32.xlu0 %v2828, 46
        %v2851 = vpop.permute.xlu0 %2850
        %2852 = vrot.lane.b32.xlu0 %v2829, 46
        %v2853 = vpop.permute.xlu0 %2852
        %v2854 = vrot.slane %v2839, 4
        %v2855 = vrot.slane %v2841, 4
        %v2856 = vrot.slane %v2843, 4
        %v2857 = vrot.slane %v2845, 4
        %v2858 = vrot.slane %v2847, 4
        %v2859 = vrot.slane %v2849, 4
        %v2860 = vrot.slane %v2851, 4
        %v2861 = vrot.slane %v2853, 4
        %v2862 = vsel %vm293, %v2854, %v2855
        %v2863 = vsel %vm555, %v2839, %v2862
        %v2864 = vsel %vm293, %v2855, %v2856
        %v2865 = vsel %vm555, %v2841, %v2864
        %v2866 = vsel %vm293, %v2856, %v2857
        %v2867 = vsel %vm555, %v2843, %v2866
        %v2868 = vsel %vm293, %v2858, %v2859
        %v2869 = vsel %vm555, %v2847, %v2868
        %v2870 = vsel %vm293, %v2859, %v2860
        %v2871 = vsel %vm555, %v2849, %v2870
        %v2872 = vsel %vm293, %v2860, %v2861
        %v2873 = vsel %vm555, %v2851, %v2872
        %2880 = vst [vmem:[#allocation2 + $0x870] sm:$0xff] %v2863
        %2881 = vst [vmem:[#allocation2 + $0x878] sm:$0xff] %v2865
        %2882 = vst [vmem:[#allocation2 + $0x880] sm:$0xff] %v2867
        %2883 = vst [vmem:[#allocation2 + $0x888] sm:$0xff] %v2869
        %2884 = vst [vmem:[#allocation2 + $0x890] sm:$0xff] %v2871
        %2885 = vst [vmem:[#allocation2 + $0x898] sm:$0xff] %v2873
        %v2886 = vld [vmem:[%s2553] sm:$0xff]
        %v2887 = vld [vmem:[%s2553 + $0x8] sm:$0xff]
        %v2888 = vld [vmem:[%s2553 + $0x10] sm:$0xff]
        %v2889 = vld [vmem:[%s2553 + $0x18] sm:$0xf]
        %v2890 = vld [vmem:[%s2553 + $0x1c] sm:$0xff]
        %v2891 = vld [vmem:[%s2553 + $0x24] sm:$0xff]
        %v2892 = vld [vmem:[%s2553 + $0x2c] sm:$0xff]
        %v2893 = vld [vmem:[%s2553 + $0x34] sm:$0xf]
        %2902 = vrot.lane.b32.xlu0 %v2886, 38
        %v2903 = vpop.permute.xlu0 %2902
        %2904 = vrot.lane.b32.xlu0 %v2887, 38
        %v2905 = vpop.permute.xlu0 %2904
        %2906 = vrot.lane.b32.xlu0 %v2888, 38
        %v2907 = vpop.permute.xlu0 %2906
        %2908 = vrot.lane.b32.xlu0 %v2889, 38
        %v2909 = vpop.permute.xlu0 %2908
        %2910 = vrot.lane.b32.xlu0 %v2890, 38
        %v2911 = vpop.permute.xlu0 %2910
        %2912 = vrot.lane.b32.xlu0 %v2891, 38
        %v2913 = vpop.permute.xlu0 %2912
        %2914 = vrot.lane.b32.xlu0 %v2892, 38
        %v2915 = vpop.permute.xlu0 %2914
        %2916 = vrot.lane.b32.xlu0 %v2893, 38
        %v2917 = vpop.permute.xlu0 %2916
        %v2918 = vrot.slane %v2903, 4
        %v2919 = vrot.slane %v2905, 4
        %v2920 = vrot.slane %v2907, 4
        %v2921 = vrot.slane %v2909, 4
        %v2922 = vrot.slane %v2911, 4
        %v2923 = vrot.slane %v2913, 4
        %v2924 = vrot.slane %v2915, 4
        %v2925 = vrot.slane %v2917, 4
        %v2926 = vsel %vm293, %v2918, %v2919
        %v2927 = vsel %vm620, %v2903, %v2926
        %v2928 = vsel %vm293, %v2919, %v2920
        %v2929 = vsel %vm620, %v2905, %v2928
        %v2930 = vsel %vm293, %v2920, %v2921
        %v2931 = vsel %vm620, %v2907, %v2930
        %v2932 = vsel %vm293, %v2922, %v2923
        %v2933 = vsel %vm620, %v2911, %v2932
        %v2934 = vsel %vm293, %v2923, %v2924
        %v2935 = vsel %vm620, %v2913, %v2934
        %v2936 = vsel %vm293, %v2924, %v2925
        %v2937 = vsel %vm620, %v2915, %v2936
        %2944 = vst [vmem:[#allocation2 + $0x8a0] sm:$0xff] %v2927
        %2945 = vst [vmem:[#allocation2 + $0x8a8] sm:$0xff] %v2929
        %2946 = vst [vmem:[#allocation2 + $0x8b0] sm:$0xff] %v2931
        %2947 = vst [vmem:[#allocation2 + $0x8b8] sm:$0xff] %v2933
        %2948 = vst [vmem:[#allocation2 + $0x8c0] sm:$0xff] %v2935
        %2949 = vst [vmem:[#allocation2 + $0x8c8] sm:$0xff] %v2937
        %v2950 = vld [vmem:[%s2553] sm:$0xff]
        %v2951 = vld [vmem:[%s2553 + $0x8] sm:$0xff]
        %v2952 = vld [vmem:[%s2553 + $0x10] sm:$0xff]
        %v2953 = vld [vmem:[%s2553 + $0x18] sm:$0xf]
        %v2954 = vld [vmem:[%s2553 + $0x1c] sm:$0xff]
        %v2955 = vld [vmem:[%s2553 + $0x24] sm:$0xff]
        %v2956 = vld [vmem:[%s2553 + $0x2c] sm:$0xff]
        %v2957 = vld [vmem:[%s2553 + $0x34] sm:$0xf]
        %2966 = vrot.lane.b32.xlu0 %v2950, 37
        %v2967 = vpop.permute.xlu0 %2966
        %2968 = vrot.lane.b32.xlu0 %v2951, 37
        %v2969 = vpop.permute.xlu0 %2968
        %2970 = vrot.lane.b32.xlu0 %v2952, 37
        %v2971 = vpop.permute.xlu0 %2970
        %2972 = vrot.lane.b32.xlu0 %v2953, 37
        %v2973 = vpop.permute.xlu0 %2972
        %2974 = vrot.lane.b32.xlu0 %v2954, 37
        %v2975 = vpop.permute.xlu0 %2974
        %2976 = vrot.lane.b32.xlu0 %v2955, 37
        %v2977 = vpop.permute.xlu0 %2976
        %2978 = vrot.lane.b32.xlu0 %v2956, 37
        %v2979 = vpop.permute.xlu0 %2978
        %2980 = vrot.lane.b32.xlu0 %v2957, 37
        %v2981 = vpop.permute.xlu0 %2980
        %v2982 = vrot.slane %v2967, 4
        %v2983 = vrot.slane %v2969, 4
        %v2984 = vrot.slane %v2971, 4
        %v2985 = vrot.slane %v2973, 4
        %v2986 = vrot.slane %v2975, 4
        %v2987 = vrot.slane %v2977, 4
        %v2988 = vrot.slane %v2979, 4
        %v2989 = vrot.slane %v2981, 4
        %v2990 = vsel %vm293, %v2982, %v2983
        %v2991 = vsel %vm685, %v2967, %v2990
        %v2992 = vsel %vm293, %v2983, %v2984
        %v2993 = vsel %vm685, %v2969, %v2992
        %v2994 = vsel %vm293, %v2984, %v2985
        %v2995 = vsel %vm685, %v2971, %v2994
        %v2996 = vsel %vm293, %v2986, %v2987
        %v2997 = vsel %vm685, %v2975, %v2996
        %v2998 = vsel %vm293, %v2987, %v2988
        %v2999 = vsel %vm685, %v2977, %v2998
        %v3000 = vsel %vm293, %v2988, %v2989
        %v3001 = vsel %vm685, %v2979, %v3000
        %3008 = vst [vmem:[#allocation2 + $0x8d0] sm:$0xff] %v2991
        %3009 = vst [vmem:[#allocation2 + $0x8d8] sm:$0xff] %v2993
        %3010 = vst [vmem:[#allocation2 + $0x8e0] sm:$0xff] %v2995
        %3011 = vst [vmem:[#allocation2 + $0x8e8] sm:$0xff] %v2997
        %3012 = vst [vmem:[#allocation2 + $0x8f0] sm:$0xff] %v2999
        %3013 = vst [vmem:[#allocation2 + $0x8f8] sm:$0xff] %v3001
        %s3014 = scalar_lea.vmem %s208, 336 [#allocation3]
        %v3015 = vld [vmem:[%s3014] sm:$0xff]
        %v3016 = vld [vmem:[%s3014 + $0x8] sm:$0xff]
        %v3017 = vld [vmem:[%s3014 + $0x10] sm:$0xff]
        %v3018 = vld [vmem:[%s3014 + $0x1c] sm:$0xff]
        %v3019 = vld [vmem:[%s3014 + $0x24] sm:$0xff]
        %v3020 = vld [vmem:[%s3014 + $0x2c] sm:$0xff]
        %3021 = vst [vmem:[#allocation2 + $0x900] sm:$0xff] %v3015
        %3022 = vst [vmem:[#allocation2 + $0x908] sm:$0xff] %v3016
        %3023 = vst [vmem:[#allocation2 + $0x910] sm:$0xff] %v3017
        %3024 = vst [vmem:[#allocation2 + $0x918] sm:$0xff] %v3018
        %3025 = vst [vmem:[#allocation2 + $0x920] sm:$0xff] %v3019
        %3026 = vst [vmem:[#allocation2 + $0x928] sm:$0xff] %v3020
        %v3027 = vld [vmem:[%s3014] sm:$0xff]
        %v3028 = vld [vmem:[%s3014 + $0x8] sm:$0xff]
        %v3029 = vld [vmem:[%s3014 + $0x10] sm:$0xff]
        %v3030 = vld [vmem:[%s3014 + $0x18] sm:$0xf]
        %v3031 = vld [vmem:[%s3014 + $0x1c] sm:$0xff]
        %v3032 = vld [vmem:[%s3014 + $0x24] sm:$0xff]
        %v3033 = vld [vmem:[%s3014 + $0x2c] sm:$0xff]
        %v3034 = vld [vmem:[%s3014 + $0x34] sm:$0xf]
        %3043 = vrot.lane.b32.xlu0 %v3027, 127
        %v3044 = vpop.permute.xlu0 %3043
        %3045 = vrot.lane.b32.xlu0 %v3028, 127
        %v3046 = vpop.permute.xlu0 %3045
        %3047 = vrot.lane.b32.xlu0 %v3029, 127
        %v3048 = vpop.permute.xlu0 %3047
        %3049 = vrot.lane.b32.xlu0 %v3030, 127
        %v3050 = vpop.permute.xlu0 %3049
        %3051 = vrot.lane.b32.xlu0 %v3031, 127
        %v3052 = vpop.permute.xlu0 %3051
        %3053 = vrot.lane.b32.xlu0 %v3032, 127
        %v3054 = vpop.permute.xlu0 %3053
        %3055 = vrot.lane.b32.xlu0 %v3033, 127
        %v3056 = vpop.permute.xlu0 %3055
        %3057 = vrot.lane.b32.xlu0 %v3034, 127
        %v3058 = vpop.permute.xlu0 %3057
        %v3059 = vrot.slane %v3044, 4
        %v3060 = vrot.slane %v3046, 4
        %v3061 = vrot.slane %v3048, 4
        %v3062 = vrot.slane %v3050, 4
        %v3063 = vrot.slane %v3052, 4
        %v3064 = vrot.slane %v3054, 4
        %v3065 = vrot.slane %v3056, 4
        %v3066 = vrot.slane %v3058, 4
        %v3067 = vsel %vm293, %v3059, %v3060
        %v3068 = vsel %vm295, %v3044, %v3067
        %v3069 = vsel %vm293, %v3060, %v3061
        %v3070 = vsel %vm295, %v3046, %v3069
        %v3071 = vsel %vm293, %v3061, %v3062
        %v3072 = vsel %vm295, %v3048, %v3071
        %v3073 = vsel %vm293, %v3063, %v3064
        %v3074 = vsel %vm295, %v3052, %v3073
        %v3075 = vsel %vm293, %v3064, %v3065
        %v3076 = vsel %vm295, %v3054, %v3075
        %v3077 = vsel %vm293, %v3065, %v3066
        %v3078 = vsel %vm295, %v3056, %v3077
        %3085 = vst [vmem:[#allocation2 + $0x930] sm:$0xff] %v3068
        %3086 = vst [vmem:[#allocation2 + $0x938] sm:$0xff] %v3070
        %3087 = vst [vmem:[#allocation2 + $0x940] sm:$0xff] %v3072
        %3088 = vst [vmem:[#allocation2 + $0x948] sm:$0xff] %v3074
        %3089 = vst [vmem:[#allocation2 + $0x950] sm:$0xff] %v3076
        %3090 = vst [vmem:[#allocation2 + $0x958] sm:$0xff] %v3078
        %v3091 = vld [vmem:[%s3014] sm:$0xff]
        %v3092 = vld [vmem:[%s3014 + $0x8] sm:$0xff]
        %v3093 = vld [vmem:[%s3014 + $0x10] sm:$0xff]
        %v3094 = vld [vmem:[%s3014 + $0x18] sm:$0xf]
        %v3095 = vld [vmem:[%s3014 + $0x1c] sm:$0xff]
        %v3096 = vld [vmem:[%s3014 + $0x24] sm:$0xff]
        %v3097 = vld [vmem:[%s3014 + $0x2c] sm:$0xff]
        %v3098 = vld [vmem:[%s3014 + $0x34] sm:$0xf]
        %3107 = vrot.lane.b32.xlu0 %v3091, 119
        %v3108 = vpop.permute.xlu0 %3107
        %3109 = vrot.lane.b32.xlu0 %v3092, 119
        %v3110 = vpop.permute.xlu0 %3109
        %3111 = vrot.lane.b32.xlu0 %v3093, 119
        %v3112 = vpop.permute.xlu0 %3111
        %3113 = vrot.lane.b32.xlu0 %v3094, 119
        %v3114 = vpop.permute.xlu0 %3113
        %3115 = vrot.lane.b32.xlu0 %v3095, 119
        %v3116 = vpop.permute.xlu0 %3115
        %3117 = vrot.lane.b32.xlu0 %v3096, 119
        %v3118 = vpop.permute.xlu0 %3117
        %3119 = vrot.lane.b32.xlu0 %v3097, 119
        %v3120 = vpop.permute.xlu0 %3119
        %3121 = vrot.lane.b32.xlu0 %v3098, 119
        %v3122 = vpop.permute.xlu0 %3121
        %v3123 = vrot.slane %v3108, 4
        %v3124 = vrot.slane %v3110, 4
        %v3125 = vrot.slane %v3112, 4
        %v3126 = vrot.slane %v3114, 4
        %v3127 = vrot.slane %v3116, 4
        %v3128 = vrot.slane %v3118, 4
        %v3129 = vrot.slane %v3120, 4
        %v3130 = vrot.slane %v3122, 4
        %v3131 = vsel %vm293, %v3123, %v3124
        %v3132 = vsel %vm360, %v3108, %v3131
        %v3133 = vsel %vm293, %v3124, %v3125
        %v3134 = vsel %vm360, %v3110, %v3133
        %v3135 = vsel %vm293, %v3125, %v3126
        %v3136 = vsel %vm360, %v3112, %v3135
        %v3137 = vsel %vm293, %v3127, %v3128
        %v3138 = vsel %vm360, %v3116, %v3137
        %v3139 = vsel %vm293, %v3128, %v3129
        %v3140 = vsel %vm360, %v3118, %v3139
        %v3141 = vsel %vm293, %v3129, %v3130
        %v3142 = vsel %vm360, %v3120, %v3141
        %3149 = vst [vmem:[#allocation2 + $0x960] sm:$0xff] %v3132
        %3150 = vst [vmem:[#allocation2 + $0x968] sm:$0xff] %v3134
        %3151 = vst [vmem:[#allocation2 + $0x970] sm:$0xff] %v3136
        %3152 = vst [vmem:[#allocation2 + $0x978] sm:$0xff] %v3138
        %3153 = vst [vmem:[#allocation2 + $0x980] sm:$0xff] %v3140
        %3154 = vst [vmem:[#allocation2 + $0x988] sm:$0xff] %v3142
        %v3155 = vld [vmem:[%s3014] sm:$0xff]
        %v3156 = vld [vmem:[%s3014 + $0x8] sm:$0xff]
        %v3157 = vld [vmem:[%s3014 + $0x10] sm:$0xff]
        %v3158 = vld [vmem:[%s3014 + $0x18] sm:$0xf]
        %v3159 = vld [vmem:[%s3014 + $0x1c] sm:$0xff]
        %v3160 = vld [vmem:[%s3014 + $0x24] sm:$0xff]
        %v3161 = vld [vmem:[%s3014 + $0x2c] sm:$0xff]
        %v3162 = vld [vmem:[%s3014 + $0x34] sm:$0xf]
        %3171 = vrot.lane.b32.xlu0 %v3155, 118
        %v3172 = vpop.permute.xlu0 %3171
        %3173 = vrot.lane.b32.xlu0 %v3156, 118
        %v3174 = vpop.permute.xlu0 %3173
        %3175 = vrot.lane.b32.xlu0 %v3157, 118
        %v3176 = vpop.permute.xlu0 %3175
        %3177 = vrot.lane.b32.xlu0 %v3158, 118
        %v3178 = vpop.permute.xlu0 %3177
        %3179 = vrot.lane.b32.xlu0 %v3159, 118
        %v3180 = vpop.permute.xlu0 %3179
        %3181 = vrot.lane.b32.xlu0 %v3160, 118
        %v3182 = vpop.permute.xlu0 %3181
        %3183 = vrot.lane.b32.xlu0 %v3161, 118
        %v3184 = vpop.permute.xlu0 %3183
        %3185 = vrot.lane.b32.xlu0 %v3162, 118
        %v3186 = vpop.permute.xlu0 %3185
        %v3187 = vrot.slane %v3172, 4
        %v3188 = vrot.slane %v3174, 4
        %v3189 = vrot.slane %v3176, 4
        %v3190 = vrot.slane %v3178, 4
        %v3191 = vrot.slane %v3180, 4
        %v3192 = vrot.slane %v3182, 4
        %v3193 = vrot.slane %v3184, 4
        %v3194 = vrot.slane %v3186, 4
        %v3195 = vsel %vm293, %v3187, %v3188
        %v3196 = vsel %vm425, %v3172, %v3195
        %v3197 = vsel %vm293, %v3188, %v3189
        %v3198 = vsel %vm425, %v3174, %v3197
        %v3199 = vsel %vm293, %v3189, %v3190
        %v3200 = vsel %vm425, %v3176, %v3199
        %v3201 = vsel %vm293, %v3191, %v3192
        %v3202 = vsel %vm425, %v3180, %v3201
        %v3203 = vsel %vm293, %v3192, %v3193
        %v3204 = vsel %vm425, %v3182, %v3203
        %v3205 = vsel %vm293, %v3193, %v3194
        %v3206 = vsel %vm425, %v3184, %v3205
        %3213 = vst [vmem:[#allocation2 + $0x990] sm:$0xff] %v3196
        %3214 = vst [vmem:[#allocation2 + $0x998] sm:$0xff] %v3198
        %3215 = vst [vmem:[#allocation2 + $0x9a0] sm:$0xff] %v3200
        %3216 = vst [vmem:[#allocation2 + $0x9a8] sm:$0xff] %v3202
        %3217 = vst [vmem:[#allocation2 + $0x9b0] sm:$0xff] %v3204
        %3218 = vst [vmem:[#allocation2 + $0x9b8] sm:$0xff] %v3206
        %v3219 = vld [vmem:[%s3014] sm:$0xff]
        %v3220 = vld [vmem:[%s3014 + $0x8] sm:$0xff]
        %v3221 = vld [vmem:[%s3014 + $0x10] sm:$0xff]
        %v3222 = vld [vmem:[%s3014 + $0x18] sm:$0xf]
        %v3223 = vld [vmem:[%s3014 + $0x1c] sm:$0xff]
        %v3224 = vld [vmem:[%s3014 + $0x24] sm:$0xff]
        %v3225 = vld [vmem:[%s3014 + $0x2c] sm:$0xff]
        %v3226 = vld [vmem:[%s3014 + $0x34] sm:$0xf]
        %3235 = vrot.lane.b32.xlu0 %v3219, 47
        %v3236 = vpop.permute.xlu0 %3235
        %3237 = vrot.lane.b32.xlu0 %v3220, 47
        %v3238 = vpop.permute.xlu0 %3237
        %3239 = vrot.lane.b32.xlu0 %v3221, 47
        %v3240 = vpop.permute.xlu0 %3239
        %3241 = vrot.lane.b32.xlu0 %v3222, 47
        %v3242 = vpop.permute.xlu0 %3241
        %3243 = vrot.lane.b32.xlu0 %v3223, 47
        %v3244 = vpop.permute.xlu0 %3243
        %3245 = vrot.lane.b32.xlu0 %v3224, 47
        %v3246 = vpop.permute.xlu0 %3245
        %3247 = vrot.lane.b32.xlu0 %v3225, 47
        %v3248 = vpop.permute.xlu0 %3247
        %3249 = vrot.lane.b32.xlu0 %v3226, 47
        %v3250 = vpop.permute.xlu0 %3249
        %v3251 = vrot.slane %v3236, 4
        %v3252 = vrot.slane %v3238, 4
        %v3253 = vrot.slane %v3240, 4
        %v3254 = vrot.slane %v3242, 4
        %v3255 = vrot.slane %v3244, 4
        %v3256 = vrot.slane %v3246, 4
        %v3257 = vrot.slane %v3248, 4
        %v3258 = vrot.slane %v3250, 4
        %v3259 = vsel %vm293, %v3251, %v3252
        %v3260 = vsel %vm490, %v3236, %v3259
        %v3261 = vsel %vm293, %v3252, %v3253
        %v3262 = vsel %vm490, %v3238, %v3261
        %v3263 = vsel %vm293, %v3253, %v3254
        %v3264 = vsel %vm490, %v3240, %v3263
        %v3265 = vsel %vm293, %v3255, %v3256
        %v3266 = vsel %vm490, %v3244, %v3265
        %v3267 = vsel %vm293, %v3256, %v3257
        %v3268 = vsel %vm490, %v3246, %v3267
        %v3269 = vsel %vm293, %v3257, %v3258
        %v3270 = vsel %vm490, %v3248, %v3269
        %3277 = vst [vmem:[#allocation2 + $0x9c0] sm:$0xff] %v3260
        %3278 = vst [vmem:[#allocation2 + $0x9c8] sm:$0xff] %v3262
        %3279 = vst [vmem:[#allocation2 + $0x9d0] sm:$0xff] %v3264
        %3280 = vst [vmem:[#allocation2 + $0x9d8] sm:$0xff] %v3266
        %3281 = vst [vmem:[#allocation2 + $0x9e0] sm:$0xff] %v3268
        %3282 = vst [vmem:[#allocation2 + $0x9e8] sm:$0xff] %v3270
        %v3283 = vld [vmem:[%s3014] sm:$0xff]
        %v3284 = vld [vmem:[%s3014 + $0x8] sm:$0xff]
        %v3285 = vld [vmem:[%s3014 + $0x10] sm:$0xff]
        %v3286 = vld [vmem:[%s3014 + $0x18] sm:$0xf]
        %v3287 = vld [vmem:[%s3014 + $0x1c] sm:$0xff]
        %v3288 = vld [vmem:[%s3014 + $0x24] sm:$0xff]
        %v3289 = vld [vmem:[%s3014 + $0x2c] sm:$0xff]
        %v3290 = vld [vmem:[%s3014 + $0x34] sm:$0xf]
        %3299 = vrot.lane.b32.xlu0 %v3283, 46
        %v3300 = vpop.permute.xlu0 %3299
        %3301 = vrot.lane.b32.xlu0 %v3284, 46
        %v3302 = vpop.permute.xlu0 %3301
        %3303 = vrot.lane.b32.xlu0 %v3285, 46
        %v3304 = vpop.permute.xlu0 %3303
        %3305 = vrot.lane.b32.xlu0 %v3286, 46
        %v3306 = vpop.permute.xlu0 %3305
        %3307 = vrot.lane.b32.xlu0 %v3287, 46
        %v3308 = vpop.permute.xlu0 %3307
        %3309 = vrot.lane.b32.xlu0 %v3288, 46
        %v3310 = vpop.permute.xlu0 %3309
        %3311 = vrot.lane.b32.xlu0 %v3289, 46
        %v3312 = vpop.permute.xlu0 %3311
        %3313 = vrot.lane.b32.xlu0 %v3290, 46
        %v3314 = vpop.permute.xlu0 %3313
        %v3315 = vrot.slane %v3300, 4
        %v3316 = vrot.slane %v3302, 4
        %v3317 = vrot.slane %v3304, 4
        %v3318 = vrot.slane %v3306, 4
        %v3319 = vrot.slane %v3308, 4
        %v3320 = vrot.slane %v3310, 4
        %v3321 = vrot.slane %v3312, 4
        %v3322 = vrot.slane %v3314, 4
        %v3323 = vsel %vm293, %v3315, %v3316
        %v3324 = vsel %vm555, %v3300, %v3323
        %v3325 = vsel %vm293, %v3316, %v3317
        %v3326 = vsel %vm555, %v3302, %v3325
        %v3327 = vsel %vm293, %v3317, %v3318
        %v3328 = vsel %vm555, %v3304, %v3327
        %v3329 = vsel %vm293, %v3319, %v3320
        %v3330 = vsel %vm555, %v3308, %v3329
        %v3331 = vsel %vm293, %v3320, %v3321
        %v3332 = vsel %vm555, %v3310, %v3331
        %v3333 = vsel %vm293, %v3321, %v3322
        %v3334 = vsel %vm555, %v3312, %v3333
        %3341 = vst [vmem:[#allocation2 + $0x9f0] sm:$0xff] %v3324
        %3342 = vst [vmem:[#allocation2 + $0x9f8] sm:$0xff] %v3326
        %3343 = vst [vmem:[#allocation2 + $0xa00] sm:$0xff] %v3328
        %3344 = vst [vmem:[#allocation2 + $0xa08] sm:$0xff] %v3330
        %3345 = vst [vmem:[#allocation2 + $0xa10] sm:$0xff] %v3332
        %3346 = vst [vmem:[#allocation2 + $0xa18] sm:$0xff] %v3334
        %v3347 = vld [vmem:[%s3014] sm:$0xff]
        %v3348 = vld [vmem:[%s3014 + $0x8] sm:$0xff]
        %v3349 = vld [vmem:[%s3014 + $0x10] sm:$0xff]
        %v3350 = vld [vmem:[%s3014 + $0x18] sm:$0xf]
        %v3351 = vld [vmem:[%s3014 + $0x1c] sm:$0xff]
        %v3352 = vld [vmem:[%s3014 + $0x24] sm:$0xff]
        %v3353 = vld [vmem:[%s3014 + $0x2c] sm:$0xff]
        %v3354 = vld [vmem:[%s3014 + $0x34] sm:$0xf]
        %3363 = vrot.lane.b32.xlu0 %v3347, 38
        %v3364 = vpop.permute.xlu0 %3363
        %3365 = vrot.lane.b32.xlu0 %v3348, 38
        %v3366 = vpop.permute.xlu0 %3365
        %3367 = vrot.lane.b32.xlu0 %v3349, 38
        %v3368 = vpop.permute.xlu0 %3367
        %3369 = vrot.lane.b32.xlu0 %v3350, 38
        %v3370 = vpop.permute.xlu0 %3369
        %3371 = vrot.lane.b32.xlu0 %v3351, 38
        %v3372 = vpop.permute.xlu0 %3371
        %3373 = vrot.lane.b32.xlu0 %v3352, 38
        %v3374 = vpop.permute.xlu0 %3373
        %3375 = vrot.lane.b32.xlu0 %v3353, 38
        %v3376 = vpop.permute.xlu0 %3375
        %3377 = vrot.lane.b32.xlu0 %v3354, 38
        %v3378 = vpop.permute.xlu0 %3377
        %v3379 = vrot.slane %v3364, 4
        %v3380 = vrot.slane %v3366, 4
        %v3381 = vrot.slane %v3368, 4
        %v3382 = vrot.slane %v3370, 4
        %v3383 = vrot.slane %v3372, 4
        %v3384 = vrot.slane %v3374, 4
        %v3385 = vrot.slane %v3376, 4
        %v3386 = vrot.slane %v3378, 4
        %v3387 = vsel %vm293, %v3379, %v3380
        %v3388 = vsel %vm620, %v3364, %v3387
        %v3389 = vsel %vm293, %v3380, %v3381
        %v3390 = vsel %vm620, %v3366, %v3389
        %v3391 = vsel %vm293, %v3381, %v3382
        %v3392 = vsel %vm620, %v3368, %v3391
        %v3393 = vsel %vm293, %v3383, %v3384
        %v3394 = vsel %vm620, %v3372, %v3393
        %v3395 = vsel %vm293, %v3384, %v3385
        %v3396 = vsel %vm620, %v3374, %v3395
        %v3397 = vsel %vm293, %v3385, %v3386
        %v3398 = vsel %vm620, %v3376, %v3397
        %3405 = vst [vmem:[#allocation2 + $0xa20] sm:$0xff] %v3388
        %3406 = vst [vmem:[#allocation2 + $0xa28] sm:$0xff] %v3390
        %3407 = vst [vmem:[#allocation2 + $0xa30] sm:$0xff] %v3392
        %3408 = vst [vmem:[#allocation2 + $0xa38] sm:$0xff] %v3394
        %3409 = vst [vmem:[#allocation2 + $0xa40] sm:$0xff] %v3396
        %3410 = vst [vmem:[#allocation2 + $0xa48] sm:$0xff] %v3398
        %v3411 = vld [vmem:[%s3014] sm:$0xff]
        %v3412 = vld [vmem:[%s3014 + $0x8] sm:$0xff]
        %v3413 = vld [vmem:[%s3014 + $0x10] sm:$0xff]
        %v3414 = vld [vmem:[%s3014 + $0x18] sm:$0xf]
        %v3415 = vld [vmem:[%s3014 + $0x1c] sm:$0xff]
        %v3416 = vld [vmem:[%s3014 + $0x24] sm:$0xff]
        %v3417 = vld [vmem:[%s3014 + $0x2c] sm:$0xff]
        %v3418 = vld [vmem:[%s3014 + $0x34] sm:$0xf]
        %3427 = vrot.lane.b32.xlu0 %v3411, 37
        %v3428 = vpop.permute.xlu0 %3427
        %3429 = vrot.lane.b32.xlu0 %v3412, 37
        %v3430 = vpop.permute.xlu0 %3429
        %3431 = vrot.lane.b32.xlu0 %v3413, 37
        %v3432 = vpop.permute.xlu0 %3431
        %3433 = vrot.lane.b32.xlu0 %v3414, 37
        %v3434 = vpop.permute.xlu0 %3433
        %3435 = vrot.lane.b32.xlu0 %v3415, 37
        %v3436 = vpop.permute.xlu0 %3435
        %3437 = vrot.lane.b32.xlu0 %v3416, 37
        %v3438 = vpop.permute.xlu0 %3437
        %3439 = vrot.lane.b32.xlu0 %v3417, 37
        %v3440 = vpop.permute.xlu0 %3439
        %3441 = vrot.lane.b32.xlu0 %v3418, 37
        %v3442 = vpop.permute.xlu0 %3441
        %v3443 = vrot.slane %v3428, 4
        %v3444 = vrot.slane %v3430, 4
        %v3445 = vrot.slane %v3432, 4
        %v3446 = vrot.slane %v3434, 4
        %v3447 = vrot.slane %v3436, 4
        %v3448 = vrot.slane %v3438, 4
        %v3449 = vrot.slane %v3440, 4
        %v3450 = vrot.slane %v3442, 4
        %v3451 = vsel %vm293, %v3443, %v3444
        %v3452 = vsel %vm685, %v3428, %v3451
        %v3453 = vsel %vm293, %v3444, %v3445
        %v3454 = vsel %vm685, %v3430, %v3453
        %v3455 = vsel %vm293, %v3445, %v3446
        %v3456 = vsel %vm685, %v3432, %v3455
        %v3457 = vsel %vm293, %v3447, %v3448
        %v3458 = vsel %vm685, %v3436, %v3457
        %v3459 = vsel %vm293, %v3448, %v3449
        %v3460 = vsel %vm685, %v3438, %v3459
        %v3461 = vsel %vm293, %v3449, %v3450
        %v3462 = vsel %vm685, %v3440, %v3461
        %3469 = vst [vmem:[#allocation2 + $0xa50] sm:$0xff] %v3452
        %3470 = vst [vmem:[#allocation2 + $0xa58] sm:$0xff] %v3454
        %3471 = vst [vmem:[#allocation2 + $0xa60] sm:$0xff] %v3456
        %3472 = vst [vmem:[#allocation2 + $0xa68] sm:$0xff] %v3458
        %3473 = vst [vmem:[#allocation2 + $0xa70] sm:$0xff] %v3460
        %3474 = vst [vmem:[#allocation2 + $0xa78] sm:$0xff] %v3462
        %s3475 = scalar_lea.vmem %s208, 392 [#allocation3]
        %v3476 = vld [vmem:[%s3475] sm:$0xff]
        %v3477 = vld [vmem:[%s3475 + $0x8] sm:$0xff]
        %v3478 = vld [vmem:[%s3475 + $0x10] sm:$0xff]
        %v3479 = vld [vmem:[%s3475 + $0x1c] sm:$0xff]
        %v3480 = vld [vmem:[%s3475 + $0x24] sm:$0xff]
        %v3481 = vld [vmem:[%s3475 + $0x2c] sm:$0xff]
        %3482 = vst [vmem:[#allocation2 + $0xa80] sm:$0xff] %v3476
        %3483 = vst [vmem:[#allocation2 + $0xa88] sm:$0xff] %v3477
        %3484 = vst [vmem:[#allocation2 + $0xa90] sm:$0xff] %v3478
        %3485 = vst [vmem:[#allocation2 + $0xa98] sm:$0xff] %v3479
        %3486 = vst [vmem:[#allocation2 + $0xaa0] sm:$0xff] %v3480
        %3487 = vst [vmem:[#allocation2 + $0xaa8] sm:$0xff] %v3481
        %v3488 = vld [vmem:[%s3475] sm:$0xff]
        %v3489 = vld [vmem:[%s3475 + $0x8] sm:$0xff]
        %v3490 = vld [vmem:[%s3475 + $0x10] sm:$0xff]
        %v3491 = vld [vmem:[%s3475 + $0x18] sm:$0xf]
        %v3492 = vld [vmem:[%s3475 + $0x1c] sm:$0xff]
        %v3493 = vld [vmem:[%s3475 + $0x24] sm:$0xff]
        %v3494 = vld [vmem:[%s3475 + $0x2c] sm:$0xff]
        %v3495 = vld [vmem:[%s3475 + $0x34] sm:$0xf]
        %3504 = vrot.lane.b32.xlu0 %v3488, 127
        %v3505 = vpop.permute.xlu0 %3504
        %3506 = vrot.lane.b32.xlu0 %v3489, 127
        %v3507 = vpop.permute.xlu0 %3506
        %3508 = vrot.lane.b32.xlu0 %v3490, 127
        %v3509 = vpop.permute.xlu0 %3508
        %3510 = vrot.lane.b32.xlu0 %v3491, 127
        %v3511 = vpop.permute.xlu0 %3510
        %3512 = vrot.lane.b32.xlu0 %v3492, 127
        %v3513 = vpop.permute.xlu0 %3512
        %3514 = vrot.lane.b32.xlu0 %v3493, 127
        %v3515 = vpop.permute.xlu0 %3514
        %3516 = vrot.lane.b32.xlu0 %v3494, 127
        %v3517 = vpop.permute.xlu0 %3516
        %3518 = vrot.lane.b32.xlu0 %v3495, 127
        %v3519 = vpop.permute.xlu0 %3518
        %v3520 = vrot.slane %v3505, 4
        %v3521 = vrot.slane %v3507, 4
        %v3522 = vrot.slane %v3509, 4
        %v3523 = vrot.slane %v3511, 4
        %v3524 = vrot.slane %v3513, 4
        %v3525 = vrot.slane %v3515, 4
        %v3526 = vrot.slane %v3517, 4
        %v3527 = vrot.slane %v3519, 4
        %v3528 = vsel %vm293, %v3520, %v3521
        %v3529 = vsel %vm295, %v3505, %v3528
        %v3530 = vsel %vm293, %v3521, %v3522
        %v3531 = vsel %vm295, %v3507, %v3530
        %v3532 = vsel %vm293, %v3522, %v3523
        %v3533 = vsel %vm295, %v3509, %v3532
        %v3534 = vsel %vm293, %v3524, %v3525
        %v3535 = vsel %vm295, %v3513, %v3534
        %v3536 = vsel %vm293, %v3525, %v3526
        %v3537 = vsel %vm295, %v3515, %v3536
        %v3538 = vsel %vm293, %v3526, %v3527
        %v3539 = vsel %vm295, %v3517, %v3538
        %3546 = vst [vmem:[#allocation2 + $0xab0] sm:$0xff] %v3529
        %3547 = vst [vmem:[#allocation2 + $0xab8] sm:$0xff] %v3531
        %3548 = vst [vmem:[#allocation2 + $0xac0] sm:$0xff] %v3533
        %3549 = vst [vmem:[#allocation2 + $0xac8] sm:$0xff] %v3535
        %3550 = vst [vmem:[#allocation2 + $0xad0] sm:$0xff] %v3537
        %3551 = vst [vmem:[#allocation2 + $0xad8] sm:$0xff] %v3539
        %v3552 = vld [vmem:[%s3475] sm:$0xff]
        %v3553 = vld [vmem:[%s3475 + $0x8] sm:$0xff]
        %v3554 = vld [vmem:[%s3475 + $0x10] sm:$0xff]
        %v3555 = vld [vmem:[%s3475 + $0x18] sm:$0xf]
        %v3556 = vld [vmem:[%s3475 + $0x1c] sm:$0xff]
        %v3557 = vld [vmem:[%s3475 + $0x24] sm:$0xff]
        %v3558 = vld [vmem:[%s3475 + $0x2c] sm:$0xff]
        %v3559 = vld [vmem:[%s3475 + $0x34] sm:$0xf]
        %3568 = vrot.lane.b32.xlu0 %v3552, 119
        %v3569 = vpop.permute.xlu0 %3568
        %3570 = vrot.lane.b32.xlu0 %v3553, 119
        %v3571 = vpop.permute.xlu0 %3570
        %3572 = vrot.lane.b32.xlu0 %v3554, 119
        %v3573 = vpop.permute.xlu0 %3572
        %3574 = vrot.lane.b32.xlu0 %v3555, 119
        %v3575 = vpop.permute.xlu0 %3574
        %3576 = vrot.lane.b32.xlu0 %v3556, 119
        %v3577 = vpop.permute.xlu0 %3576
        %3578 = vrot.lane.b32.xlu0 %v3557, 119
        %v3579 = vpop.permute.xlu0 %3578
        %3580 = vrot.lane.b32.xlu0 %v3558, 119
        %v3581 = vpop.permute.xlu0 %3580
        %3582 = vrot.lane.b32.xlu0 %v3559, 119
        %v3583 = vpop.permute.xlu0 %3582
        %v3584 = vrot.slane %v3569, 4
        %v3585 = vrot.slane %v3571, 4
        %v3586 = vrot.slane %v3573, 4
        %v3587 = vrot.slane %v3575, 4
        %v3588 = vrot.slane %v3577, 4
        %v3589 = vrot.slane %v3579, 4
        %v3590 = vrot.slane %v3581, 4
        %v3591 = vrot.slane %v3583, 4
        %v3592 = vsel %vm293, %v3584, %v3585
        %v3593 = vsel %vm360, %v3569, %v3592
        %v3594 = vsel %vm293, %v3585, %v3586
        %v3595 = vsel %vm360, %v3571, %v3594
        %v3596 = vsel %vm293, %v3586, %v3587
        %v3597 = vsel %vm360, %v3573, %v3596
        %v3598 = vsel %vm293, %v3588, %v3589
        %v3599 = vsel %vm360, %v3577, %v3598
        %v3600 = vsel %vm293, %v3589, %v3590
        %v3601 = vsel %vm360, %v3579, %v3600
        %v3602 = vsel %vm293, %v3590, %v3591
        %v3603 = vsel %vm360, %v3581, %v3602
        %3610 = vst [vmem:[#allocation2 + $0xae0] sm:$0xff] %v3593
        %3611 = vst [vmem:[#allocation2 + $0xae8] sm:$0xff] %v3595
        %3612 = vst [vmem:[#allocation2 + $0xaf0] sm:$0xff] %v3597
        %3613 = vst [vmem:[#allocation2 + $0xaf8] sm:$0xff] %v3599
        %3614 = vst [vmem:[#allocation2 + $0xb00] sm:$0xff] %v3601
        %3615 = vst [vmem:[#allocation2 + $0xb08] sm:$0xff] %v3603
        %v3616 = vld [vmem:[%s3475] sm:$0xff]
        %v3617 = vld [vmem:[%s3475 + $0x8] sm:$0xff]
        %v3618 = vld [vmem:[%s3475 + $0x10] sm:$0xff]
        %v3619 = vld [vmem:[%s3475 + $0x18] sm:$0xf]
        %v3620 = vld [vmem:[%s3475 + $0x1c] sm:$0xff]
        %v3621 = vld [vmem:[%s3475 + $0x24] sm:$0xff]
        %v3622 = vld [vmem:[%s3475 + $0x2c] sm:$0xff]
        %v3623 = vld [vmem:[%s3475 + $0x34] sm:$0xf]
        %3632 = vrot.lane.b32.xlu0 %v3616, 118
        %v3633 = vpop.permute.xlu0 %3632
        %3634 = vrot.lane.b32.xlu0 %v3617, 118
        %v3635 = vpop.permute.xlu0 %3634
        %3636 = vrot.lane.b32.xlu0 %v3618, 118
        %v3637 = vpop.permute.xlu0 %3636
        %3638 = vrot.lane.b32.xlu0 %v3619, 118
        %v3639 = vpop.permute.xlu0 %3638
        %3640 = vrot.lane.b32.xlu0 %v3620, 118
        %v3641 = vpop.permute.xlu0 %3640
        %3642 = vrot.lane.b32.xlu0 %v3621, 118
        %v3643 = vpop.permute.xlu0 %3642
        %3644 = vrot.lane.b32.xlu0 %v3622, 118
        %v3645 = vpop.permute.xlu0 %3644
        %3646 = vrot.lane.b32.xlu0 %v3623, 118
        %v3647 = vpop.permute.xlu0 %3646
        %v3648 = vrot.slane %v3633, 4
        %v3649 = vrot.slane %v3635, 4
        %v3650 = vrot.slane %v3637, 4
        %v3651 = vrot.slane %v3639, 4
        %v3652 = vrot.slane %v3641, 4
        %v3653 = vrot.slane %v3643, 4
        %v3654 = vrot.slane %v3645, 4
        %v3655 = vrot.slane %v3647, 4
        %v3656 = vsel %vm293, %v3648, %v3649
        %v3657 = vsel %vm425, %v3633, %v3656
        %v3658 = vsel %vm293, %v3649, %v3650
        %v3659 = vsel %vm425, %v3635, %v3658
        %v3660 = vsel %vm293, %v3650, %v3651
        %v3661 = vsel %vm425, %v3637, %v3660
        %v3662 = vsel %vm293, %v3652, %v3653
        %v3663 = vsel %vm425, %v3641, %v3662
        %v3664 = vsel %vm293, %v3653, %v3654
        %v3665 = vsel %vm425, %v3643, %v3664
        %v3666 = vsel %vm293, %v3654, %v3655
        %v3667 = vsel %vm425, %v3645, %v3666
        %3674 = vst [vmem:[#allocation2 + $0xb10] sm:$0xff] %v3657
        %3675 = vst [vmem:[#allocation2 + $0xb18] sm:$0xff] %v3659
        %3676 = vst [vmem:[#allocation2 + $0xb20] sm:$0xff] %v3661
        %3677 = vst [vmem:[#allocation2 + $0xb28] sm:$0xff] %v3663
        %3678 = vst [vmem:[#allocation2 + $0xb30] sm:$0xff] %v3665
        %3679 = vst [vmem:[#allocation2 + $0xb38] sm:$0xff] %v3667
        %v3680 = vld [vmem:[%s3475] sm:$0xff]
        %v3681 = vld [vmem:[%s3475 + $0x8] sm:$0xff]
        %v3682 = vld [vmem:[%s3475 + $0x10] sm:$0xff]
        %v3683 = vld [vmem:[%s3475 + $0x18] sm:$0xf]
        %v3684 = vld [vmem:[%s3475 + $0x1c] sm:$0xff]
        %v3685 = vld [vmem:[%s3475 + $0x24] sm:$0xff]
        %v3686 = vld [vmem:[%s3475 + $0x2c] sm:$0xff]
        %v3687 = vld [vmem:[%s3475 + $0x34] sm:$0xf]
        %3696 = vrot.lane.b32.xlu0 %v3680, 47
        %v3697 = vpop.permute.xlu0 %3696
        %3698 = vrot.lane.b32.xlu0 %v3681, 47
        %v3699 = vpop.permute.xlu0 %3698
        %3700 = vrot.lane.b32.xlu0 %v3682, 47
        %v3701 = vpop.permute.xlu0 %3700
        %3702 = vrot.lane.b32.xlu0 %v3683, 47
        %v3703 = vpop.permute.xlu0 %3702
        %3704 = vrot.lane.b32.xlu0 %v3684, 47
        %v3705 = vpop.permute.xlu0 %3704
        %3706 = vrot.lane.b32.xlu0 %v3685, 47
        %v3707 = vpop.permute.xlu0 %3706
        %3708 = vrot.lane.b32.xlu0 %v3686, 47
        %v3709 = vpop.permute.xlu0 %3708
        %3710 = vrot.lane.b32.xlu0 %v3687, 47
        %v3711 = vpop.permute.xlu0 %3710
        %v3712 = vrot.slane %v3697, 4
        %v3713 = vrot.slane %v3699, 4
        %v3714 = vrot.slane %v3701, 4
        %v3715 = vrot.slane %v3703, 4
        %v3716 = vrot.slane %v3705, 4
        %v3717 = vrot.slane %v3707, 4
        %v3718 = vrot.slane %v3709, 4
        %v3719 = vrot.slane %v3711, 4
        %v3720 = vsel %vm293, %v3712, %v3713
        %v3721 = vsel %vm490, %v3697, %v3720
        %v3722 = vsel %vm293, %v3713, %v3714
        %v3723 = vsel %vm490, %v3699, %v3722
        %v3724 = vsel %vm293, %v3714, %v3715
        %v3725 = vsel %vm490, %v3701, %v3724
        %v3726 = vsel %vm293, %v3716, %v3717
        %v3727 = vsel %vm490, %v3705, %v3726
        %v3728 = vsel %vm293, %v3717, %v3718
        %v3729 = vsel %vm490, %v3707, %v3728
        %v3730 = vsel %vm293, %v3718, %v3719
        %v3731 = vsel %vm490, %v3709, %v3730
        %3738 = vst [vmem:[#allocation2 + $0xb40] sm:$0xff] %v3721
        %3739 = vst [vmem:[#allocation2 + $0xb48] sm:$0xff] %v3723
        %3740 = vst [vmem:[#allocation2 + $0xb50] sm:$0xff] %v3725
        %3741 = vst [vmem:[#allocation2 + $0xb58] sm:$0xff] %v3727
        %3742 = vst [vmem:[#allocation2 + $0xb60] sm:$0xff] %v3729
        %3743 = vst [vmem:[#allocation2 + $0xb68] sm:$0xff] %v3731
        %v3744 = vld [vmem:[%s3475] sm:$0xff]
        %v3745 = vld [vmem:[%s3475 + $0x8] sm:$0xff]
        %v3746 = vld [vmem:[%s3475 + $0x10] sm:$0xff]
        %v3747 = vld [vmem:[%s3475 + $0x18] sm:$0xf]
        %v3748 = vld [vmem:[%s3475 + $0x1c] sm:$0xff]
        %v3749 = vld [vmem:[%s3475 + $0x24] sm:$0xff]
        %v3750 = vld [vmem:[%s3475 + $0x2c] sm:$0xff]
        %v3751 = vld [vmem:[%s3475 + $0x34] sm:$0xf]
        %3760 = vrot.lane.b32.xlu0 %v3744, 46
        %v3761 = vpop.permute.xlu0 %3760
        %3762 = vrot.lane.b32.xlu0 %v3745, 46
        %v3763 = vpop.permute.xlu0 %3762
        %3764 = vrot.lane.b32.xlu0 %v3746, 46
        %v3765 = vpop.permute.xlu0 %3764
        %3766 = vrot.lane.b32.xlu0 %v3747, 46
        %v3767 = vpop.permute.xlu0 %3766
        %3768 = vrot.lane.b32.xlu0 %v3748, 46
        %v3769 = vpop.permute.xlu0 %3768
        %3770 = vrot.lane.b32.xlu0 %v3749, 46
        %v3771 = vpop.permute.xlu0 %3770
        %3772 = vrot.lane.b32.xlu0 %v3750, 46
        %v3773 = vpop.permute.xlu0 %3772
        %3774 = vrot.lane.b32.xlu0 %v3751, 46
        %v3775 = vpop.permute.xlu0 %3774
        %v3776 = vrot.slane %v3761, 4
        %v3777 = vrot.slane %v3763, 4
        %v3778 = vrot.slane %v3765, 4
        %v3779 = vrot.slane %v3767, 4
        %v3780 = vrot.slane %v3769, 4
        %v3781 = vrot.slane %v3771, 4
        %v3782 = vrot.slane %v3773, 4
        %v3783 = vrot.slane %v3775, 4
        %v3784 = vsel %vm293, %v3776, %v3777
        %v3785 = vsel %vm555, %v3761, %v3784
        %v3786 = vsel %vm293, %v3777, %v3778
        %v3787 = vsel %vm555, %v3763, %v3786
        %v3788 = vsel %vm293, %v3778, %v3779
        %v3789 = vsel %vm555, %v3765, %v3788
        %v3790 = vsel %vm293, %v3780, %v3781
        %v3791 = vsel %vm555, %v3769, %v3790
        %v3792 = vsel %vm293, %v3781, %v3782
        %v3793 = vsel %vm555, %v3771, %v3792
        %v3794 = vsel %vm293, %v3782, %v3783
        %v3795 = vsel %vm555, %v3773, %v3794
        %3802 = vst [vmem:[#allocation2 + $0xb70] sm:$0xff] %v3785
        %3803 = vst [vmem:[#allocation2 + $0xb78] sm:$0xff] %v3787
        %3804 = vst [vmem:[#allocation2 + $0xb80] sm:$0xff] %v3789
        %3805 = vst [vmem:[#allocation2 + $0xb88] sm:$0xff] %v3791
        %3806 = vst [vmem:[#allocation2 + $0xb90] sm:$0xff] %v3793
        %3807 = vst [vmem:[#allocation2 + $0xb98] sm:$0xff] %v3795
        %v3808 = vld [vmem:[%s3475] sm:$0xff]
        %v3809 = vld [vmem:[%s3475 + $0x8] sm:$0xff]
        %v3810 = vld [vmem:[%s3475 + $0x10] sm:$0xff]
        %v3811 = vld [vmem:[%s3475 + $0x18] sm:$0xf]
        %v3812 = vld [vmem:[%s3475 + $0x1c] sm:$0xff]
        %v3813 = vld [vmem:[%s3475 + $0x24] sm:$0xff]
        %v3814 = vld [vmem:[%s3475 + $0x2c] sm:$0xff]
        %v3815 = vld [vmem:[%s3475 + $0x34] sm:$0xf]
        %3824 = vrot.lane.b32.xlu0 %v3808, 38
        %v3825 = vpop.permute.xlu0 %3824
        %3826 = vrot.lane.b32.xlu0 %v3809, 38
        %v3827 = vpop.permute.xlu0 %3826
        %3828 = vrot.lane.b32.xlu0 %v3810, 38
        %v3829 = vpop.permute.xlu0 %3828
        %3830 = vrot.lane.b32.xlu0 %v3811, 38
        %v3831 = vpop.permute.xlu0 %3830
        %3832 = vrot.lane.b32.xlu0 %v3812, 38
        %v3833 = vpop.permute.xlu0 %3832
        %3834 = vrot.lane.b32.xlu0 %v3813, 38
        %v3835 = vpop.permute.xlu0 %3834
        %3836 = vrot.lane.b32.xlu0 %v3814, 38
        %v3837 = vpop.permute.xlu0 %3836
        %3838 = vrot.lane.b32.xlu0 %v3815, 38
        %v3839 = vpop.permute.xlu0 %3838
        %v3840 = vrot.slane %v3825, 4
        %v3841 = vrot.slane %v3827, 4
        %v3842 = vrot.slane %v3829, 4
        %v3843 = vrot.slane %v3831, 4
        %v3844 = vrot.slane %v3833, 4
        %v3845 = vrot.slane %v3835, 4
        %v3846 = vrot.slane %v3837, 4
        %v3847 = vrot.slane %v3839, 4
        %v3848 = vsel %vm293, %v3840, %v3841
        %v3849 = vsel %vm620, %v3825, %v3848
        %v3850 = vsel %vm293, %v3841, %v3842
        %v3851 = vsel %vm620, %v3827, %v3850
        %v3852 = vsel %vm293, %v3842, %v3843
        %v3853 = vsel %vm620, %v3829, %v3852
        %v3854 = vsel %vm293, %v3844, %v3845
        %v3855 = vsel %vm620, %v3833, %v3854
        %v3856 = vsel %vm293, %v3845, %v3846
        %v3857 = vsel %vm620, %v3835, %v3856
        %v3858 = vsel %vm293, %v3846, %v3847
        %v3859 = vsel %vm620, %v3837, %v3858
        %3866 = vst [vmem:[#allocation2 + $0xba0] sm:$0xff] %v3849
        %3867 = vst [vmem:[#allocation2 + $0xba8] sm:$0xff] %v3851
        %3868 = vst [vmem:[#allocation2 + $0xbb0] sm:$0xff] %v3853
        %3869 = vst [vmem:[#allocation2 + $0xbb8] sm:$0xff] %v3855
        %3870 = vst [vmem:[#allocation2 + $0xbc0] sm:$0xff] %v3857
        %3871 = vst [vmem:[#allocation2 + $0xbc8] sm:$0xff] %v3859
        %v3872 = vld [vmem:[%s3475] sm:$0xff]
        %v3873 = vld [vmem:[%s3475 + $0x8] sm:$0xff]
        %v3874 = vld [vmem:[%s3475 + $0x10] sm:$0xff]
        %v3875 = vld [vmem:[%s3475 + $0x18] sm:$0xf]
        %v3876 = vld [vmem:[%s3475 + $0x1c] sm:$0xff]
        %v3877 = vld [vmem:[%s3475 + $0x24] sm:$0xff]
        %v3878 = vld [vmem:[%s3475 + $0x2c] sm:$0xff]
        %v3879 = vld [vmem:[%s3475 + $0x34] sm:$0xf]
        %3888 = vrot.lane.b32.xlu0 %v3872, 37
        %v3889 = vpop.permute.xlu0 %3888
        %3890 = vrot.lane.b32.xlu0 %v3873, 37
        %v3891 = vpop.permute.xlu0 %3890
        %3892 = vrot.lane.b32.xlu0 %v3874, 37
        %v3893 = vpop.permute.xlu0 %3892
        %3894 = vrot.lane.b32.xlu0 %v3875, 37
        %v3895 = vpop.permute.xlu0 %3894
        %3896 = vrot.lane.b32.xlu0 %v3876, 37
        %v3897 = vpop.permute.xlu0 %3896
        %3898 = vrot.lane.b32.xlu0 %v3877, 37
        %v3899 = vpop.permute.xlu0 %3898
        %3900 = vrot.lane.b32.xlu0 %v3878, 37
        %v3901 = vpop.permute.xlu0 %3900
        %3902 = vrot.lane.b32.xlu0 %v3879, 37
        %v3903 = vpop.permute.xlu0 %3902
        %v3904 = vrot.slane %v3889, 4
        %v3905 = vrot.slane %v3891, 4
        %v3906 = vrot.slane %v3893, 4
        %v3907 = vrot.slane %v3895, 4
        %v3908 = vrot.slane %v3897, 4
        %v3909 = vrot.slane %v3899, 4
        %v3910 = vrot.slane %v3901, 4
        %v3911 = vrot.slane %v3903, 4
        %v3912 = vsel %vm293, %v3904, %v3905
        %v3913 = vsel %vm685, %v3889, %v3912
        %v3914 = vsel %vm293, %v3905, %v3906
        %v3915 = vsel %vm685, %v3891, %v3914
        %v3916 = vsel %vm293, %v3906, %v3907
        %v3917 = vsel %vm685, %v3893, %v3916
        %v3918 = vsel %vm293, %v3908, %v3909
        %v3919 = vsel %vm685, %v3897, %v3918
        %v3920 = vsel %vm293, %v3909, %v3910
        %v3921 = vsel %vm685, %v3899, %v3920
        %v3922 = vsel %vm293, %v3910, %v3911
        %v3923 = vsel %vm685, %v3901, %v3922
        %3930 = vst [vmem:[#allocation2 + $0xbd0] sm:$0xff] %v3913
        %3931 = vst [vmem:[#allocation2 + $0xbd8] sm:$0xff] %v3915
        %3932 = vst [vmem:[#allocation2 + $0xbe0] sm:$0xff] %v3917
        %3933 = vst [vmem:[#allocation2 + $0xbe8] sm:$0xff] %v3919
        %3934 = vst [vmem:[#allocation2 + $0xbf0] sm:$0xff] %v3921
        %3935 = vst [vmem:[#allocation2 + $0xbf8] sm:$0xff] %v3923
        %v3936 = vld [vmem:[#allocation6] sm:$0xff]
        %v3937 = vld [vmem:[#allocation6 + $0x8] sm:$0xff]
        %v3938 = vld [vmem:[#allocation6 + $0x10] sm:$0xff]
        %v3939 = vld [vmem:[#allocation6 + $0x18] sm:$0xff]
        %v3940 = vld [vmem:[#allocation6 + $0x20] sm:$0xff]
        %v3941 = vld [vmem:[#allocation6 + $0x28] sm:$0xff]
        %v3942 = vld [vmem:[#allocation6 + $0x30] sm:$0xff]
        %v3943 = vld [vmem:[#allocation6 + $0x38] sm:$0xff]
        %v3944 = vld [vmem:[#allocation2] sm:$0xff]
        %v3945 = vld [vmem:[#allocation2 + $0x8] sm:$0xff]
        %v3946 = vld [vmem:[#allocation2 + $0x10] sm:$0xff]
        %v3947 = vld [vmem:[#allocation2 + $0x18] sm:$0xff]
        %v3948 = vld [vmem:[#allocation2 + $0x20] sm:$0xff]
        %v3949 = vld [vmem:[#allocation2 + $0x28] sm:$0xff]
        %v3950 = vld [vmem:[#allocation2 + $0x30] sm:$0xff]
        %v3951 = vld [vmem:[#allocation2 + $0x38] sm:$0xff]
        %v3952 = vld [vmem:[#allocation2 + $0x40] sm:$0xff]
        %v3953 = vld [vmem:[#allocation2 + $0x48] sm:$0xff]
        %v3954 = vld [vmem:[#allocation2 + $0x50] sm:$0xff]
        %v3955 = vld [vmem:[#allocation2 + $0x58] sm:$0xff]
        %v3956 = vld [vmem:[#allocation2 + $0x60] sm:$0xff]
        %v3957 = vld [vmem:[#allocation2 + $0x68] sm:$0xff]
        %v3958 = vld [vmem:[#allocation2 + $0x70] sm:$0xff]
        %v3959 = vld [vmem:[#allocation2 + $0x78] sm:$0xff]
        %v3960 = vld [vmem:[#allocation2 + $0x80] sm:$0xff]
        %v3961 = vld [vmem:[#allocation2 + $0x88] sm:$0xff]
        %v3962 = vld [vmem:[#allocation2 + $0x90] sm:$0xff]
        %v3963 = vld [vmem:[#allocation2 + $0x98] sm:$0xff]
        %v3964 = vld [vmem:[#allocation2 + $0xa0] sm:$0xff]
        %v3965 = vld [vmem:[#allocation2 + $0xa8] sm:$0xff]
        %v3966 = vld [vmem:[#allocation2 + $0xb0] sm:$0xff]
        %v3967 = vld [vmem:[#allocation2 + $0xb8] sm:$0xff]
        %v3968 = vld [vmem:[#allocation2 + $0xc0] sm:$0xff]
        %v3969 = vld [vmem:[#allocation2 + $0xc8] sm:$0xff]
        %v3970 = vld [vmem:[#allocation2 + $0xd0] sm:$0xff]
        %v3971 = vld [vmem:[#allocation2 + $0xd8] sm:$0xff]
        %v3972 = vld [vmem:[#allocation2 + $0xe0] sm:$0xff]
        %v3973 = vld [vmem:[#allocation2 + $0xe8] sm:$0xff]
        %v3974 = vld [vmem:[#allocation2 + $0xf0] sm:$0xff]
        %v3975 = vld [vmem:[#allocation2 + $0xf8] sm:$0xff]
        %v3976 = vld [vmem:[#allocation2 + $0x100] sm:$0xff]
        %v3977 = vld [vmem:[#allocation2 + $0x108] sm:$0xff]
        %v3978 = vld [vmem:[#allocation2 + $0x110] sm:$0xff]
        %v3979 = vld [vmem:[#allocation2 + $0x118] sm:$0xff]
        %v3980 = vld [vmem:[#allocation2 + $0x120] sm:$0xff]
        %v3981 = vld [vmem:[#allocation2 + $0x128] sm:$0xff]
        %v3982 = vld [vmem:[#allocation2 + $0x130] sm:$0xff]
        %v3983 = vld [vmem:[#allocation2 + $0x138] sm:$0xff]
        %v3984 = vld [vmem:[#allocation2 + $0x140] sm:$0xff]
        %v3985 = vld [vmem:[#allocation2 + $0x148] sm:$0xff]
        %v3986 = vld [vmem:[#allocation2 + $0x150] sm:$0xff]
        %v3987 = vld [vmem:[#allocation2 + $0x158] sm:$0xff]
        %v3988 = vld [vmem:[#allocation2 + $0x160] sm:$0xff]
        %v3989 = vld [vmem:[#allocation2 + $0x168] sm:$0xff]
        %v3990 = vld [vmem:[#allocation2 + $0x170] sm:$0xff]
        %v3991 = vld [vmem:[#allocation2 + $0x178] sm:$0xff]
        %v3992 = vld [vmem:[#allocation2 + $0x180] sm:$0xff]
        %v3993 = vld [vmem:[#allocation2 + $0x188] sm:$0xff]
        %v3994 = vld [vmem:[#allocation2 + $0x190] sm:$0xff]
        %v3995 = vld [vmem:[#allocation2 + $0x198] sm:$0xff]
        %v3996 = vld [vmem:[#allocation2 + $0x1a0] sm:$0xff]
        %v3997 = vld [vmem:[#allocation2 + $0x1a8] sm:$0xff]
        %v3998 = vld [vmem:[#allocation2 + $0x1b0] sm:$0xff]
        %v3999 = vld [vmem:[#allocation2 + $0x1b8] sm:$0xff]
        %v4000 = vld [vmem:[#allocation2 + $0x1c0] sm:$0xff]
        %v4001 = vld [vmem:[#allocation2 + $0x1c8] sm:$0xff]
        %v4002 = vld [vmem:[#allocation2 + $0x1d0] sm:$0xff]
        %v4003 = vld [vmem:[#allocation2 + $0x1d8] sm:$0xff]
        %v4004 = vld [vmem:[#allocation2 + $0x1e0] sm:$0xff]
        %v4005 = vld [vmem:[#allocation2 + $0x1e8] sm:$0xff]
        %v4006 = vld [vmem:[#allocation2 + $0x1f0] sm:$0xff]
        %v4007 = vld [vmem:[#allocation2 + $0x1f8] sm:$0xff]
        %v4008 = vld [vmem:[#allocation2 + $0x200] sm:$0xff]
        %v4009 = vld [vmem:[#allocation2 + $0x208] sm:$0xff]
        %v4010 = vld [vmem:[#allocation2 + $0x210] sm:$0xff]
        %v4011 = vld [vmem:[#allocation2 + $0x218] sm:$0xff]
        %v4012 = vld [vmem:[#allocation2 + $0x220] sm:$0xff]
        %v4013 = vld [vmem:[#allocation2 + $0x228] sm:$0xff]
        %v4014 = vld [vmem:[#allocation2 + $0x230] sm:$0xff]
        %v4015 = vld [vmem:[#allocation2 + $0x238] sm:$0xff]
        %v4016 = vld [vmem:[#allocation2 + $0x240] sm:$0xff]
        %v4017 = vld [vmem:[#allocation2 + $0x248] sm:$0xff]
        %v4018 = vld [vmem:[#allocation2 + $0x250] sm:$0xff]
        %v4019 = vld [vmem:[#allocation2 + $0x258] sm:$0xff]
        %v4020 = vld [vmem:[#allocation2 + $0x260] sm:$0xff]
        %v4021 = vld [vmem:[#allocation2 + $0x268] sm:$0xff]
        %v4022 = vld [vmem:[#allocation2 + $0x270] sm:$0xff]
        %v4023 = vld [vmem:[#allocation2 + $0x278] sm:$0xff]
        %v4024 = vld [vmem:[#allocation2 + $0x280] sm:$0xff]
        %v4025 = vld [vmem:[#allocation2 + $0x288] sm:$0xff]
        %v4026 = vld [vmem:[#allocation2 + $0x290] sm:$0xff]
        %v4027 = vld [vmem:[#allocation2 + $0x298] sm:$0xff]
        %v4028 = vld [vmem:[#allocation2 + $0x2a0] sm:$0xff]
        %v4029 = vld [vmem:[#allocation2 + $0x2a8] sm:$0xff]
        %v4030 = vld [vmem:[#allocation2 + $0x2b0] sm:$0xff]
        %v4031 = vld [vmem:[#allocation2 + $0x2b8] sm:$0xff]
        %v4032 = vld [vmem:[#allocation2 + $0x2c0] sm:$0xff]
        %v4033 = vld [vmem:[#allocation2 + $0x2c8] sm:$0xff]
        %v4034 = vld [vmem:[#allocation2 + $0x2d0] sm:$0xff]
        %v4035 = vld [vmem:[#allocation2 + $0x2d8] sm:$0xff]
        %v4036 = vld [vmem:[#allocation2 + $0x2e0] sm:$0xff]
        %v4037 = vld [vmem:[#allocation2 + $0x2e8] sm:$0xff]
        %v4038 = vld [vmem:[#allocation2 + $0x2f0] sm:$0xff]
        %v4039 = vld [vmem:[#allocation2 + $0x2f8] sm:$0xff]
        %v4040 = vld [vmem:[#allocation2 + $0x300] sm:$0xff]
        %v4041 = vld [vmem:[#allocation2 + $0x308] sm:$0xff]
        %v4042 = vld [vmem:[#allocation2 + $0x310] sm:$0xff]
        %v4043 = vld [vmem:[#allocation2 + $0x318] sm:$0xff]
        %v4044 = vld [vmem:[#allocation2 + $0x320] sm:$0xff]
        %v4045 = vld [vmem:[#allocation2 + $0x328] sm:$0xff]
        %v4046 = vld [vmem:[#allocation2 + $0x330] sm:$0xff]
        %v4047 = vld [vmem:[#allocation2 + $0x338] sm:$0xff]
        %v4048 = vld [vmem:[#allocation2 + $0x340] sm:$0xff]
        %v4049 = vld [vmem:[#allocation2 + $0x348] sm:$0xff]
        %v4050 = vld [vmem:[#allocation2 + $0x350] sm:$0xff]
        %v4051 = vld [vmem:[#allocation2 + $0x358] sm:$0xff]
        %v4052 = vld [vmem:[#allocation2 + $0x360] sm:$0xff]
        %v4053 = vld [vmem:[#allocation2 + $0x368] sm:$0xff]
        %v4054 = vld [vmem:[#allocation2 + $0x370] sm:$0xff]
        %v4055 = vld [vmem:[#allocation2 + $0x378] sm:$0xff]
        %v4056 = vld [vmem:[#allocation2 + $0x380] sm:$0xff]
        %v4057 = vld [vmem:[#allocation2 + $0x388] sm:$0xff]
        %v4058 = vld [vmem:[#allocation2 + $0x390] sm:$0xff]
        %v4059 = vld [vmem:[#allocation2 + $0x398] sm:$0xff]
        %v4060 = vld [vmem:[#allocation2 + $0x3a0] sm:$0xff]
        %v4061 = vld [vmem:[#allocation2 + $0x3a8] sm:$0xff]
        %v4062 = vld [vmem:[#allocation2 + $0x3b0] sm:$0xff]
        %v4063 = vld [vmem:[#allocation2 + $0x3b8] sm:$0xff]
        %v4064 = vld [vmem:[#allocation2 + $0x3c0] sm:$0xff]
        %v4065 = vld [vmem:[#allocation2 + $0x3c8] sm:$0xff]
        %v4066 = vld [vmem:[#allocation2 + $0x3d0] sm:$0xff]
        %v4067 = vld [vmem:[#allocation2 + $0x3d8] sm:$0xff]
        %v4068 = vld [vmem:[#allocation2 + $0x3e0] sm:$0xff]
        %v4069 = vld [vmem:[#allocation2 + $0x3e8] sm:$0xff]
        %v4070 = vld [vmem:[#allocation2 + $0x3f0] sm:$0xff]
        %v4071 = vld [vmem:[#allocation2 + $0x3f8] sm:$0xff]
        %v4072 = vld [vmem:[#allocation2 + $0x400] sm:$0xff]
        %v4073 = vld [vmem:[#allocation2 + $0x408] sm:$0xff]
        %v4074 = vld [vmem:[#allocation2 + $0x410] sm:$0xff]
        %v4075 = vld [vmem:[#allocation2 + $0x418] sm:$0xff]
        %v4076 = vld [vmem:[#allocation2 + $0x420] sm:$0xff]
        %v4077 = vld [vmem:[#allocation2 + $0x428] sm:$0xff]
        %v4078 = vld [vmem:[#allocation2 + $0x430] sm:$0xff]
        %v4079 = vld [vmem:[#allocation2 + $0x438] sm:$0xff]
        %v4080 = vld [vmem:[#allocation2 + $0x440] sm:$0xff]
        %v4081 = vld [vmem:[#allocation2 + $0x448] sm:$0xff]
        %v4082 = vld [vmem:[#allocation2 + $0x450] sm:$0xff]
        %v4083 = vld [vmem:[#allocation2 + $0x458] sm:$0xff]
        %v4084 = vld [vmem:[#allocation2 + $0x460] sm:$0xff]
        %v4085 = vld [vmem:[#allocation2 + $0x468] sm:$0xff]
        %v4086 = vld [vmem:[#allocation2 + $0x470] sm:$0xff]
        %v4087 = vld [vmem:[#allocation2 + $0x478] sm:$0xff]
        %v4088 = vld [vmem:[#allocation2 + $0x480] sm:$0xff]
        %v4089 = vld [vmem:[#allocation2 + $0x488] sm:$0xff]
        %v4090 = vld [vmem:[#allocation2 + $0x490] sm:$0xff]
        %v4091 = vld [vmem:[#allocation2 + $0x498] sm:$0xff]
        %v4092 = vld [vmem:[#allocation2 + $0x4a0] sm:$0xff]
        %v4093 = vld [vmem:[#allocation2 + $0x4a8] sm:$0xff]
        %v4094 = vld [vmem:[#allocation2 + $0x4b0] sm:$0xff]
        %v4095 = vld [vmem:[#allocation2 + $0x4b8] sm:$0xff]
        %v4096 = vld [vmem:[#allocation2 + $0x4c0] sm:$0xff]
        %v4097 = vld [vmem:[#allocation2 + $0x4c8] sm:$0xff]
        %v4098 = vld [vmem:[#allocation2 + $0x4d0] sm:$0xff]
        %v4099 = vld [vmem:[#allocation2 + $0x4d8] sm:$0xff]
        %v4100 = vld [vmem:[#allocation2 + $0x4e0] sm:$0xff]
        %v4101 = vld [vmem:[#allocation2 + $0x4e8] sm:$0xff]
        %v4102 = vld [vmem:[#allocation2 + $0x4f0] sm:$0xff]
        %v4103 = vld [vmem:[#allocation2 + $0x4f8] sm:$0xff]
        %v4104 = vld [vmem:[#allocation2 + $0x500] sm:$0xff]
        %v4105 = vld [vmem:[#allocation2 + $0x508] sm:$0xff]
        %v4106 = vld [vmem:[#allocation2 + $0x510] sm:$0xff]
        %v4107 = vld [vmem:[#allocation2 + $0x518] sm:$0xff]
        %v4108 = vld [vmem:[#allocation2 + $0x520] sm:$0xff]
        %v4109 = vld [vmem:[#allocation2 + $0x528] sm:$0xff]
        %v4110 = vld [vmem:[#allocation2 + $0x530] sm:$0xff]
        %v4111 = vld [vmem:[#allocation2 + $0x538] sm:$0xff]
        %v4112 = vld [vmem:[#allocation2 + $0x540] sm:$0xff]
        %v4113 = vld [vmem:[#allocation2 + $0x548] sm:$0xff]
        %v4114 = vld [vmem:[#allocation2 + $0x550] sm:$0xff]
        %v4115 = vld [vmem:[#allocation2 + $0x558] sm:$0xff]
        %v4116 = vld [vmem:[#allocation2 + $0x560] sm:$0xff]
        %v4117 = vld [vmem:[#allocation2 + $0x568] sm:$0xff]
        %v4118 = vld [vmem:[#allocation2 + $0x570] sm:$0xff]
        %v4119 = vld [vmem:[#allocation2 + $0x578] sm:$0xff]
        %v4120 = vld [vmem:[#allocation2 + $0x580] sm:$0xff]
        %v4121 = vld [vmem:[#allocation2 + $0x588] sm:$0xff]
        %v4122 = vld [vmem:[#allocation2 + $0x590] sm:$0xff]
        %v4123 = vld [vmem:[#allocation2 + $0x598] sm:$0xff]
        %v4124 = vld [vmem:[#allocation2 + $0x5a0] sm:$0xff]
        %v4125 = vld [vmem:[#allocation2 + $0x5a8] sm:$0xff]
        %v4126 = vld [vmem:[#allocation2 + $0x5b0] sm:$0xff]
        %v4127 = vld [vmem:[#allocation2 + $0x5b8] sm:$0xff]
        %v4128 = vld [vmem:[#allocation2 + $0x5c0] sm:$0xff]
        %v4129 = vld [vmem:[#allocation2 + $0x5c8] sm:$0xff]
        %v4130 = vld [vmem:[#allocation2 + $0x5d0] sm:$0xff]
        %v4131 = vld [vmem:[#allocation2 + $0x5d8] sm:$0xff]
        %v4132 = vld [vmem:[#allocation2 + $0x5e0] sm:$0xff]
        %v4133 = vld [vmem:[#allocation2 + $0x5e8] sm:$0xff]
        %v4134 = vld [vmem:[#allocation2 + $0x5f0] sm:$0xff]
        %v4135 = vld [vmem:[#allocation2 + $0x5f8] sm:$0xff]
        %v4136 = vld [vmem:[#allocation2 + $0x600] sm:$0xff]
        %v4137 = vld [vmem:[#allocation2 + $0x608] sm:$0xff]
        %v4138 = vld [vmem:[#allocation2 + $0x610] sm:$0xff]
        %v4139 = vld [vmem:[#allocation2 + $0x618] sm:$0xff]
        %v4140 = vld [vmem:[#allocation2 + $0x620] sm:$0xff]
        %v4141 = vld [vmem:[#allocation2 + $0x628] sm:$0xff]
        %v4142 = vld [vmem:[#allocation2 + $0x630] sm:$0xff]
        %v4143 = vld [vmem:[#allocation2 + $0x638] sm:$0xff]
        %v4144 = vld [vmem:[#allocation2 + $0x640] sm:$0xff]
        %v4145 = vld [vmem:[#allocation2 + $0x648] sm:$0xff]
        %v4146 = vld [vmem:[#allocation2 + $0x650] sm:$0xff]
        %v4147 = vld [vmem:[#allocation2 + $0x658] sm:$0xff]
        %v4148 = vld [vmem:[#allocation2 + $0x660] sm:$0xff]
        %v4149 = vld [vmem:[#allocation2 + $0x668] sm:$0xff]
        %v4150 = vld [vmem:[#allocation2 + $0x670] sm:$0xff]
        %v4151 = vld [vmem:[#allocation2 + $0x678] sm:$0xff]
        %v4152 = vld [vmem:[#allocation2 + $0x680] sm:$0xff]
        %v4153 = vld [vmem:[#allocation2 + $0x688] sm:$0xff]
        %v4154 = vld [vmem:[#allocation2 + $0x690] sm:$0xff]
        %v4155 = vld [vmem:[#allocation2 + $0x698] sm:$0xff]
        %v4156 = vld [vmem:[#allocation2 + $0x6a0] sm:$0xff]
        %v4157 = vld [vmem:[#allocation2 + $0x6a8] sm:$0xff]
        %v4158 = vld [vmem:[#allocation2 + $0x6b0] sm:$0xff]
        %v4159 = vld [vmem:[#allocation2 + $0x6b8] sm:$0xff]
        %v4160 = vld [vmem:[#allocation2 + $0x6c0] sm:$0xff]
        %v4161 = vld [vmem:[#allocation2 + $0x6c8] sm:$0xff]
        %v4162 = vld [vmem:[#allocation2 + $0x6d0] sm:$0xff]
        %v4163 = vld [vmem:[#allocation2 + $0x6d8] sm:$0xff]
        %v4164 = vld [vmem:[#allocation2 + $0x6e0] sm:$0xff]
        %v4165 = vld [vmem:[#allocation2 + $0x6e8] sm:$0xff]
        %v4166 = vld [vmem:[#allocation2 + $0x6f0] sm:$0xff]
        %v4167 = vld [vmem:[#allocation2 + $0x6f8] sm:$0xff]
        %v4168 = vld [vmem:[#allocation2 + $0x700] sm:$0xff]
        %v4169 = vld [vmem:[#allocation2 + $0x708] sm:$0xff]
        %v4170 = vld [vmem:[#allocation2 + $0x710] sm:$0xff]
        %v4171 = vld [vmem:[#allocation2 + $0x718] sm:$0xff]
        %v4172 = vld [vmem:[#allocation2 + $0x720] sm:$0xff]
        %v4173 = vld [vmem:[#allocation2 + $0x728] sm:$0xff]
        %v4174 = vld [vmem:[#allocation2 + $0x730] sm:$0xff]
        %v4175 = vld [vmem:[#allocation2 + $0x738] sm:$0xff]
        %v4176 = vld [vmem:[#allocation2 + $0x740] sm:$0xff]
        %v4177 = vld [vmem:[#allocation2 + $0x748] sm:$0xff]
        %v4178 = vld [vmem:[#allocation2 + $0x750] sm:$0xff]
        %v4179 = vld [vmem:[#allocation2 + $0x758] sm:$0xff]
        %v4180 = vld [vmem:[#allocation2 + $0x760] sm:$0xff]
        %v4181 = vld [vmem:[#allocation2 + $0x768] sm:$0xff]
        %v4182 = vld [vmem:[#allocation2 + $0x770] sm:$0xff]
        %v4183 = vld [vmem:[#allocation2 + $0x778] sm:$0xff]
        %v4184 = vld [vmem:[#allocation2 + $0x780] sm:$0xff]
        %v4185 = vld [vmem:[#allocation2 + $0x788] sm:$0xff]
        %v4186 = vld [vmem:[#allocation2 + $0x790] sm:$0xff]
        %v4187 = vld [vmem:[#allocation2 + $0x798] sm:$0xff]
        %v4188 = vld [vmem:[#allocation2 + $0x7a0] sm:$0xff]
        %v4189 = vld [vmem:[#allocation2 + $0x7a8] sm:$0xff]
        %v4190 = vld [vmem:[#allocation2 + $0x7b0] sm:$0xff]
        %v4191 = vld [vmem:[#allocation2 + $0x7b8] sm:$0xff]
        %v4192 = vld [vmem:[#allocation2 + $0x7c0] sm:$0xff]
        %v4193 = vld [vmem:[#allocation2 + $0x7c8] sm:$0xff]
        %v4194 = vld [vmem:[#allocation2 + $0x7d0] sm:$0xff]
        %v4195 = vld [vmem:[#allocation2 + $0x7d8] sm:$0xff]
        %v4196 = vld [vmem:[#allocation2 + $0x7e0] sm:$0xff]
        %v4197 = vld [vmem:[#allocation2 + $0x7e8] sm:$0xff]
        %v4198 = vld [vmem:[#allocation2 + $0x7f0] sm:$0xff]
        %v4199 = vld [vmem:[#allocation2 + $0x7f8] sm:$0xff]
        %v4200 = vld [vmem:[#allocation2 + $0x800] sm:$0xff]
        %v4201 = vld [vmem:[#allocation2 + $0x808] sm:$0xff]
        %v4202 = vld [vmem:[#allocation2 + $0x810] sm:$0xff]
        %v4203 = vld [vmem:[#allocation2 + $0x818] sm:$0xff]
        %v4204 = vld [vmem:[#allocation2 + $0x820] sm:$0xff]
        %v4205 = vld [vmem:[#allocation2 + $0x828] sm:$0xff]
        %v4206 = vld [vmem:[#allocation2 + $0x830] sm:$0xff]
        %v4207 = vld [vmem:[#allocation2 + $0x838] sm:$0xff]
        %v4208 = vld [vmem:[#allocation2 + $0x840] sm:$0xff]
        %v4209 = vld [vmem:[#allocation2 + $0x848] sm:$0xff]
        %v4210 = vld [vmem:[#allocation2 + $0x850] sm:$0xff]
        %v4211 = vld [vmem:[#allocation2 + $0x858] sm:$0xff]
        %v4212 = vld [vmem:[#allocation2 + $0x860] sm:$0xff]
        %v4213 = vld [vmem:[#allocation2 + $0x868] sm:$0xff]
        %v4214 = vld [vmem:[#allocation2 + $0x870] sm:$0xff]
        %v4215 = vld [vmem:[#allocation2 + $0x878] sm:$0xff]
        %v4216 = vld [vmem:[#allocation2 + $0x880] sm:$0xff]
        %v4217 = vld [vmem:[#allocation2 + $0x888] sm:$0xff]
        %v4218 = vld [vmem:[#allocation2 + $0x890] sm:$0xff]
        %v4219 = vld [vmem:[#allocation2 + $0x898] sm:$0xff]
        %v4220 = vld [vmem:[#allocation2 + $0x8a0] sm:$0xff]
        %v4221 = vld [vmem:[#allocation2 + $0x8a8] sm:$0xff]
        %v4222 = vld [vmem:[#allocation2 + $0x8b0] sm:$0xff]
        %v4223 = vld [vmem:[#allocation2 + $0x8b8] sm:$0xff]
        %v4224 = vld [vmem:[#allocation2 + $0x8c0] sm:$0xff]
        %v4225 = vld [vmem:[#allocation2 + $0x8c8] sm:$0xff]
        %v4226 = vld [vmem:[#allocation2 + $0x8d0] sm:$0xff]
        %v4227 = vld [vmem:[#allocation2 + $0x8d8] sm:$0xff]
        %v4228 = vld [vmem:[#allocation2 + $0x8e0] sm:$0xff]
        %v4229 = vld [vmem:[#allocation2 + $0x8e8] sm:$0xff]
        %v4230 = vld [vmem:[#allocation2 + $0x8f0] sm:$0xff]
        %v4231 = vld [vmem:[#allocation2 + $0x8f8] sm:$0xff]
        %v4232 = vld [vmem:[#allocation2 + $0x900] sm:$0xff]
        %v4233 = vld [vmem:[#allocation2 + $0x908] sm:$0xff]
        %v4234 = vld [vmem:[#allocation2 + $0x910] sm:$0xff]
        %v4235 = vld [vmem:[#allocation2 + $0x918] sm:$0xff]
        %v4236 = vld [vmem:[#allocation2 + $0x920] sm:$0xff]
        %v4237 = vld [vmem:[#allocation2 + $0x928] sm:$0xff]
        %v4238 = vld [vmem:[#allocation2 + $0x930] sm:$0xff]
        %v4239 = vld [vmem:[#allocation2 + $0x938] sm:$0xff]
        %v4240 = vld [vmem:[#allocation2 + $0x940] sm:$0xff]
        %v4241 = vld [vmem:[#allocation2 + $0x948] sm:$0xff]
        %v4242 = vld [vmem:[#allocation2 + $0x950] sm:$0xff]
        %v4243 = vld [vmem:[#allocation2 + $0x958] sm:$0xff]
        %v4244 = vld [vmem:[#allocation2 + $0x960] sm:$0xff]
        %v4245 = vld [vmem:[#allocation2 + $0x968] sm:$0xff]
        %v4246 = vld [vmem:[#allocation2 + $0x970] sm:$0xff]
        %v4247 = vld [vmem:[#allocation2 + $0x978] sm:$0xff]
        %v4248 = vld [vmem:[#allocation2 + $0x980] sm:$0xff]
        %v4249 = vld [vmem:[#allocation2 + $0x988] sm:$0xff]
        %v4250 = vld [vmem:[#allocation2 + $0x990] sm:$0xff]
        %v4251 = vld [vmem:[#allocation2 + $0x998] sm:$0xff]
        %v4252 = vld [vmem:[#allocation2 + $0x9a0] sm:$0xff]
        %v4253 = vld [vmem:[#allocation2 + $0x9a8] sm:$0xff]
        %v4254 = vld [vmem:[#allocation2 + $0x9b0] sm:$0xff]
        %v4255 = vld [vmem:[#allocation2 + $0x9b8] sm:$0xff]
        %v4256 = vld [vmem:[#allocation2 + $0x9c0] sm:$0xff]
        %v4257 = vld [vmem:[#allocation2 + $0x9c8] sm:$0xff]
        %v4258 = vld [vmem:[#allocation2 + $0x9d0] sm:$0xff]
        %v4259 = vld [vmem:[#allocation2 + $0x9d8] sm:$0xff]
        %v4260 = vld [vmem:[#allocation2 + $0x9e0] sm:$0xff]
        %v4261 = vld [vmem:[#allocation2 + $0x9e8] sm:$0xff]
        %v4262 = vld [vmem:[#allocation2 + $0x9f0] sm:$0xff]
        %v4263 = vld [vmem:[#allocation2 + $0x9f8] sm:$0xff]
        %v4264 = vld [vmem:[#allocation2 + $0xa00] sm:$0xff]
        %v4265 = vld [vmem:[#allocation2 + $0xa08] sm:$0xff]
        %v4266 = vld [vmem:[#allocation2 + $0xa10] sm:$0xff]
        %v4267 = vld [vmem:[#allocation2 + $0xa18] sm:$0xff]
        %v4268 = vld [vmem:[#allocation2 + $0xa20] sm:$0xff]
        %v4269 = vld [vmem:[#allocation2 + $0xa28] sm:$0xff]
        %v4270 = vld [vmem:[#allocation2 + $0xa30] sm:$0xff]
        %v4271 = vld [vmem:[#allocation2 + $0xa38] sm:$0xff]
        %v4272 = vld [vmem:[#allocation2 + $0xa40] sm:$0xff]
        %v4273 = vld [vmem:[#allocation2 + $0xa48] sm:$0xff]
        %v4274 = vld [vmem:[#allocation2 + $0xa50] sm:$0xff]
        %v4275 = vld [vmem:[#allocation2 + $0xa58] sm:$0xff]
        %v4276 = vld [vmem:[#allocation2 + $0xa60] sm:$0xff]
        %v4277 = vld [vmem:[#allocation2 + $0xa68] sm:$0xff]
        %v4278 = vld [vmem:[#allocation2 + $0xa70] sm:$0xff]
        %v4279 = vld [vmem:[#allocation2 + $0xa78] sm:$0xff]
        %v4280 = vld [vmem:[#allocation2 + $0xa80] sm:$0xff]
        %v4281 = vld [vmem:[#allocation2 + $0xa88] sm:$0xff]
        %v4282 = vld [vmem:[#allocation2 + $0xa90] sm:$0xff]
        %v4283 = vld [vmem:[#allocation2 + $0xa98] sm:$0xff]
        %v4284 = vld [vmem:[#allocation2 + $0xaa0] sm:$0xff]
        %v4285 = vld [vmem:[#allocation2 + $0xaa8] sm:$0xff]
        %v4286 = vld [vmem:[#allocation2 + $0xab0] sm:$0xff]
        %v4287 = vld [vmem:[#allocation2 + $0xab8] sm:$0xff]
        %v4288 = vld [vmem:[#allocation2 + $0xac0] sm:$0xff]
        %v4289 = vld [vmem:[#allocation2 + $0xac8] sm:$0xff]
        %v4290 = vld [vmem:[#allocation2 + $0xad0] sm:$0xff]
        %v4291 = vld [vmem:[#allocation2 + $0xad8] sm:$0xff]
        %v4292 = vld [vmem:[#allocation2 + $0xae0] sm:$0xff]
        %v4293 = vld [vmem:[#allocation2 + $0xae8] sm:$0xff]
        %v4294 = vld [vmem:[#allocation2 + $0xaf0] sm:$0xff]
        %v4295 = vld [vmem:[#allocation2 + $0xaf8] sm:$0xff]
        %v4296 = vld [vmem:[#allocation2 + $0xb00] sm:$0xff]
        %v4297 = vld [vmem:[#allocation2 + $0xb08] sm:$0xff]
        %v4298 = vld [vmem:[#allocation2 + $0xb10] sm:$0xff]
        %v4299 = vld [vmem:[#allocation2 + $0xb18] sm:$0xff]
        %v4300 = vld [vmem:[#allocation2 + $0xb20] sm:$0xff]
        %v4301 = vld [vmem:[#allocation2 + $0xb28] sm:$0xff]
        %v4302 = vld [vmem:[#allocation2 + $0xb30] sm:$0xff]
        %v4303 = vld [vmem:[#allocation2 + $0xb38] sm:$0xff]
        %v4304 = vld [vmem:[#allocation2 + $0xb40] sm:$0xff]
        %v4305 = vld [vmem:[#allocation2 + $0xb48] sm:$0xff]
        %v4306 = vld [vmem:[#allocation2 + $0xb50] sm:$0xff]
        %v4307 = vld [vmem:[#allocation2 + $0xb58] sm:$0xff]
        %v4308 = vld [vmem:[#allocation2 + $0xb60] sm:$0xff]
        %v4309 = vld [vmem:[#allocation2 + $0xb68] sm:$0xff]
        %v4310 = vld [vmem:[#allocation2 + $0xb70] sm:$0xff]
        %v4311 = vld [vmem:[#allocation2 + $0xb78] sm:$0xff]
        %v4312 = vld [vmem:[#allocation2 + $0xb80] sm:$0xff]
        %v4313 = vld [vmem:[#allocation2 + $0xb88] sm:$0xff]
        %v4314 = vld [vmem:[#allocation2 + $0xb90] sm:$0xff]
        %v4315 = vld [vmem:[#allocation2 + $0xb98] sm:$0xff]
        %v4316 = vld [vmem:[#allocation2 + $0xba0] sm:$0xff]
        %v4317 = vld [vmem:[#allocation2 + $0xba8] sm:$0xff]
        %v4318 = vld [vmem:[#allocation2 + $0xbb0] sm:$0xff]
        %v4319 = vld [vmem:[#allocation2 + $0xbb8] sm:$0xff]
        %v4320 = vld [vmem:[#allocation2 + $0xbc0] sm:$0xff]
        %v4321 = vld [vmem:[#allocation2 + $0xbc8] sm:$0xff]
        %v4322 = vld [vmem:[#allocation2 + $0xbd0] sm:$0xff]
        %v4323 = vld [vmem:[#allocation2 + $0xbd8] sm:$0xff]
        %v4324 = vld [vmem:[#allocation2 + $0xbe0] sm:$0xff]
        %v4325 = vld [vmem:[#allocation2 + $0xbe8] sm:$0xff]
        %v4326 = vld [vmem:[#allocation2 + $0xbf0] sm:$0xff]
        %v4327 = vld [vmem:[#allocation2 + $0xbf8] sm:$0xff]
        %v4336 = vunpack.c.l.b16 %v3936
        %v4337 = vunpack.c.h.b16 %v3936
        %v4338 = vunpack.c.l.b16 %v3937
        %v4339 = vunpack.c.h.b16 %v3937
        %v4340 = vunpack.c.l.b16 %v3938
        %v4341 = vunpack.c.h.b16 %v3938
        %v4342 = vunpack.c.l.b16 %v3939
        %v4343 = vunpack.c.h.b16 %v3939
        %v4344 = vunpack.c.l.b16 %v3940
        %v4345 = vunpack.c.h.b16 %v3940
        %v4346 = vunpack.c.l.b16 %v3941
        %v4347 = vunpack.c.h.b16 %v3941
        %v4348 = vunpack.c.l.b16 %v3942
        %v4349 = vunpack.c.h.b16 %v3942
        %v4350 = vunpack.c.l.b16 %v3943
        %v4351 = vunpack.c.h.b16 %v3943
        %v4352 = vpack.c.b16 %v4344, %v4336
        %v4353 = vpack.c.b16 %v4345, %v4337
        %v4354 = vpack.c.b16 %v4346, %v4338
        %v4355 = vpack.c.b16 %v4347, %v4339
        %v4356 = vpack.c.b16 %v4348, %v4340
        %v4357 = vpack.c.b16 %v4349, %v4341
        %v4358 = vpack.c.b16 %v4350, %v4342
        %v4359 = vpack.c.b16 %v4351, %v4343
        %v4752 = vunpack.c.l.b16 %v3944
        %v4753 = vunpack.c.h.b16 %v3944
        %v4754 = vunpack.c.l.b16 %v3945
        %v4755 = vunpack.c.h.b16 %v3945
        %v4756 = vunpack.c.l.b16 %v3946
        %v4757 = vunpack.c.h.b16 %v3946
        %v4758 = vunpack.c.l.b16 %v3947
        %v4759 = vunpack.c.h.b16 %v3947
        %v4760 = vunpack.c.l.b16 %v3948
        %v4761 = vunpack.c.h.b16 %v3948
        %v4762 = vunpack.c.l.b16 %v3949
        %v4763 = vunpack.c.h.b16 %v3949
        %v4764 = vunpack.c.l.b16 %v3950
        %v4765 = vunpack.c.h.b16 %v3950
        %v4766 = vunpack.c.l.b16 %v3951
        %v4767 = vunpack.c.h.b16 %v3951
        %v4768 = vunpack.c.l.b16 %v3952
        %v4769 = vunpack.c.h.b16 %v3952
        %v4770 = vunpack.c.l.b16 %v3953
        %v4771 = vunpack.c.h.b16 %v3953
        %v4772 = vunpack.c.l.b16 %v3954
        %v4773 = vunpack.c.h.b16 %v3954
        %v4774 = vunpack.c.l.b16 %v3955
        %v4775 = vunpack.c.h.b16 %v3955
        %v4776 = vunpack.c.l.b16 %v3956
        %v4777 = vunpack.c.h.b16 %v3956
        %v4778 = vunpack.c.l.b16 %v3957
        %v4779 = vunpack.c.h.b16 %v3957
        %v4780 = vunpack.c.l.b16 %v3958
        %v4781 = vunpack.c.h.b16 %v3958
        %v4782 = vunpack.c.l.b16 %v3959
        %v4783 = vunpack.c.h.b16 %v3959
        %v4784 = vunpack.c.l.b16 %v3960
        %v4785 = vunpack.c.h.b16 %v3960
        %v4786 = vunpack.c.l.b16 %v3961
        %v4787 = vunpack.c.h.b16 %v3961
        %v4788 = vunpack.c.l.b16 %v3962
        %v4789 = vunpack.c.h.b16 %v3962
        %v4790 = vunpack.c.l.b16 %v3963
        %v4791 = vunpack.c.h.b16 %v3963
        %v4792 = vunpack.c.l.b16 %v3964
        %v4793 = vunpack.c.h.b16 %v3964
        %v4794 = vunpack.c.l.b16 %v3965
        %v4795 = vunpack.c.h.b16 %v3965
        %v4796 = vunpack.c.l.b16 %v3966
        %v4797 = vunpack.c.h.b16 %v3966
        %v4798 = vunpack.c.l.b16 %v3967
        %v4799 = vunpack.c.h.b16 %v3967
        %v4800 = vunpack.c.l.b16 %v3968
        %v4801 = vunpack.c.h.b16 %v3968
        %v4802 = vunpack.c.l.b16 %v3969
        %v4803 = vunpack.c.h.b16 %v3969
        %v4804 = vunpack.c.l.b16 %v3970
        %v4805 = vunpack.c.h.b16 %v3970
        %v4806 = vunpack.c.l.b16 %v3971
        %v4807 = vunpack.c.h.b16 %v3971
        %v4808 = vunpack.c.l.b16 %v3972
        %v4809 = vunpack.c.h.b16 %v3972
        %v4810 = vunpack.c.l.b16 %v3973
        %v4811 = vunpack.c.h.b16 %v3973
        %v4812 = vunpack.c.l.b16 %v3974
        %v4813 = vunpack.c.h.b16 %v3974
        %v4814 = vunpack.c.l.b16 %v3975
        %v4815 = vunpack.c.h.b16 %v3975
        %v4816 = vunpack.c.l.b16 %v3976
        %v4817 = vunpack.c.h.b16 %v3976
        %v4818 = vunpack.c.l.b16 %v3977
        %v4819 = vunpack.c.h.b16 %v3977
        %v4820 = vunpack.c.l.b16 %v3978
        %v4821 = vunpack.c.h.b16 %v3978
        %v4822 = vunpack.c.l.b16 %v3979
        %v4823 = vunpack.c.h.b16 %v3979
        %v4824 = vunpack.c.l.b16 %v3980
        %v4825 = vunpack.c.h.b16 %v3980
        %v4826 = vunpack.c.l.b16 %v3981
        %v4827 = vunpack.c.h.b16 %v3981
        %v4828 = vunpack.c.l.b16 %v3982
        %v4829 = vunpack.c.h.b16 %v3982
        %v4830 = vunpack.c.l.b16 %v3983
        %v4831 = vunpack.c.h.b16 %v3983
        %v4832 = vunpack.c.l.b16 %v3984
        %v4833 = vunpack.c.h.b16 %v3984
        %v4834 = vunpack.c.l.b16 %v3985
        %v4835 = vunpack.c.h.b16 %v3985
        %v4836 = vunpack.c.l.b16 %v3986
        %v4837 = vunpack.c.h.b16 %v3986
        %v4838 = vunpack.c.l.b16 %v3987
        %v4839 = vunpack.c.h.b16 %v3987
        %v4840 = vunpack.c.l.b16 %v3988
        %v4841 = vunpack.c.h.b16 %v3988
        %v4842 = vunpack.c.l.b16 %v3989
        %v4843 = vunpack.c.h.b16 %v3989
        %v4844 = vunpack.c.l.b16 %v3990
        %v4845 = vunpack.c.h.b16 %v3990
        %v4846 = vunpack.c.l.b16 %v3991
        %v4847 = vunpack.c.h.b16 %v3991
        %v4848 = vunpack.c.l.b16 %v3992
        %v4849 = vunpack.c.h.b16 %v3992
        %v4850 = vunpack.c.l.b16 %v3993
        %v4851 = vunpack.c.h.b16 %v3993
        %v4852 = vunpack.c.l.b16 %v3994
        %v4853 = vunpack.c.h.b16 %v3994
        %v4854 = vunpack.c.l.b16 %v3995
        %v4855 = vunpack.c.h.b16 %v3995
        %v4856 = vunpack.c.l.b16 %v3996
        %v4857 = vunpack.c.h.b16 %v3996
        %v4858 = vunpack.c.l.b16 %v3997
        %v4859 = vunpack.c.h.b16 %v3997
        %v4860 = vunpack.c.l.b16 %v3998
        %v4861 = vunpack.c.h.b16 %v3998
        %v4862 = vunpack.c.l.b16 %v3999
        %v4863 = vunpack.c.h.b16 %v3999
        %v4864 = vunpack.c.l.b16 %v4000
        %v4865 = vunpack.c.h.b16 %v4000
        %v4866 = vunpack.c.l.b16 %v4001
        %v4867 = vunpack.c.h.b16 %v4001
        %v4868 = vunpack.c.l.b16 %v4002
        %v4869 = vunpack.c.h.b16 %v4002
        %v4870 = vunpack.c.l.b16 %v4003
        %v4871 = vunpack.c.h.b16 %v4003
        %v4872 = vunpack.c.l.b16 %v4004
        %v4873 = vunpack.c.h.b16 %v4004
        %v4874 = vunpack.c.l.b16 %v4005
        %v4875 = vunpack.c.h.b16 %v4005
        %v4876 = vunpack.c.l.b16 %v4006
        %v4877 = vunpack.c.h.b16 %v4006
        %v4878 = vunpack.c.l.b16 %v4007
        %v4879 = vunpack.c.h.b16 %v4007
        %v4880 = vunpack.c.l.b16 %v4008
        %v4881 = vunpack.c.h.b16 %v4008
        %v4882 = vunpack.c.l.b16 %v4009
        %v4883 = vunpack.c.h.b16 %v4009
        %v4884 = vunpack.c.l.b16 %v4010
        %v4885 = vunpack.c.h.b16 %v4010
        %v4886 = vunpack.c.l.b16 %v4011
        %v4887 = vunpack.c.h.b16 %v4011
        %v4888 = vunpack.c.l.b16 %v4012
        %v4889 = vunpack.c.h.b16 %v4012
        %v4890 = vunpack.c.l.b16 %v4013
        %v4891 = vunpack.c.h.b16 %v4013
        %v4892 = vunpack.c.l.b16 %v4014
        %v4893 = vunpack.c.h.b16 %v4014
        %v4894 = vunpack.c.l.b16 %v4015
        %v4895 = vunpack.c.h.b16 %v4015
        %v4896 = vunpack.c.l.b16 %v4016
        %v4897 = vunpack.c.h.b16 %v4016
        %v4898 = vunpack.c.l.b16 %v4017
        %v4899 = vunpack.c.h.b16 %v4017
        %v4900 = vunpack.c.l.b16 %v4018
        %v4901 = vunpack.c.h.b16 %v4018
        %v4902 = vunpack.c.l.b16 %v4019
        %v4903 = vunpack.c.h.b16 %v4019
        %v4904 = vunpack.c.l.b16 %v4020
        %v4905 = vunpack.c.h.b16 %v4020
        %v4906 = vunpack.c.l.b16 %v4021
        %v4907 = vunpack.c.h.b16 %v4021
        %v4908 = vunpack.c.l.b16 %v4022
        %v4909 = vunpack.c.h.b16 %v4022
        %v4910 = vunpack.c.l.b16 %v4023
        %v4911 = vunpack.c.h.b16 %v4023
        %v4912 = vunpack.c.l.b16 %v4024
        %v4913 = vunpack.c.h.b16 %v4024
        %v4914 = vunpack.c.l.b16 %v4025
        %v4915 = vunpack.c.h.b16 %v4025
        %v4916 = vunpack.c.l.b16 %v4026
        %v4917 = vunpack.c.h.b16 %v4026
        %v4918 = vunpack.c.l.b16 %v4027
        %v4919 = vunpack.c.h.b16 %v4027
        %v4920 = vunpack.c.l.b16 %v4028
        %v4921 = vunpack.c.h.b16 %v4028
        %v4922 = vunpack.c.l.b16 %v4029
        %v4923 = vunpack.c.h.b16 %v4029
        %v4924 = vunpack.c.l.b16 %v4030
        %v4925 = vunpack.c.h.b16 %v4030
        %v4926 = vunpack.c.l.b16 %v4031
        %v4927 = vunpack.c.h.b16 %v4031
        %v4928 = vunpack.c.l.b16 %v4032
        %v4929 = vunpack.c.h.b16 %v4032
        %v4930 = vunpack.c.l.b16 %v4033
        %v4931 = vunpack.c.h.b16 %v4033
        %v4932 = vunpack.c.l.b16 %v4034
        %v4933 = vunpack.c.h.b16 %v4034
        %v4934 = vunpack.c.l.b16 %v4035
        %v4935 = vunpack.c.h.b16 %v4035
        %v4936 = vunpack.c.l.b16 %v4036
        %v4937 = vunpack.c.h.b16 %v4036
        %v4938 = vunpack.c.l.b16 %v4037
        %v4939 = vunpack.c.h.b16 %v4037
        %v4940 = vunpack.c.l.b16 %v4038
        %v4941 = vunpack.c.h.b16 %v4038
        %v4942 = vunpack.c.l.b16 %v4039
        %v4943 = vunpack.c.h.b16 %v4039
        %v4944 = vunpack.c.l.b16 %v4040
        %v4945 = vunpack.c.h.b16 %v4040
        %v4946 = vunpack.c.l.b16 %v4041
        %v4947 = vunpack.c.h.b16 %v4041
        %v4948 = vunpack.c.l.b16 %v4042
        %v4949 = vunpack.c.h.b16 %v4042
        %v4950 = vunpack.c.l.b16 %v4043
        %v4951 = vunpack.c.h.b16 %v4043
        %v4952 = vunpack.c.l.b16 %v4044
        %v4953 = vunpack.c.h.b16 %v4044
        %v4954 = vunpack.c.l.b16 %v4045
        %v4955 = vunpack.c.h.b16 %v4045
        %v4956 = vunpack.c.l.b16 %v4046
        %v4957 = vunpack.c.h.b16 %v4046
        %v4958 = vunpack.c.l.b16 %v4047
        %v4959 = vunpack.c.h.b16 %v4047
        %v4960 = vunpack.c.l.b16 %v4048
        %v4961 = vunpack.c.h.b16 %v4048
        %v4962 = vunpack.c.l.b16 %v4049
        %v4963 = vunpack.c.h.b16 %v4049
        %v4964 = vunpack.c.l.b16 %v4050
        %v4965 = vunpack.c.h.b16 %v4050
        %v4966 = vunpack.c.l.b16 %v4051
        %v4967 = vunpack.c.h.b16 %v4051
        %v4968 = vunpack.c.l.b16 %v4052
        %v4969 = vunpack.c.h.b16 %v4052
        %v4970 = vunpack.c.l.b16 %v4053
        %v4971 = vunpack.c.h.b16 %v4053
        %v4972 = vunpack.c.l.b16 %v4054
        %v4973 = vunpack.c.h.b16 %v4054
        %v4974 = vunpack.c.l.b16 %v4055
        %v4975 = vunpack.c.h.b16 %v4055
        %v4976 = vunpack.c.l.b16 %v4056
        %v4977 = vunpack.c.h.b16 %v4056
        %v4978 = vunpack.c.l.b16 %v4057
        %v4979 = vunpack.c.h.b16 %v4057
        %v4980 = vunpack.c.l.b16 %v4058
        %v4981 = vunpack.c.h.b16 %v4058
        %v4982 = vunpack.c.l.b16 %v4059
        %v4983 = vunpack.c.h.b16 %v4059
        %v4984 = vunpack.c.l.b16 %v4060
        %v4985 = vunpack.c.h.b16 %v4060
        %v4986 = vunpack.c.l.b16 %v4061
        %v4987 = vunpack.c.h.b16 %v4061
        %v4988 = vunpack.c.l.b16 %v4062
        %v4989 = vunpack.c.h.b16 %v4062
        %v4990 = vunpack.c.l.b16 %v4063
        %v4991 = vunpack.c.h.b16 %v4063
        %v4992 = vunpack.c.l.b16 %v4064
        %v4993 = vunpack.c.h.b16 %v4064
        %v4994 = vunpack.c.l.b16 %v4065
        %v4995 = vunpack.c.h.b16 %v4065
        %v4996 = vunpack.c.l.b16 %v4066
        %v4997 = vunpack.c.h.b16 %v4066
        %v4998 = vunpack.c.l.b16 %v4067
        %v4999 = vunpack.c.h.b16 %v4067
        %v5000 = vunpack.c.l.b16 %v4068
        %v5001 = vunpack.c.h.b16 %v4068
        %v5002 = vunpack.c.l.b16 %v4069
        %v5003 = vunpack.c.h.b16 %v4069
        %v5004 = vunpack.c.l.b16 %v4070
        %v5005 = vunpack.c.h.b16 %v4070
        %v5006 = vunpack.c.l.b16 %v4071
        %v5007 = vunpack.c.h.b16 %v4071
        %v5008 = vunpack.c.l.b16 %v4072
        %v5009 = vunpack.c.h.b16 %v4072
        %v5010 = vunpack.c.l.b16 %v4073
        %v5011 = vunpack.c.h.b16 %v4073
        %v5012 = vunpack.c.l.b16 %v4074
        %v5013 = vunpack.c.h.b16 %v4074
        %v5014 = vunpack.c.l.b16 %v4075
        %v5015 = vunpack.c.h.b16 %v4075
        %v5016 = vunpack.c.l.b16 %v4076
        %v5017 = vunpack.c.h.b16 %v4076
        %v5018 = vunpack.c.l.b16 %v4077
        %v5019 = vunpack.c.h.b16 %v4077
        %v5020 = vunpack.c.l.b16 %v4078
        %v5021 = vunpack.c.h.b16 %v4078
        %v5022 = vunpack.c.l.b16 %v4079
        %v5023 = vunpack.c.h.b16 %v4079
        %v5024 = vunpack.c.l.b16 %v4080
        %v5025 = vunpack.c.h.b16 %v4080
        %v5026 = vunpack.c.l.b16 %v4081
        %v5027 = vunpack.c.h.b16 %v4081
        %v5028 = vunpack.c.l.b16 %v4082
        %v5029 = vunpack.c.h.b16 %v4082
        %v5030 = vunpack.c.l.b16 %v4083
        %v5031 = vunpack.c.h.b16 %v4083
        %v5032 = vunpack.c.l.b16 %v4084
        %v5033 = vunpack.c.h.b16 %v4084
        %v5034 = vunpack.c.l.b16 %v4085
        %v5035 = vunpack.c.h.b16 %v4085
        %v5036 = vunpack.c.l.b16 %v4086
        %v5037 = vunpack.c.h.b16 %v4086
        %v5038 = vunpack.c.l.b16 %v4087
        %v5039 = vunpack.c.h.b16 %v4087
        %v5040 = vunpack.c.l.b16 %v4088
        %v5041 = vunpack.c.h.b16 %v4088
        %v5042 = vunpack.c.l.b16 %v4089
        %v5043 = vunpack.c.h.b16 %v4089
        %v5044 = vunpack.c.l.b16 %v4090
        %v5045 = vunpack.c.h.b16 %v4090
        %v5046 = vunpack.c.l.b16 %v4091
        %v5047 = vunpack.c.h.b16 %v4091
        %v5048 = vunpack.c.l.b16 %v4092
        %v5049 = vunpack.c.h.b16 %v4092
        %v5050 = vunpack.c.l.b16 %v4093
        %v5051 = vunpack.c.h.b16 %v4093
        %v5052 = vunpack.c.l.b16 %v4094
        %v5053 = vunpack.c.h.b16 %v4094
        %v5054 = vunpack.c.l.b16 %v4095
        %v5055 = vunpack.c.h.b16 %v4095
        %v5056 = vunpack.c.l.b16 %v4096
        %v5057 = vunpack.c.h.b16 %v4096
        %v5058 = vunpack.c.l.b16 %v4097
        %v5059 = vunpack.c.h.b16 %v4097
        %v5060 = vunpack.c.l.b16 %v4098
        %v5061 = vunpack.c.h.b16 %v4098
        %v5062 = vunpack.c.l.b16 %v4099
        %v5063 = vunpack.c.h.b16 %v4099
        %v5064 = vunpack.c.l.b16 %v4100
        %v5065 = vunpack.c.h.b16 %v4100
        %v5066 = vunpack.c.l.b16 %v4101
        %v5067 = vunpack.c.h.b16 %v4101
        %v5068 = vunpack.c.l.b16 %v4102
        %v5069 = vunpack.c.h.b16 %v4102
        %v5070 = vunpack.c.l.b16 %v4103
        %v5071 = vunpack.c.h.b16 %v4103
        %v5072 = vunpack.c.l.b16 %v4104
        %v5073 = vunpack.c.h.b16 %v4104
        %v5074 = vunpack.c.l.b16 %v4105
        %v5075 = vunpack.c.h.b16 %v4105
        %v5076 = vunpack.c.l.b16 %v4106
        %v5077 = vunpack.c.h.b16 %v4106
        %v5078 = vunpack.c.l.b16 %v4107
        %v5079 = vunpack.c.h.b16 %v4107
        %v5080 = vunpack.c.l.b16 %v4108
        %v5081 = vunpack.c.h.b16 %v4108
        %v5082 = vunpack.c.l.b16 %v4109
        %v5083 = vunpack.c.h.b16 %v4109
        %v5084 = vunpack.c.l.b16 %v4110
        %v5085 = vunpack.c.h.b16 %v4110
        %v5086 = vunpack.c.l.b16 %v4111
        %v5087 = vunpack.c.h.b16 %v4111
        %v5088 = vunpack.c.l.b16 %v4112
        %v5089 = vunpack.c.h.b16 %v4112
        %v5090 = vunpack.c.l.b16 %v4113
        %v5091 = vunpack.c.h.b16 %v4113
        %v5092 = vunpack.c.l.b16 %v4114
        %v5093 = vunpack.c.h.b16 %v4114
        %v5094 = vunpack.c.l.b16 %v4115
        %v5095 = vunpack.c.h.b16 %v4115
        %v5096 = vunpack.c.l.b16 %v4116
        %v5097 = vunpack.c.h.b16 %v4116
        %v5098 = vunpack.c.l.b16 %v4117
        %v5099 = vunpack.c.h.b16 %v4117
        %v5100 = vunpack.c.l.b16 %v4118
        %v5101 = vunpack.c.h.b16 %v4118
        %v5102 = vunpack.c.l.b16 %v4119
        %v5103 = vunpack.c.h.b16 %v4119
        %v5104 = vunpack.c.l.b16 %v4120
        %v5105 = vunpack.c.h.b16 %v4120
        %v5106 = vunpack.c.l.b16 %v4121
        %v5107 = vunpack.c.h.b16 %v4121
        %v5108 = vunpack.c.l.b16 %v4122
        %v5109 = vunpack.c.h.b16 %v4122
        %v5110 = vunpack.c.l.b16 %v4123
        %v5111 = vunpack.c.h.b16 %v4123
        %v5112 = vunpack.c.l.b16 %v4124
        %v5113 = vunpack.c.h.b16 %v4124
        %v5114 = vunpack.c.l.b16 %v4125
        %v5115 = vunpack.c.h.b16 %v4125
        %v5116 = vunpack.c.l.b16 %v4126
        %v5117 = vunpack.c.h.b16 %v4126
        %v5118 = vunpack.c.l.b16 %v4127
        %v5119 = vunpack.c.h.b16 %v4127
        %v5120 = vunpack.c.l.b16 %v4128
        %v5121 = vunpack.c.h.b16 %v4128
        %v5122 = vunpack.c.l.b16 %v4129
        %v5123 = vunpack.c.h.b16 %v4129
        %v5124 = vunpack.c.l.b16 %v4130
        %v5125 = vunpack.c.h.b16 %v4130
        %v5126 = vunpack.c.l.b16 %v4131
        %v5127 = vunpack.c.h.b16 %v4131
        %v5128 = vunpack.c.l.b16 %v4132
        %v5129 = vunpack.c.h.b16 %v4132
        %v5130 = vunpack.c.l.b16 %v4133
        %v5131 = vunpack.c.h.b16 %v4133
        %v5132 = vunpack.c.l.b16 %v4134
        %v5133 = vunpack.c.h.b16 %v4134
        %v5134 = vunpack.c.l.b16 %v4135
        %v5135 = vunpack.c.h.b16 %v4135
        %v5136 = vunpack.c.l.b16 %v4136
        %v5137 = vunpack.c.h.b16 %v4136
        %v5138 = vunpack.c.l.b16 %v4137
        %v5139 = vunpack.c.h.b16 %v4137
        %v5140 = vunpack.c.l.b16 %v4138
        %v5141 = vunpack.c.h.b16 %v4138
        %v5142 = vunpack.c.l.b16 %v4139
        %v5143 = vunpack.c.h.b16 %v4139
        %v5144 = vunpack.c.l.b16 %v4140
        %v5145 = vunpack.c.h.b16 %v4140
        %v5146 = vunpack.c.l.b16 %v4141
        %v5147 = vunpack.c.h.b16 %v4141
        %v5148 = vunpack.c.l.b16 %v4142
        %v5149 = vunpack.c.h.b16 %v4142
        %v5150 = vunpack.c.l.b16 %v4143
        %v5151 = vunpack.c.h.b16 %v4143
        %v5152 = vunpack.c.l.b16 %v4144
        %v5153 = vunpack.c.h.b16 %v4144
        %v5154 = vunpack.c.l.b16 %v4145
        %v5155 = vunpack.c.h.b16 %v4145
        %v5156 = vunpack.c.l.b16 %v4146
        %v5157 = vunpack.c.h.b16 %v4146
        %v5158 = vunpack.c.l.b16 %v4147
        %v5159 = vunpack.c.h.b16 %v4147
        %v5160 = vunpack.c.l.b16 %v4148
        %v5161 = vunpack.c.h.b16 %v4148
        %v5162 = vunpack.c.l.b16 %v4149
        %v5163 = vunpack.c.h.b16 %v4149
        %v5164 = vunpack.c.l.b16 %v4150
        %v5165 = vunpack.c.h.b16 %v4150
        %v5166 = vunpack.c.l.b16 %v4151
        %v5167 = vunpack.c.h.b16 %v4151
        %v5168 = vunpack.c.l.b16 %v4152
        %v5169 = vunpack.c.h.b16 %v4152
        %v5170 = vunpack.c.l.b16 %v4153
        %v5171 = vunpack.c.h.b16 %v4153
        %v5172 = vunpack.c.l.b16 %v4154
        %v5173 = vunpack.c.h.b16 %v4154
        %v5174 = vunpack.c.l.b16 %v4155
        %v5175 = vunpack.c.h.b16 %v4155
        %v5176 = vunpack.c.l.b16 %v4156
        %v5177 = vunpack.c.h.b16 %v4156
        %v5178 = vunpack.c.l.b16 %v4157
        %v5179 = vunpack.c.h.b16 %v4157
        %v5180 = vunpack.c.l.b16 %v4158
        %v5181 = vunpack.c.h.b16 %v4158
        %v5182 = vunpack.c.l.b16 %v4159
        %v5183 = vunpack.c.h.b16 %v4159
        %v5184 = vunpack.c.l.b16 %v4160
        %v5185 = vunpack.c.h.b16 %v4160
        %v5186 = vunpack.c.l.b16 %v4161
        %v5187 = vunpack.c.h.b16 %v4161
        %v5188 = vunpack.c.l.b16 %v4162
        %v5189 = vunpack.c.h.b16 %v4162
        %v5190 = vunpack.c.l.b16 %v4163
        %v5191 = vunpack.c.h.b16 %v4163
        %v5192 = vunpack.c.l.b16 %v4164
        %v5193 = vunpack.c.h.b16 %v4164
        %v5194 = vunpack.c.l.b16 %v4165
        %v5195 = vunpack.c.h.b16 %v4165
        %v5196 = vunpack.c.l.b16 %v4166
        %v5197 = vunpack.c.h.b16 %v4166
        %v5198 = vunpack.c.l.b16 %v4167
        %v5199 = vunpack.c.h.b16 %v4167
        %v5200 = vunpack.c.l.b16 %v4168
        %v5201 = vunpack.c.h.b16 %v4168
        %v5202 = vunpack.c.l.b16 %v4169
        %v5203 = vunpack.c.h.b16 %v4169
        %v5204 = vunpack.c.l.b16 %v4170
        %v5205 = vunpack.c.h.b16 %v4170
        %v5206 = vunpack.c.l.b16 %v4171
        %v5207 = vunpack.c.h.b16 %v4171
        %v5208 = vunpack.c.l.b16 %v4172
        %v5209 = vunpack.c.h.b16 %v4172
        %v5210 = vunpack.c.l.b16 %v4173
        %v5211 = vunpack.c.h.b16 %v4173
        %v5212 = vunpack.c.l.b16 %v4174
        %v5213 = vunpack.c.h.b16 %v4174
        %v5214 = vunpack.c.l.b16 %v4175
        %v5215 = vunpack.c.h.b16 %v4175
        %v5216 = vunpack.c.l.b16 %v4176
        %v5217 = vunpack.c.h.b16 %v4176
        %v5218 = vunpack.c.l.b16 %v4177
        %v5219 = vunpack.c.h.b16 %v4177
        %v5220 = vunpack.c.l.b16 %v4178
        %v5221 = vunpack.c.h.b16 %v4178
        %v5222 = vunpack.c.l.b16 %v4179
        %v5223 = vunpack.c.h.b16 %v4179
        %v5224 = vunpack.c.l.b16 %v4180
        %v5225 = vunpack.c.h.b16 %v4180
        %v5226 = vunpack.c.l.b16 %v4181
        %v5227 = vunpack.c.h.b16 %v4181
        %v5228 = vunpack.c.l.b16 %v4182
        %v5229 = vunpack.c.h.b16 %v4182
        %v5230 = vunpack.c.l.b16 %v4183
        %v5231 = vunpack.c.h.b16 %v4183
        %v5232 = vunpack.c.l.b16 %v4184
        %v5233 = vunpack.c.h.b16 %v4184
        %v5234 = vunpack.c.l.b16 %v4185
        %v5235 = vunpack.c.h.b16 %v4185
        %v5236 = vunpack.c.l.b16 %v4186
        %v5237 = vunpack.c.h.b16 %v4186
        %v5238 = vunpack.c.l.b16 %v4187
        %v5239 = vunpack.c.h.b16 %v4187
        %v5240 = vunpack.c.l.b16 %v4188
        %v5241 = vunpack.c.h.b16 %v4188
        %v5242 = vunpack.c.l.b16 %v4189
        %v5243 = vunpack.c.h.b16 %v4189
        %v5244 = vunpack.c.l.b16 %v4190
        %v5245 = vunpack.c.h.b16 %v4190
        %v5246 = vunpack.c.l.b16 %v4191
        %v5247 = vunpack.c.h.b16 %v4191
        %v5248 = vunpack.c.l.b16 %v4192
        %v5249 = vunpack.c.h.b16 %v4192
        %v5250 = vunpack.c.l.b16 %v4193
        %v5251 = vunpack.c.h.b16 %v4193
        %v5252 = vunpack.c.l.b16 %v4194
        %v5253 = vunpack.c.h.b16 %v4194
        %v5254 = vunpack.c.l.b16 %v4195
        %v5255 = vunpack.c.h.b16 %v4195
        %v5256 = vunpack.c.l.b16 %v4196
        %v5257 = vunpack.c.h.b16 %v4196
        %v5258 = vunpack.c.l.b16 %v4197
        %v5259 = vunpack.c.h.b16 %v4197
        %v5260 = vunpack.c.l.b16 %v4198
        %v5261 = vunpack.c.h.b16 %v4198
        %v5262 = vunpack.c.l.b16 %v4199
        %v5263 = vunpack.c.h.b16 %v4199
        %v5264 = vunpack.c.l.b16 %v4200
        %v5265 = vunpack.c.h.b16 %v4200
        %v5266 = vunpack.c.l.b16 %v4201
        %v5267 = vunpack.c.h.b16 %v4201
        %v5268 = vunpack.c.l.b16 %v4202
        %v5269 = vunpack.c.h.b16 %v4202
        %v5270 = vunpack.c.l.b16 %v4203
        %v5271 = vunpack.c.h.b16 %v4203
        %v5272 = vunpack.c.l.b16 %v4204
        %v5273 = vunpack.c.h.b16 %v4204
        %v5274 = vunpack.c.l.b16 %v4205
        %v5275 = vunpack.c.h.b16 %v4205
        %v5276 = vunpack.c.l.b16 %v4206
        %v5277 = vunpack.c.h.b16 %v4206
        %v5278 = vunpack.c.l.b16 %v4207
        %v5279 = vunpack.c.h.b16 %v4207
        %v5280 = vunpack.c.l.b16 %v4208
        %v5281 = vunpack.c.h.b16 %v4208
        %v5282 = vunpack.c.l.b16 %v4209
        %v5283 = vunpack.c.h.b16 %v4209
        %v5284 = vunpack.c.l.b16 %v4210
        %v5285 = vunpack.c.h.b16 %v4210
        %v5286 = vunpack.c.l.b16 %v4211
        %v5287 = vunpack.c.h.b16 %v4211
        %v5288 = vunpack.c.l.b16 %v4212
        %v5289 = vunpack.c.h.b16 %v4212
        %v5290 = vunpack.c.l.b16 %v4213
        %v5291 = vunpack.c.h.b16 %v4213
        %v5292 = vunpack.c.l.b16 %v4214
        %v5293 = vunpack.c.h.b16 %v4214
        %v5294 = vunpack.c.l.b16 %v4215
        %v5295 = vunpack.c.h.b16 %v4215
        %v5296 = vunpack.c.l.b16 %v4216
        %v5297 = vunpack.c.h.b16 %v4216
        %v5298 = vunpack.c.l.b16 %v4217
        %v5299 = vunpack.c.h.b16 %v4217
        %v5300 = vunpack.c.l.b16 %v4218
        %v5301 = vunpack.c.h.b16 %v4218
        %v5302 = vunpack.c.l.b16 %v4219
        %v5303 = vunpack.c.h.b16 %v4219
        %v5304 = vunpack.c.l.b16 %v4220
        %v5305 = vunpack.c.h.b16 %v4220
        %v5306 = vunpack.c.l.b16 %v4221
        %v5307 = vunpack.c.h.b16 %v4221
        %v5308 = vunpack.c.l.b16 %v4222
        %v5309 = vunpack.c.h.b16 %v4222
        %v5310 = vunpack.c.l.b16 %v4223
        %v5311 = vunpack.c.h.b16 %v4223
        %v5312 = vunpack.c.l.b16 %v4224
        %v5313 = vunpack.c.h.b16 %v4224
        %v5314 = vunpack.c.l.b16 %v4225
        %v5315 = vunpack.c.h.b16 %v4225
        %v5316 = vunpack.c.l.b16 %v4226
        %v5317 = vunpack.c.h.b16 %v4226
        %v5318 = vunpack.c.l.b16 %v4227
        %v5319 = vunpack.c.h.b16 %v4227
        %v5320 = vunpack.c.l.b16 %v4228
        %v5321 = vunpack.c.h.b16 %v4228
        %v5322 = vunpack.c.l.b16 %v4229
        %v5323 = vunpack.c.h.b16 %v4229
        %v5324 = vunpack.c.l.b16 %v4230
        %v5325 = vunpack.c.h.b16 %v4230
        %v5326 = vunpack.c.l.b16 %v4231
        %v5327 = vunpack.c.h.b16 %v4231
        %v5328 = vunpack.c.l.b16 %v4232
        %v5329 = vunpack.c.h.b16 %v4232
        %v5330 = vunpack.c.l.b16 %v4233
        %v5331 = vunpack.c.h.b16 %v4233
        %v5332 = vunpack.c.l.b16 %v4234
        %v5333 = vunpack.c.h.b16 %v4234
        %v5334 = vunpack.c.l.b16 %v4235
        %v5335 = vunpack.c.h.b16 %v4235
        %v5336 = vunpack.c.l.b16 %v4236
        %v5337 = vunpack.c.h.b16 %v4236
        %v5338 = vunpack.c.l.b16 %v4237
        %v5339 = vunpack.c.h.b16 %v4237
        %v5340 = vunpack.c.l.b16 %v4238
        %v5341 = vunpack.c.h.b16 %v4238
        %v5342 = vunpack.c.l.b16 %v4239
        %v5343 = vunpack.c.h.b16 %v4239
        %v5344 = vunpack.c.l.b16 %v4240
        %v5345 = vunpack.c.h.b16 %v4240
        %v5346 = vunpack.c.l.b16 %v4241
        %v5347 = vunpack.c.h.b16 %v4241
        %v5348 = vunpack.c.l.b16 %v4242
        %v5349 = vunpack.c.h.b16 %v4242
        %v5350 = vunpack.c.l.b16 %v4243
        %v5351 = vunpack.c.h.b16 %v4243
        %v5352 = vunpack.c.l.b16 %v4244
        %v5353 = vunpack.c.h.b16 %v4244
        %v5354 = vunpack.c.l.b16 %v4245
        %v5355 = vunpack.c.h.b16 %v4245
        %v5356 = vunpack.c.l.b16 %v4246
        %v5357 = vunpack.c.h.b16 %v4246
        %v5358 = vunpack.c.l.b16 %v4247
        %v5359 = vunpack.c.h.b16 %v4247
        %v5360 = vunpack.c.l.b16 %v4248
        %v5361 = vunpack.c.h.b16 %v4248
        %v5362 = vunpack.c.l.b16 %v4249
        %v5363 = vunpack.c.h.b16 %v4249
        %v5364 = vunpack.c.l.b16 %v4250
        %v5365 = vunpack.c.h.b16 %v4250
        %v5366 = vunpack.c.l.b16 %v4251
        %v5367 = vunpack.c.h.b16 %v4251
        %v5368 = vunpack.c.l.b16 %v4252
        %v5369 = vunpack.c.h.b16 %v4252
        %v5370 = vunpack.c.l.b16 %v4253
        %v5371 = vunpack.c.h.b16 %v4253
        %v5372 = vunpack.c.l.b16 %v4254
        %v5373 = vunpack.c.h.b16 %v4254
        %v5374 = vunpack.c.l.b16 %v4255
        %v5375 = vunpack.c.h.b16 %v4255
        %v5376 = vunpack.c.l.b16 %v4256
        %v5377 = vunpack.c.h.b16 %v4256
        %v5378 = vunpack.c.l.b16 %v4257
        %v5379 = vunpack.c.h.b16 %v4257
        %v5380 = vunpack.c.l.b16 %v4258
        %v5381 = vunpack.c.h.b16 %v4258
        %v5382 = vunpack.c.l.b16 %v4259
        %v5383 = vunpack.c.h.b16 %v4259
        %v5384 = vunpack.c.l.b16 %v4260
        %v5385 = vunpack.c.h.b16 %v4260
        %v5386 = vunpack.c.l.b16 %v4261
        %v5387 = vunpack.c.h.b16 %v4261
        %v5388 = vunpack.c.l.b16 %v4262
        %v5389 = vunpack.c.h.b16 %v4262
        %v5390 = vunpack.c.l.b16 %v4263
        %v5391 = vunpack.c.h.b16 %v4263
        %v5392 = vunpack.c.l.b16 %v4264
        %v5393 = vunpack.c.h.b16 %v4264
        %v5394 = vunpack.c.l.b16 %v4265
        %v5395 = vunpack.c.h.b16 %v4265
        %v5396 = vunpack.c.l.b16 %v4266
        %v5397 = vunpack.c.h.b16 %v4266
        %v5398 = vunpack.c.l.b16 %v4267
        %v5399 = vunpack.c.h.b16 %v4267
        %v5400 = vunpack.c.l.b16 %v4268
        %v5401 = vunpack.c.h.b16 %v4268
        %v5402 = vunpack.c.l.b16 %v4269
        %v5403 = vunpack.c.h.b16 %v4269
        %v5404 = vunpack.c.l.b16 %v4270
        %v5405 = vunpack.c.h.b16 %v4270
        %v5406 = vunpack.c.l.b16 %v4271
        %v5407 = vunpack.c.h.b16 %v4271
        %v5408 = vunpack.c.l.b16 %v4272
        %v5409 = vunpack.c.h.b16 %v4272
        %v5410 = vunpack.c.l.b16 %v4273
        %v5411 = vunpack.c.h.b16 %v4273
        %v5412 = vunpack.c.l.b16 %v4274
        %v5413 = vunpack.c.h.b16 %v4274
        %v5414 = vunpack.c.l.b16 %v4275
        %v5415 = vunpack.c.h.b16 %v4275
        %v5416 = vunpack.c.l.b16 %v4276
        %v5417 = vunpack.c.h.b16 %v4276
        %v5418 = vunpack.c.l.b16 %v4277
        %v5419 = vunpack.c.h.b16 %v4277
        %v5420 = vunpack.c.l.b16 %v4278
        %v5421 = vunpack.c.h.b16 %v4278
        %v5422 = vunpack.c.l.b16 %v4279
        %v5423 = vunpack.c.h.b16 %v4279
        %v5424 = vunpack.c.l.b16 %v4280
        %v5425 = vunpack.c.h.b16 %v4280
        %v5426 = vunpack.c.l.b16 %v4281
        %v5427 = vunpack.c.h.b16 %v4281
        %v5428 = vunpack.c.l.b16 %v4282
        %v5429 = vunpack.c.h.b16 %v4282
        %v5430 = vunpack.c.l.b16 %v4283
        %v5431 = vunpack.c.h.b16 %v4283
        %v5432 = vunpack.c.l.b16 %v4284
        %v5433 = vunpack.c.h.b16 %v4284
        %v5434 = vunpack.c.l.b16 %v4285
        %v5435 = vunpack.c.h.b16 %v4285
        %v5436 = vunpack.c.l.b16 %v4286
        %v5437 = vunpack.c.h.b16 %v4286
        %v5438 = vunpack.c.l.b16 %v4287
        %v5439 = vunpack.c.h.b16 %v4287
        %v5440 = vunpack.c.l.b16 %v4288
        %v5441 = vunpack.c.h.b16 %v4288
        %v5442 = vunpack.c.l.b16 %v4289
        %v5443 = vunpack.c.h.b16 %v4289
        %v5444 = vunpack.c.l.b16 %v4290
        %v5445 = vunpack.c.h.b16 %v4290
        %v5446 = vunpack.c.l.b16 %v4291
        %v5447 = vunpack.c.h.b16 %v4291
        %v5448 = vunpack.c.l.b16 %v4292
        %v5449 = vunpack.c.h.b16 %v4292
        %v5450 = vunpack.c.l.b16 %v4293
        %v5451 = vunpack.c.h.b16 %v4293
        %v5452 = vunpack.c.l.b16 %v4294
        %v5453 = vunpack.c.h.b16 %v4294
        %v5454 = vunpack.c.l.b16 %v4295
        %v5455 = vunpack.c.h.b16 %v4295
        %v5456 = vunpack.c.l.b16 %v4296
        %v5457 = vunpack.c.h.b16 %v4296
        %v5458 = vunpack.c.l.b16 %v4297
        %v5459 = vunpack.c.h.b16 %v4297
        %v5460 = vunpack.c.l.b16 %v4298
        %v5461 = vunpack.c.h.b16 %v4298
        %v5462 = vunpack.c.l.b16 %v4299
        %v5463 = vunpack.c.h.b16 %v4299
        %v5464 = vunpack.c.l.b16 %v4300
        %v5465 = vunpack.c.h.b16 %v4300
        %v5466 = vunpack.c.l.b16 %v4301
        %v5467 = vunpack.c.h.b16 %v4301
        %v5468 = vunpack.c.l.b16 %v4302
        %v5469 = vunpack.c.h.b16 %v4302
        %v5470 = vunpack.c.l.b16 %v4303
        %v5471 = vunpack.c.h.b16 %v4303
        %v5472 = vunpack.c.l.b16 %v4304
        %v5473 = vunpack.c.h.b16 %v4304
        %v5474 = vunpack.c.l.b16 %v4305
        %v5475 = vunpack.c.h.b16 %v4305
        %v5476 = vunpack.c.l.b16 %v4306
        %v5477 = vunpack.c.h.b16 %v4306
        %v5478 = vunpack.c.l.b16 %v4307
        %v5479 = vunpack.c.h.b16 %v4307
        %v5480 = vunpack.c.l.b16 %v4308
        %v5481 = vunpack.c.h.b16 %v4308
        %v5482 = vunpack.c.l.b16 %v4309
        %v5483 = vunpack.c.h.b16 %v4309
        %v5484 = vunpack.c.l.b16 %v4310
        %v5485 = vunpack.c.h.b16 %v4310
        %v5486 = vunpack.c.l.b16 %v4311
        %v5487 = vunpack.c.h.b16 %v4311
        %v5488 = vunpack.c.l.b16 %v4312
        %v5489 = vunpack.c.h.b16 %v4312
        %v5490 = vunpack.c.l.b16 %v4313
        %v5491 = vunpack.c.h.b16 %v4313
        %v5492 = vunpack.c.l.b16 %v4314
        %v5493 = vunpack.c.h.b16 %v4314
        %v5494 = vunpack.c.l.b16 %v4315
        %v5495 = vunpack.c.h.b16 %v4315
        %v5496 = vunpack.c.l.b16 %v4316
        %v5497 = vunpack.c.h.b16 %v4316
        %v5498 = vunpack.c.l.b16 %v4317
        %v5499 = vunpack.c.h.b16 %v4317
        %v5500 = vunpack.c.l.b16 %v4318
        %v5501 = vunpack.c.h.b16 %v4318
        %v5502 = vunpack.c.l.b16 %v4319
        %v5503 = vunpack.c.h.b16 %v4319
        %v5504 = vunpack.c.l.b16 %v4320
        %v5505 = vunpack.c.h.b16 %v4320
        %v5506 = vunpack.c.l.b16 %v4321
        %v5507 = vunpack.c.h.b16 %v4321
        %v5508 = vunpack.c.l.b16 %v4322
        %v5509 = vunpack.c.h.b16 %v4322
        %v5510 = vunpack.c.l.b16 %v4323
        %v5511 = vunpack.c.h.b16 %v4323
        %v5512 = vunpack.c.l.b16 %v4324
        %v5513 = vunpack.c.h.b16 %v4324
        %v5514 = vunpack.c.l.b16 %v4325
        %v5515 = vunpack.c.h.b16 %v4325
        %v5516 = vunpack.c.l.b16 %v4326
        %v5517 = vunpack.c.h.b16 %v4326
        %v5518 = vunpack.c.l.b16 %v4327
        %v5519 = vunpack.c.h.b16 %v4327
        %v5520 = vpack.c.b16 %v4758, %v4752
        %v5521 = vpack.c.b16 %v4759, %v4753
        %v5522 = vpack.c.b16 %v4760, %v4754
        %v5523 = vpack.c.b16 %v4761, %v4755
        %v5524 = vpack.c.b16 %v4762, %v4756
        %v5525 = vpack.c.b16 %v4763, %v4757
        %v5526 = vpack.c.b16 %v4770, %v4764
        %v5527 = vpack.c.b16 %v4771, %v4765
        %v5528 = vpack.c.b16 %v4772, %v4766
        %v5529 = vpack.c.b16 %v4773, %v4767
        %v5530 = vpack.c.b16 %v4774, %v4768
        %v5531 = vpack.c.b16 %v4775, %v4769
        %v5532 = vpack.c.b16 %v4782, %v4776
        %v5533 = vpack.c.b16 %v4783, %v4777
        %v5534 = vpack.c.b16 %v4784, %v4778
        %v5535 = vpack.c.b16 %v4785, %v4779
        %v5536 = vpack.c.b16 %v4786, %v4780
        %v5537 = vpack.c.b16 %v4787, %v4781
        %v5538 = vpack.c.b16 %v4794, %v4788
        %v5539 = vpack.c.b16 %v4795, %v4789
        %v5540 = vpack.c.b16 %v4796, %v4790
        %v5541 = vpack.c.b16 %v4797, %v4791
        %v5542 = vpack.c.b16 %v4798, %v4792
        %v5543 = vpack.c.b16 %v4799, %v4793
        %v5544 = vpack.c.b16 %v4806, %v4800
        %v5545 = vpack.c.b16 %v4807, %v4801
        %v5546 = vpack.c.b16 %v4808, %v4802
        %v5547 = vpack.c.b16 %v4809, %v4803
        %v5548 = vpack.c.b16 %v4810, %v4804
        %v5549 = vpack.c.b16 %v4811, %v4805
        %v5550 = vpack.c.b16 %v4818, %v4812
        %v5551 = vpack.c.b16 %v4819, %v4813
        %v5552 = vpack.c.b16 %v4820, %v4814
        %v5553 = vpack.c.b16 %v4821, %v4815
        %v5554 = vpack.c.b16 %v4822, %v4816
        %v5555 = vpack.c.b16 %v4823, %v4817
        %v5556 = vpack.c.b16 %v4830, %v4824
        %v5557 = vpack.c.b16 %v4831, %v4825
        %v5558 = vpack.c.b16 %v4832, %v4826
        %v5559 = vpack.c.b16 %v4833, %v4827
        %v5560 = vpack.c.b16 %v4834, %v4828
        %v5561 = vpack.c.b16 %v4835, %v4829
        %v5562 = vpack.c.b16 %v4842, %v4836
        %v5563 = vpack.c.b16 %v4843, %v4837
        %v5564 = vpack.c.b16 %v4844, %v4838
        %v5565 = vpack.c.b16 %v4845, %v4839
        %v5566 = vpack.c.b16 %v4846, %v4840
        %v5567 = vpack.c.b16 %v4847, %v4841
        %v5568 = vpack.c.b16 %v4854, %v4848
        %v5569 = vpack.c.b16 %v4855, %v4849
        %v5570 = vpack.c.b16 %v4856, %v4850
        %v5571 = vpack.c.b16 %v4857, %v4851
        %v5572 = vpack.c.b16 %v4858, %v4852
        %v5573 = vpack.c.b16 %v4859, %v4853
        %v5574 = vpack.c.b16 %v4866, %v4860
        %v5575 = vpack.c.b16 %v4867, %v4861
        %v5576 = vpack.c.b16 %v4868, %v4862
        %v5577 = vpack.c.b16 %v4869, %v4863
        %v5578 = vpack.c.b16 %v4870, %v4864
        %v5579 = vpack.c.b16 %v4871, %v4865
        %v5580 = vpack.c.b16 %v4878, %v4872
        %v5581 = vpack.c.b16 %v4879, %v4873
        %v5582 = vpack.c.b16 %v4880, %v4874
        %v5583 = vpack.c.b16 %v4881, %v4875
        %v5584 = vpack.c.b16 %v4882, %v4876
        %v5585 = vpack.c.b16 %v4883, %v4877
        %v5586 = vpack.c.b16 %v4890, %v4884
        %v5587 = vpack.c.b16 %v4891, %v4885
        %v5588 = vpack.c.b16 %v4892, %v4886
        %v5589 = vpack.c.b16 %v4893, %v4887
        %v5590 = vpack.c.b16 %v4894, %v4888
        %v5591 = vpack.c.b16 %v4895, %v4889
        %v5592 = vpack.c.b16 %v4902, %v4896
        %v5593 = vpack.c.b16 %v4903, %v4897
        %v5594 = vpack.c.b16 %v4904, %v4898
        %v5595 = vpack.c.b16 %v4905, %v4899
        %v5596 = vpack.c.b16 %v4906, %v4900
        %v5597 = vpack.c.b16 %v4907, %v4901
        %v5598 = vpack.c.b16 %v4914, %v4908
        %v5599 = vpack.c.b16 %v4915, %v4909
        %v5600 = vpack.c.b16 %v4916, %v4910
        %v5601 = vpack.c.b16 %v4917, %v4911
        %v5602 = vpack.c.b16 %v4918, %v4912
        %v5603 = vpack.c.b16 %v4919, %v4913
        %v5604 = vpack.c.b16 %v4926, %v4920
        %v5605 = vpack.c.b16 %v4927, %v4921
        %v5606 = vpack.c.b16 %v4928, %v4922
        %v5607 = vpack.c.b16 %v4929, %v4923
        %v5608 = vpack.c.b16 %v4930, %v4924
        %v5609 = vpack.c.b16 %v4931, %v4925
        %v5610 = vpack.c.b16 %v4938, %v4932
        %v5611 = vpack.c.b16 %v4939, %v4933
        %v5612 = vpack.c.b16 %v4940, %v4934
        %v5613 = vpack.c.b16 %v4941, %v4935
        %v5614 = vpack.c.b16 %v4942, %v4936
        %v5615 = vpack.c.b16 %v4943, %v4937
        %v5616 = vpack.c.b16 %v4950, %v4944
        %v5617 = vpack.c.b16 %v4951, %v4945
        %v5618 = vpack.c.b16 %v4952, %v4946
        %v5619 = vpack.c.b16 %v4953, %v4947
        %v5620 = vpack.c.b16 %v4954, %v4948
        %v5621 = vpack.c.b16 %v4955, %v4949
        %v5622 = vpack.c.b16 %v4962, %v4956
        %v5623 = vpack.c.b16 %v4963, %v4957
        %v5624 = vpack.c.b16 %v4964, %v4958
        %v5625 = vpack.c.b16 %v4965, %v4959
        %v5626 = vpack.c.b16 %v4966, %v4960
        %v5627 = vpack.c.b16 %v4967, %v4961
        %v5628 = vpack.c.b16 %v4974, %v4968
        %v5629 = vpack.c.b16 %v4975, %v4969
        %v5630 = vpack.c.b16 %v4976, %v4970
        %v5631 = vpack.c.b16 %v4977, %v4971
        %v5632 = vpack.c.b16 %v4978, %v4972
        %v5633 = vpack.c.b16 %v4979, %v4973
        %v5634 = vpack.c.b16 %v4986, %v4980
        %v5635 = vpack.c.b16 %v4987, %v4981
        %v5636 = vpack.c.b16 %v4988, %v4982
        %v5637 = vpack.c.b16 %v4989, %v4983
        %v5638 = vpack.c.b16 %v4990, %v4984
        %v5639 = vpack.c.b16 %v4991, %v4985
        %v5640 = vpack.c.b16 %v4998, %v4992
        %v5641 = vpack.c.b16 %v4999, %v4993
        %v5642 = vpack.c.b16 %v5000, %v4994
        %v5643 = vpack.c.b16 %v5001, %v4995
        %v5644 = vpack.c.b16 %v5002, %v4996
        %v5645 = vpack.c.b16 %v5003, %v4997
        %v5646 = vpack.c.b16 %v5010, %v5004
        %v5647 = vpack.c.b16 %v5011, %v5005
        %v5648 = vpack.c.b16 %v5012, %v5006
        %v5649 = vpack.c.b16 %v5013, %v5007
        %v5650 = vpack.c.b16 %v5014, %v5008
        %v5651 = vpack.c.b16 %v5015, %v5009
        %v5652 = vpack.c.b16 %v5022, %v5016
        %v5653 = vpack.c.b16 %v5023, %v5017
        %v5654 = vpack.c.b16 %v5024, %v5018
        %v5655 = vpack.c.b16 %v5025, %v5019
        %v5656 = vpack.c.b16 %v5026, %v5020
        %v5657 = vpack.c.b16 %v5027, %v5021
        %v5658 = vpack.c.b16 %v5034, %v5028
        %v5659 = vpack.c.b16 %v5035, %v5029
        %v5660 = vpack.c.b16 %v5036, %v5030
        %v5661 = vpack.c.b16 %v5037, %v5031
        %v5662 = vpack.c.b16 %v5038, %v5032
        %v5663 = vpack.c.b16 %v5039, %v5033
        %v5664 = vpack.c.b16 %v5046, %v5040
        %v5665 = vpack.c.b16 %v5047, %v5041
        %v5666 = vpack.c.b16 %v5048, %v5042
        %v5667 = vpack.c.b16 %v5049, %v5043
        %v5668 = vpack.c.b16 %v5050, %v5044
        %v5669 = vpack.c.b16 %v5051, %v5045
        %v5670 = vpack.c.b16 %v5058, %v5052
        %v5671 = vpack.c.b16 %v5059, %v5053
        %v5672 = vpack.c.b16 %v5060, %v5054
        %v5673 = vpack.c.b16 %v5061, %v5055
        %v5674 = vpack.c.b16 %v5062, %v5056
        %v5675 = vpack.c.b16 %v5063, %v5057
        %v5676 = vpack.c.b16 %v5070, %v5064
        %v5677 = vpack.c.b16 %v5071, %v5065
        %v5678 = vpack.c.b16 %v5072, %v5066
        %v5679 = vpack.c.b16 %v5073, %v5067
        %v5680 = vpack.c.b16 %v5074, %v5068
        %v5681 = vpack.c.b16 %v5075, %v5069
        %v5682 = vpack.c.b16 %v5082, %v5076
        %v5683 = vpack.c.b16 %v5083, %v5077
        %v5684 = vpack.c.b16 %v5084, %v5078
        %v5685 = vpack.c.b16 %v5085, %v5079
        %v5686 = vpack.c.b16 %v5086, %v5080
        %v5687 = vpack.c.b16 %v5087, %v5081
        %v5688 = vpack.c.b16 %v5094, %v5088
        %v5689 = vpack.c.b16 %v5095, %v5089
        %v5690 = vpack.c.b16 %v5096, %v5090
        %v5691 = vpack.c.b16 %v5097, %v5091
        %v5692 = vpack.c.b16 %v5098, %v5092
        %v5693 = vpack.c.b16 %v5099, %v5093
        %v5694 = vpack.c.b16 %v5106, %v5100
        %v5695 = vpack.c.b16 %v5107, %v5101
        %v5696 = vpack.c.b16 %v5108, %v5102
        %v5697 = vpack.c.b16 %v5109, %v5103
        %v5698 = vpack.c.b16 %v5110, %v5104
        %v5699 = vpack.c.b16 %v5111, %v5105
        %v5700 = vpack.c.b16 %v5118, %v5112
        %v5701 = vpack.c.b16 %v5119, %v5113
        %v5702 = vpack.c.b16 %v5120, %v5114
        %v5703 = vpack.c.b16 %v5121, %v5115
        %v5704 = vpack.c.b16 %v5122, %v5116
        %v5705 = vpack.c.b16 %v5123, %v5117
        %v5706 = vpack.c.b16 %v5130, %v5124
        %v5707 = vpack.c.b16 %v5131, %v5125
        %v5708 = vpack.c.b16 %v5132, %v5126
        %v5709 = vpack.c.b16 %v5133, %v5127
        %v5710 = vpack.c.b16 %v5134, %v5128
        %v5711 = vpack.c.b16 %v5135, %v5129
        %v5712 = vpack.c.b16 %v5142, %v5136
        %v5713 = vpack.c.b16 %v5143, %v5137
        %v5714 = vpack.c.b16 %v5144, %v5138
        %v5715 = vpack.c.b16 %v5145, %v5139
        %v5716 = vpack.c.b16 %v5146, %v5140
        %v5717 = vpack.c.b16 %v5147, %v5141
        %v5718 = vpack.c.b16 %v5154, %v5148
        %v5719 = vpack.c.b16 %v5155, %v5149
        %v5720 = vpack.c.b16 %v5156, %v5150
        %v5721 = vpack.c.b16 %v5157, %v5151
        %v5722 = vpack.c.b16 %v5158, %v5152
        %v5723 = vpack.c.b16 %v5159, %v5153
        %v5724 = vpack.c.b16 %v5166, %v5160
        %v5725 = vpack.c.b16 %v5167, %v5161
        %v5726 = vpack.c.b16 %v5168, %v5162
        %v5727 = vpack.c.b16 %v5169, %v5163
        %v5728 = vpack.c.b16 %v5170, %v5164
        %v5729 = vpack.c.b16 %v5171, %v5165
        %v5730 = vpack.c.b16 %v5178, %v5172
        %v5731 = vpack.c.b16 %v5179, %v5173
        %v5732 = vpack.c.b16 %v5180, %v5174
        %v5733 = vpack.c.b16 %v5181, %v5175
        %v5734 = vpack.c.b16 %v5182, %v5176
        %v5735 = vpack.c.b16 %v5183, %v5177
        %v5736 = vpack.c.b16 %v5190, %v5184
        %v5737 = vpack.c.b16 %v5191, %v5185
        %v5738 = vpack.c.b16 %v5192, %v5186
        %v5739 = vpack.c.b16 %v5193, %v5187
        %v5740 = vpack.c.b16 %v5194, %v5188
        %v5741 = vpack.c.b16 %v5195, %v5189
        %v5742 = vpack.c.b16 %v5202, %v5196
        %v5743 = vpack.c.b16 %v5203, %v5197
        %v5744 = vpack.c.b16 %v5204, %v5198
        %v5745 = vpack.c.b16 %v5205, %v5199
        %v5746 = vpack.c.b16 %v5206, %v5200
        %v5747 = vpack.c.b16 %v5207, %v5201
        %v5748 = vpack.c.b16 %v5214, %v5208
        %v5749 = vpack.c.b16 %v5215, %v5209
        %v5750 = vpack.c.b16 %v5216, %v5210
        %v5751 = vpack.c.b16 %v5217, %v5211
        %v5752 = vpack.c.b16 %v5218, %v5212
        %v5753 = vpack.c.b16 %v5219, %v5213
        %v5754 = vpack.c.b16 %v5226, %v5220
        %v5755 = vpack.c.b16 %v5227, %v5221
        %v5756 = vpack.c.b16 %v5228, %v5222
        %v5757 = vpack.c.b16 %v5229, %v5223
        %v5758 = vpack.c.b16 %v5230, %v5224
        %v5759 = vpack.c.b16 %v5231, %v5225
        %v5760 = vpack.c.b16 %v5238, %v5232
        %v5761 = vpack.c.b16 %v5239, %v5233
        %v5762 = vpack.c.b16 %v5240, %v5234
        %v5763 = vpack.c.b16 %v5241, %v5235
        %v5764 = vpack.c.b16 %v5242, %v5236
        %v5765 = vpack.c.b16 %v5243, %v5237
        %v5766 = vpack.c.b16 %v5250, %v5244
        %v5767 = vpack.c.b16 %v5251, %v5245
        %v5768 = vpack.c.b16 %v5252, %v5246
        %v5769 = vpack.c.b16 %v5253, %v5247
        %v5770 = vpack.c.b16 %v5254, %v5248
        %v5771 = vpack.c.b16 %v5255, %v5249
        %v5772 = vpack.c.b16 %v5262, %v5256
        %v5773 = vpack.c.b16 %v5263, %v5257
        %v5774 = vpack.c.b16 %v5264, %v5258
        %v5775 = vpack.c.b16 %v5265, %v5259
        %v5776 = vpack.c.b16 %v5266, %v5260
        %v5777 = vpack.c.b16 %v5267, %v5261
        %v5778 = vpack.c.b16 %v5274, %v5268
        %v5779 = vpack.c.b16 %v5275, %v5269
        %v5780 = vpack.c.b16 %v5276, %v5270
        %v5781 = vpack.c.b16 %v5277, %v5271
        %v5782 = vpack.c.b16 %v5278, %v5272
        %v5783 = vpack.c.b16 %v5279, %v5273
        %v5784 = vpack.c.b16 %v5286, %v5280
        %v5785 = vpack.c.b16 %v5287, %v5281
        %v5786 = vpack.c.b16 %v5288, %v5282
        %v5787 = vpack.c.b16 %v5289, %v5283
        %v5788 = vpack.c.b16 %v5290, %v5284
        %v5789 = vpack.c.b16 %v5291, %v5285
        %v5790 = vpack.c.b16 %v5298, %v5292
        %v5791 = vpack.c.b16 %v5299, %v5293
        %v5792 = vpack.c.b16 %v5300, %v5294
        %v5793 = vpack.c.b16 %v5301, %v5295
        %v5794 = vpack.c.b16 %v5302, %v5296
        %v5795 = vpack.c.b16 %v5303, %v5297
        %v5796 = vpack.c.b16 %v5310, %v5304
        %v5797 = vpack.c.b16 %v5311, %v5305
        %v5798 = vpack.c.b16 %v5312, %v5306
        %v5799 = vpack.c.b16 %v5313, %v5307
        %v5800 = vpack.c.b16 %v5314, %v5308
        %v5801 = vpack.c.b16 %v5315, %v5309
        %v5802 = vpack.c.b16 %v5322, %v5316
        %v5803 = vpack.c.b16 %v5323, %v5317
        %v5804 = vpack.c.b16 %v5324, %v5318
        %v5805 = vpack.c.b16 %v5325, %v5319
        %v5806 = vpack.c.b16 %v5326, %v5320
        %v5807 = vpack.c.b16 %v5327, %v5321
        %v5808 = vpack.c.b16 %v5334, %v5328
        %v5809 = vpack.c.b16 %v5335, %v5329
        %v5810 = vpack.c.b16 %v5336, %v5330
        %v5811 = vpack.c.b16 %v5337, %v5331
        %v5812 = vpack.c.b16 %v5338, %v5332
        %v5813 = vpack.c.b16 %v5339, %v5333
        %v5814 = vpack.c.b16 %v5346, %v5340
        %v5815 = vpack.c.b16 %v5347, %v5341
        %v5816 = vpack.c.b16 %v5348, %v5342
        %v5817 = vpack.c.b16 %v5349, %v5343
        %v5818 = vpack.c.b16 %v5350, %v5344
        %v5819 = vpack.c.b16 %v5351, %v5345
        %v5820 = vpack.c.b16 %v5358, %v5352
        %v5821 = vpack.c.b16 %v5359, %v5353
        %v5822 = vpack.c.b16 %v5360, %v5354
        %v5823 = vpack.c.b16 %v5361, %v5355
        %v5824 = vpack.c.b16 %v5362, %v5356
        %v5825 = vpack.c.b16 %v5363, %v5357
        %v5826 = vpack.c.b16 %v5370, %v5364
        %v5827 = vpack.c.b16 %v5371, %v5365
        %v5828 = vpack.c.b16 %v5372, %v5366
        %v5829 = vpack.c.b16 %v5373, %v5367
        %v5830 = vpack.c.b16 %v5374, %v5368
        %v5831 = vpack.c.b16 %v5375, %v5369
        %v5832 = vpack.c.b16 %v5382, %v5376
        %v5833 = vpack.c.b16 %v5383, %v5377
        %v5834 = vpack.c.b16 %v5384, %v5378
        %v5835 = vpack.c.b16 %v5385, %v5379
        %v5836 = vpack.c.b16 %v5386, %v5380
        %v5837 = vpack.c.b16 %v5387, %v5381
        %v5838 = vpack.c.b16 %v5394, %v5388
        %v5839 = vpack.c.b16 %v5395, %v5389
        %v5840 = vpack.c.b16 %v5396, %v5390
        %v5841 = vpack.c.b16 %v5397, %v5391
        %v5842 = vpack.c.b16 %v5398, %v5392
        %v5843 = vpack.c.b16 %v5399, %v5393
        %v5844 = vpack.c.b16 %v5406, %v5400
        %v5845 = vpack.c.b16 %v5407, %v5401
        %v5846 = vpack.c.b16 %v5408, %v5402
        %v5847 = vpack.c.b16 %v5409, %v5403
        %v5848 = vpack.c.b16 %v5410, %v5404
        %v5849 = vpack.c.b16 %v5411, %v5405
        %v5850 = vpack.c.b16 %v5418, %v5412
        %v5851 = vpack.c.b16 %v5419, %v5413
        %v5852 = vpack.c.b16 %v5420, %v5414
        %v5853 = vpack.c.b16 %v5421, %v5415
        %v5854 = vpack.c.b16 %v5422, %v5416
        %v5855 = vpack.c.b16 %v5423, %v5417
        %v5856 = vpack.c.b16 %v5430, %v5424
        %v5857 = vpack.c.b16 %v5431, %v5425
        %v5858 = vpack.c.b16 %v5432, %v5426
        %v5859 = vpack.c.b16 %v5433, %v5427
        %v5860 = vpack.c.b16 %v5434, %v5428
        %v5861 = vpack.c.b16 %v5435, %v5429
        %v5862 = vpack.c.b16 %v5442, %v5436
        %v5863 = vpack.c.b16 %v5443, %v5437
        %v5864 = vpack.c.b16 %v5444, %v5438
        %v5865 = vpack.c.b16 %v5445, %v5439
        %v5866 = vpack.c.b16 %v5446, %v5440
        %v5867 = vpack.c.b16 %v5447, %v5441
        %v5868 = vpack.c.b16 %v5454, %v5448
        %v5869 = vpack.c.b16 %v5455, %v5449
        %v5870 = vpack.c.b16 %v5456, %v5450
        %v5871 = vpack.c.b16 %v5457, %v5451
        %v5872 = vpack.c.b16 %v5458, %v5452
        %v5873 = vpack.c.b16 %v5459, %v5453
        %v5874 = vpack.c.b16 %v5466, %v5460
        %v5875 = vpack.c.b16 %v5467, %v5461
        %v5876 = vpack.c.b16 %v5468, %v5462
        %v5877 = vpack.c.b16 %v5469, %v5463
        %v5878 = vpack.c.b16 %v5470, %v5464
        %v5879 = vpack.c.b16 %v5471, %v5465
        %v5880 = vpack.c.b16 %v5478, %v5472
        %v5881 = vpack.c.b16 %v5479, %v5473
        %v5882 = vpack.c.b16 %v5480, %v5474
        %v5883 = vpack.c.b16 %v5481, %v5475
        %v5884 = vpack.c.b16 %v5482, %v5476
        %v5885 = vpack.c.b16 %v5483, %v5477
        %v5886 = vpack.c.b16 %v5490, %v5484
        %v5887 = vpack.c.b16 %v5491, %v5485
        %v5888 = vpack.c.b16 %v5492, %v5486
        %v5889 = vpack.c.b16 %v5493, %v5487
        %v5890 = vpack.c.b16 %v5494, %v5488
        %v5891 = vpack.c.b16 %v5495, %v5489
        %v5892 = vpack.c.b16 %v5502, %v5496
        %v5893 = vpack.c.b16 %v5503, %v5497
        %v5894 = vpack.c.b16 %v5504, %v5498
        %v5895 = vpack.c.b16 %v5505, %v5499
        %v5896 = vpack.c.b16 %v5506, %v5500
        %v5897 = vpack.c.b16 %v5507, %v5501
        %v5898 = vpack.c.b16 %v5514, %v5508
        %v5899 = vpack.c.b16 %v5515, %v5509
        %v5900 = vpack.c.b16 %v5516, %v5510
        %v5901 = vpack.c.b16 %v5517, %v5511
        %v5902 = vpack.c.b16 %v5518, %v5512
        %v5903 = vpack.c.b16 %v5519, %v5513
        %6288 = vmatprep.subr.bf16.mxu0 %v5563
        %6289 = vmatpush1.bf16.msra.mxu0 %v5562
        %6290 = vmatprep.subr.bf16.mxu0 %v5557
        %6291 = vmatpush1.bf16.msra.mxu0 %v5556
        %6292 = vmatprep.subr.bf16.mxu0 %v5551
        %6293 = vmatpush1.bf16.msra.mxu0 %v5550
        %6294 = vmatprep.subr.bf16.mxu0 %v5545
        %6295 = vmatpush1.bf16.msra.mxu0 %v5544
        %6296 = vmatprep.subr.bf16.mxu0 %v5539
        %6297 = vmatpush1.bf16.msra.mxu0 %v5538
        %6298 = vmatprep.subr.bf16.mxu0 %v5533
        %6299 = vmatpush1.bf16.msra.mxu0 %v5532
        %6300 = vmatprep.subr.bf16.mxu0 %v5527
        %6301 = vmatpush1.bf16.msra.mxu0 %v5526
        %6302 = vmatprep.subr.bf16.mxu0 %v5521
        %6303 = vmatpush1.bf16.msra.mxu0 %v5520
        %6304 = vmatprep.subr.bf16.mxu0 %v5611
        %6305 = vmatpush2.bf16.msra.mxu0 %v5610
        %6306 = vmatprep.subr.bf16.mxu0 %v5605
        %6307 = vmatpush2.bf16.msra.mxu0 %v5604
        %6308 = vmatprep.subr.bf16.mxu0 %v5599
        %6309 = vmatpush2.bf16.msra.mxu0 %v5598
        %6310 = vmatprep.subr.bf16.mxu0 %v5593
        %6311 = vmatpush2.bf16.msra.mxu0 %v5592
        %6312 = vmatprep.subr.bf16.mxu0 %v5587
        %6313 = vmatpush2.bf16.msra.mxu0 %v5586
        %6314 = vmatprep.subr.bf16.mxu0 %v5581
        %6315 = vmatpush2.bf16.msra.mxu0 %v5580
        %6316 = vmatprep.subr.bf16.mxu0 %v5575
        %6317 = vmatpush2.bf16.msra.mxu0 %v5574
        %6318 = vmatprep.subr.bf16.mxu0 %v5569
        %6319 = vmatpush2.bf16.msra.mxu0 %v5568
        %6320 = vmatprep.mubr.bf16.mxu0 %v4353
        %6321 = vmatmul.mubr.bf16.gmra.mxu0 %v4352
        %v6322 = vpop.f32.mrf.mxu0
        %v6323 = vadd.f32 0.0, %v6322
        %v6324 = vpop.f32.mrf.mxu0
        %v6325 = vadd.f32 0.0, %v6324
        %v6326 = vpop.f32.mrf.mxu0
        %v6327 = vadd.f32 0.0, %v6326
        %v6328 = vpop.f32.mrf.mxu0
        %v6329 = vadd.f32 0.0, %v6328
        %6330 = vdwg.mxu0
        %6331 = vmatprep.subr.bf16.mxu0 %v5659
        %6332 = vmatpush1.bf16.msra.mxu0 %v5658
        %6333 = vmatprep.subr.bf16.mxu0 %v5653
        %6334 = vmatpush1.bf16.msra.mxu0 %v5652
        %6335 = vmatprep.subr.bf16.mxu0 %v5647
        %6336 = vmatpush1.bf16.msra.mxu0 %v5646
        %6337 = vmatprep.subr.bf16.mxu0 %v5641
        %6338 = vmatpush1.bf16.msra.mxu0 %v5640
        %6339 = vmatprep.subr.bf16.mxu0 %v5635
        %6340 = vmatpush1.bf16.msra.mxu0 %v5634
        %6341 = vmatprep.subr.bf16.mxu0 %v5629
        %6342 = vmatpush1.bf16.msra.mxu0 %v5628
        %6343 = vmatprep.subr.bf16.mxu0 %v5623
        %6344 = vmatpush1.bf16.msra.mxu0 %v5622
        %6345 = vmatprep.subr.bf16.mxu0 %v5617
        %6346 = vmatpush1.bf16.msra.mxu0 %v5616
        %6347 = vmatprep.subr.bf16.mxu0 %v5707
        %6348 = vmatpush2.bf16.msra.mxu0 %v5706
        %6349 = vmatprep.subr.bf16.mxu0 %v5701
        %6350 = vmatpush2.bf16.msra.mxu0 %v5700
        %6351 = vmatprep.subr.bf16.mxu0 %v5695
        %6352 = vmatpush2.bf16.msra.mxu0 %v5694
        %6353 = vmatprep.subr.bf16.mxu0 %v5689
        %6354 = vmatpush2.bf16.msra.mxu0 %v5688
        %6355 = vmatprep.subr.bf16.mxu0 %v5683
        %6356 = vmatpush2.bf16.msra.mxu0 %v5682
        %6357 = vmatprep.subr.bf16.mxu0 %v5677
        %6358 = vmatpush2.bf16.msra.mxu0 %v5676
        %6359 = vmatprep.subr.bf16.mxu0 %v5671
        %6360 = vmatpush2.bf16.msra.mxu0 %v5670
        %6361 = vmatprep.subr.bf16.mxu0 %v5665
        %6362 = vmatpush2.bf16.msra.mxu0 %v5664
        %6363 = vmatprep.mubr.bf16.mxu0 %v4355
        %6364 = vmatmul.mubr.bf16.gmra.mxu0 %v4354
        %v6365 = vpop.f32.mrf.mxu0
        %v6366 = vadd.f32 %v6323, %v6365
        %v6367 = vpop.f32.mrf.mxu0
        %v6368 = vadd.f32 %v6325, %v6367
        %v6369 = vpop.f32.mrf.mxu0
        %v6370 = vadd.f32 %v6327, %v6369
        %v6371 = vpop.f32.mrf.mxu0
        %v6372 = vadd.f32 %v6329, %v6371
        %6373 = vdwg.mxu0
        %6374 = vmatprep.subr.bf16.mxu0 %v5755
        %6375 = vmatpush1.bf16.msra.mxu0 %v5754
        %6376 = vmatprep.subr.bf16.mxu0 %v5749
        %6377 = vmatpush1.bf16.msra.mxu0 %v5748
        %6378 = vmatprep.subr.bf16.mxu0 %v5743
        %6379 = vmatpush1.bf16.msra.mxu0 %v5742
        %6380 = vmatprep.subr.bf16.mxu0 %v5737
        %6381 = vmatpush1.bf16.msra.mxu0 %v5736
        %6382 = vmatprep.subr.bf16.mxu0 %v5731
        %6383 = vmatpush1.bf16.msra.mxu0 %v5730
        %6384 = vmatprep.subr.bf16.mxu0 %v5725
        %6385 = vmatpush1.bf16.msra.mxu0 %v5724
        %6386 = vmatprep.subr.bf16.mxu0 %v5719
        %6387 = vmatpush1.bf16.msra.mxu0 %v5718
        %6388 = vmatprep.subr.bf16.mxu0 %v5713
        %6389 = vmatpush1.bf16.msra.mxu0 %v5712
        %6390 = vmatprep.subr.bf16.mxu0 %v5803
        %6391 = vmatpush2.bf16.msra.mxu0 %v5802
        %6392 = vmatprep.subr.bf16.mxu0 %v5797
        %6393 = vmatpush2.bf16.msra.mxu0 %v5796
        %6394 = vmatprep.subr.bf16.mxu0 %v5791
        %6395 = vmatpush2.bf16.msra.mxu0 %v5790
        %6396 = vmatprep.subr.bf16.mxu0 %v5785
        %6397 = vmatpush2.bf16.msra.mxu0 %v5784
        %6398 = vmatprep.subr.bf16.mxu0 %v5779
        %6399 = vmatpush2.bf16.msra.mxu0 %v5778
        %6400 = vmatprep.subr.bf16.mxu0 %v5773
        %6401 = vmatpush2.bf16.msra.mxu0 %v5772
        %6402 = vmatprep.subr.bf16.mxu0 %v5767
        %6403 = vmatpush2.bf16.msra.mxu0 %v5766
        %6404 = vmatprep.subr.bf16.mxu0 %v5761
        %6405 = vmatpush2.bf16.msra.mxu0 %v5760
        %6406 = vmatprep.mubr.bf16.mxu0 %v4357
        %6407 = vmatmul.mubr.bf16.gmra.mxu0 %v4356
        %v6408 = vpop.f32.mrf.mxu0
        %v6409 = vadd.f32 %v6366, %v6408
        %v6410 = vpop.f32.mrf.mxu0
        %v6411 = vadd.f32 %v6368, %v6410
        %v6412 = vpop.f32.mrf.mxu0
        %v6413 = vadd.f32 %v6370, %v6412
        %v6414 = vpop.f32.mrf.mxu0
        %v6415 = vadd.f32 %v6372, %v6414
        %6416 = vdwg.mxu0
        %6417 = vmatprep.subr.bf16.mxu0 %v5851
        %6418 = vmatpush1.bf16.msra.mxu0 %v5850
        %6419 = vmatprep.subr.bf16.mxu0 %v5845
        %6420 = vmatpush1.bf16.msra.mxu0 %v5844
        %6421 = vmatprep.subr.bf16.mxu0 %v5839
        %6422 = vmatpush1.bf16.msra.mxu0 %v5838
        %6423 = vmatprep.subr.bf16.mxu0 %v5833
        %6424 = vmatpush1.bf16.msra.mxu0 %v5832
        %6425 = vmatprep.subr.bf16.mxu0 %v5827
        %6426 = vmatpush1.bf16.msra.mxu0 %v5826
        %6427 = vmatprep.subr.bf16.mxu0 %v5821
        %6428 = vmatpush1.bf16.msra.mxu0 %v5820
        %6429 = vmatprep.subr.bf16.mxu0 %v5815
        %6430 = vmatpush1.bf16.msra.mxu0 %v5814
        %6431 = vmatprep.subr.bf16.mxu0 %v5809
        %6432 = vmatpush1.bf16.msra.mxu0 %v5808
        %6433 = vmatprep.subr.bf16.mxu0 %v5899
        %6434 = vmatpush2.bf16.msra.mxu0 %v5898
        %6435 = vmatprep.subr.bf16.mxu0 %v5893
        %6436 = vmatpush2.bf16.msra.mxu0 %v5892
        %6437 = vmatprep.subr.bf16.mxu0 %v5887
        %6438 = vmatpush2.bf16.msra.mxu0 %v5886
        %6439 = vmatprep.subr.bf16.mxu0 %v5881
        %6440 = vmatpush2.bf16.msra.mxu0 %v5880
        %6441 = vmatprep.subr.bf16.mxu0 %v5875
        %6442 = vmatpush2.bf16.msra.mxu0 %v5874
        %6443 = vmatprep.subr.bf16.mxu0 %v5869
        %6444 = vmatpush2.bf16.msra.mxu0 %v5868
        %6445 = vmatprep.subr.bf16.mxu0 %v5863
        %6446 = vmatpush2.bf16.msra.mxu0 %v5862
        %6447 = vmatprep.subr.bf16.mxu0 %v5857
        %6448 = vmatpush2.bf16.msra.mxu0 %v5856
        %6449 = vmatprep.mubr.bf16.mxu0 %v4359
        %6450 = vmatmul.mubr.bf16.gmra.mxu0 %v4358
        %v6451 = vpop.f32.mrf.mxu0
        %v6452 = vadd.f32 %v6409, %v6451
        %v6453 = vpop.f32.mrf.mxu0
        %v6454 = vadd.f32 %v6411, %v6453
        %v6455 = vpop.f32.mrf.mxu0
        %v6456 = vadd.f32 %v6413, %v6455
        %v6457 = vpop.f32.mrf.mxu0
        %v6458 = vadd.f32 %v6415, %v6457
        %6459 = vdwg.mxu0
        %6460 = vmatprep.subr.bf16.mxu0 %v5565
        %6461 = vmatpush1.bf16.msra.mxu0 %v5564
        %6462 = vmatprep.subr.bf16.mxu0 %v5559
        %6463 = vmatpush1.bf16.msra.mxu0 %v5558
        %6464 = vmatprep.subr.bf16.mxu0 %v5553
        %6465 = vmatpush1.bf16.msra.mxu0 %v5552
        %6466 = vmatprep.subr.bf16.mxu0 %v5547
        %6467 = vmatpush1.bf16.msra.mxu0 %v5546
        %6468 = vmatprep.subr.bf16.mxu0 %v5541
        %6469 = vmatpush1.bf16.msra.mxu0 %v5540
        %6470 = vmatprep.subr.bf16.mxu0 %v5535
        %6471 = vmatpush1.bf16.msra.mxu0 %v5534
        %6472 = vmatprep.subr.bf16.mxu0 %v5529
        %6473 = vmatpush1.bf16.msra.mxu0 %v5528
        %6474 = vmatprep.subr.bf16.mxu0 %v5523
        %6475 = vmatpush1.bf16.msra.mxu0 %v5522
        %6476 = vmatprep.subr.bf16.mxu0 %v5613
        %6477 = vmatpush2.bf16.msra.mxu0 %v5612
        %6478 = vmatprep.subr.bf16.mxu0 %v5607
        %6479 = vmatpush2.bf16.msra.mxu0 %v5606
        %6480 = vmatprep.subr.bf16.mxu0 %v5601
        %6481 = vmatpush2.bf16.msra.mxu0 %v5600
        %6482 = vmatprep.subr.bf16.mxu0 %v5595
        %6483 = vmatpush2.bf16.msra.mxu0 %v5594
        %6484 = vmatprep.subr.bf16.mxu0 %v5589
        %6485 = vmatpush2.bf16.msra.mxu0 %v5588
        %6486 = vmatprep.subr.bf16.mxu0 %v5583
        %6487 = vmatpush2.bf16.msra.mxu0 %v5582
        %6488 = vmatprep.subr.bf16.mxu0 %v5577
        %6489 = vmatpush2.bf16.msra.mxu0 %v5576
        %6490 = vmatprep.subr.bf16.mxu0 %v5571
        %6491 = vmatpush2.bf16.msra.mxu0 %v5570
        %6492 = vmatprep.mubr.bf16.mxu0 %v4353
        %6493 = vmatmul.mubr.bf16.gmra.mxu0 %v4352
        %v6494 = vpop.f32.mrf.mxu0
        %v6495 = vadd.f32 0.0, %v6494
        %v6496 = vpop.f32.mrf.mxu0
        %v6497 = vadd.f32 0.0, %v6496
        %v6498 = vpop.f32.mrf.mxu0
        %v6499 = vadd.f32 0.0, %v6498
        %v6500 = vpop.f32.mrf.mxu0
        %v6501 = vadd.f32 0.0, %v6500
        %6502 = vdwg.mxu0
        %6503 = vmatprep.subr.bf16.mxu0 %v5661
        %6504 = vmatpush1.bf16.msra.mxu0 %v5660
        %6505 = vmatprep.subr.bf16.mxu0 %v5655
        %6506 = vmatpush1.bf16.msra.mxu0 %v5654
        %6507 = vmatprep.subr.bf16.mxu0 %v5649
        %6508 = vmatpush1.bf16.msra.mxu0 %v5648
        %6509 = vmatprep.subr.bf16.mxu0 %v5643
        %6510 = vmatpush1.bf16.msra.mxu0 %v5642
        %6511 = vmatprep.subr.bf16.mxu0 %v5637
        %6512 = vmatpush1.bf16.msra.mxu0 %v5636
        %6513 = vmatprep.subr.bf16.mxu0 %v5631
        %6514 = vmatpush1.bf16.msra.mxu0 %v5630
        %6515 = vmatprep.subr.bf16.mxu0 %v5625
        %6516 = vmatpush1.bf16.msra.mxu0 %v5624
        %6517 = vmatprep.subr.bf16.mxu0 %v5619
        %6518 = vmatpush1.bf16.msra.mxu0 %v5618
        %6519 = vmatprep.subr.bf16.mxu0 %v5709
        %6520 = vmatpush2.bf16.msra.mxu0 %v5708
        %6521 = vmatprep.subr.bf16.mxu0 %v5703
        %6522 = vmatpush2.bf16.msra.mxu0 %v5702
        %6523 = vmatprep.subr.bf16.mxu0 %v5697
        %6524 = vmatpush2.bf16.msra.mxu0 %v5696
        %6525 = vmatprep.subr.bf16.mxu0 %v5691
        %6526 = vmatpush2.bf16.msra.mxu0 %v5690
        %6527 = vmatprep.subr.bf16.mxu0 %v5685
        %6528 = vmatpush2.bf16.msra.mxu0 %v5684
        %6529 = vmatprep.subr.bf16.mxu0 %v5679
        %6530 = vmatpush2.bf16.msra.mxu0 %v5678
        %6531 = vmatprep.subr.bf16.mxu0 %v5673
        %6532 = vmatpush2.bf16.msra.mxu0 %v5672
        %6533 = vmatprep.subr.bf16.mxu0 %v5667
        %6534 = vmatpush2.bf16.msra.mxu0 %v5666
        %6535 = vmatprep.mubr.bf16.mxu0 %v4355
        %6536 = vmatmul.mubr.bf16.gmra.mxu0 %v4354
        %v6537 = vpop.f32.mrf.mxu0
        %v6538 = vadd.f32 %v6495, %v6537
        %v6539 = vpop.f32.mrf.mxu0
        %v6540 = vadd.f32 %v6497, %v6539
        %v6541 = vpop.f32.mrf.mxu0
        %v6542 = vadd.f32 %v6499, %v6541
        %v6543 = vpop.f32.mrf.mxu0
        %v6544 = vadd.f32 %v6501, %v6543
        %6545 = vdwg.mxu0
        %6546 = vmatprep.subr.bf16.mxu0 %v5757
        %6547 = vmatpush1.bf16.msra.mxu0 %v5756
        %6548 = vmatprep.subr.bf16.mxu0 %v5751
        %6549 = vmatpush1.bf16.msra.mxu0 %v5750
        %6550 = vmatprep.subr.bf16.mxu0 %v5745
        %6551 = vmatpush1.bf16.msra.mxu0 %v5744
        %6552 = vmatprep.subr.bf16.mxu0 %v5739
        %6553 = vmatpush1.bf16.msra.mxu0 %v5738
        %6554 = vmatprep.subr.bf16.mxu0 %v5733
        %6555 = vmatpush1.bf16.msra.mxu0 %v5732
        %6556 = vmatprep.subr.bf16.mxu0 %v5727
        %6557 = vmatpush1.bf16.msra.mxu0 %v5726
        %6558 = vmatprep.subr.bf16.mxu0 %v5721
        %6559 = vmatpush1.bf16.msra.mxu0 %v5720
        %6560 = vmatprep.subr.bf16.mxu0 %v5715
        %6561 = vmatpush1.bf16.msra.mxu0 %v5714
        %6562 = vmatprep.subr.bf16.mxu0 %v5805
        %6563 = vmatpush2.bf16.msra.mxu0 %v5804
        %6564 = vmatprep.subr.bf16.mxu0 %v5799
        %6565 = vmatpush2.bf16.msra.mxu0 %v5798
        %6566 = vmatprep.subr.bf16.mxu0 %v5793
        %6567 = vmatpush2.bf16.msra.mxu0 %v5792
        %6568 = vmatprep.subr.bf16.mxu0 %v5787
        %6569 = vmatpush2.bf16.msra.mxu0 %v5786
        %6570 = vmatprep.subr.bf16.mxu0 %v5781
        %6571 = vmatpush2.bf16.msra.mxu0 %v5780
        %6572 = vmatprep.subr.bf16.mxu0 %v5775
        %6573 = vmatpush2.bf16.msra.mxu0 %v5774
        %6574 = vmatprep.subr.bf16.mxu0 %v5769
        %6575 = vmatpush2.bf16.msra.mxu0 %v5768
        %6576 = vmatprep.subr.bf16.mxu0 %v5763
        %6577 = vmatpush2.bf16.msra.mxu0 %v5762
        %6578 = vmatprep.mubr.bf16.mxu0 %v4357
        %6579 = vmatmul.mubr.bf16.gmra.mxu0 %v4356
        %v6580 = vpop.f32.mrf.mxu0
        %v6581 = vadd.f32 %v6538, %v6580
        %v6582 = vpop.f32.mrf.mxu0
        %v6583 = vadd.f32 %v6540, %v6582
        %v6584 = vpop.f32.mrf.mxu0
        %v6585 = vadd.f32 %v6542, %v6584
        %v6586 = vpop.f32.mrf.mxu0
        %v6587 = vadd.f32 %v6544, %v6586
        %6588 = vdwg.mxu0
        %6589 = vmatprep.subr.bf16.mxu0 %v5853
        %6590 = vmatpush1.bf16.msra.mxu0 %v5852
        %6591 = vmatprep.subr.bf16.mxu0 %v5847
        %6592 = vmatpush1.bf16.msra.mxu0 %v5846
        %6593 = vmatprep.subr.bf16.mxu0 %v5841
        %6594 = vmatpush1.bf16.msra.mxu0 %v5840
        %6595 = vmatprep.subr.bf16.mxu0 %v5835
        %6596 = vmatpush1.bf16.msra.mxu0 %v5834
        %6597 = vmatprep.subr.bf16.mxu0 %v5829
        %6598 = vmatpush1.bf16.msra.mxu0 %v5828
        %6599 = vmatprep.subr.bf16.mxu0 %v5823
        %6600 = vmatpush1.bf16.msra.mxu0 %v5822
        %6601 = vmatprep.subr.bf16.mxu0 %v5817
        %6602 = vmatpush1.bf16.msra.mxu0 %v5816
        %6603 = vmatprep.subr.bf16.mxu0 %v5811
        %6604 = vmatpush1.bf16.msra.mxu0 %v5810
        %6605 = vmatprep.subr.bf16.mxu0 %v5901
        %6606 = vmatpush2.bf16.msra.mxu0 %v5900
        %6607 = vmatprep.subr.bf16.mxu0 %v5895
        %6608 = vmatpush2.bf16.msra.mxu0 %v5894
        %6609 = vmatprep.subr.bf16.mxu0 %v5889
        %6610 = vmatpush2.bf16.msra.mxu0 %v5888
        %6611 = vmatprep.subr.bf16.mxu0 %v5883
        %6612 = vmatpush2.bf16.msra.mxu0 %v5882
        %6613 = vmatprep.subr.bf16.mxu0 %v5877
        %6614 = vmatpush2.bf16.msra.mxu0 %v5876
        %6615 = vmatprep.subr.bf16.mxu0 %v5871
        %6616 = vmatpush2.bf16.msra.mxu0 %v5870
        %6617 = vmatprep.subr.bf16.mxu0 %v5865
        %6618 = vmatpush2.bf16.msra.mxu0 %v5864
        %6619 = vmatprep.subr.bf16.mxu0 %v5859
        %6620 = vmatpush2.bf16.msra.mxu0 %v5858
        %6621 = vmatprep.mubr.bf16.mxu0 %v4359
        %6622 = vmatmul.mubr.bf16.gmra.mxu0 %v4358
        %v6623 = vpop.f32.mrf.mxu0
        %v6624 = vadd.f32 %v6581, %v6623
        %v6625 = vpop.f32.mrf.mxu0
        %v6626 = vadd.f32 %v6583, %v6625
        %v6627 = vpop.f32.mrf.mxu0
        %v6628 = vadd.f32 %v6585, %v6627
        %v6629 = vpop.f32.mrf.mxu0
        %v6630 = vadd.f32 %v6587, %v6629
        %6631 = vdwg.mxu0
        %6632 = vmatprep.subr.bf16.mxu0 %v5567
        %6633 = vmatpush1.bf16.msra.mxu0 %v5566
        %6634 = vmatprep.subr.bf16.mxu0 %v5561
        %6635 = vmatpush1.bf16.msra.mxu0 %v5560
        %6636 = vmatprep.subr.bf16.mxu0 %v5555
        %6637 = vmatpush1.bf16.msra.mxu0 %v5554
        %6638 = vmatprep.subr.bf16.mxu0 %v5549
        %6639 = vmatpush1.bf16.msra.mxu0 %v5548
        %6640 = vmatprep.subr.bf16.mxu0 %v5543
        %6641 = vmatpush1.bf16.msra.mxu0 %v5542
        %6642 = vmatprep.subr.bf16.mxu0 %v5537
        %6643 = vmatpush1.bf16.msra.mxu0 %v5536
        %6644 = vmatprep.subr.bf16.mxu0 %v5531
        %6645 = vmatpush1.bf16.msra.mxu0 %v5530
        %6646 = vmatprep.subr.bf16.mxu0 %v5525
        %6647 = vmatpush1.bf16.msra.mxu0 %v5524
        %6648 = vmatprep.subr.bf16.mxu0 %v5615
        %6649 = vmatpush2.bf16.msra.mxu0 %v5614
        %6650 = vmatprep.subr.bf16.mxu0 %v5609
        %6651 = vmatpush2.bf16.msra.mxu0 %v5608
        %6652 = vmatprep.subr.bf16.mxu0 %v5603
        %6653 = vmatpush2.bf16.msra.mxu0 %v5602
        %6654 = vmatprep.subr.bf16.mxu0 %v5597
        %6655 = vmatpush2.bf16.msra.mxu0 %v5596
        %6656 = vmatprep.subr.bf16.mxu0 %v5591
        %6657 = vmatpush2.bf16.msra.mxu0 %v5590
        %6658 = vmatprep.subr.bf16.mxu0 %v5585
        %6659 = vmatpush2.bf16.msra.mxu0 %v5584
        %6660 = vmatprep.subr.bf16.mxu0 %v5579
        %6661 = vmatpush2.bf16.msra.mxu0 %v5578
        %6662 = vmatprep.subr.bf16.mxu0 %v5573
        %6663 = vmatpush2.bf16.msra.mxu0 %v5572
        %6664 = vmatprep.mubr.bf16.mxu0 %v4353
        %6665 = vmatmul.mubr.bf16.gmra.mxu0 %v4352
        %v6666 = vpop.f32.mrf.mxu0
        %v6667 = vadd.f32 0.0, %v6666
        %v6668 = vpop.f32.mrf.mxu0
        %v6669 = vadd.f32 0.0, %v6668
        %v6670 = vpop.f32.mrf.mxu0
        %v6671 = vadd.f32 0.0, %v6670
        %v6672 = vpop.f32.mrf.mxu0
        %v6673 = vadd.f32 0.0, %v6672
        %6674 = vdwg.mxu0
        %6675 = vmatprep.subr.bf16.mxu0 %v5663
        %6676 = vmatpush1.bf16.msra.mxu0 %v5662
        %6677 = vmatprep.subr.bf16.mxu0 %v5657
        %6678 = vmatpush1.bf16.msra.mxu0 %v5656
        %6679 = vmatprep.subr.bf16.mxu0 %v5651
        %6680 = vmatpush1.bf16.msra.mxu0 %v5650
        %6681 = vmatprep.subr.bf16.mxu0 %v5645
        %6682 = vmatpush1.bf16.msra.mxu0 %v5644
        %6683 = vmatprep.subr.bf16.mxu0 %v5639
        %6684 = vmatpush1.bf16.msra.mxu0 %v5638
        %6685 = vmatprep.subr.bf16.mxu0 %v5633
        %6686 = vmatpush1.bf16.msra.mxu0 %v5632
        %6687 = vmatprep.subr.bf16.mxu0 %v5627
        %6688 = vmatpush1.bf16.msra.mxu0 %v5626
        %6689 = vmatprep.subr.bf16.mxu0 %v5621
        %6690 = vmatpush1.bf16.msra.mxu0 %v5620
        %6691 = vmatprep.subr.bf16.mxu0 %v5711
        %6692 = vmatpush2.bf16.msra.mxu0 %v5710
        %6693 = vmatprep.subr.bf16.mxu0 %v5705
        %6694 = vmatpush2.bf16.msra.mxu0 %v5704
        %6695 = vmatprep.subr.bf16.mxu0 %v5699
        %6696 = vmatpush2.bf16.msra.mxu0 %v5698
        %6697 = vmatprep.subr.bf16.mxu0 %v5693
        %6698 = vmatpush2.bf16.msra.mxu0 %v5692
        %6699 = vmatprep.subr.bf16.mxu0 %v5687
        %6700 = vmatpush2.bf16.msra.mxu0 %v5686
        %6701 = vmatprep.subr.bf16.mxu0 %v5681
        %6702 = vmatpush2.bf16.msra.mxu0 %v5680
        %6703 = vmatprep.subr.bf16.mxu0 %v5675
        %6704 = vmatpush2.bf16.msra.mxu0 %v5674
        %6705 = vmatprep.subr.bf16.mxu0 %v5669
        %6706 = vmatpush2.bf16.msra.mxu0 %v5668
        %6707 = vmatprep.mubr.bf16.mxu0 %v4355
        %6708 = vmatmul.mubr.bf16.gmra.mxu0 %v4354
        %v6709 = vpop.f32.mrf.mxu0
        %v6710 = vadd.f32 %v6667, %v6709
        %v6711 = vpop.f32.mrf.mxu0
        %v6712 = vadd.f32 %v6669, %v6711
        %v6713 = vpop.f32.mrf.mxu0
        %v6714 = vadd.f32 %v6671, %v6713
        %v6715 = vpop.f32.mrf.mxu0
        %v6716 = vadd.f32 %v6673, %v6715
        %6717 = vdwg.mxu0
        %6718 = vmatprep.subr.bf16.mxu0 %v5759
        %6719 = vmatpush1.bf16.msra.mxu0 %v5758
        %6720 = vmatprep.subr.bf16.mxu0 %v5753
        %6721 = vmatpush1.bf16.msra.mxu0 %v5752
        %6722 = vmatprep.subr.bf16.mxu0 %v5747
        %6723 = vmatpush1.bf16.msra.mxu0 %v5746
        %6724 = vmatprep.subr.bf16.mxu0 %v5741
        %6725 = vmatpush1.bf16.msra.mxu0 %v5740
        %6726 = vmatprep.subr.bf16.mxu0 %v5735
        %6727 = vmatpush1.bf16.msra.mxu0 %v5734
        %6728 = vmatprep.subr.bf16.mxu0 %v5729
        %6729 = vmatpush1.bf16.msra.mxu0 %v5728
        %6730 = vmatprep.subr.bf16.mxu0 %v5723
        %6731 = vmatpush1.bf16.msra.mxu0 %v5722
        %6732 = vmatprep.subr.bf16.mxu0 %v5717
        %6733 = vmatpush1.bf16.msra.mxu0 %v5716
        %6734 = vmatprep.subr.bf16.mxu0 %v5807
        %6735 = vmatpush2.bf16.msra.mxu0 %v5806
        %6736 = vmatprep.subr.bf16.mxu0 %v5801
        %6737 = vmatpush2.bf16.msra.mxu0 %v5800
        %6738 = vmatprep.subr.bf16.mxu0 %v5795
        %6739 = vmatpush2.bf16.msra.mxu0 %v5794
        %6740 = vmatprep.subr.bf16.mxu0 %v5789
        %6741 = vmatpush2.bf16.msra.mxu0 %v5788
        %6742 = vmatprep.subr.bf16.mxu0 %v5783
        %6743 = vmatpush2.bf16.msra.mxu0 %v5782
        %6744 = vmatprep.subr.bf16.mxu0 %v5777
        %6745 = vmatpush2.bf16.msra.mxu0 %v5776
        %6746 = vmatprep.subr.bf16.mxu0 %v5771
        %6747 = vmatpush2.bf16.msra.mxu0 %v5770
        %6748 = vmatprep.subr.bf16.mxu0 %v5765
        %6749 = vmatpush2.bf16.msra.mxu0 %v5764
        %6750 = vmatprep.mubr.bf16.mxu0 %v4357
        %6751 = vmatmul.mubr.bf16.gmra.mxu0 %v4356
        %v6752 = vpop.f32.mrf.mxu0
        %v6753 = vadd.f32 %v6710, %v6752
        %v6754 = vpop.f32.mrf.mxu0
        %v6755 = vadd.f32 %v6712, %v6754
        %v6756 = vpop.f32.mrf.mxu0
        %v6757 = vadd.f32 %v6714, %v6756
        %v6758 = vpop.f32.mrf.mxu0
        %v6759 = vadd.f32 %v6716, %v6758
        %6760 = vdwg.mxu0
        %6761 = vmatprep.subr.bf16.mxu0 %v5855
        %6762 = vmatpush1.bf16.msra.mxu0 %v5854
        %6763 = vmatprep.subr.bf16.mxu0 %v5849
        %6764 = vmatpush1.bf16.msra.mxu0 %v5848
        %6765 = vmatprep.subr.bf16.mxu0 %v5843
        %6766 = vmatpush1.bf16.msra.mxu0 %v5842
        %6767 = vmatprep.subr.bf16.mxu0 %v5837
        %6768 = vmatpush1.bf16.msra.mxu0 %v5836
        %6769 = vmatprep.subr.bf16.mxu0 %v5831
        %6770 = vmatpush1.bf16.msra.mxu0 %v5830
        %6771 = vmatprep.subr.bf16.mxu0 %v5825
        %6772 = vmatpush1.bf16.msra.mxu0 %v5824
        %6773 = vmatprep.subr.bf16.mxu0 %v5819
        %6774 = vmatpush1.bf16.msra.mxu0 %v5818
        %6775 = vmatprep.subr.bf16.mxu0 %v5813
        %6776 = vmatpush1.bf16.msra.mxu0 %v5812
        %6777 = vmatprep.subr.bf16.mxu0 %v5903
        %6778 = vmatpush2.bf16.msra.mxu0 %v5902
        %6779 = vmatprep.subr.bf16.mxu0 %v5897
        %6780 = vmatpush2.bf16.msra.mxu0 %v5896
        %6781 = vmatprep.subr.bf16.mxu0 %v5891
        %6782 = vmatpush2.bf16.msra.mxu0 %v5890
        %6783 = vmatprep.subr.bf16.mxu0 %v5885
        %6784 = vmatpush2.bf16.msra.mxu0 %v5884
        %6785 = vmatprep.subr.bf16.mxu0 %v5879
        %6786 = vmatpush2.bf16.msra.mxu0 %v5878
        %6787 = vmatprep.subr.bf16.mxu0 %v5873
        %6788 = vmatpush2.bf16.msra.mxu0 %v5872
        %6789 = vmatprep.subr.bf16.mxu0 %v5867
        %6790 = vmatpush2.bf16.msra.mxu0 %v5866
        %6791 = vmatprep.subr.bf16.mxu0 %v5861
        %6792 = vmatpush2.bf16.msra.mxu0 %v5860
        %6793 = vmatprep.mubr.bf16.mxu0 %v4359
        %6794 = vmatmul.mubr.bf16.gmra.mxu0 %v4358
        %v6795 = vpop.f32.mrf.mxu0
        %v6796 = vadd.f32 %v6753, %v6795
        %v6797 = vpop.f32.mrf.mxu0
        %v6798 = vadd.f32 %v6755, %v6797
        %v6799 = vpop.f32.mrf.mxu0
        %v6800 = vadd.f32 %v6757, %v6799
        %v6801 = vpop.f32.mrf.mxu0
        %v6802 = vadd.f32 %v6759, %v6801
        %6803 = vdwg.mxu0
        %6804 = vst [vmem:[%s238] sm:$0xff] %v6452
        %6805 = vst [vmem:[%s238 + $0x8] sm:$0xff] %v6454
        %6806 = vst [vmem:[%s238 + $0x10] sm:$0xff] %v6624
        %6807 = vst [vmem:[%s238 + $0x18] sm:$0xff] %v6626
        %6808 = vst [vmem:[%s238 + $0x20] sm:$0xff] %v6796
        %6809 = vst [vmem:[%s238 + $0x28] sm:$0xff] %v6798
        %6810 = vst [vmem:[%s238 + $0x30] sm:$0xff] %v6456
        %6811 = vst [vmem:[%s238 + $0x38] sm:$0xff] %v6458
        %6812 = vst [vmem:[%s238 + $0x40] sm:$0xff] %v6628
        %6813 = vst [vmem:[%s238 + $0x48] sm:$0xff] %v6630
        %6814 = vst [vmem:[%s238 + $0x50] sm:$0xff] %v6800
        %6815 = vst [vmem:[%s238 + $0x58] sm:$0xff] %v6802
        %v6816 = vld [vmem:[%s238] sm:$0xff]
        %v6817 = vld [vmem:[%s238 + $0x8] sm:$0xff]
        %v6818 = vld [vmem:[%s238 + $0x10] sm:$0xff]
        %v6819 = vld [vmem:[%s238 + $0x18] sm:$0xff]
        %v6820 = vld [vmem:[%s238 + $0x20] sm:$0xff]
        %v6821 = vld [vmem:[%s238 + $0x28] sm:$0xff]
        %v6822 = vld [vmem:[%s238 + $0x30] sm:$0xff]
        %v6823 = vld [vmem:[%s238 + $0x38] sm:$0xff]
        %v6824 = vld [vmem:[%s238 + $0x40] sm:$0xff]
        %v6825 = vld [vmem:[%s238 + $0x48] sm:$0xff]
        %v6826 = vld [vmem:[%s238 + $0x50] sm:$0xff]
        %v6827 = vld [vmem:[%s238 + $0x58] sm:$0xff]
        %v6828 = vld [vmem:[#allocation8] sm:$0x3f]
        %v6830 = vlaneseq
        %v6831 = vshrl.u32 %v6830, 7
        %v6832 = vsub.s32 0, %v6831
        %v6833 = vrot.slane %v6828, %v6832
        %v6834 = vlaneseq
        %v6835 = vshrl.u32 %v6834, 7
        %v6836 = vsub.s32 1, %v6835
        %v6837 = vrot.slane %v6828, %v6836
        %v6838 = vlaneseq
        %v6839 = vshrl.u32 %v6838, 7
        %v6840 = vsub.s32 2, %v6839
        %v6841 = vrot.slane %v6828, %v6840
        %v6842 = vlaneseq
        %v6843 = vshrl.u32 %v6842, 7
        %v6844 = vsub.s32 3, %v6843
        %v6845 = vrot.slane %v6828, %v6844
        %v6846 = vlaneseq
        %v6847 = vshrl.u32 %v6846, 7
        %v6848 = vsub.s32 4, %v6847
        %v6849 = vrot.slane %v6828, %v6848
        %v6850 = vlaneseq
        %v6851 = vshrl.u32 %v6850, 7
        %v6852 = vsub.s32 5, %v6851
        %v6853 = vrot.slane %v6828, %v6852
        %v6860 = vmul.f32 %v6816, %v6833
        %v6861 = vmul.f32 %v6817, %v6837
        %v6862 = vmul.f32 %v6818, %v6841
        %v6863 = vmul.f32 %v6819, %v6845
        %v6864 = vmul.f32 %v6820, %v6849
        %v6865 = vmul.f32 %v6821, %v6853
        %v6866 = vmul.f32 %v6822, %v6833
        %v6867 = vmul.f32 %v6823, %v6837
        %v6868 = vmul.f32 %v6824, %v6841
        %v6869 = vmul.f32 %v6825, %v6845
        %v6870 = vmul.f32 %v6826, %v6849
        %v6871 = vmul.f32 %v6827, %v6853
        %v6872 = vadd.f32 %v6860, %v6861
        %v6873 = vadd.f32 %v6872, %v6862
        %v6874 = vadd.f32 %v6873, %v6863
        %v6875 = vadd.f32 %v6874, %v6864
        %v6876 = vadd.f32 %v6875, %v6865
        %6877 = vadd.xlane.f32.xlu0 %v6876
        %v6878 = vpop.xlane.xlu0 %6877
        %v6879 = vadd.f32 %v6866, %v6867
        %v6880 = vadd.f32 %v6879, %v6868
        %v6881 = vadd.f32 %v6880, %v6869
        %v6882 = vadd.f32 %v6881, %v6870
        %v6883 = vadd.f32 %v6882, %v6871
        %6884 = vadd.xlane.f32.xlu0 %v6883
        %v6885 = vpop.xlane.xlu0 %6884
        %v6886 = vmul.f32 %v6878, 0.001953125
        %v6887 = vmul.f32 %v6885, 0.001953125
        %v6888 = vmul.f32 %v6860, %v6816
        %v6889 = vmul.f32 %v6861, %v6817
        %v6890 = vmul.f32 %v6862, %v6818
        %v6891 = vmul.f32 %v6863, %v6819
        %v6892 = vmul.f32 %v6864, %v6820
        %v6893 = vmul.f32 %v6865, %v6821
        %v6894 = vmul.f32 %v6866, %v6822
        %v6895 = vmul.f32 %v6867, %v6823
        %v6896 = vmul.f32 %v6868, %v6824
        %v6897 = vmul.f32 %v6869, %v6825
        %v6898 = vmul.f32 %v6870, %v6826
        %v6899 = vmul.f32 %v6871, %v6827
        %v6900 = vadd.f32 %v6888, %v6889
        %v6901 = vadd.f32 %v6900, %v6890
        %v6902 = vadd.f32 %v6901, %v6891
        %v6903 = vadd.f32 %v6902, %v6892
        %v6904 = vadd.f32 %v6903, %v6893
        %6905 = vadd.xlane.f32.xlu0 %v6904
        %v6906 = vpop.xlane.xlu0 %6905
        %v6907 = vadd.f32 %v6894, %v6895
        %v6908 = vadd.f32 %v6907, %v6896
        %v6909 = vadd.f32 %v6908, %v6897
        %v6910 = vadd.f32 %v6909, %v6898
        %v6911 = vadd.f32 %v6910, %v6899
        %6912 = vadd.xlane.f32.xlu0 %v6911
        %v6913 = vpop.xlane.xlu0 %6912
        %v6914 = vmul.f32 %v6906, 0.001953125
        %v6915 = vmul.f32 %v6913, 0.001953125
        %v6916 = vmul.f32 %v6886, %v6886
        %v6917 = vmul.f32 %v6887, %v6887
        %v6918 = vsub.f32 %v6914, %v6916
        %v6919 = vsub.f32 %v6915, %v6917
        %v6920 = vsub.f32 %v6816, %v6886
        %v6921 = vsub.f32 %v6817, %v6886
        %v6922 = vsub.f32 %v6818, %v6886
        %v6923 = vsub.f32 %v6819, %v6886
        %v6924 = vsub.f32 %v6820, %v6886
        %v6925 = vsub.f32 %v6821, %v6886
        %v6926 = vsub.f32 %v6822, %v6887
        %v6927 = vsub.f32 %v6823, %v6887
        %v6928 = vsub.f32 %v6824, %v6887
        %v6929 = vsub.f32 %v6825, %v6887
        %v6930 = vsub.f32 %v6826, %v6887
        %v6931 = vsub.f32 %v6827, %v6887
        %v6932 = vadd.f32 %v6918, 1e-05
        %v6933 = vadd.f32 %v6919, 1e-05
        %v6934 = vrsqrt.pop %v6932
        %v6935 = vrsqrt.pop %v6933
        %v6936 = vmul.f32 %v6920, %v6934
        %v6937 = vmul.f32 %v6921, %v6934
        %v6938 = vmul.f32 %v6922, %v6934
        %v6939 = vmul.f32 %v6923, %v6934
        %v6940 = vmul.f32 %v6924, %v6934
        %v6941 = vmul.f32 %v6925, %v6934
        %v6942 = vmul.f32 %v6926, %v6935
        %v6943 = vmul.f32 %v6927, %v6935
        %v6944 = vmul.f32 %v6928, %v6935
        %v6945 = vmul.f32 %v6929, %v6935
        %v6946 = vmul.f32 %v6930, %v6935
        %v6947 = vmul.f32 %v6931, %v6935
        %vm6948 = vcmp.ge.f32.partialorder %v6936, 0.0
        %vm6949 = vcmp.ge.f32.partialorder %v6937, 0.0
        %vm6950 = vcmp.ge.f32.partialorder %v6938, 0.0
        %vm6951 = vcmp.ge.f32.partialorder %v6939, 0.0
        %vm6952 = vcmp.ge.f32.partialorder %v6940, 0.0
        %vm6953 = vcmp.ge.f32.partialorder %v6941, 0.0
        %vm6954 = vcmp.ge.f32.partialorder %v6942, 0.0
        %vm6955 = vcmp.ge.f32.partialorder %v6943, 0.0
        %vm6956 = vcmp.ge.f32.partialorder %v6944, 0.0
        %vm6957 = vcmp.ge.f32.partialorder %v6945, 0.0
        %vm6958 = vcmp.ge.f32.partialorder %v6946, 0.0
        %vm6959 = vcmp.ge.f32.partialorder %v6947, 0.0
        %v6960 = vmul.f32 %v6936, 0.2
        %v6961 = vmul.f32 %v6937, 0.2
        %v6962 = vmul.f32 %v6938, 0.2
        %v6963 = vmul.f32 %v6939, 0.2
        %v6964 = vmul.f32 %v6940, 0.2
        %v6965 = vmul.f32 %v6941, 0.2
        %v6966 = vmul.f32 %v6942, 0.2
        %v6967 = vmul.f32 %v6943, 0.2
        %v6968 = vmul.f32 %v6944, 0.2
        %v6969 = vmul.f32 %v6945, 0.2
        %v6970 = vmul.f32 %v6946, 0.2
        %v6971 = vmul.f32 %v6947, 0.2
        %v6972 = vsel %vm6948, %v6936, %v6960
        %v6973 = vsel %vm6949, %v6937, %v6961
        %v6974 = vsel %vm6950, %v6938, %v6962
        %v6975 = vsel %vm6951, %v6939, %v6963
        %v6976 = vsel %vm6952, %v6940, %v6964
        %v6977 = vsel %vm6953, %v6941, %v6965
        %v6978 = vsel %vm6954, %v6942, %v6966
        %v6979 = vsel %vm6955, %v6943, %v6967
        %v6980 = vsel %vm6956, %v6944, %v6968
        %v6981 = vsel %vm6957, %v6945, %v6969
        %v6982 = vsel %vm6958, %v6946, %v6970
        %v6983 = vsel %vm6959, %v6947, %v6971
        %6984 = vst [vmem:[%s238] sm:$0xff] %v6972
        %6985 = vst [vmem:[%s238 + $0x8] sm:$0xff] %v6973
        %6986 = vst [vmem:[%s238 + $0x10] sm:$0xff] %v6974
        %6987 = vst [vmem:[%s238 + $0x18] sm:$0xff] %v6975
        %6988 = vst [vmem:[%s238 + $0x20] sm:$0xff] %v6976
        %6989 = vst [vmem:[%s238 + $0x28] sm:$0xff] %v6977
        %6990 = vst [vmem:[%s238 + $0x30] sm:$0xff] %v6978
        %6991 = vst [vmem:[%s238 + $0x38] sm:$0xff] %v6979
        %6992 = vst [vmem:[%s238 + $0x40] sm:$0xff] %v6980
        %6993 = vst [vmem:[%s238 + $0x48] sm:$0xff] %v6981
        %6994 = vst [vmem:[%s238 + $0x50] sm:$0xff] %v6982
        %6995 = vst [vmem:[%s238 + $0x58] sm:$0xff] %v6983
        %s6996 = sand.u32 %s116, 1
        %s6997 = scalar_lea.sflag [#allocation5], %s6996
        %s6998 = sand.u32 %s116, 1
        %s6999 = smul.addr %s6998, 96
        %s7000 = scalar_lea.vmem [#allocation9], %s6999
        // Predicated region
        $region45: #{tpu_custom_call.1} parent=31 // pred_check
          %p7001 = pneg %p126
        $region46: #{tpu_custom_call.1} parent=31 // pred_check_branch
          %7003 = sbr.rel (%p7001) target = $region48
        $region47: #{tpu_custom_call.1} parent=31 // pred_region
          %s7004 = smul.u32 2, %s26
          %s7006 = ssub.s32 1536, 1536
          %7007 = vsyncadd %s6997, %s7006
          %s7008 = smul.addr %s7004, 6
          %s7009 = smul.addr %s25, 12
          %s7010 = sadd.s32 %s7008, %s7009
          %s7011 = smul.addr %s7010, 128
          %s7012 = scalar_lea.hbm %s3, %s7011
          %s7013 = sshll.u32 %s7000, 4
          %s7014 = int_to_ptr.vmem [resolvable:$true] %s7013
          %7019 = dma.vmem_to_hbm [thread:$0]  %s7014, 1536, %s7012, %s6997, 768, 768, 48
        $region48: #{tpu_custom_call.1} parent=31 // pred_fallthru
          _
      $region32: #{tpu_custom_call.1} parent=5 // pred_fallthru
        _
      %p7020 = scmp.le.s32.totalorder 2, %s16
      // Predicated region
      $region49: #{tpu_custom_call.1} parent=5 // pred_check
        %p7021 = pneg %p7020
      $region50: #{tpu_custom_call.1} parent=5 // pred_check_branch
        %7023 = sbr.rel (%p7021) target = $region52
      $region51: #{tpu_custom_call.1} parent=5 // pred_region
        %s7024 = ssub.s32 %s16, 2
        // Predicated region
        $region53: #{tpu_custom_call.1} parent=51 // pred_check
          %p7025 = pneg %p132
        $region54: #{tpu_custom_call.1} parent=51 // pred_check_branch
          %7027 = sbr.rel (%p7025) target = $region56
        $region55: #{tpu_custom_call.1} parent=51 // pred_region
          %s7028 = sand.u32 %s117, 1
          %s7029 = scalar_lea.sflag [#allocation5], %s7028
          %s7030 = sand.u32 %s117, 1
          %s7031 = smul.addr %s7030, 96
          %s7032 = scalar_lea.vmem [#allocation9], %s7031
          %7033 = dma.done %s7029, 1536
        $region56: #{tpu_custom_call.1} parent=51 // pred_fallthru
          _
      $region52: #{tpu_custom_call.1} parent=5 // pred_fallthru
        _
    $region6: #{tpu_custom_call.1} parent=1 // loop_footer
      %s20 = sadd.s32 1, %s16
    $region7: #{tpu_custom_call.1} parent=1 // loop_footer_branch
      %15 = sbr.rel target = $region3
    $region8: #{tpu_custom_call.1} parent=1 // loop_exit
      _
    %7034 = vsyncpa [#allocation4], 1
    %s7035 = scalar_lea.sflag [#allocation4], 1
    %7036 = vsyncpa %s7035, 1
    %7037 = vsyncpa [#allocation7], 1
    %7038 = vsyncpa [#allocation5], 1
    %s7039 = scalar_lea.sflag [#allocation5], 1
    %7040 = vsyncpa %s7039, 1

</llo_original>
